<compile_context>
chip_gen: v7x
topology: tpu7x:2x2x1
jax: 0.10.0
libtpu: 0.0.40
codegen_flags: <defaults>
</compile_context>

<pallas_src>
import jax
import jax.numpy as jnp
from jax.experimental import pallas as pl
from jax.experimental.pallas import tpu as pltpu

LEAKY_SLOPE = 0.05  # matches F.leaky_relu(..., 0.05) in the PyTorch G21


# ---------------------------------------------------------------------------
# Pallas kernel 1: plain matmul + bias + leaky-relu (used for conv1).
# ---------------------------------------------------------------------------
def _matmul_bias_leaky_kernel(p_ref, w_ref, b_ref, o_ref):
    acc = jnp.dot(p_ref[...], w_ref[...], preferred_element_type=jnp.float32)
    acc = acc + b_ref[...]
    acc = jnp.where(acc >= 0.0, acc, LEAKY_SLOPE * acc)
    o_ref[...] = acc.astype(o_ref.dtype)


def conv1_pallas(patches, w1, b1):
    """patches: (M, K) bf16, w1: (K, Cout) bf16, b1: (1, Cout) f32 -> (M, Cout) bf16."""
    M, K = patches.shape
    cout = w1.shape[1]
    tm = 256 if M % 256 == 0 else M
    return pl.pallas_call(
        _matmul_bias_leaky_kernel,
        out_shape=jax.ShapeDtypeStruct((M, cout), jnp.bfloat16),
        grid_spec=pltpu.PrefetchScalarGridSpec(
            num_scalar_prefetch=0,
            grid=(M // tm,),
            in_specs=[
                pl.BlockSpec((tm, K), lambda i: (i, 0)),
                pl.BlockSpec((K, cout), lambda i: (0, 0)),
                pl.BlockSpec((1, cout), lambda i: (0, 0)),
            ],
            out_specs=pl.BlockSpec((tm, cout), lambda i: (i, 0)),
        ),
        compiler_params=pltpu.CompilerParams(dimension_semantics=("parallel",)),
        cost_estimate=pl.CostEstimate(
            flops=2 * M * K * cout,
            transcendentals=0,
            bytes_accessed=patches.size * 2 + w1.size * 2 + b1.size * 4 + M * cout * 2,
        ),
    )(patches, w1, b1)


# ---------------------------------------------------------------------------
# Pallas kernel 2: fused conv2 + conv3 + conv4 + deconv1 + deconv2 on the 8x8 grid.
# One grid step per batch image ("parallel" -> both v7x TensorCores).
# ---------------------------------------------------------------------------
def _fused_tail_kernel(x_ref, w2_ref, b2_ref, w3_ref, b3_ref, w4_ref, b4_ref,
                       w5_ref, b5_ref, w6_ref, o_ref, pad128, pad256):
    H = x_ref.shape[0] - 1        # 8 (x_ref is the 9x9 padded space-to-depth grid)
    W = x_ref.shape[1] - 1        # 8
    M = H * W                     # 64 rows (one image)

    def leaky(a):
        return jnp.where(a >= 0.0, a, LEAKY_SLOPE * a)

    def conv3x3(scratch, w_ref):
        """3x3 / stride-1 / pad-1 conv over the 8x8 grid stored (zero-padded) in
        `scratch` (10,10,cin); weight rows ordered (tap_row, tap_col, cin)."""
        cin = scratch.shape[-1]
        cout = w_ref.shape[-1]
        acc = jnp.zeros((M, cout), jnp.float32)
        t = 0
        for di in range(3):
            for dj in range(3):
                p = scratch[di:di + H, dj:dj + W, :].reshape(M, cin)
                acc = acc + jnp.dot(p, w_ref[t * cin:(t + 1) * cin, :],
                                    preferred_element_type=jnp.float32)
                t += 1
        return acc

    # Zero borders of the padded scratches (re-done every grid step: steps may run on
    # different cores, and it is trivially cheap).
    pad128[...] = jnp.zeros_like(pad128)
    pad256[...] = jnp.zeros_like(pad256)

    # ---- conv2: Conv2d(64->128, k=4, s=2, p=1) as a 2x2/s1 conv over the 9x9
    #      pad+space-to-depth grid (channels ordered (sub_row, sub_col, c)). ----
    cin2 = x_ref.shape[-1]        # 256
    c128 = w2_ref.shape[-1]       # 128
    acc = jnp.zeros((M, c128), jnp.float32)
    t = 0
    for bi in range(2):
        for bj in range(2):
            p = x_ref[bi:bi + H, bj:bj + W, :].reshape(M, cin2)
            acc = acc + jnp.dot(p, w2_ref[t * cin2:(t + 1) * cin2, :],
                                preferred_element_type=jnp.float32)
            t += 1
    h = leaky(acc + b2_ref[...]).astype(jnp.bfloat16)                 # (64, 128)

    # ---- conv3 ----
    pad128[1:1 + H, 1:1 + W, :] = h.reshape(H, W, c128)
    h = leaky(conv3x3(pad128, w3_ref) + b3_ref[...]).astype(jnp.bfloat16)

    # ---- conv4 ----
    pad128[1:1 + H, 1:1 + W, :] = h.reshape(H, W, c128)
    h = leaky(conv3x3(pad128, w4_ref) + b4_ref[...]).astype(jnp.bfloat16)

    # ---- deconv1 (phase form: 4 x 64 channels, BN+leaky fused) ----
    pad128[1:1 + H, 1:1 + W, :] = h.reshape(H, W, c128)
    h = leaky(conv3x3(pad128, w5_ref) + b5_ref[...]).astype(jnp.bfloat16)   # (64, 256)

    # ---- deconv2 composed onto the 8x8 grid: 16 output sub-pixels per cell + tanh ----
    pad256[1:1 + H, 1:1 + W, :] = h.reshape(H, W, pad256.shape[-1])
    o_ref[...] = jnp.tanh(conv3x3(pad256, w6_ref))                    # (64, 128) f32


def fused_tail_pallas(h1s2d, prep):
    """h1s2d: (N, 9, 9, 256) bf16 (padded space-to-depth of conv1 output)."""
    N = h1s2d.shape[0]
    w2, b2 = prep["w2"], prep["b2"]
    w3, b3 = prep["w3"], prep["b3"]
    w4, b4 = prep["w4"], prep["b4"]
    w5, b5 = prep["w5"], prep["b5"]
    w6 = prep["w6"]

    flops = 2 * N * 64 * sum(int(w.shape[0]) * int(w.shape[1])
                             for w in (w2, w3, w4, w5, w6))
    bytes_acc = (h1s2d.size * 2
                 + sum(w.size * 2 for w in (w2, w3, w4, w5, w6))
                 + sum(b.size * 4 for b in (b2, b3, b4, b5))
                 + N * 64 * 128 * 4)

    return pl.pallas_call(
        _fused_tail_kernel,
        out_shape=jax.ShapeDtypeStruct((N * 64, 128), jnp.float32),
        grid_spec=pltpu.PrefetchScalarGridSpec(
            num_scalar_prefetch=0,
            grid=(N,),
            in_specs=[
                pl.BlockSpec((None, 9, 9, h1s2d.shape[-1]), lambda n: (n, 0, 0, 0)),
                pl.BlockSpec(w2.shape, lambda n: (0, 0)),
                pl.BlockSpec(b2.shape, lambda n: (0, 0)),
                pl.BlockSpec(w3.shape, lambda n: (0, 0)),
                pl.BlockSpec(b3.shape, lambda n: (0, 0)),
                pl.BlockSpec(w4.shape, lambda n: (0, 0)),
                pl.BlockSpec(b4.shape, lambda n: (0, 0)),
                pl.BlockSpec(w5.shape, lambda n: (0, 0)),
                pl.BlockSpec(b5.shape, lambda n: (0, 0)),
                pl.BlockSpec(w6.shape, lambda n: (0, 0)),
            ],
            out_specs=pl.BlockSpec((64, 128), lambda n: (n, 0)),
            scratch_shapes=[
                pltpu.VMEM((10, 10, 128), jnp.bfloat16),
                pltpu.VMEM((10, 10, 256), jnp.bfloat16),
            ],
        ),
        compiler_params=pltpu.CompilerParams(dimension_semantics=("parallel",)),
        cost_estimate=pl.CostEstimate(flops=flops, transcendentals=N * 64 * 128,
                                      bytes_accessed=bytes_acc),
    )(h1s2d, w2, b2, w3, b3, w4, b4, w5, b5, w6)


# ---------------------------------------------------------------------------
# Host-side (XLA) glue: pad + space-to-depth for the stride-2 k=4 layers.
# ---------------------------------------------------------------------------
def pad_space_to_depth(x):
    """(N,H,W,C) -> pad by 1 and fold 2x2 pixel blocks into channels -> (N,(H+2)//2,(W+2)//2,4C).
    Channel order within a block: (sub_row, sub_col, c)."""
    N, H, W, C = x.shape
    xp = jnp.pad(x, ((0, 0), (1, 1), (1, 1), (0, 0)))
    Hb, Wb = (H + 2) // 2, (W + 2) // 2
    s = xp.reshape(N, Hb, 2, Wb, 2, C)
    s = jnp.transpose(s, (0, 1, 3, 2, 4, 5))
    return s.reshape(N, Hb, Wb, 4 * C)


def im2col_k4s2(x):
    """im2col for Conv2d(k=4,s=2,p=1): 4 contiguous slices of the space-to-depth grid.
    K ordered (block_row, block_col, sub_row, sub_col, c)."""
    s = pad_space_to_depth(x)
    N, Hb, Wb, C4 = s.shape
    Ho, Wo = Hb - 1, Wb - 1
    cols = [s[:, bi:bi + Ho, bj:bj + Wo, :] for bi in range(2) for bj in range(2)]
    patches = jnp.concatenate(cols, axis=-1)
    return patches.reshape(N * Ho * Wo, 4 * C4), (N, Ho, Wo)


# ---------------------------------------------------------------------------
# Host-side weight preparation (BN fold, deconv decompositions, bf16 cast).
# ---------------------------------------------------------------------------
def _conv_k4s2_weight(w, scale):
    """Conv2d(k=4,s=2,p=1) weight (Cout,Cin,4,4) -> (16*Cin, Cout) matmul weight with
    K ordered (block_row, block_col, sub_row, sub_col, Cin); BN scale folded."""
    cout, cin = w.shape[0], w.shape[1]
    wk = jnp.transpose(w, (2, 3, 1, 0))                 # (ki, kj, cin, cout)
    wk = wk.reshape(2, 2, 2, 2, cin, cout)              # (bi, sr, bj, sc, cin, cout)
    wk = jnp.transpose(wk, (0, 2, 1, 3, 4, 5))          # (bi, bj, sr, sc, cin, cout)
    return wk.reshape(16 * cin, cout) * scale[None, :]


def _conv_k3s1_weight(w, scale):
    """Conv2d(k=3,s=1,p=1) weight (Cout,Cin,3,3) -> (9*Cin, Cout), K=(kh,kw,Cin)."""
    cout = w.shape[0]
    wm = jnp.transpose(w, (2, 3, 1, 0)).reshape(-1, cout)
    return wm * scale[None, :]


def _deconv1_as_conv3x3_weight(wt, scale):
    """ConvTranspose2d(k=4,s=2,p=1) weight (Cin,Cout,4,4) -> equivalent 3x3/s1/p1 conv
    weight (9*Cin, 4*Cout) over the input grid; output channels phase(2r+s)-major.
    ki = r + 3 - 2u follows from the transposed-conv relation ki = y + pad - s*q."""
    cin, cout = wt.shape[0], wt.shape[1]
    w = jnp.zeros((3, 3, cin, 4, cout), wt.dtype)
    for u in range(3):
        for v in range(3):
            for r in range(2):
                for s in range(2):
                    ki, kj = r + 3 - 2 * u, s + 3 - 2 * v
                    if 0 <= ki < 4 and 0 <= kj < 4:
                        w = w.at[u, v, :, 2 * r + s, :].set(wt[:, :, ki, kj])
    w = w * scale[None, None, None, None, :]
    return w.reshape(9 * cin, 4 * cout)


def _deconv2_composed_weight(wt):
    """Compose (depth-to-space of deconv1's phase output) + ConvTranspose2d(Cin->1,k=4,
    s=2,p=1) + (space-to-depth of the 32x32 output) into a single 3x3/s1/p1 conv over
    the 8x8 grid: (9*4*Cin, 16), K=(tap_row, tap_col, phase, Cin), out channel = 4A+B.
    ki = A + 5 - 4U - 2rp follows from ki = y + pad - s*p with y=4I+A, p=2(I+U-1)+rp."""
    cin = wt.shape[0]
    w = jnp.zeros((3, 3, 4, cin, 16), wt.dtype)
    for U in range(3):
        for V in range(3):
            for rp in range(2):
                for sp in range(2):
                    for A in range(4):
                        for B in range(4):
                            ki = A + 5 - 4 * U - 2 * rp
                            kj = B + 5 - 4 * V - 2 * sp
                            if 0 <= ki < 4 and 0 <= kj < 4:
                                w = w.at[U, V, 2 * rp + sp, :, 4 * A + B].set(
                                    wt[:, 0, ki, kj])
    return w.reshape(36 * cin, 16)


def prepare_params(p):
    def bf(w):
        return w.astype(jnp.bfloat16)

    return {
        "w1": bf(_conv_k4s2_weight(p["conv1_w"], p["bn1"][0])), "b1": p["bn1"][1],
        "w2": bf(_conv_k4s2_weight(p["conv2_w"], p["bn2"][0])), "b2": p["bn2"][1],
        "w3": bf(_conv_k3s1_weight(p["conv3_w"], p["bn3"][0])), "b3": p["bn3"][1],
        "w4": bf(_conv_k3s1_weight(p["conv4_w"], p["bn4"][0])), "b4": p["bn4"][1],
        "w5": bf(_deconv1_as_conv3x3_weight(p["deconv1_w"], p["bn5"][0])),
        "b5": jnp.tile(p["bn5"][1], (1, 4)),
        # deconv2 has no BN and no bias; pad Cout 16 -> 128 (lane-dense output).
        "w6": bf(jnp.pad(_deconv2_composed_weight(p["deconv2_w"]), ((0, 0), (0, 112)))),
    }


# ---------------------------------------------------------------------------
# Deterministic synthetic parameters (eval-mode BatchNorm statistics).
# ---------------------------------------------------------------------------
def init_params(key, conv_dim=64):
    keys = iter(jax.random.split(key, 32))

    def conv_w(cout, cin, k):
        return 0.05 * jax.random.normal(next(keys), (cout, cin, k, k), jnp.float32)

    def deconv_w(cin, cout, k):
        return 0.05 * jax.random.normal(next(keys), (cin, cout, k, k), jnp.float32)

    def bn(c):
        gamma = 1.0 + 0.1 * jax.random.normal(next(keys), (c,), jnp.float32)
        beta = 0.1 * jax.random.normal(next(keys), (c,), jnp.float32)
        mean = 0.1 * jax.random.normal(next(keys), (c,), jnp.float32)
        var = 1.0 + 0.1 * jnp.abs(jax.random.normal(next(keys), (c,), jnp.float32))
        scale = gamma * jax.lax.rsqrt(var + 1e-5)
        bias = beta - mean * scale
        return scale, bias[None, :]

    cd = conv_dim
    p = {}
    p["conv1_w"] = conv_w(cd, 3, 4);            p["bn1"] = bn(cd)
    p["conv2_w"] = conv_w(cd * 2, cd, 4);       p["bn2"] = bn(cd * 2)
    p["conv3_w"] = conv_w(cd * 2, cd * 2, 3);   p["bn3"] = bn(cd * 2)
    p["conv4_w"] = conv_w(cd * 2, cd * 2, 3);   p["bn4"] = bn(cd * 2)
    p["deconv1_w"] = deconv_w(cd * 2, cd, 4);   p["bn5"] = bn(cd)
    p["deconv2_w"] = deconv_w(cd, 1, 4)
    return p


# ---------------------------------------------------------------------------
# Forward pass (2 pallas_calls total).
# ---------------------------------------------------------------------------
def g21_forward(x_nchw, prep):
    x = jnp.transpose(x_nchw, (0, 2, 3, 1)).astype(jnp.bfloat16)     # NCHW -> NHWC
    patches, (N, Ho, Wo) = im2col_k4s2(x)                            # (512, 48)
    h1 = conv1_pallas(patches, prep["w1"], prep["b1"])               # (512, 64) bf16
    h1 = h1.reshape(N, Ho, Wo, -1)                                   # (2, 16, 16, 64)
    h1s2d = pad_space_to_depth(h1)                                   # (2, 9, 9, 256)
    o = fused_tail_pallas(h1s2d, prep)                               # (128, 128) f32
    # rows = (n, I, J) over the 8x8 grid, cols[:16] = 4x4 output sub-block (A, B)
    o = o[:, :16].reshape(N, 8, 8, 4, 4)
    o = jnp.transpose(o, (0, 1, 3, 2, 4)).reshape(N, 32, 32)
    return o[:, None, :, :]                                          # (N, 1, 32, 32)


# ---------------------------------------------------------------------------
# Pure-JAX f32 reference (validates the deconv decompositions & fusion).
# ---------------------------------------------------------------------------
def reference_forward(x, p):
    def conv(h, w, s, pad):
        return jax.lax.conv_general_dilated(
            h, w, (s, s), [(pad, pad), (pad, pad)],
            dimension_numbers=("NCHW", "OIHW", "NCHW"))

    def deconv(h, wt, s=2, pad=1):
        k = wt.shape[2]
        w = jnp.transpose(jnp.flip(wt, (2, 3)), (1, 0, 2, 3))
        return jax.lax.conv_general_dilated(
            h, w, (1, 1), [(k - 1 - pad, k - 1 - pad)] * 2,
            lhs_dilation=(s, s), dimension_numbers=("NCHW", "OIHW", "NCHW"))

    def bn(h, scale, bias):
        return h * scale.reshape(1, -1, 1, 1) + bias.reshape(1, -1, 1, 1)

    def lrelu(h):
        return jnp.where(h >= 0, h, LEAKY_SLOPE * h)

    h = lrelu(bn(conv(x, p["conv1_w"], 2, 1), *p["bn1"]))
    h = lrelu(bn(conv(h, p["conv2_w"], 2, 1), *p["bn2"]))
    h = lrelu(bn(conv(h, p["conv3_w"], 1, 1), *p["bn3"]))
    h = lrelu(bn(conv(h, p["conv4_w"], 1, 1), *p["bn4"]))
    h = lrelu(bn(deconv(h, p["deconv1_w"]), *p["bn5"]))
    return jnp.tanh(deconv(h, p["deconv2_w"]))


if __name__ == "__main__":
    key = jax.random.PRNGKey(0)
    k_x, k_p = jax.random.split(key)
    x = jax.random.normal(k_x, (2, 3, 32, 32), jnp.float32)   # SVHN-like input
    params = init_params(k_p, conv_dim=64)
    prep = prepare_params(params)                             # one-time, outside jit

    fwd = jax.jit(g21_forward)
    out = jax.block_until_ready(fwd(x, prep))
    assert out.shape == (2, 1, 32, 32), out.shape
    assert bool(jnp.all(jnp.isfinite(out)))

    ref = jax.block_until_ready(jax.jit(reference_forward)(x, params))
    max_err = float(jnp.max(jnp.abs(out - ref)))
    assert max_err < 5e-2, f"max abs error vs f32 reference: {max_err}"

    print("KERNEL_OK")
</pallas_src>

<mosaic_0001>
module attributes {stable_mosaic.version = 11 : i64} {
  func.func @_matmul_bias_leaky_kernel(%arg0: i32, %arg1: memref<256x48xbf16, #tpu.memory_space<vmem>>, %arg2: memref<48x64xbf16, #tpu.memory_space<vmem>>, %arg3: memref<1x64xf32, #tpu.memory_space<vmem>>, %arg4: memref<256x64xbf16, #tpu.memory_space<vmem>>) attributes {dimension_semantics = [#tpu.dimension_semantics<parallel>], iteration_bounds = array<i64: 2>, scalar_prefetch = 0 : i64, scratch_operands = 0 : i64, tpu.core_type = #tpu.core_type<tc>, window_params = [{transform_indices = @transform_0, window_bounds = array<i64: 256, 48>}, {pipeline_mode = #tpu.pipeline_mode<synchronous>, transform_indices = @transform_1, window_bounds = array<i64: 48, 64>}, {pipeline_mode = #tpu.pipeline_mode<synchronous>, transform_indices = @transform_2, window_bounds = array<i64: 1, 64>}, {transform_indices = @transform_3, window_bounds = array<i64: 256, 64>}]} {
    %c0 = arith.constant 0 : index
    %c0_0 = arith.constant 0 : index
    %0 = vector.load %arg1[%c0, %c0_0] : memref<256x48xbf16, #tpu.memory_space<vmem>>, vector<256x48xbf16>
    %c0_1 = arith.constant 0 : index
    %c0_2 = arith.constant 0 : index
    %1 = vector.load %arg2[%c0_1, %c0_2] : memref<48x64xbf16, #tpu.memory_space<vmem>>, vector<48x64xbf16>
    %cst = arith.constant dense<0.000000e+00> : vector<256x64xf32>
    %2 = tpu.matmul %0, %1, %cst {dimension_numbers = #tpu.dot_dimension_numbers<[1], [0], [0], [1], [0, 0, 1, 1], [], []>} : vector<256x48xbf16>, vector<48x64xbf16>, vector<256x64xf32> -> vector<256x64xf32>
    %c0_3 = arith.constant 0 : index
    %c0_4 = arith.constant 0 : index
    %3 = vector.load %arg3[%c0_3, %c0_4] : memref<1x64xf32, #tpu.memory_space<vmem>>, vector<1x64xf32>
    %4 = vector.broadcast %3 : vector<1x64xf32> to vector<256x64xf32>
    %5 = arith.addf %2, %4 : vector<256x64xf32>
    %cst_5 = arith.constant 0.000000e+00 : f32
    %6 = vector.broadcast %cst_5 : f32 to vector<256x64xf32>
    %7 = arith.cmpf oge, %5, %6 : vector<256x64xf32>
    %cst_6 = arith.constant 5.000000e-02 : f32
    %8 = vector.broadcast %cst_6 : f32 to vector<256x64xf32>
    %9 = arith.mulf %8, %5 : vector<256x64xf32>
    %10 = arith.select %7, %5, %9 : vector<256x64xi1>, vector<256x64xf32>
    %11 = arith.truncf %10 : vector<256x64xf32> to vector<256x64xbf16>
    %c0_7 = arith.constant 0 : index
    %c0_8 = arith.constant 0 : index
    %12 = vector.load %arg4[%c0_7, %c0_8] : memref<256x64xbf16, #tpu.memory_space<vmem>>, vector<256x64xbf16>
    tpu.vector_store %arg4[%c0_7, %c0_8], %11 {strides = array<i32>} : memref<256x64xbf16, #tpu.memory_space<vmem>>, vector<256x64xbf16>,
    return
  }
  func.func @transform_0(%arg0: i32) -> (i32, i32) {
    %c0_i32 = arith.constant 0 : i32
    %c0_i32_0 = arith.constant 0 : i32
    return %arg0, %c0_i32 : i32, i32
  }
  func.func @transform_1(%arg0: i32) -> (i32, i32) {
    %c0_i32 = arith.constant 0 : i32
    %c0_i32_0 = arith.constant 0 : i32
    %c0_i32_1 = arith.constant 0 : i32
    return %c0_i32, %c0_i32_0 : i32, i32
  }
  func.func @transform_2(%arg0: i32) -> (i32, i32) {
    %c0_i32 = arith.constant 0 : i32
    %c0_i32_0 = arith.constant 0 : i32
    %c0_i32_1 = arith.constant 0 : i32
    return %c0_i32, %c0_i32_0 : i32, i32
  }
  func.func @transform_3(%arg0: i32) -> (i32, i32) {
    %c0_i32 = arith.constant 0 : i32
    %c0_i32_0 = arith.constant 0 : i32
    return %arg0, %c0_i32 : i32, i32
  }
}

module attributes {stable_mosaic.version = 11 : i64} {
  func.func @_fused_tail_kernel(%arg0: i32, %arg1: memref<1x9x9x256xbf16, #tpu.memory_space<vmem>>, %arg2: memref<1024x128xbf16, #tpu.memory_space<vmem>>, %arg3: memref<1x128xf32, #tpu.memory_space<vmem>>, %arg4: memref<1152x128xbf16, #tpu.memory_space<vmem>>, %arg5: memref<1x128xf32, #tpu.memory_space<vmem>>, %arg6: memref<1152x128xbf16, #tpu.memory_space<vmem>>, %arg7: memref<1x128xf32, #tpu.memory_space<vmem>>, %arg8: memref<1152x256xbf16, #tpu.memory_space<vmem>>, %arg9: memref<1x256xf32, #tpu.memory_space<vmem>>, %arg10: memref<2304x128xbf16, #tpu.memory_space<vmem>>, %arg11: memref<64x128xf32, #tpu.memory_space<vmem>>, %arg12: memref<10x10x128xbf16, #tpu.memory_space<vmem>>, %arg13: memref<10x10x256xbf16, #tpu.memory_space<vmem>>) attributes {dimension_semantics = [#tpu.dimension_semantics<parallel>], iteration_bounds = array<i64: 2>, scalar_prefetch = 0 : i64, scratch_operands = 2 : i64, tpu.core_type = #tpu.core_type<tc>, window_params = [{transform_indices = @transform_0, window_bounds = array<i64: 1, 9, 9, 256>}, {pipeline_mode = #tpu.pipeline_mode<synchronous>, transform_indices = @transform_1, window_bounds = array<i64: 1024, 128>}, {pipeline_mode = #tpu.pipeline_mode<synchronous>, transform_indices = @transform_2, window_bounds = array<i64: 1, 128>}, {pipeline_mode = #tpu.pipeline_mode<synchronous>, transform_indices = @transform_3, window_bounds = array<i64: 1152, 128>}, {pipeline_mode = #tpu.pipeline_mode<synchronous>, transform_indices = @transform_4, window_bounds = array<i64: 1, 128>}, {pipeline_mode = #tpu.pipeline_mode<synchronous>, transform_indices = @transform_5, window_bounds = array<i64: 1152, 128>}, {pipeline_mode = #tpu.pipeline_mode<synchronous>, transform_indices = @transform_6, window_bounds = array<i64: 1, 128>}, {pipeline_mode = #tpu.pipeline_mode<synchronous>, transform_indices = @transform_7, window_bounds = array<i64: 1152, 256>}, {pipeline_mode = #tpu.pipeline_mode<synchronous>, transform_indices = @transform_8, window_bounds = array<i64: 1, 256>}, {pipeline_mode = #tpu.pipeline_mode<synchronous>, transform_indices = @transform_9, window_bounds = array<i64: 2304, 128>}, {transform_indices = @transform_10, window_bounds = array<i64: 64, 128>}]} {
    %cst = arith.constant 0.000000e+00 : bf16
    %0 = vector.broadcast %cst : bf16 to vector<10x10x128xbf16>
    %c0 = arith.constant 0 : index
    %c0_0 = arith.constant 0 : index
    %c0_1 = arith.constant 0 : index
    %1 = vector.load %arg12[%c0, %c0_0, %c0_1] : memref<10x10x128xbf16, #tpu.memory_space<vmem>>, vector<10x10x128xbf16>
    tpu.vector_store %arg12[%c0, %c0_0, %c0_1], %0 {strides = array<i32>} : memref<10x10x128xbf16, #tpu.memory_space<vmem>>, vector<10x10x128xbf16>,
    %cst_2 = arith.constant 0.000000e+00 : bf16
    %2 = vector.broadcast %cst_2 : bf16 to vector<10x10x256xbf16>
    %c0_3 = arith.constant 0 : index
    %c0_4 = arith.constant 0 : index
    %c0_5 = arith.constant 0 : index
    %3 = vector.load %arg13[%c0_3, %c0_4, %c0_5] : memref<10x10x256xbf16, #tpu.memory_space<vmem>>, vector<10x10x256xbf16>
    tpu.vector_store %arg13[%c0_3, %c0_4, %c0_5], %2 {strides = array<i32>} : memref<10x10x256xbf16, #tpu.memory_space<vmem>>, vector<10x10x256xbf16>,
    %cst_6 = arith.constant 0.000000e+00 : f32
    %4 = vector.broadcast %cst_6 : f32 to vector<64x128xf32>
    %c0_7 = arith.constant 0 : index
    %c0_8 = arith.constant 0 : index
    %c0_9 = arith.constant 0 : index
    %c0_10 = arith.constant 0 : index
    %5 = vector.load %arg1[%c0_7, %c0_8, %c0_9, %c0_10] : memref<1x9x9x256xbf16, #tpu.memory_space<vmem>>, vector<1x8x8x256xbf16>
    %6 = vector.shape_cast %5 : vector<1x8x8x256xbf16> to vector<8x8x256xbf16>
    %7 = vector.shape_cast %6 : vector<8x8x256xbf16> to vector<64x256xbf16>
    %c0_11 = arith.constant 0 : index
    %c0_12 = arith.constant 0 : index
    %8 = vector.load %arg2[%c0_11, %c0_12] : memref<1024x128xbf16, #tpu.memory_space<vmem>>, vector<256x128xbf16>
    %cst_13 = arith.constant dense<0.000000e+00> : vector<64x128xf32>
    %9 = tpu.matmul %7, %8, %cst_13 {dimension_numbers = #tpu.dot_dimension_numbers<[1], [0], [0], [1], [0, 0, 1, 1], [], []>} : vector<64x256xbf16>, vector<256x128xbf16>, vector<64x128xf32> -> vector<64x128xf32>
    %10 = arith.addf %4, %9 : vector<64x128xf32>
    %c0_14 = arith.constant 0 : index
    %c0_15 = arith.constant 0 : index
    %c1 = arith.constant 1 : index
    %c0_16 = arith.constant 0 : index
    %11 = vector.load %arg1[%c0_14, %c0_15, %c1, %c0_16] : memref<1x9x9x256xbf16, #tpu.memory_space<vmem>>, vector<1x8x8x256xbf16>
    %12 = vector.shape_cast %11 : vector<1x8x8x256xbf16> to vector<8x8x256xbf16>
    %13 = vector.shape_cast %12 : vector<8x8x256xbf16> to vector<64x256xbf16>
    %c256 = arith.constant 256 : index
    %c0_17 = arith.constant 0 : index
    %14 = vector.load %arg2[%c256, %c0_17] : memref<1024x128xbf16, #tpu.memory_space<vmem>>, vector<256x128xbf16>
    %cst_18 = arith.constant dense<0.000000e+00> : vector<64x128xf32>
    %15 = tpu.matmul %13, %14, %cst_18 {dimension_numbers = #tpu.dot_dimension_numbers<[1], [0], [0], [1], [0, 0, 1, 1], [], []>} : vector<64x256xbf16>, vector<256x128xbf16>, vector<64x128xf32> -> vector<64x128xf32>
    %16 = arith.addf %10, %15 : vector<64x128xf32>
    %c0_19 = arith.constant 0 : index
    %c1_20 = arith.constant 1 : index
    %c0_21 = arith.constant 0 : index
    %c0_22 = arith.constant 0 : index
    %17 = vector.load %arg1[%c0_19, %c1_20, %c0_21, %c0_22] : memref<1x9x9x256xbf16, #tpu.memory_space<vmem>>, vector<1x8x8x256xbf16>
    %18 = vector.shape_cast %17 : vector<1x8x8x256xbf16> to vector<8x8x256xbf16>
    %19 = vector.shape_cast %18 : vector<8x8x256xbf16> to vector<64x256xbf16>
    %c512 = arith.constant 512 : index
    %c0_23 = arith.constant 0 : index
    %20 = vector.load %arg2[%c512, %c0_23] : memref<1024x128xbf16, #tpu.memory_space<vmem>>, vector<256x128xbf16>
    %cst_24 = arith.constant dense<0.000000e+00> : vector<64x128xf32>
    %21 = tpu.matmul %19, %20, %cst_24 {dimension_numbers = #tpu.dot_dimension_numbers<[1], [0], [0], [1], [0, 0, 1, 1], [], []>} : vector<64x256xbf16>, vector<256x128xbf16>, vector<64x128xf32> -> vector<64x128xf32>
    %22 = arith.addf %16, %21 : vector<64x128xf32>
    %c0_25 = arith.constant 0 : index
    %c1_26 = arith.constant 1 : index
    %c1_27 = arith.constant 1 : index
    %c0_28 = arith.constant 0 : index
    %23 = vector.load %arg1[%c0_25, %c1_26, %c1_27, %c0_28] : memref<1x9x9x256xbf16, #tpu.memory_space<vmem>>, vector<1x8x8x256xbf16>
    %24 = vector.shape_cast %23 : vector<1x8x8x256xbf16> to vector<8x8x256xbf16>
    %25 = vector.shape_cast %24 : vector<8x8x256xbf16> to vector<64x256xbf16>
    %c768 = arith.constant 768 : index
    %c0_29 = arith.constant 0 : index
    %26 = vector.load %arg2[%c768, %c0_29] : memref<1024x128xbf16, #tpu.memory_space<vmem>>, vector<256x128xbf16>
    %cst_30 = arith.constant dense<0.000000e+00> : vector<64x128xf32>
    %27 = tpu.matmul %25, %26, %cst_30 {dimension_numbers = #tpu.dot_dimension_numbers<[1], [0], [0], [1], [0, 0, 1, 1], [], []>} : vector<64x256xbf16>, vector<256x128xbf16>, vector<64x128xf32> -> vector<64x128xf32>
    %28 = arith.addf %22, %27 : vector<64x128xf32>
    %c0_31 = arith.constant 0 : index
    %c0_32 = arith.constant 0 : index
    %29 = vector.load %arg3[%c0_31, %c0_32] : memref<1x128xf32, #tpu.memory_space<vmem>>, vector<1x128xf32>
    %30 = vector.broadcast %29 : vector<1x128xf32> to vector<64x128xf32>
    %31 = arith.addf %28, %30 : vector<64x128xf32>
    %cst_33 = arith.constant 0.000000e+00 : f32
    %32 = vector.broadcast %cst_33 : f32 to vector<64x128xf32>
    %33 = arith.cmpf oge, %31, %32 : vector<64x128xf32>
    %cst_34 = arith.constant 5.000000e-02 : f32
    %34 = vector.broadcast %cst_34 : f32 to vector<64x128xf32>
    %35 = arith.mulf %34, %31 : vector<64x128xf32>
    %36 = arith.select %33, %31, %35 : vector<64x128xi1>, vector<64x128xf32>
    %37 = arith.truncf %36 : vector<64x128xf32> to vector<64x128xbf16>
    %38 = vector.shape_cast %37 : vector<64x128xbf16> to vector<8x8x128xbf16>
    %c1_35 = arith.constant 1 : index
    %c1_36 = arith.constant 1 : index
    %c0_37 = arith.constant 0 : index
    %39 = vector.load %arg12[%c1_35, %c1_36, %c0_37] : memref<10x10x128xbf16, #tpu.memory_space<vmem>>, vector<8x8x128xbf16>
    tpu.vector_store %arg12[%c1_35, %c1_36, %c0_37], %38 {strides = array<i32>} : memref<10x10x128xbf16, #tpu.memory_space<vmem>>, vector<8x8x128xbf16>,
    %cst_38 = arith.constant 0.000000e+00 : f32
    %40 = vector.broadcast %cst_38 : f32 to vector<64x128xf32>
    %c0_39 = arith.constant 0 : index
    %c0_40 = arith.constant 0 : index
    %c0_41 = arith.constant 0 : index
    %41 = vector.load %arg12[%c0_39, %c0_40, %c0_41] : memref<10x10x128xbf16, #tpu.memory_space<vmem>>, vector<8x8x128xbf16>
    %42 = vector.shape_cast %41 : vector<8x8x128xbf16> to vector<64x128xbf16>
    %c0_42 = arith.constant 0 : index
    %c0_43 = arith.constant 0 : index
    %43 = vector.load %arg4[%c0_42, %c0_43] : memref<1152x128xbf16, #tpu.memory_space<vmem>>, vector<128x128xbf16>
    %cst_44 = arith.constant dense<0.000000e+00> : vector<64x128xf32>
    %44 = tpu.matmul %42, %43, %cst_44 {dimension_numbers = #tpu.dot_dimension_numbers<[1], [0], [0], [1], [0, 0, 1, 1], [], []>} : vector<64x128xbf16>, vector<128x128xbf16>, vector<64x128xf32> -> vector<64x128xf32>
    %45 = arith.addf %40, %44 : vector<64x128xf32>
    %c0_45 = arith.constant 0 : index
    %c1_46 = arith.constant 1 : index
    %c0_47 = arith.constant 0 : index
    %46 = vector.load %arg12[%c0_45, %c1_46, %c0_47] : memref<10x10x128xbf16, #tpu.memory_space<vmem>>, vector<8x8x128xbf16>
    %47 = vector.shape_cast %46 : vector<8x8x128xbf16> to vector<64x128xbf16>
    %c128 = arith.constant 128 : index
    %c0_48 = arith.constant 0 : index
    %48 = vector.load %arg4[%c128, %c0_48] : memref<1152x128xbf16, #tpu.memory_space<vmem>>, vector<128x128xbf16>
    %cst_49 = arith.constant dense<0.000000e+00> : vector<64x128xf32>
    %49 = tpu.matmul %47, %48, %cst_49 {dimension_numbers = #tpu.dot_dimension_numbers<[1], [0], [0], [1], [0, 0, 1, 1], [], []>} : vector<64x128xbf16>, vector<128x128xbf16>, vector<64x128xf32> -> vector<64x128xf32>
    %50 = arith.addf %45, %49 : vector<64x128xf32>
    %c0_50 = arith.constant 0 : index
    %c2 = arith.constant 2 : index
    %c0_51 = arith.constant 0 : index
    %51 = vector.load %arg12[%c0_50, %c2, %c0_51] : memref<10x10x128xbf16, #tpu.memory_space<vmem>>, vector<8x8x128xbf16>
    %52 = vector.shape_cast %51 : vector<8x8x128xbf16> to vector<64x128xbf16>
    %c256_52 = arith.constant 256 : index
    %c0_53 = arith.constant 0 : index
    %53 = vector.load %arg4[%c256_52, %c0_53] : memref<1152x128xbf16, #tpu.memory_space<vmem>>, vector<128x128xbf16>
    %cst_54 = arith.constant dense<0.000000e+00> : vector<64x128xf32>
    %54 = tpu.matmul %52, %53, %cst_54 {dimension_numbers = #tpu.dot_dimension_numbers<[1], [0], [0], [1], [0, 0, 1, 1], [], []>} : vector<64x128xbf16>, vector<128x128xbf16>, vector<64x128xf32> -> vector<64x128xf32>
    %55 = arith.addf %50, %54 : vector<64x128xf32>
    %c1_55 = arith.constant 1 : index
    %c0_56 = arith.constant 0 : index
    %c0_57 = arith.constant 0 : index
    %56 = vector.load %arg12[%c1_55, %c0_56, %c0_57] : memref<10x10x128xbf16, #tpu.memory_space<vmem>>, vector<8x8x128xbf16>
    %57 = vector.shape_cast %56 : vector<8x8x128xbf16> to vector<64x128xbf16>
    %c384 = arith.constant 384 : index
    %c0_58 = arith.constant 0 : index
    %58 = vector.load %arg4[%c384, %c0_58] : memref<1152x128xbf16, #tpu.memory_space<vmem>>, vector<128x128xbf16>
    %cst_59 = arith.constant dense<0.000000e+00> : vector<64x128xf32>
    %59 = tpu.matmul %57, %58, %cst_59 {dimension_numbers = #tpu.dot_dimension_numbers<[1], [0], [0], [1], [0, 0, 1, 1], [], []>} : vector<64x128xbf16>, vector<128x128xbf16>, vector<64x128xf32> -> vector<64x128xf32>
    %60 = arith.addf %55, %59 : vector<64x128xf32>
    %c1_60 = arith.constant 1 : index
    %c1_61 = arith.constant 1 : index
    %c0_62 = arith.constant 0 : index
    %61 = vector.load %arg12[%c1_60, %c1_61, %c0_62] : memref<10x10x128xbf16, #tpu.memory_space<vmem>>, vector<8x8x128xbf16>
    %62 = vector.shape_cast %61 : vector<8x8x128xbf16> to vector<64x128xbf16>
    %c512_63 = arith.constant 512 : index
    %c0_64 = arith.constant 0 : index
    %63 = vector.load %arg4[%c512_63, %c0_64] : memref<1152x128xbf16, #tpu.memory_space<vmem>>, vector<128x128xbf16>
    %cst_65 = arith.constant dense<0.000000e+00> : vector<64x128xf32>
    %64 = tpu.matmul %62, %63, %cst_65 {dimension_numbers = #tpu.dot_dimension_numbers<[1], [0], [0], [1], [0, 0, 1, 1], [], []>} : vector<64x128xbf16>, vector<128x128xbf16>, vector<64x128xf32> -> vector<64x128xf32>
    %65 = arith.addf %60, %64 : vector<64x128xf32>
    %c1_66 = arith.constant 1 : index
    %c2_67 = arith.constant 2 : index
    %c0_68 = arith.constant 0 : index
    %66 = vector.load %arg12[%c1_66, %c2_67, %c0_68] : memref<10x10x128xbf16, #tpu.memory_space<vmem>>, vector<8x8x128xbf16>
    %67 = vector.shape_cast %66 : vector<8x8x128xbf16> to vector<64x128xbf16>
    %c640 = arith.constant 640 : index
    %c0_69 = arith.constant 0 : index
    %68 = vector.load %arg4[%c640, %c0_69] : memref<1152x128xbf16, #tpu.memory_space<vmem>>, vector<128x128xbf16>
    %cst_70 = arith.constant dense<0.000000e+00> : vector<64x128xf32>
    %69 = tpu.matmul %67, %68, %cst_70 {dimension_numbers = #tpu.dot_dimension_numbers<[1], [0], [0], [1], [0, 0, 1, 1], [], []>} : vector<64x128xbf16>, vector<128x128xbf16>, vector<64x128xf32> -> vector<64x128xf32>
    %70 = arith.addf %65, %69 : vector<64x128xf32>
    %c2_71 = arith.constant 2 : index
    %c0_72 = arith.constant 0 : index
    %c0_73 = arith.constant 0 : index
    %71 = vector.load %arg12[%c2_71, %c0_72, %c0_73] : memref<10x10x128xbf16, #tpu.memory_space<vmem>>, vector<8x8x128xbf16>
    %72 = vector.shape_cast %71 : vector<8x8x128xbf16> to vector<64x128xbf16>
    %c768_74 = arith.constant 768 : index
    %c0_75 = arith.constant 0 : index
    %73 = vector.load %arg4[%c768_74, %c0_75] : memref<1152x128xbf16, #tpu.memory_space<vmem>>, vector<128x128xbf16>
    %cst_76 = arith.constant dense<0.000000e+00> : vector<64x128xf32>
    %74 = tpu.matmul %72, %73, %cst_76 {dimension_numbers = #tpu.dot_dimension_numbers<[1], [0], [0], [1], [0, 0, 1, 1], [], []>} : vector<64x128xbf16>, vector<128x128xbf16>, vector<64x128xf32> -> vector<64x128xf32>
    %75 = arith.addf %70, %74 : vector<64x128xf32>
    %c2_77 = arith.constant 2 : index
    %c1_78 = arith.constant 1 : index
    %c0_79 = arith.constant 0 : index
    %76 = vector.load %arg12[%c2_77, %c1_78, %c0_79] : memref<10x10x128xbf16, #tpu.memory_space<vmem>>, vector<8x8x128xbf16>
    %77 = vector.shape_cast %76 : vector<8x8x128xbf16> to vector<64x128xbf16>
    %c896 = arith.constant 896 : index
    %c0_80 = arith.constant 0 : index
    %78 = vector.load %arg4[%c896, %c0_80] : memref<1152x128xbf16, #tpu.memory_space<vmem>>, vector<128x128xbf16>
    %cst_81 = arith.constant dense<0.000000e+00> : vector<64x128xf32>
    %79 = tpu.matmul %77, %78, %cst_81 {dimension_numbers = #tpu.dot_dimension_numbers<[1], [0], [0], [1], [0, 0, 1, 1], [], []>} : vector<64x128xbf16>, vector<128x128xbf16>, vector<64x128xf32> -> vector<64x128xf32>
    %80 = arith.addf %75, %79 : vector<64x128xf32>
    %c2_82 = arith.constant 2 : index
    %c2_83 = arith.constant 2 : index
    %c0_84 = arith.constant 0 : index
    %81 = vector.load %arg12[%c2_82, %c2_83, %c0_84] : memref<10x10x128xbf16, #tpu.memory_space<vmem>>, vector<8x8x128xbf16>
    %82 = vector.shape_cast %81 : vector<8x8x128xbf16> to vector<64x128xbf16>
    %c1024 = arith.constant 1024 : index
    %c0_85 = arith.constant 0 : index
    %83 = vector.load %arg4[%c1024, %c0_85] : memref<1152x128xbf16, #tpu.memory_space<vmem>>, vector<128x128xbf16>
    %cst_86 = arith.constant dense<0.000000e+00> : vector<64x128xf32>
    %84 = tpu.matmul %82, %83, %cst_86 {dimension_numbers = #tpu.dot_dimension_numbers<[1], [0], [0], [1], [0, 0, 1, 1], [], []>} : vector<64x128xbf16>, vector<128x128xbf16>, vector<64x128xf32> -> vector<64x128xf32>
    %85 = arith.addf %80, %84 : vector<64x128xf32>
    %c0_87 = arith.constant 0 : index
    %c0_88 = arith.constant 0 : index
    %86 = vector.load %arg5[%c0_87, %c0_88] : memref<1x128xf32, #tpu.memory_space<vmem>>, vector<1x128xf32>
    %87 = vector.broadcast %86 : vector<1x128xf32> to vector<64x128xf32>
    %88 = arith.addf %85, %87 : vector<64x128xf32>
    %cst_89 = arith.constant 0.000000e+00 : f32
    %89 = vector.broadcast %cst_89 : f32 to vector<64x128xf32>
    %90 = arith.cmpf oge, %88, %89 : vector<64x128xf32>
    %cst_90 = arith.constant 5.000000e-02 : f32
    %91 = vector.broadcast %cst_90 : f32 to vector<64x128xf32>
    %92 = arith.mulf %91, %88 : vector<64x128xf32>
    %93 = arith.select %90, %88, %92 : vector<64x128xi1>, vector<64x128xf32>
    %94 = arith.truncf %93 : vector<64x128xf32> to vector<64x128xbf16>
    %95 = vector.shape_cast %94 : vector<64x128xbf16> to vector<8x8x128xbf16>
    %c1_91 = arith.constant 1 : index
    %c1_92 = arith.constant 1 : index
    %c0_93 = arith.constant 0 : index
    %96 = vector.load %arg12[%c1_91, %c1_92, %c0_93] : memref<10x10x128xbf16, #tpu.memory_space<vmem>>, vector<8x8x128xbf16>
    tpu.vector_store %arg12[%c1_91, %c1_92, %c0_93], %95 {strides = array<i32>} : memref<10x10x128xbf16, #tpu.memory_space<vmem>>, vector<8x8x128xbf16>,
    %cst_94 = arith.constant 0.000000e+00 : f32
    %97 = vector.broadcast %cst_94 : f32 to vector<64x128xf32>
    %c0_95 = arith.constant 0 : index
    %c0_96 = arith.constant 0 : index
    %c0_97 = arith.constant 0 : index
    %98 = vector.load %arg12[%c0_95, %c0_96, %c0_97] : memref<10x10x128xbf16, #tpu.memory_space<vmem>>, vector<8x8x128xbf16>
    %99 = vector.shape_cast %98 : vector<8x8x128xbf16> to vector<64x128xbf16>
    %c0_98 = arith.constant 0 : index
    %c0_99 = arith.constant 0 : index
    %100 = vector.load %arg6[%c0_98, %c0_99] : memref<1152x128xbf16, #tpu.memory_space<vmem>>, vector<128x128xbf16>
    %cst_100 = arith.constant dense<0.000000e+00> : vector<64x128xf32>
    %101 = tpu.matmul %99, %100, %cst_100 {dimension_numbers = #tpu.dot_dimension_numbers<[1], [0], [0], [1], [0, 0, 1, 1], [], []>} : vector<64x128xbf16>, vector<128x128xbf16>, vector<64x128xf32> -> vector<64x128xf32>
    %102 = arith.addf %97, %101 : vector<64x128xf32>
    %c0_101 = arith.constant 0 : index
    %c1_102 = arith.constant 1 : index
    %c0_103 = arith.constant 0 : index
    %103 = vector.load %arg12[%c0_101, %c1_102, %c0_103] : memref<10x10x128xbf16, #tpu.memory_space<vmem>>, vector<8x8x128xbf16>
    %104 = vector.shape_cast %103 : vector<8x8x128xbf16> to vector<64x128xbf16>
    %c128_104 = arith.constant 128 : index
    %c0_105 = arith.constant 0 : index
    %105 = vector.load %arg6[%c128_104, %c0_105] : memref<1152x128xbf16, #tpu.memory_space<vmem>>, vector<128x128xbf16>
    %cst_106 = arith.constant dense<0.000000e+00> : vector<64x128xf32>
    %106 = tpu.matmul %104, %105, %cst_106 {dimension_numbers = #tpu.dot_dimension_numbers<[1], [0], [0], [1], [0, 0, 1, 1], [], []>} : vector<64x128xbf16>, vector<128x128xbf16>, vector<64x128xf32> -> vector<64x128xf32>
    %107 = arith.addf %102, %106 : vector<64x128xf32>
    %c0_107 = arith.constant 0 : index
    %c2_108 = arith.constant 2 : index
    %c0_109 = arith.constant 0 : index
    %108 = vector.load %arg12[%c0_107, %c2_108, %c0_109] : memref<10x10x128xbf16, #tpu.memory_space<vmem>>, vector<8x8x128xbf16>
    %109 = vector.shape_cast %108 : vector<8x8x128xbf16> to vector<64x128xbf16>
    %c256_110 = arith.constant 256 : index
    %c0_111 = arith.constant 0 : index
    %110 = vector.load %arg6[%c256_110, %c0_111] : memref<1152x128xbf16, #tpu.memory_space<vmem>>, vector<128x128xbf16>
    %cst_112 = arith.constant dense<0.000000e+00> : vector<64x128xf32>
    %111 = tpu.matmul %109, %110, %cst_112 {dimension_numbers = #tpu.dot_dimension_numbers<[1], [0], [0], [1], [0, 0, 1, 1], [], []>} : vector<64x128xbf16>, vector<128x128xbf16>, vector<64x128xf32> -> vector<64x128xf32>
    %112 = arith.addf %107, %111 : vector<64x128xf32>
    %c1_113 = arith.constant 1 : index
    %c0_114 = arith.constant 0 : index
    %c0_115 = arith.constant 0 : index
    %113 = vector.load %arg12[%c1_113, %c0_114, %c0_115] : memref<10x10x128xbf16, #tpu.memory_space<vmem>>, vector<8x8x128xbf16>
    %114 = vector.shape_cast %113 : vector<8x8x128xbf16> to vector<64x128xbf16>
    %c384_116 = arith.constant 384 : index
    %c0_117 = arith.constant 0 : index
    %115 = vector.load %arg6[%c384_116, %c0_117] : memref<1152x128xbf16, #tpu.memory_space<vmem>>, vector<128x128xbf16>
    %cst_118 = arith.constant dense<0.000000e+00> : vector<64x128xf32>
    %116 = tpu.matmul %114, %115, %cst_118 {dimension_numbers = #tpu.dot_dimension_numbers<[1], [0], [0], [1], [0, 0, 1, 1], [], []>} : vector<64x128xbf16>, vector<128x128xbf16>, vector<64x128xf32> -> vector<64x128xf32>
    %117 = arith.addf %112, %116 : vector<64x128xf32>
    %c1_119 = arith.constant 1 : index
    %c1_120 = arith.constant 1 : index
    %c0_121 = arith.constant 0 : index
    %118 = vector.load %arg12[%c1_119, %c1_120, %c0_121] : memref<10x10x128xbf16, #tpu.memory_space<vmem>>, vector<8x8x128xbf16>
    %119 = vector.shape_cast %118 : vector<8x8x128xbf16> to vector<64x128xbf16>
    %c512_122 = arith.constant 512 : index
    %c0_123 = arith.constant 0 : index
    %120 = vector.load %arg6[%c512_122, %c0_123] : memref<1152x128xbf16, #tpu.memory_space<vmem>>, vector<128x128xbf16>
    %cst_124 = arith.constant dense<0.000000e+00> : vector<64x128xf32>
    %121 = tpu.matmul %119, %120, %cst_124 {dimension_numbers = #tpu.dot_dimension_numbers<[1], [0], [0], [1], [0, 0, 1, 1], [], []>} : vector<64x128xbf16>, vector<128x128xbf16>, vector<64x128xf32> -> vector<64x128xf32>
    %122 = arith.addf %117, %121 : vector<64x128xf32>
    %c1_125 = arith.constant 1 : index
    %c2_126 = arith.constant 2 : index
    %c0_127 = arith.constant 0 : index
    %123 = vector.load %arg12[%c1_125, %c2_126, %c0_127] : memref<10x10x128xbf16, #tpu.memory_space<vmem>>, vector<8x8x128xbf16>
    %124 = vector.shape_cast %123 : vector<8x8x128xbf16> to vector<64x128xbf16>
    %c640_128 = arith.constant 640 : index
    %c0_129 = arith.constant 0 : index
    %125 = vector.load %arg6[%c640_128, %c0_129] : memref<1152x128xbf16, #tpu.memory_space<vmem>>, vector<128x128xbf16>
    %cst_130 = arith.constant dense<0.000000e+00> : vector<64x128xf32>
    %126 = tpu.matmul %124, %125, %cst_130 {dimension_numbers = #tpu.dot_dimension_numbers<[1], [0], [0], [1], [0, 0, 1, 1], [], []>} : vector<64x128xbf16>, vector<128x128xbf16>, vector<64x128xf32> -> vector<64x128xf32>
    %127 = arith.addf %122, %126 : vector<64x128xf32>
    %c2_131 = arith.constant 2 : index
    %c0_132 = arith.constant 0 : index
    %c0_133 = arith.constant 0 : index
    %128 = vector.load %arg12[%c2_131, %c0_132, %c0_133] : memref<10x10x128xbf16, #tpu.memory_space<vmem>>, vector<8x8x128xbf16>
    %129 = vector.shape_cast %128 : vector<8x8x128xbf16> to vector<64x128xbf16>
    %c768_134 = arith.constant 768 : index
    %c0_135 = arith.constant 0 : index
    %130 = vector.load %arg6[%c768_134, %c0_135] : memref<1152x128xbf16, #tpu.memory_space<vmem>>, vector<128x128xbf16>
    %cst_136 = arith.constant dense<0.000000e+00> : vector<64x128xf32>
    %131 = tpu.matmul %129, %130, %cst_136 {dimension_numbers = #tpu.dot_dimension_numbers<[1], [0], [0], [1], [0, 0, 1, 1], [], []>} : vector<64x128xbf16>, vector<128x128xbf16>, vector<64x128xf32> -> vector<64x128xf32>
    %132 = arith.addf %127, %131 : vector<64x128xf32>
    %c2_137 = arith.constant 2 : index
    %c1_138 = arith.constant 1 : index
    %c0_139 = arith.constant 0 : index
    %133 = vector.load %arg12[%c2_137, %c1_138, %c0_139] : memref<10x10x128xbf16, #tpu.memory_space<vmem>>, vector<8x8x128xbf16>
    %134 = vector.shape_cast %133 : vector<8x8x128xbf16> to vector<64x128xbf16>
    %c896_140 = arith.constant 896 : index
    %c0_141 = arith.constant 0 : index
    %135 = vector.load %arg6[%c896_140, %c0_141] : memref<1152x128xbf16, #tpu.memory_space<vmem>>, vector<128x128xbf16>
    %cst_142 = arith.constant dense<0.000000e+00> : vector<64x128xf32>
    %136 = tpu.matmul %134, %135, %cst_142 {dimension_numbers = #tpu.dot_dimension_numbers<[1], [0], [0], [1], [0, 0, 1, 1], [], []>} : vector<64x128xbf16>, vector<128x128xbf16>, vector<64x128xf32> -> vector<64x128xf32>
    %137 = arith.addf %132, %136 : vector<64x128xf32>
    %c2_143 = arith.constant 2 : index
    %c2_144 = arith.constant 2 : index
    %c0_145 = arith.constant 0 : index
    %138 = vector.load %arg12[%c2_143, %c2_144, %c0_145] : memref<10x10x128xbf16, #tpu.memory_space<vmem>>, vector<8x8x128xbf16>
    %139 = vector.shape_cast %138 : vector<8x8x128xbf16> to vector<64x128xbf16>
    %c1024_146 = arith.constant 1024 : index
    %c0_147 = arith.constant 0 : index
    %140 = vector.load %arg6[%c1024_146, %c0_147] : memref<1152x128xbf16, #tpu.memory_space<vmem>>, vector<128x128xbf16>
    %cst_148 = arith.constant dense<0.000000e+00> : vector<64x128xf32>
    %141 = tpu.matmul %139, %140, %cst_148 {dimension_numbers = #tpu.dot_dimension_numbers<[1], [0], [0], [1], [0, 0, 1, 1], [], []>} : vector<64x128xbf16>, vector<128x128xbf16>, vector<64x128xf32> -> vector<64x128xf32>
    %142 = arith.addf %137, %141 : vector<64x128xf32>
    %c0_149 = arith.constant 0 : index
    %c0_150 = arith.constant 0 : index
    %143 = vector.load %arg7[%c0_149, %c0_150] : memref<1x128xf32, #tpu.memory_space<vmem>>, vector<1x128xf32>
    %144 = vector.broadcast %143 : vector<1x128xf32> to vector<64x128xf32>
    %145 = arith.addf %142, %144 : vector<64x128xf32>
    %cst_151 = arith.constant 0.000000e+00 : f32
    %146 = vector.broadcast %cst_151 : f32 to vector<64x128xf32>
    %147 = arith.cmpf oge, %145, %146 : vector<64x128xf32>
    %cst_152 = arith.constant 5.000000e-02 : f32
    %148 = vector.broadcast %cst_152 : f32 to vector<64x128xf32>
    %149 = arith.mulf %148, %145 : vector<64x128xf32>
    %150 = arith.select %147, %145, %149 : vector<64x128xi1>, vector<64x128xf32>
    %151 = arith.truncf %150 : vector<64x128xf32> to vector<64x128xbf16>
    %152 = vector.shape_cast %151 : vector<64x128xbf16> to vector<8x8x128xbf16>
    %c1_153 = arith.constant 1 : index
    %c1_154 = arith.constant 1 : index
    %c0_155 = arith.constant 0 : index
    %153 = vector.load %arg12[%c1_153, %c1_154, %c0_155] : memref<10x10x128xbf16, #tpu.memory_space<vmem>>, vector<8x8x128xbf16>
    tpu.vector_store %arg12[%c1_153, %c1_154, %c0_155], %152 {strides = array<i32>} : memref<10x10x128xbf16, #tpu.memory_space<vmem>>, vector<8x8x128xbf16>,
    %cst_156 = arith.constant 0.000000e+00 : f32
    %154 = vector.broadcast %cst_156 : f32 to vector<64x256xf32>
    %c0_157 = arith.constant 0 : index
    %c0_158 = arith.constant 0 : index
    %c0_159 = arith.constant 0 : index
    %155 = vector.load %arg12[%c0_157, %c0_158, %c0_159] : memref<10x10x128xbf16, #tpu.memory_space<vmem>>, vector<8x8x128xbf16>
    %156 = vector.shape_cast %155 : vector<8x8x128xbf16> to vector<64x128xbf16>
    %c0_160 = arith.constant 0 : index
    %c0_161 = arith.constant 0 : index
    %157 = vector.load %arg8[%c0_160, %c0_161] : memref<1152x256xbf16, #tpu.memory_space<vmem>>, vector<128x256xbf16>
    %cst_162 = arith.constant dense<0.000000e+00> : vector<64x256xf32>
    %158 = tpu.matmul %156, %157, %cst_162 {dimension_numbers = #tpu.dot_dimension_numbers<[1], [0], [0], [1], [0, 0, 1, 1], [], []>} : vector<64x128xbf16>, vector<128x256xbf16>, vector<64x256xf32> -> vector<64x256xf32>
    %159 = arith.addf %154, %158 : vector<64x256xf32>
    %c0_163 = arith.constant 0 : index
    %c1_164 = arith.constant 1 : index
    %c0_165 = arith.constant 0 : index
    %160 = vector.load %arg12[%c0_163, %c1_164, %c0_165] : memref<10x10x128xbf16, #tpu.memory_space<vmem>>, vector<8x8x128xbf16>
    %161 = vector.shape_cast %160 : vector<8x8x128xbf16> to vector<64x128xbf16>
    %c128_166 = arith.constant 128 : index
    %c0_167 = arith.constant 0 : index
    %162 = vector.load %arg8[%c128_166, %c0_167] : memref<1152x256xbf16, #tpu.memory_space<vmem>>, vector<128x256xbf16>
    %cst_168 = arith.constant dense<0.000000e+00> : vector<64x256xf32>
    %163 = tpu.matmul %161, %162, %cst_168 {dimension_numbers = #tpu.dot_dimension_numbers<[1], [0], [0], [1], [0, 0, 1, 1], [], []>} : vector<64x128xbf16>, vector<128x256xbf16>, vector<64x256xf32> -> vector<64x256xf32>
    %164 = arith.addf %159, %163 : vector<64x256xf32>
    %c0_169 = arith.constant 0 : index
    %c2_170 = arith.constant 2 : index
    %c0_171 = arith.constant 0 : index
    %165 = vector.load %arg12[%c0_169, %c2_170, %c0_171] : memref<10x10x128xbf16, #tpu.memory_space<vmem>>, vector<8x8x128xbf16>
    %166 = vector.shape_cast %165 : vector<8x8x128xbf16> to vector<64x128xbf16>
    %c256_172 = arith.constant 256 : index
    %c0_173 = arith.constant 0 : index
    %167 = vector.load %arg8[%c256_172, %c0_173] : memref<1152x256xbf16, #tpu.memory_space<vmem>>, vector<128x256xbf16>
    %cst_174 = arith.constant dense<0.000000e+00> : vector<64x256xf32>
    %168 = tpu.matmul %166, %167, %cst_174 {dimension_numbers = #tpu.dot_dimension_numbers<[1], [0], [0], [1], [0, 0, 1, 1], [], []>} : vector<64x128xbf16>, vector<128x256xbf16>, vector<64x256xf32> -> vector<64x256xf32>
    %169 = arith.addf %164, %168 : vector<64x256xf32>
    %c1_175 = arith.constant 1 : index
    %c0_176 = arith.constant 0 : index
    %c0_177 = arith.constant 0 : index
    %170 = vector.load %arg12[%c1_175, %c0_176, %c0_177] : memref<10x10x128xbf16, #tpu.memory_space<vmem>>, vector<8x8x128xbf16>
    %171 = vector.shape_cast %170 : vector<8x8x128xbf16> to vector<64x128xbf16>
    %c384_178 = arith.constant 384 : index
    %c0_179 = arith.constant 0 : index
    %172 = vector.load %arg8[%c384_178, %c0_179] : memref<1152x256xbf16, #tpu.memory_space<vmem>>, vector<128x256xbf16>
    %cst_180 = arith.constant dense<0.000000e+00> : vector<64x256xf32>
    %173 = tpu.matmul %171, %172, %cst_180 {dimension_numbers = #tpu.dot_dimension_numbers<[1], [0], [0], [1], [0, 0, 1, 1], [], []>} : vector<64x128xbf16>, vector<128x256xbf16>, vector<64x256xf32> -> vector<64x256xf32>
    %174 = arith.addf %169, %173 : vector<64x256xf32>
    %c1_181 = arith.constant 1 : index
    %c1_182 = arith.constant 1 : index
    %c0_183 = arith.constant 0 : index
    %175 = vector.load %arg12[%c1_181, %c1_182, %c0_183] : memref<10x10x128xbf16, #tpu.memory_space<vmem>>, vector<8x8x128xbf16>
    %176 = vector.shape_cast %175 : vector<8x8x128xbf16> to vector<64x128xbf16>
    %c512_184 = arith.constant 512 : index
    %c0_185 = arith.constant 0 : index
    %177 = vector.load %arg8[%c512_184, %c0_185] : memref<1152x256xbf16, #tpu.memory_space<vmem>>, vector<128x256xbf16>
    %cst_186 = arith.constant dense<0.000000e+00> : vector<64x256xf32>
    %178 = tpu.matmul %176, %177, %cst_186 {dimension_numbers = #tpu.dot_dimension_numbers<[1], [0], [0], [1], [0, 0, 1, 1], [], []>} : vector<64x128xbf16>, vector<128x256xbf16>, vector<64x256xf32> -> vector<64x256xf32>
    %179 = arith.addf %174, %178 : vector<64x256xf32>
    %c1_187 = arith.constant 1 : index
    %c2_188 = arith.constant 2 : index
    %c0_189 = arith.constant 0 : index
    %180 = vector.load %arg12[%c1_187, %c2_188, %c0_189] : memref<10x10x128xbf16, #tpu.memory_space<vmem>>, vector<8x8x128xbf16>
    %181 = vector.shape_cast %180 : vector<8x8x128xbf16> to vector<64x128xbf16>
    %c640_190 = arith.constant 640 : index
    %c0_191 = arith.constant 0 : index
    %182 = vector.load %arg8[%c640_190, %c0_191] : memref<1152x256xbf16, #tpu.memory_space<vmem>>, vector<128x256xbf16>
    %cst_192 = arith.constant dense<0.000000e+00> : vector<64x256xf32>
    %183 = tpu.matmul %181, %182, %cst_192 {dimension_numbers = #tpu.dot_dimension_numbers<[1], [0], [0], [1], [0, 0, 1, 1], [], []>} : vector<64x128xbf16>, vector<128x256xbf16>, vector<64x256xf32> -> vector<64x256xf32>
    %184 = arith.addf %179, %183 : vector<64x256xf32>
    %c2_193 = arith.constant 2 : index
    %c0_194 = arith.constant 0 : index
    %c0_195 = arith.constant 0 : index
    %185 = vector.load %arg12[%c2_193, %c0_194, %c0_195] : memref<10x10x128xbf16, #tpu.memory_space<vmem>>, vector<8x8x128xbf16>
    %186 = vector.shape_cast %185 : vector<8x8x128xbf16> to vector<64x128xbf16>
    %c768_196 = arith.constant 768 : index
    %c0_197 = arith.constant 0 : index
    %187 = vector.load %arg8[%c768_196, %c0_197] : memref<1152x256xbf16, #tpu.memory_space<vmem>>, vector<128x256xbf16>
    %cst_198 = arith.constant dense<0.000000e+00> : vector<64x256xf32>
    %188 = tpu.matmul %186, %187, %cst_198 {dimension_numbers = #tpu.dot_dimension_numbers<[1], [0], [0], [1], [0, 0, 1, 1], [], []>} : vector<64x128xbf16>, vector<128x256xbf16>, vector<64x256xf32> -> vector<64x256xf32>
    %189 = arith.addf %184, %188 : vector<64x256xf32>
    %c2_199 = arith.constant 2 : index
    %c1_200 = arith.constant 1 : index
    %c0_201 = arith.constant 0 : index
    %190 = vector.load %arg12[%c2_199, %c1_200, %c0_201] : memref<10x10x128xbf16, #tpu.memory_space<vmem>>, vector<8x8x128xbf16>
    %191 = vector.shape_cast %190 : vector<8x8x128xbf16> to vector<64x128xbf16>
    %c896_202 = arith.constant 896 : index
    %c0_203 = arith.constant 0 : index
    %192 = vector.load %arg8[%c896_202, %c0_203] : memref<1152x256xbf16, #tpu.memory_space<vmem>>, vector<128x256xbf16>
    %cst_204 = arith.constant dense<0.000000e+00> : vector<64x256xf32>
    %193 = tpu.matmul %191, %192, %cst_204 {dimension_numbers = #tpu.dot_dimension_numbers<[1], [0], [0], [1], [0, 0, 1, 1], [], []>} : vector<64x128xbf16>, vector<128x256xbf16>, vector<64x256xf32> -> vector<64x256xf32>
    %194 = arith.addf %189, %193 : vector<64x256xf32>
    %c2_205 = arith.constant 2 : index
    %c2_206 = arith.constant 2 : index
    %c0_207 = arith.constant 0 : index
    %195 = vector.load %arg12[%c2_205, %c2_206, %c0_207] : memref<10x10x128xbf16, #tpu.memory_space<vmem>>, vector<8x8x128xbf16>
    %196 = vector.shape_cast %195 : vector<8x8x128xbf16> to vector<64x128xbf16>
    %c1024_208 = arith.constant 1024 : index
    %c0_209 = arith.constant 0 : index
    %197 = vector.load %arg8[%c1024_208, %c0_209] : memref<1152x256xbf16, #tpu.memory_space<vmem>>, vector<128x256xbf16>
    %cst_210 = arith.constant dense<0.000000e+00> : vector<64x256xf32>
    %198 = tpu.matmul %196, %197, %cst_210 {dimension_numbers = #tpu.dot_dimension_numbers<[1], [0], [0], [1], [0, 0, 1, 1], [], []>} : vector<64x128xbf16>, vector<128x256xbf16>, vector<64x256xf32> -> vector<64x256xf32>
    %199 = arith.addf %194, %198 : vector<64x256xf32>
    %c0_211 = arith.constant 0 : index
    %c0_212 = arith.constant 0 : index
    %200 = vector.load %arg9[%c0_211, %c0_212] : memref<1x256xf32, #tpu.memory_space<vmem>>, vector<1x256xf32>
    %201 = vector.broadcast %200 : vector<1x256xf32> to vector<64x256xf32>
    %202 = arith.addf %199, %201 : vector<64x256xf32>
    %cst_213 = arith.constant 0.000000e+00 : f32
    %203 = vector.broadcast %cst_213 : f32 to vector<64x256xf32>
    %204 = arith.cmpf oge, %202, %203 : vector<64x256xf32>
    %cst_214 = arith.constant 5.000000e-02 : f32
    %205 = vector.broadcast %cst_214 : f32 to vector<64x256xf32>
    %206 = arith.mulf %205, %202 : vector<64x256xf32>
    %207 = arith.select %204, %202, %206 : vector<64x256xi1>, vector<64x256xf32>
    %208 = arith.truncf %207 : vector<64x256xf32> to vector<64x256xbf16>
    %209 = vector.shape_cast %208 : vector<64x256xbf16> to vector<8x8x256xbf16>
    %c1_215 = arith.constant 1 : index
    %c1_216 = arith.constant 1 : index
    %c0_217 = arith.constant 0 : index
    %210 = vector.load %arg13[%c1_215, %c1_216, %c0_217] : memref<10x10x256xbf16, #tpu.memory_space<vmem>>, vector<8x8x256xbf16>
    tpu.vector_store %arg13[%c1_215, %c1_216, %c0_217], %209 {strides = array<i32>} : memref<10x10x256xbf16, #tpu.memory_space<vmem>>, vector<8x8x256xbf16>,
    %cst_218 = arith.constant 0.000000e+00 : f32
    %211 = vector.broadcast %cst_218 : f32 to vector<64x128xf32>
    %c0_219 = arith.constant 0 : index
    %c0_220 = arith.constant 0 : index
    %c0_221 = arith.constant 0 : index
    %212 = vector.load %arg13[%c0_219, %c0_220, %c0_221] : memref<10x10x256xbf16, #tpu.memory_space<vmem>>, vector<8x8x256xbf16>
    %213 = vector.shape_cast %212 : vector<8x8x256xbf16> to vector<64x256xbf16>
    %c0_222 = arith.constant 0 : index
    %c0_223 = arith.constant 0 : index
    %214 = vector.load %arg10[%c0_222, %c0_223] : memref<2304x128xbf16, #tpu.memory_space<vmem>>, vector<256x128xbf16>
    %cst_224 = arith.constant dense<0.000000e+00> : vector<64x128xf32>
    %215 = tpu.matmul %213, %214, %cst_224 {dimension_numbers = #tpu.dot_dimension_numbers<[1], [0], [0], [1], [0, 0, 1, 1], [], []>} : vector<64x256xbf16>, vector<256x128xbf16>, vector<64x128xf32> -> vector<64x128xf32>
    %216 = arith.addf %211, %215 : vector<64x128xf32>
    %c0_225 = arith.constant 0 : index
    %c1_226 = arith.constant 1 : index
    %c0_227 = arith.constant 0 : index
    %217 = vector.load %arg13[%c0_225, %c1_226, %c0_227] : memref<10x10x256xbf16, #tpu.memory_space<vmem>>, vector<8x8x256xbf16>
    %218 = vector.shape_cast %217 : vector<8x8x256xbf16> to vector<64x256xbf16>
    %c256_228 = arith.constant 256 : index
    %c0_229 = arith.constant 0 : index
    %219 = vector.load %arg10[%c256_228, %c0_229] : memref<2304x128xbf16, #tpu.memory_space<vmem>>, vector<256x128xbf16>
    %cst_230 = arith.constant dense<0.000000e+00> : vector<64x128xf32>
    %220 = tpu.matmul %218, %219, %cst_230 {dimension_numbers = #tpu.dot_dimension_numbers<[1], [0], [0], [1], [0, 0, 1, 1], [], []>} : vector<64x256xbf16>, vector<256x128xbf16>, vector<64x128xf32> -> vector<64x128xf32>
    %221 = arith.addf %216, %220 : vector<64x128xf32>
    %c0_231 = arith.constant 0 : index
    %c2_232 = arith.constant 2 : index
    %c0_233 = arith.constant 0 : index
    %222 = vector.load %arg13[%c0_231, %c2_232, %c0_233] : memref<10x10x256xbf16, #tpu.memory_space<vmem>>, vector<8x8x256xbf16>
    %223 = vector.shape_cast %222 : vector<8x8x256xbf16> to vector<64x256xbf16>
    %c512_234 = arith.constant 512 : index
    %c0_235 = arith.constant 0 : index
    %224 = vector.load %arg10[%c512_234, %c0_235] : memref<2304x128xbf16, #tpu.memory_space<vmem>>, vector<256x128xbf16>
    %cst_236 = arith.constant dense<0.000000e+00> : vector<64x128xf32>
    %225 = tpu.matmul %223, %224, %cst_236 {dimension_numbers = #tpu.dot_dimension_numbers<[1], [0], [0], [1], [0, 0, 1, 1], [], []>} : vector<64x256xbf16>, vector<256x128xbf16>, vector<64x128xf32> -> vector<64x128xf32>
    %226 = arith.addf %221, %225 : vector<64x128xf32>
    %c1_237 = arith.constant 1 : index
    %c0_238 = arith.constant 0 : index
    %c0_239 = arith.constant 0 : index
    %227 = vector.load %arg13[%c1_237, %c0_238, %c0_239] : memref<10x10x256xbf16, #tpu.memory_space<vmem>>, vector<8x8x256xbf16>
    %228 = vector.shape_cast %227 : vector<8x8x256xbf16> to vector<64x256xbf16>
    %c768_240 = arith.constant 768 : index
    %c0_241 = arith.constant 0 : index
    %229 = vector.load %arg10[%c768_240, %c0_241] : memref<2304x128xbf16, #tpu.memory_space<vmem>>, vector<256x128xbf16>
    %cst_242 = arith.constant dense<0.000000e+00> : vector<64x128xf32>
    %230 = tpu.matmul %228, %229, %cst_242 {dimension_numbers = #tpu.dot_dimension_numbers<[1], [0], [0], [1], [0, 0, 1, 1], [], []>} : vector<64x256xbf16>, vector<256x128xbf16>, vector<64x128xf32> -> vector<64x128xf32>
    %231 = arith.addf %226, %230 : vector<64x128xf32>
    %c1_243 = arith.constant 1 : index
    %c1_244 = arith.constant 1 : index
    %c0_245 = arith.constant 0 : index
    %232 = vector.load %arg13[%c1_243, %c1_244, %c0_245] : memref<10x10x256xbf16, #tpu.memory_space<vmem>>, vector<8x8x256xbf16>
    %233 = vector.shape_cast %232 : vector<8x8x256xbf16> to vector<64x256xbf16>
    %c1024_246 = arith.constant 1024 : index
    %c0_247 = arith.constant 0 : index
    %234 = vector.load %arg10[%c1024_246, %c0_247] : memref<2304x128xbf16, #tpu.memory_space<vmem>>, vector<256x128xbf16>
    %cst_248 = arith.constant dense<0.000000e+00> : vector<64x128xf32>
    %235 = tpu.matmul %233, %234, %cst_248 {dimension_numbers = #tpu.dot_dimension_numbers<[1], [0], [0], [1], [0, 0, 1, 1], [], []>} : vector<64x256xbf16>, vector<256x128xbf16>, vector<64x128xf32> -> vector<64x128xf32>
    %236 = arith.addf %231, %235 : vector<64x128xf32>
    %c1_249 = arith.constant 1 : index
    %c2_250 = arith.constant 2 : index
    %c0_251 = arith.constant 0 : index
    %237 = vector.load %arg13[%c1_249, %c2_250, %c0_251] : memref<10x10x256xbf16, #tpu.memory_space<vmem>>, vector<8x8x256xbf16>
    %238 = vector.shape_cast %237 : vector<8x8x256xbf16> to vector<64x256xbf16>
    %c1280 = arith.constant 1280 : index
    %c0_252 = arith.constant 0 : index
    %239 = vector.load %arg10[%c1280, %c0_252] : memref<2304x128xbf16, #tpu.memory_space<vmem>>, vector<256x128xbf16>
    %cst_253 = arith.constant dense<0.000000e+00> : vector<64x128xf32>
    %240 = tpu.matmul %238, %239, %cst_253 {dimension_numbers = #tpu.dot_dimension_numbers<[1], [0], [0], [1], [0, 0, 1, 1], [], []>} : vector<64x256xbf16>, vector<256x128xbf16>, vector<64x128xf32> -> vector<64x128xf32>
    %241 = arith.addf %236, %240 : vector<64x128xf32>
    %c2_254 = arith.constant 2 : index
    %c0_255 = arith.constant 0 : index
    %c0_256 = arith.constant 0 : index
    %242 = vector.load %arg13[%c2_254, %c0_255, %c0_256] : memref<10x10x256xbf16, #tpu.memory_space<vmem>>, vector<8x8x256xbf16>
    %243 = vector.shape_cast %242 : vector<8x8x256xbf16> to vector<64x256xbf16>
    %c1536 = arith.constant 1536 : index
    %c0_257 = arith.constant 0 : index
    %244 = vector.load %arg10[%c1536, %c0_257] : memref<2304x128xbf16, #tpu.memory_space<vmem>>, vector<256x128xbf16>
    %cst_258 = arith.constant dense<0.000000e+00> : vector<64x128xf32>
    %245 = tpu.matmul %243, %244, %cst_258 {dimension_numbers = #tpu.dot_dimension_numbers<[1], [0], [0], [1], [0, 0, 1, 1], [], []>} : vector<64x256xbf16>, vector<256x128xbf16>, vector<64x128xf32> -> vector<64x128xf32>
    %246 = arith.addf %241, %245 : vector<64x128xf32>
    %c2_259 = arith.constant 2 : index
    %c1_260 = arith.constant 1 : index
    %c0_261 = arith.constant 0 : index
    %247 = vector.load %arg13[%c2_259, %c1_260, %c0_261] : memref<10x10x256xbf16, #tpu.memory_space<vmem>>, vector<8x8x256xbf16>
    %248 = vector.shape_cast %247 : vector<8x8x256xbf16> to vector<64x256xbf16>
    %c1792 = arith.constant 1792 : index
    %c0_262 = arith.constant 0 : index
    %249 = vector.load %arg10[%c1792, %c0_262] : memref<2304x128xbf16, #tpu.memory_space<vmem>>, vector<256x128xbf16>
    %cst_263 = arith.constant dense<0.000000e+00> : vector<64x128xf32>
    %250 = tpu.matmul %248, %249, %cst_263 {dimension_numbers = #tpu.dot_dimension_numbers<[1], [0], [0], [1], [0, 0, 1, 1], [], []>} : vector<64x256xbf16>, vector<256x128xbf16>, vector<64x128xf32> -> vector<64x128xf32>
    %251 = arith.addf %246, %250 : vector<64x128xf32>
    %c2_264 = arith.constant 2 : index
    %c2_265 = arith.constant 2 : index
    %c0_266 = arith.constant 0 : index
    %252 = vector.load %arg13[%c2_264, %c2_265, %c0_266] : memref<10x10x256xbf16, #tpu.memory_space<vmem>>, vector<8x8x256xbf16>
    %253 = vector.shape_cast %252 : vector<8x8x256xbf16> to vector<64x256xbf16>
    %c2048 = arith.constant 2048 : index
    %c0_267 = arith.constant 0 : index
    %254 = vector.load %arg10[%c2048, %c0_267] : memref<2304x128xbf16, #tpu.memory_space<vmem>>, vector<256x128xbf16>
    %cst_268 = arith.constant dense<0.000000e+00> : vector<64x128xf32>
    %255 = tpu.matmul %253, %254, %cst_268 {dimension_numbers = #tpu.dot_dimension_numbers<[1], [0], [0], [1], [0, 0, 1, 1], [], []>} : vector<64x256xbf16>, vector<256x128xbf16>, vector<64x128xf32> -> vector<64x128xf32>
    %256 = arith.addf %251, %255 : vector<64x128xf32>
    %257 = math.tanh %256 : vector<64x128xf32>
    %c0_269 = arith.constant 0 : index
    %c0_270 = arith.constant 0 : index
    %258 = vector.load %arg11[%c0_269, %c0_270] : memref<64x128xf32, #tpu.memory_space<vmem>>, vector<64x128xf32>
    tpu.vector_store %arg11[%c0_269, %c0_270], %257 {strides = array<i32>} : memref<64x128xf32, #tpu.memory_space<vmem>>, vector<64x128xf32>,
    return
  }
  func.func @transform_0(%arg0: i32) -> (i32, i32, i32, i32) {
    %c0_i32 = arith.constant 0 : i32
    %c0_i32_0 = arith.constant 0 : i32
    %c0_i32_1 = arith.constant 0 : i32
    %c0_i32_2 = arith.constant 0 : i32
    return %arg0, %c0_i32, %c0_i32_0, %c0_i32_1 : i32, i32, i32, i32
  }
  func.func @transform_1(%arg0: i32) -> (i32, i32) {
    %c0_i32 = arith.constant 0 : i32
    %c0_i32_0 = arith.constant 0 : i32
    %c0_i32_1 = arith.constant 0 : i32
    return %c0_i32, %c0_i32_0 : i32, i32
  }
  func.func @transform_2(%arg0: i32) -> (i32, i32) {
    %c0_i32 = arith.constant 0 : i32
    %c0_i32_0 = arith.constant 0 : i32
    %c0_i32_1 = arith.constant 0 : i32
    return %c0_i32, %c0_i32_0 : i32, i32
  }
  func.func @transform_3(%arg0: i32) -> (i32, i32) {
    %c0_i32 = arith.constant 0 : i32
    %c0_i32_0 = arith.constant 0 : i32
    %c0_i32_1 = arith.constant 0 : i32
    return %c0_i32, %c0_i32_0 : i32, i32
  }
  func.func @transform_4(%arg0: i32) -> (i32, i32) {
    %c0_i32 = arith.constant 0 : i32
    %c0_i32_0 = arith.constant 0 : i32
    %c0_i32_1 = arith.constant 0 : i32
    return %c0_i32, %c0_i32_0 : i32, i32
  }
  func.func @transform_5(%arg0: i32) -> (i32, i32) {
    %c0_i32 = arith.constant 0 : i32
    %c0_i32_0 = arith.constant 0 : i32
    %c0_i32_1 = arith.constant 0 : i32
    return %c0_i32, %c0_i32_0 : i32, i32
  }
  func.func @transform_6(%arg0: i32) -> (i32, i32) {
    %c0_i32 = arith.constant 0 : i32
    %c0_i32_0 = arith.constant 0 : i32
    %c0_i32_1 = arith.constant 0 : i32
    return %c0_i32, %c0_i32_0 : i32, i32
  }
  func.func @transform_7(%arg0: i32) -> (i32, i32) {
    %c0_i32 = arith.constant 0 : i32
    %c0_i32_0 = arith.constant 0 : i32
    %c0_i32_1 = arith.constant 0 : i32
    return %c0_i32, %c0_i32_0 : i32, i32
  }
  func.func @transform_8(%arg0: i32) -> (i32, i32) {
    %c0_i32 = arith.constant 0 : i32
    %c0_i32_0 = arith.constant 0 : i32
    %c0_i32_1 = arith.constant 0 : i32
    return %c0_i32, %c0_i32_0 : i32, i32
  }
  func.func @transform_9(%arg0: i32) -> (i32, i32) {
    %c0_i32 = arith.constant 0 : i32
    %c0_i32_0 = arith.constant 0 : i32
    %c0_i32_1 = arith.constant 0 : i32
    return %c0_i32, %c0_i32_0 : i32, i32
  }
  func.func @transform_10(%arg0: i32) -> (i32, i32) {
    %c0_i32 = arith.constant 0 : i32
    %c0_i32_0 = arith.constant 0 : i32
    return %arg0, %c0_i32 : i32, i32
  }
}

</mosaic_0001>

<llo_original>
// kernel: g21_forward.2
$region0: #{g21_forward.2}
  #allocation0 [shape = 'u32[]', space=smem, size = 0x4, offset = 0x4, fixed_abs, tag = 'smem constant byte address 0x4 - core index']
  #allocation1 [shape = 'u32[144,128]{1,0:T(1,128)}', space=vmem, size = 0x12000, scoped, tag = 'internal scratch']
  %s0 = inlined_call_operand.vmem [shape: bf16[512,48], index: 0, kind: input, shape index: {}]
  %s1 = inlined_call_operand.vmem [shape: bf16[48,64], index: 1, kind: input, shape index: {}]
  %s2 = inlined_call_operand.vmem [shape: f32[1,64], index: 2, kind: input, shape index: {}]
  %s3 = inlined_call_operand.vmem [shape: bf16[512,64], index: 3, kind: output, shape index: {}]
  %s4 = sld [smem:[#allocation0]]
  $region45: #{g21_forward.2} parent=0
    _
  %s6 = ssub.s32 1, %s4
  %s7 = scalar_select 0, %s6, %s4
  loop: start=0, step=1, limit=4
  $region2: #{g21_forward.2} parent=0 // loop_pre_header
    _
  $region3: #{g21_forward.2} parent=0 // loop_header
    %s9 = sphi 0, %s13
    %p10 = scmp.ge.s32.totalorder %s9, 4
    %s19 = sphi 0, %s21
    %s22 = sphi 0, %s19
    %s23 = sphi 0, %s22
    %s39 = sphi 0, %s23
    %s43 = sphi 0, %s43
    %s45 = sphi 0, %s43
    %s46 = sphi 0, %s45
    %s60 = sphi 0, %s46
    %s64 = sphi 0, %s64
    %s66 = sphi 0, %s64
    %s67 = sphi 0, %s66
    %s81 = sphi 0, %s67
    %s87 = sphi 0, %s89
    %s90 = sphi 0, %s87
    %s91 = sphi 0, %s90
    %s107 = sphi 0, %s91
  $region4: #{g21_forward.2} parent=0 // loop_header_branch
    %12 = sbr.rel (%p10) target = $region8
  $region5: #{g21_forward.2} parent=0 // loop_body
    %s14 = ssub.s32 %s9, 1
    %s15 = ssub.s32 %s9, 2
    %s16 = sadd.s32 %s9, 1
    %s17 = ssub.s32 %s9, %s16
    %p18 = scmp.eq.s32.totalorder %s17, 0
    %s20 = sadd.s32 %s19, 1
    %s21 = scalar_select %p18, %s19, %s20
    %p24 = pneg %p18
    %p25 = scmp.eq.s32.totalorder %s9, 1
    %p26 = por %p24, %p25
    %p27 = scmp.ne.s32.totalorder %s19, %s22
    %p28 = scmp.eq.s32.totalorder %s9, 0
    %p29 = por %p27, %p28
    %p30 = scmp.ne.s32.totalorder %s19, %s22
    %p31 = scmp.eq.s32.totalorder %s14, 1
    %p32 = por %p30, %p31
    %p33 = scmp.ne.s32.totalorder %s22, %s23
    %p34 = scmp.eq.s32.totalorder %s14, 0
    %p35 = por %p33, %p34
    %p36 = scmp.ne.s32.totalorder %s22, %s23
    %p37 = scmp.eq.s32.totalorder %s15, 1
    %p38 = por %p36, %p37
    %p40 = scmp.ne.s32.totalorder %s23, %s39
    %p41 = scmp.eq.s32.totalorder %s15, 0
    %p42 = por %p40, %p41
    %s44 = sadd.s32 %s43, 1
    %p47 = scmp.eq.s32.totalorder %s9, 1
    %p48 = scmp.ne.s32.totalorder %s43, %s45
    %p49 = scmp.eq.s32.totalorder %s9, 0
    %p50 = por %p48, %p49
    %p51 = scmp.ne.s32.totalorder %s43, %s45
    %p52 = scmp.eq.s32.totalorder %s14, 1
    %p53 = por %p51, %p52
    %p54 = scmp.ne.s32.totalorder %s45, %s46
    %p55 = scmp.eq.s32.totalorder %s14, 0
    %p56 = por %p54, %p55
    %p57 = scmp.ne.s32.totalorder %s45, %s46
    %p58 = scmp.eq.s32.totalorder %s15, 1
    %p59 = por %p57, %p58
    %p61 = scmp.ne.s32.totalorder %s46, %s60
    %p62 = scmp.eq.s32.totalorder %s15, 0
    %p63 = por %p61, %p62
    %s65 = sadd.s32 %s64, 1
    %p68 = scmp.eq.s32.totalorder %s9, 1
    %p69 = scmp.ne.s32.totalorder %s64, %s66
    %p70 = scmp.eq.s32.totalorder %s9, 0
    %p71 = por %p69, %p70
    %p72 = scmp.ne.s32.totalorder %s64, %s66
    %p73 = scmp.eq.s32.totalorder %s14, 1
    %p74 = por %p72, %p73
    %p75 = scmp.ne.s32.totalorder %s66, %s67
    %p76 = scmp.eq.s32.totalorder %s14, 0
    %p77 = por %p75, %p76
    %p78 = scmp.ne.s32.totalorder %s66, %s67
    %p79 = scmp.eq.s32.totalorder %s15, 1
    %p80 = por %p78, %p79
    %p82 = scmp.ne.s32.totalorder %s67, %s81
    %p83 = scmp.eq.s32.totalorder %s15, 0
    %p84 = por %p82, %p83
    %s85 = ssub.s32 %s9, %s16
    %p86 = scmp.eq.s32.totalorder %s85, 0
    %s88 = sadd.s32 %s87, 1
    %s89 = scalar_select %p86, %s87, %s88
    %p92 = pneg %p86
    %p93 = scmp.eq.s32.totalorder %s9, 1
    %p94 = por %p92, %p93
    %p95 = scmp.ne.s32.totalorder %s87, %s90
    %p96 = scmp.eq.s32.totalorder %s9, 0
    %p97 = por %p95, %p96
    %p98 = scmp.ne.s32.totalorder %s87, %s90
    %p99 = scmp.eq.s32.totalorder %s14, 1
    %p100 = por %p98, %p99
    %p101 = scmp.ne.s32.totalorder %s90, %s91
    %p102 = scmp.eq.s32.totalorder %s14, 0
    %p103 = por %p101, %p102
    %p104 = scmp.ne.s32.totalorder %s90, %s91
    %p105 = scmp.eq.s32.totalorder %s15, 1
    %p106 = por %p104, %p105
    %p108 = scmp.ne.s32.totalorder %s91, %s107
    %p109 = scmp.eq.s32.totalorder %s15, 0
    %p110 = por %p108, %p109
    %p111 = scmp.le.s32.totalorder 1, %s9
    %p112 = scmp.lt.s32.totalorder %s9, 3
    %p113 = pnand %p111, %p112
    %p114 = pneg %p113
    // Predicated region
    $region9: #{g21_forward.2} parent=5 // pred_check
      _
    $region10: #{g21_forward.2} parent=5 // pred_check_branch
      %116 = sbr.rel (%p113) target = $region12
    $region11: #{g21_forward.2} parent=5 // pred_region
      %s117 = ssub.s32 %s9, 1
      // Predicated region
      $region13: #{g21_forward.2} parent=11 // pred_check
        %p118 = pneg %p56
      $region14: #{g21_forward.2} parent=11 // pred_check_branch
        %120 = sbr.rel (%p118) target = $region16
      $region15: #{g21_forward.2} parent=11 // pred_region
        _
      $region16: #{g21_forward.2} parent=11 // pred_fallthru
        _
      // Predicated region
      $region17: #{g21_forward.2} parent=11 // pred_check
        %p121 = pneg %p77
      $region18: #{g21_forward.2} parent=11 // pred_check_branch
        %123 = sbr.rel (%p121) target = $region20
      $region19: #{g21_forward.2} parent=11 // pred_region
        _
      $region20: #{g21_forward.2} parent=11 // pred_fallthru
        _
    $region12: #{g21_forward.2} parent=5 // pred_fallthru
      _
    %p124 = scmp.lt.s32.totalorder %s9, 2
    // Predicated region
    $region21: #{g21_forward.2} parent=5 // pred_check
      %p125 = pneg %p124
    $region22: #{g21_forward.2} parent=5 // pred_check_branch
      %127 = sbr.rel (%p125) target = $region24
    $region23: #{g21_forward.2} parent=5 // pred_region
      // Predicated region
      $region25: #{g21_forward.2} parent=23 // pred_check
        %p128 = pneg %p29
      $region26: #{g21_forward.2} parent=23 // pred_check_branch
        %130 = sbr.rel (%p128) target = $region28
      $region27: #{g21_forward.2} parent=23 // pred_region
        %s131 = smul.u32 32, %s9
        %p132 = scmp.lt.s32.totalorder %s131, 63
        %s133 = scalar_select %p132, %s131, 63
        %s134 = smul.addr %s133, 4
        %s135 = scalar_lea.vmem %s0, %s134
        %s136 = smul.u32 32, %s9
      $region28: #{g21_forward.2} parent=23 // pred_fallthru
        _
    $region24: #{g21_forward.2} parent=5 // pred_fallthru
      _
    %p137 = scmp.le.s32.totalorder 1, %s9
    %p138 = scmp.lt.s32.totalorder %s9, 3
    %p139 = pnand %p137, %p138
    %p140 = pneg %p139
    // Predicated region
    $region29: #{g21_forward.2} parent=5 // pred_check
      _
    $region30: #{g21_forward.2} parent=5 // pred_check_branch
      %142 = sbr.rel (%p139) target = $region32
    $region31: #{g21_forward.2} parent=5 // pred_region
      %s143 = ssub.s32 %s9, 1
      %s144 = smul.u32 32, %s14
      %p145 = scmp.lt.s32.totalorder %s144, 63
      %s146 = scalar_select %p145, %s144, 63
      %s147 = smul.addr %s146, 4
      %s148 = scalar_lea.vmem %s0, %s147
      %p149 = pneg %p35
      %p150 = pneg %p32
      %p151 = pneg %p56
      %p152 = pneg %p53
      %p153 = pneg %p77
      %p154 = pneg %p74
      %p155 = pneg %p103
      %p156 = pneg %p100
      %s157 = smul.u32 32, %s14
      %p158 = scmp.lt.s32.totalorder %s157, 63
      %s159 = scalar_select %p158, %s157, 63
      %s160 = smul.addr %s159, 4
      %s161 = scalar_lea.vmem %s3, %s160
      %s162 = smul.u32 32, %s14
      %p163 = scmp.lt.s32.totalorder %s162, 63
      %s164 = scalar_select %p163, %s162, 63
      %s165 = smul.addr %s164, 4
      %s166 = scalar_lea.vmem %s0, %s165
      %s167 = smul.u32 32, %s14
      %s168 = smul.u32 32, %s14
      %p169 = scmp.lt.s32.totalorder %s168, 63
      %s170 = scalar_select %p169, %s168, 63
      %s171 = smul.addr %s170, 4
      %s172 = scalar_lea.vmem %s3, %s171
      %s173 = smul.u32 32, %s14
      %v175 = vld [vmem:[%s166] sm:$0xf]
      %v176 = vld [vmem:[%s166 + $0x4] sm:$0xf]
      %v177 = vld [vmem:[%s166 + $0x8] sm:$0xf]
      %v178 = vld [vmem:[%s166 + $0xc] sm:$0xf]
      %v179 = vld [vmem:[%s166 + $0x10] sm:$0xf]
      %v180 = vld [vmem:[%s166 + $0x14] sm:$0xf]
      %v181 = vld [vmem:[%s166 + $0x18] sm:$0xf]
      %v182 = vld [vmem:[%s166 + $0x1c] sm:$0xf]
      %v183 = vld [vmem:[%s166 + $0x20] sm:$0xf]
      %v184 = vld [vmem:[%s166 + $0x24] sm:$0xf]
      %v185 = vld [vmem:[%s166 + $0x28] sm:$0xf]
      %v186 = vld [vmem:[%s166 + $0x2c] sm:$0xf]
      %v187 = vld [vmem:[%s166 + $0x30] sm:$0xf]
      %v188 = vld [vmem:[%s166 + $0x34] sm:$0xf]
      %v189 = vld [vmem:[%s166 + $0x38] sm:$0xf]
      %v190 = vld [vmem:[%s166 + $0x3c] sm:$0xf]
      %v191 = vld [vmem:[%s166 + $0x40] sm:$0xf]
      %v192 = vld [vmem:[%s166 + $0x44] sm:$0xf]
      %v193 = vld [vmem:[%s166 + $0x48] sm:$0xf]
      %v194 = vld [vmem:[%s166 + $0x4c] sm:$0xf]
      %v195 = vld [vmem:[%s166 + $0x50] sm:$0xf]
      %v196 = vld [vmem:[%s166 + $0x54] sm:$0xf]
      %v197 = vld [vmem:[%s166 + $0x58] sm:$0xf]
      %v198 = vld [vmem:[%s166 + $0x5c] sm:$0xf]
      %v199 = vld [vmem:[%s166 + $0x60] sm:$0xf]
      %v200 = vld [vmem:[%s166 + $0x64] sm:$0xf]
      %v201 = vld [vmem:[%s166 + $0x68] sm:$0xf]
      %v202 = vld [vmem:[%s166 + $0x6c] sm:$0xf]
      %v203 = vld [vmem:[%s166 + $0x70] sm:$0xf]
      %v204 = vld [vmem:[%s166 + $0x74] sm:$0xf]
      %v205 = vld [vmem:[%s166 + $0x78] sm:$0xf]
      %v206 = vld [vmem:[%s166 + $0x7c] sm:$0xf]
      %v207 = vld [vmem:[%s1] sm:$0xf]
      %v208 = vld [vmem:[%s1 + $0x4] sm:$0xf]
      %v209 = vld [vmem:[%s1 + $0x8] sm:$0xf]
      %v210 = vld [vmem:[%s1 + $0xc] sm:$0xf]
      %v211 = vld [vmem:[%s1 + $0x10] sm:$0xf]
      %v212 = vld [vmem:[%s1 + $0x14] sm:$0xf]
      %v213 = vld [vmem:[%s2] sm:$0x1]
      %v215 = vlaneseq
      %v216 = vshrl.u32 %v215, 7
      %v217 = vsub.s32 0, %v216
      %v218 = vrot.slane %v213, %v217
      %v252 = vunpack.c.l.b16 %v175
      %v253 = vunpack.c.l.b16 %v176
      %v254 = vunpack.c.l.b16 %v177
      %v255 = vunpack.c.l.b16 %v178
      %v256 = vunpack.c.l.b16 %v179
      %v257 = vunpack.c.l.b16 %v180
      %v258 = vunpack.c.l.b16 %v181
      %v259 = vunpack.c.l.b16 %v182
      %v260 = vunpack.c.l.b16 %v183
      %v261 = vunpack.c.l.b16 %v184
      %v262 = vunpack.c.l.b16 %v185
      %v263 = vunpack.c.l.b16 %v186
      %v264 = vunpack.c.l.b16 %v187
      %v265 = vunpack.c.l.b16 %v188
      %v266 = vunpack.c.l.b16 %v189
      %v267 = vunpack.c.l.b16 %v190
      %v268 = vunpack.c.l.b16 %v191
      %v269 = vunpack.c.l.b16 %v192
      %v270 = vunpack.c.l.b16 %v193
      %v271 = vunpack.c.l.b16 %v194
      %v272 = vunpack.c.l.b16 %v195
      %v273 = vunpack.c.l.b16 %v196
      %v274 = vunpack.c.l.b16 %v197
      %v275 = vunpack.c.l.b16 %v198
      %v276 = vunpack.c.l.b16 %v199
      %v277 = vunpack.c.l.b16 %v200
      %v278 = vunpack.c.l.b16 %v201
      %v279 = vunpack.c.l.b16 %v202
      %v280 = vunpack.c.l.b16 %v203
      %v281 = vunpack.c.l.b16 %v204
      %v282 = vunpack.c.l.b16 %v205
      %v283 = vunpack.c.l.b16 %v206
      %v284 = vpack.c.b16 %v253, %v252
      %v285 = vpack.c.b16 %v255, %v254
      %v286 = vpack.c.b16 %v257, %v256
      %v287 = vpack.c.b16 %v259, %v258
      %v288 = vpack.c.b16 %v261, %v260
      %v289 = vpack.c.b16 %v263, %v262
      %v290 = vpack.c.b16 %v265, %v264
      %v291 = vpack.c.b16 %v267, %v266
      %v292 = vpack.c.b16 %v269, %v268
      %v293 = vpack.c.b16 %v271, %v270
      %v294 = vpack.c.b16 %v273, %v272
      %v295 = vpack.c.b16 %v275, %v274
      %v296 = vpack.c.b16 %v277, %v276
      %v297 = vpack.c.b16 %v279, %v278
      %v298 = vpack.c.b16 %v281, %v280
      %v299 = vpack.c.b16 %v283, %v282
      %v306 = vunpack.c.l.b16 %v207
      %v307 = vunpack.c.l.b16 %v208
      %v308 = vunpack.c.l.b16 %v209
      %v309 = vunpack.c.l.b16 %v210
      %v310 = vunpack.c.l.b16 %v211
      %v311 = vunpack.c.l.b16 %v212
      %v312 = vpack.c.b16 %v307, %v306
      %v313 = vpack.c.b16 %v309, %v308
      %v314 = vpack.c.b16 %v311, %v310
      %vm318 = vcmask 392192
      %v320 = vsel %vm318, %v284, 0
      %v323 = vsel %vm318, %v285, 0
      %v326 = vsel %vm318, %v286, 0
      %v329 = vsel %vm318, %v287, 0
      %v332 = vsel %vm318, %v288, 0
      %v335 = vsel %vm318, %v289, 0
      %v338 = vsel %vm318, %v290, 0
      %v341 = vsel %vm318, %v291, 0
      %v344 = vsel %vm318, %v292, 0
      %v347 = vsel %vm318, %v293, 0
      %v350 = vsel %vm318, %v294, 0
      %v353 = vsel %vm318, %v295, 0
      %v356 = vsel %vm318, %v296, 0
      %v359 = vsel %vm318, %v297, 0
      %v362 = vsel %vm318, %v298, 0
      %v365 = vsel %vm318, %v299, 0
      %367 = vmatprep.subr.bf16.mxu0 0
      %368 = vmatpush1.bf16.msra.mxu0 %v312
      %369 = vmatprep.subr.bf16.mxu0 0
      %370 = vmatpush1.bf16.msra.mxu0 %v313
      %371 = vmatprep.subr.bf16.mxu0 0
      %372 = vmatpush1.bf16.msra.mxu0 %v314
      %373 = vmatprep.subr.bf16.mxu0 0
      %374 = vmatpush1.bf16.msra.mxu0 0
      %375 = vmatprep.subr.bf16.mxu0 0
      %376 = vmatpush1.bf16.msra.mxu0 0
      %377 = vmatprep.subr.bf16.mxu0 0
      %378 = vmatpush1.bf16.msra.mxu0 0
      %379 = vmatprep.subr.bf16.mxu0 0
      %380 = vmatpush1.bf16.msra.mxu0 0
      %381 = vmatprep.subr.bf16.mxu0 0
      %382 = vmatpush1.bf16.msra.mxu0 0
      %383 = vmatprep.subr.bf16.mxu0 0
      %384 = vmatpush1.bf16.msra.mxu0 0
      %385 = vmatprep.subr.bf16.mxu0 0
      %386 = vmatpush1.bf16.msra.mxu0 0
      %387 = vmatprep.subr.bf16.mxu0 0
      %388 = vmatpush1.bf16.msra.mxu0 0
      %389 = vmatprep.subr.bf16.mxu0 0
      %390 = vmatpush1.bf16.msra.mxu0 0
      %391 = vmatprep.subr.bf16.mxu0 0
      %392 = vmatpush1.bf16.msra.mxu0 0
      %393 = vmatprep.subr.bf16.mxu0 0
      %394 = vmatpush1.bf16.msra.mxu0 0
      %395 = vmatprep.subr.bf16.mxu0 0
      %396 = vmatpush1.bf16.msra.mxu0 0
      %397 = vmatprep.subr.bf16.mxu0 0
      %398 = vmatpush1.bf16.msra.mxu0 0
      %399 = vmatprep.mubr.bf16.mxu0 0
      %400 = vmatmul.mubr.bf16.gmra.mrb[0].mxu0 %v320
      %v401 = vpop.f32.mrb[0].mxu0
      %v402 = vadd.f32 %v218, %v401
      %v403 = vpop.f32.mrb[0].mxu0
      %v404 = vpop.f32.mrb[0].mxu0
      %v405 = vadd.f32 %v218, %v404
      %v406 = vpop.f32.mrb[0].mxu0
      %407 = vmatprep.mubr.bf16.mxu0 0
      %408 = vmatmul.mubr.bf16.gmra.mrb[0].mxu0 %v323
      %v409 = vpop.f32.mrb[0].mxu0
      %v410 = vadd.f32 %v218, %v409
      %v411 = vpop.f32.mrb[0].mxu0
      %v412 = vpop.f32.mrb[0].mxu0
      %v413 = vadd.f32 %v218, %v412
      %v414 = vpop.f32.mrb[0].mxu0
      %415 = vmatprep.mubr.bf16.mxu0 0
      %416 = vmatmul.mubr.bf16.gmra.mrb[0].mxu0 %v326
      %v417 = vpop.f32.mrb[0].mxu0
      %v418 = vadd.f32 %v218, %v417
      %v419 = vpop.f32.mrb[0].mxu0
      %v420 = vpop.f32.mrb[0].mxu0
      %v421 = vadd.f32 %v218, %v420
      %v422 = vpop.f32.mrb[0].mxu0
      %423 = vmatprep.mubr.bf16.mxu0 0
      %424 = vmatmul.mubr.bf16.gmra.mrb[0].mxu0 %v329
      %v425 = vpop.f32.mrb[0].mxu0
      %v426 = vadd.f32 %v218, %v425
      %v427 = vpop.f32.mrb[0].mxu0
      %v428 = vpop.f32.mrb[0].mxu0
      %v429 = vadd.f32 %v218, %v428
      %v430 = vpop.f32.mrb[0].mxu0
      %431 = vmatprep.mubr.bf16.mxu0 0
      %432 = vmatmul.mubr.bf16.gmra.mrb[0].mxu0 %v332
      %v433 = vpop.f32.mrb[0].mxu0
      %v434 = vadd.f32 %v218, %v433
      %v435 = vpop.f32.mrb[0].mxu0
      %v436 = vpop.f32.mrb[0].mxu0
      %v437 = vadd.f32 %v218, %v436
      %v438 = vpop.f32.mrb[0].mxu0
      %439 = vmatprep.mubr.bf16.mxu0 0
      %440 = vmatmul.mubr.bf16.gmra.mrb[0].mxu0 %v335
      %v441 = vpop.f32.mrb[0].mxu0
      %v442 = vadd.f32 %v218, %v441
      %v443 = vpop.f32.mrb[0].mxu0
      %v444 = vpop.f32.mrb[0].mxu0
      %v445 = vadd.f32 %v218, %v444
      %v446 = vpop.f32.mrb[0].mxu0
      %447 = vmatprep.mubr.bf16.mxu0 0
      %448 = vmatmul.mubr.bf16.gmra.mrb[0].mxu0 %v338
      %v449 = vpop.f32.mrb[0].mxu0
      %v450 = vadd.f32 %v218, %v449
      %v451 = vpop.f32.mrb[0].mxu0
      %v452 = vpop.f32.mrb[0].mxu0
      %v453 = vadd.f32 %v218, %v452
      %v454 = vpop.f32.mrb[0].mxu0
      %455 = vmatprep.mubr.bf16.mxu0 0
      %456 = vmatmul.mubr.bf16.gmra.mrb[0].mxu0 %v341
      %v457 = vpop.f32.mrb[0].mxu0
      %v458 = vadd.f32 %v218, %v457
      %v459 = vpop.f32.mrb[0].mxu0
      %v460 = vpop.f32.mrb[0].mxu0
      %v461 = vadd.f32 %v218, %v460
      %v462 = vpop.f32.mrb[0].mxu0
      %463 = vmatprep.mubr.bf16.mxu0 0
      %464 = vmatmul.mubr.bf16.gmra.mrb[0].mxu0 %v344
      %v465 = vpop.f32.mrb[0].mxu0
      %v466 = vadd.f32 %v218, %v465
      %v467 = vpop.f32.mrb[0].mxu0
      %v468 = vpop.f32.mrb[0].mxu0
      %v469 = vadd.f32 %v218, %v468
      %v470 = vpop.f32.mrb[0].mxu0
      %471 = vmatprep.mubr.bf16.mxu0 0
      %472 = vmatmul.mubr.bf16.gmra.mrb[0].mxu0 %v347
      %v473 = vpop.f32.mrb[0].mxu0
      %v474 = vadd.f32 %v218, %v473
      %v475 = vpop.f32.mrb[0].mxu0
      %v476 = vpop.f32.mrb[0].mxu0
      %v477 = vadd.f32 %v218, %v476
      %v478 = vpop.f32.mrb[0].mxu0
      %479 = vmatprep.mubr.bf16.mxu0 0
      %480 = vmatmul.mubr.bf16.gmra.mrb[0].mxu0 %v350
      %v481 = vpop.f32.mrb[0].mxu0
      %v482 = vadd.f32 %v218, %v481
      %v483 = vpop.f32.mrb[0].mxu0
      %v484 = vpop.f32.mrb[0].mxu0
      %v485 = vadd.f32 %v218, %v484
      %v486 = vpop.f32.mrb[0].mxu0
      %487 = vmatprep.mubr.bf16.mxu0 0
      %488 = vmatmul.mubr.bf16.gmra.mrb[0].mxu0 %v353
      %v489 = vpop.f32.mrb[0].mxu0
      %v490 = vadd.f32 %v218, %v489
      %v491 = vpop.f32.mrb[0].mxu0
      %v492 = vpop.f32.mrb[0].mxu0
      %v493 = vadd.f32 %v218, %v492
      %v494 = vpop.f32.mrb[0].mxu0
      %495 = vmatprep.mubr.bf16.mxu0 0
      %496 = vmatmul.mubr.bf16.gmra.mrb[0].mxu0 %v356
      %v497 = vpop.f32.mrb[0].mxu0
      %v498 = vadd.f32 %v218, %v497
      %v499 = vpop.f32.mrb[0].mxu0
      %v500 = vpop.f32.mrb[0].mxu0
      %v501 = vadd.f32 %v218, %v500
      %v502 = vpop.f32.mrb[0].mxu0
      %503 = vmatprep.mubr.bf16.mxu0 0
      %504 = vmatmul.mubr.bf16.gmra.mrb[0].mxu0 %v359
      %v505 = vpop.f32.mrb[0].mxu0
      %v506 = vadd.f32 %v218, %v505
      %v507 = vpop.f32.mrb[0].mxu0
      %v508 = vpop.f32.mrb[0].mxu0
      %v509 = vadd.f32 %v218, %v508
      %v510 = vpop.f32.mrb[0].mxu0
      %511 = vmatprep.mubr.bf16.mxu0 0
      %512 = vmatmul.mubr.bf16.gmra.mrb[0].mxu0 %v362
      %v513 = vpop.f32.mrb[0].mxu0
      %v514 = vadd.f32 %v218, %v513
      %v515 = vpop.f32.mrb[0].mxu0
      %v516 = vpop.f32.mrb[0].mxu0
      %v517 = vadd.f32 %v218, %v516
      %v518 = vpop.f32.mrb[0].mxu0
      %519 = vmatprep.mubr.bf16.mxu0 0
      %520 = vmatmul.mubr.bf16.gmra.mrb[0].mxu0 %v365
      %v521 = vpop.f32.mrb[0].mxu0
      %v522 = vadd.f32 %v218, %v521
      %v523 = vpop.f32.mrb[0].mxu0
      %v524 = vpop.f32.mrb[0].mxu0
      %v525 = vadd.f32 %v218, %v524
      %v526 = vpop.f32.mrb[0].mxu0
      %527 = vdwg.mxu0
      %vm528 = vcmp.ge.f32.partialorder %v402, 0.0
      %vm529 = vcmp.ge.f32.partialorder %v405, 0.0
      %vm530 = vcmp.ge.f32.partialorder %v410, 0.0
      %vm531 = vcmp.ge.f32.partialorder %v413, 0.0
      %vm532 = vcmp.ge.f32.partialorder %v418, 0.0
      %vm533 = vcmp.ge.f32.partialorder %v421, 0.0
      %vm534 = vcmp.ge.f32.partialorder %v426, 0.0
      %vm535 = vcmp.ge.f32.partialorder %v429, 0.0
      %vm536 = vcmp.ge.f32.partialorder %v434, 0.0
      %vm537 = vcmp.ge.f32.partialorder %v437, 0.0
      %vm538 = vcmp.ge.f32.partialorder %v442, 0.0
      %vm539 = vcmp.ge.f32.partialorder %v445, 0.0
      %vm540 = vcmp.ge.f32.partialorder %v450, 0.0
      %vm541 = vcmp.ge.f32.partialorder %v453, 0.0
      %vm542 = vcmp.ge.f32.partialorder %v458, 0.0
      %vm543 = vcmp.ge.f32.partialorder %v461, 0.0
      %vm544 = vcmp.ge.f32.partialorder %v466, 0.0
      %vm545 = vcmp.ge.f32.partialorder %v469, 0.0
      %vm546 = vcmp.ge.f32.partialorder %v474, 0.0
      %vm547 = vcmp.ge.f32.partialorder %v477, 0.0
      %vm548 = vcmp.ge.f32.partialorder %v482, 0.0
      %vm549 = vcmp.ge.f32.partialorder %v485, 0.0
      %vm550 = vcmp.ge.f32.partialorder %v490, 0.0
      %vm551 = vcmp.ge.f32.partialorder %v493, 0.0
      %vm552 = vcmp.ge.f32.partialorder %v498, 0.0
      %vm553 = vcmp.ge.f32.partialorder %v501, 0.0
      %vm554 = vcmp.ge.f32.partialorder %v506, 0.0
      %vm555 = vcmp.ge.f32.partialorder %v509, 0.0
      %vm556 = vcmp.ge.f32.partialorder %v514, 0.0
      %vm557 = vcmp.ge.f32.partialorder %v517, 0.0
      %vm558 = vcmp.ge.f32.partialorder %v522, 0.0
      %vm559 = vcmp.ge.f32.partialorder %v525, 0.0
      %v560 = vmul.f32 %v402, 0.05
      %v561 = vmul.f32 %v405, 0.05
      %v562 = vmul.f32 %v410, 0.05
      %v563 = vmul.f32 %v413, 0.05
      %v564 = vmul.f32 %v418, 0.05
      %v565 = vmul.f32 %v421, 0.05
      %v566 = vmul.f32 %v426, 0.05
      %v567 = vmul.f32 %v429, 0.05
      %v568 = vmul.f32 %v434, 0.05
      %v569 = vmul.f32 %v437, 0.05
      %v570 = vmul.f32 %v442, 0.05
      %v571 = vmul.f32 %v445, 0.05
      %v572 = vmul.f32 %v450, 0.05
      %v573 = vmul.f32 %v453, 0.05
      %v574 = vmul.f32 %v458, 0.05
      %v575 = vmul.f32 %v461, 0.05
      %v576 = vmul.f32 %v466, 0.05
      %v577 = vmul.f32 %v469, 0.05
      %v578 = vmul.f32 %v474, 0.05
      %v579 = vmul.f32 %v477, 0.05
      %v580 = vmul.f32 %v482, 0.05
      %v581 = vmul.f32 %v485, 0.05
      %v582 = vmul.f32 %v490, 0.05
      %v583 = vmul.f32 %v493, 0.05
      %v584 = vmul.f32 %v498, 0.05
      %v585 = vmul.f32 %v501, 0.05
      %v586 = vmul.f32 %v506, 0.05
      %v587 = vmul.f32 %v509, 0.05
      %v588 = vmul.f32 %v514, 0.05
      %v589 = vmul.f32 %v517, 0.05
      %v590 = vmul.f32 %v522, 0.05
      %v591 = vmul.f32 %v525, 0.05
      %v592 = vsel %vm528, %v402, %v560
      %v593 = vsel %vm529, %v405, %v561
      %v594 = vsel %vm530, %v410, %v562
      %v595 = vsel %vm531, %v413, %v563
      %v596 = vsel %vm532, %v418, %v564
      %v597 = vsel %vm533, %v421, %v565
      %v598 = vsel %vm534, %v426, %v566
      %v599 = vsel %vm535, %v429, %v567
      %v600 = vsel %vm536, %v434, %v568
      %v601 = vsel %vm537, %v437, %v569
      %v602 = vsel %vm538, %v442, %v570
      %v603 = vsel %vm539, %v445, %v571
      %v604 = vsel %vm540, %v450, %v572
      %v605 = vsel %vm541, %v453, %v573
      %v606 = vsel %vm542, %v458, %v574
      %v607 = vsel %vm543, %v461, %v575
      %v608 = vsel %vm544, %v466, %v576
      %v609 = vsel %vm545, %v469, %v577
      %v610 = vsel %vm546, %v474, %v578
      %v611 = vsel %vm547, %v477, %v579
      %v612 = vsel %vm548, %v482, %v580
      %v613 = vsel %vm549, %v485, %v581
      %v614 = vsel %vm550, %v490, %v582
      %v615 = vsel %vm551, %v493, %v583
      %v616 = vsel %vm552, %v498, %v584
      %v617 = vsel %vm553, %v501, %v585
      %v618 = vsel %vm554, %v506, %v586
      %v619 = vsel %vm555, %v509, %v587
      %v620 = vsel %vm556, %v514, %v588
      %v621 = vsel %vm557, %v517, %v589
      %v622 = vsel %vm558, %v522, %v590
      %v623 = vsel %vm559, %v525, %v591
      %v624 = vpack.c.bf16 %v593, %v592
      %v625 = vpack.c.bf16 %v595, %v594
      %v626 = vpack.c.bf16 %v597, %v596
      %v627 = vpack.c.bf16 %v599, %v598
      %v628 = vpack.c.bf16 %v601, %v600
      %v629 = vpack.c.bf16 %v603, %v602
      %v630 = vpack.c.bf16 %v605, %v604
      %v631 = vpack.c.bf16 %v607, %v606
      %v632 = vpack.c.bf16 %v609, %v608
      %v633 = vpack.c.bf16 %v611, %v610
      %v634 = vpack.c.bf16 %v613, %v612
      %v635 = vpack.c.bf16 %v615, %v614
      %v636 = vpack.c.bf16 %v617, %v616
      %v637 = vpack.c.bf16 %v619, %v618
      %v638 = vpack.c.bf16 %v621, %v620
      %v639 = vpack.c.bf16 %v623, %v622
      %v656 = vunpack.c.l.b16 %v624
      %v657 = vunpack.c.h.b16 %v624
      %v658 = vunpack.c.l.b16 %v625
      %v659 = vunpack.c.h.b16 %v625
      %v660 = vunpack.c.l.b16 %v626
      %v661 = vunpack.c.h.b16 %v626
      %v662 = vunpack.c.l.b16 %v627
      %v663 = vunpack.c.h.b16 %v627
      %v664 = vunpack.c.l.b16 %v628
      %v665 = vunpack.c.h.b16 %v628
      %v666 = vunpack.c.l.b16 %v629
      %v667 = vunpack.c.h.b16 %v629
      %v668 = vunpack.c.l.b16 %v630
      %v669 = vunpack.c.h.b16 %v630
      %v670 = vunpack.c.l.b16 %v631
      %v671 = vunpack.c.h.b16 %v631
      %v672 = vunpack.c.l.b16 %v632
      %v673 = vunpack.c.h.b16 %v632
      %v674 = vunpack.c.l.b16 %v633
      %v675 = vunpack.c.h.b16 %v633
      %v676 = vunpack.c.l.b16 %v634
      %v677 = vunpack.c.h.b16 %v634
      %v678 = vunpack.c.l.b16 %v635
      %v679 = vunpack.c.h.b16 %v635
      %v680 = vunpack.c.l.b16 %v636
      %v681 = vunpack.c.h.b16 %v636
      %v682 = vunpack.c.l.b16 %v637
      %v683 = vunpack.c.h.b16 %v637
      %v684 = vunpack.c.l.b16 %v638
      %v685 = vunpack.c.h.b16 %v638
      %v686 = vunpack.c.l.b16 %v639
      %v687 = vunpack.c.h.b16 %v639
      %v688 = vpack.c.b16 %v656, %v656
      %v689 = vpack.c.b16 %v657, %v657
      %v690 = vpack.c.b16 %v658, %v658
      %v691 = vpack.c.b16 %v659, %v659
      %v692 = vpack.c.b16 %v660, %v660
      %v693 = vpack.c.b16 %v661, %v661
      %v694 = vpack.c.b16 %v662, %v662
      %v695 = vpack.c.b16 %v663, %v663
      %v696 = vpack.c.b16 %v664, %v664
      %v697 = vpack.c.b16 %v665, %v665
      %v698 = vpack.c.b16 %v666, %v666
      %v699 = vpack.c.b16 %v667, %v667
      %v700 = vpack.c.b16 %v668, %v668
      %v701 = vpack.c.b16 %v669, %v669
      %v702 = vpack.c.b16 %v670, %v670
      %v703 = vpack.c.b16 %v671, %v671
      %v704 = vpack.c.b16 %v672, %v672
      %v705 = vpack.c.b16 %v673, %v673
      %v706 = vpack.c.b16 %v674, %v674
      %v707 = vpack.c.b16 %v675, %v675
      %v708 = vpack.c.b16 %v676, %v676
      %v709 = vpack.c.b16 %v677, %v677
      %v710 = vpack.c.b16 %v678, %v678
      %v711 = vpack.c.b16 %v679, %v679
      %v712 = vpack.c.b16 %v680, %v680
      %v713 = vpack.c.b16 %v681, %v681
      %v714 = vpack.c.b16 %v682, %v682
      %v715 = vpack.c.b16 %v683, %v683
      %v716 = vpack.c.b16 %v684, %v684
      %v717 = vpack.c.b16 %v685, %v685
      %v718 = vpack.c.b16 %v686, %v686
      %v719 = vpack.c.b16 %v687, %v687
      %vm752 = vcmask 519168
      %753 = vst.msk [vmem:[%s172] sm:$0xf] %vm752, %v688
      %754 = vst.msk [vmem:[%s172 + $0x4] sm:$0xf] %vm752, %v689
      %755 = vst.msk [vmem:[%s172 + $0x8] sm:$0xf] %vm752, %v690
      %756 = vst.msk [vmem:[%s172 + $0xc] sm:$0xf] %vm752, %v691
      %757 = vst.msk [vmem:[%s172 + $0x10] sm:$0xf] %vm752, %v692
      %758 = vst.msk [vmem:[%s172 + $0x14] sm:$0xf] %vm752, %v693
      %759 = vst.msk [vmem:[%s172 + $0x18] sm:$0xf] %vm752, %v694
      %760 = vst.msk [vmem:[%s172 + $0x1c] sm:$0xf] %vm752, %v695
      %761 = vst.msk [vmem:[%s172 + $0x20] sm:$0xf] %vm752, %v696
      %762 = vst.msk [vmem:[%s172 + $0x24] sm:$0xf] %vm752, %v697
      %763 = vst.msk [vmem:[%s172 + $0x28] sm:$0xf] %vm752, %v698
      %764 = vst.msk [vmem:[%s172 + $0x2c] sm:$0xf] %vm752, %v699
      %765 = vst.msk [vmem:[%s172 + $0x30] sm:$0xf] %vm752, %v700
      %766 = vst.msk [vmem:[%s172 + $0x34] sm:$0xf] %vm752, %v701
      %767 = vst.msk [vmem:[%s172 + $0x38] sm:$0xf] %vm752, %v702
      %768 = vst.msk [vmem:[%s172 + $0x3c] sm:$0xf] %vm752, %v703
      %769 = vst.msk [vmem:[%s172 + $0x40] sm:$0xf] %vm752, %v704
      %770 = vst.msk [vmem:[%s172 + $0x44] sm:$0xf] %vm752, %v705
      %771 = vst.msk [vmem:[%s172 + $0x48] sm:$0xf] %vm752, %v706
      %772 = vst.msk [vmem:[%s172 + $0x4c] sm:$0xf] %vm752, %v707
      %773 = vst.msk [vmem:[%s172 + $0x50] sm:$0xf] %vm752, %v708
      %774 = vst.msk [vmem:[%s172 + $0x54] sm:$0xf] %vm752, %v709
      %775 = vst.msk [vmem:[%s172 + $0x58] sm:$0xf] %vm752, %v710
      %776 = vst.msk [vmem:[%s172 + $0x5c] sm:$0xf] %vm752, %v711
      %777 = vst.msk [vmem:[%s172 + $0x60] sm:$0xf] %vm752, %v712
      %778 = vst.msk [vmem:[%s172 + $0x64] sm:$0xf] %vm752, %v713
      %779 = vst.msk [vmem:[%s172 + $0x68] sm:$0xf] %vm752, %v714
      %780 = vst.msk [vmem:[%s172 + $0x6c] sm:$0xf] %vm752, %v715
      %781 = vst.msk [vmem:[%s172 + $0x70] sm:$0xf] %vm752, %v716
      %782 = vst.msk [vmem:[%s172 + $0x74] sm:$0xf] %vm752, %v717
      %783 = vst.msk [vmem:[%s172 + $0x78] sm:$0xf] %vm752, %v718
      %784 = vst.msk [vmem:[%s172 + $0x7c] sm:$0xf] %vm752, %v719
      %s785 = smul.u32 32, %s14
      %p786 = scmp.lt.s32.totalorder %s785, 63
      %s787 = scalar_select %p786, %s785, 63
      %s788 = smul.addr %s787, 4
      %s789 = scalar_lea.vmem %s3, %s788
      // Predicated region
      $region33: #{g21_forward.2} parent=31 // pred_check
        %p790 = pneg %p100
      $region34: #{g21_forward.2} parent=31 // pred_check_branch
        %792 = sbr.rel (%p790) target = $region36
      $region35: #{g21_forward.2} parent=31 // pred_region
        %s793 = smul.u32 32, %s14
      $region36: #{g21_forward.2} parent=31 // pred_fallthru
        _
    $region32: #{g21_forward.2} parent=5 // pred_fallthru
      _
    %p794 = scmp.le.s32.totalorder 2, %s9
    // Predicated region
    $region37: #{g21_forward.2} parent=5 // pred_check
      %p795 = pneg %p794
    $region38: #{g21_forward.2} parent=5 // pred_check_branch
      %797 = sbr.rel (%p795) target = $region40
    $region39: #{g21_forward.2} parent=5 // pred_region
      %s798 = ssub.s32 %s9, 2
      // Predicated region
      $region41: #{g21_forward.2} parent=39 // pred_check
        %p799 = pneg %p106
      $region42: #{g21_forward.2} parent=39 // pred_check_branch
        %801 = sbr.rel (%p799) target = $region44
      $region43: #{g21_forward.2} parent=39 // pred_region
        %s802 = smul.u32 32, %s15
        %p803 = scmp.lt.s32.totalorder %s802, 63
        %s804 = scalar_select %p803, %s802, 63
        %s805 = smul.addr %s804, 4
        %s806 = scalar_lea.vmem %s3, %s805
      $region44: #{g21_forward.2} parent=39 // pred_fallthru
        _
    $region40: #{g21_forward.2} parent=5 // pred_fallthru
      _
  $region6: #{g21_forward.2} parent=0 // loop_footer
    %s13 = sadd.s32 1, %s9
  $region7: #{g21_forward.2} parent=0 // loop_footer_branch
    %8 = sbr.rel target = $region3
  $region8: #{g21_forward.2} parent=0 // loop_exit
    _

// kernel: g21_forward.3
$region0: #{g21_forward.3}
  #allocation0 [shape = 'u32[]', space=smem, size = 0x4, offset = 0x4, fixed_abs, tag = 'smem constant byte address 0x4 - core index']
  #allocation1 [shape = 'u32[144,128]{1,0:T(1,128)}', space=vmem, size = 0x12000, scoped, tag = 'internal scratch']
  #allocation2 [shape = 'bf16[10,10,128]{2,1,0:T(8,128)(2,1)}', space=vmem, size = 0xa000, scoped, tag = 'scratch operand']
  #allocation3 [shape = 'bf16[10,10,256]{2,1,0:T(8,128)(2,1)}', space=vmem, size = 0x14000, scoped, tag = 'scratch operand']
  %s0 = inlined_call_operand.vmem [shape: bf16[2,9,9,256], index: 0, kind: input, shape index: {}]
  %s1 = inlined_call_operand.vmem [shape: bf16[1024,128], index: 1, kind: input, shape index: {}]
  %s2 = inlined_call_operand.vmem [shape: f32[1,128], index: 2, kind: input, shape index: {}]
  %s3 = inlined_call_operand.vmem [shape: bf16[1152,128], index: 3, kind: input, shape index: {}]
  %s4 = inlined_call_operand.vmem [shape: f32[1,128], index: 4, kind: input, shape index: {}]
  %s5 = inlined_call_operand.vmem [shape: bf16[1152,128], index: 5, kind: input, shape index: {}]
  %s6 = inlined_call_operand.vmem [shape: f32[1,128], index: 6, kind: input, shape index: {}]
  %s7 = inlined_call_operand.vmem [shape: bf16[1152,256], index: 7, kind: input, shape index: {}]
  %s8 = inlined_call_operand.vmem [shape: f32[1,256], index: 8, kind: input, shape index: {}]
  %s9 = inlined_call_operand.vmem [shape: bf16[2304,128], index: 9, kind: input, shape index: {}]
  %s10 = inlined_call_operand.vmem [shape: f32[128,128], index: 10, kind: output, shape index: {}]
  %s11 = sld [smem:[#allocation0]]
  $region73: #{g21_forward.3} parent=0
    _
  %s13 = ssub.s32 1, %s11
  %s14 = scalar_select 0, %s13, %s11
  loop: start=0, step=1, limit=4
  $region2: #{g21_forward.3} parent=0 // loop_pre_header
    _
  $region3: #{g21_forward.3} parent=0 // loop_header
    %s16 = sphi 0, %s20
    %p17 = scmp.ge.s32.totalorder %s16, 4
    %s26 = sphi 0, %s28
    %s29 = sphi 0, %s26
    %s30 = sphi 0, %s29
    %s46 = sphi 0, %s30
    %s50 = sphi 0, %s50
    %s52 = sphi 0, %s50
    %s53 = sphi 0, %s52
    %s67 = sphi 0, %s53
    %s71 = sphi 0, %s71
    %s73 = sphi 0, %s71
    %s74 = sphi 0, %s73
    %s88 = sphi 0, %s74
    %s92 = sphi 0, %s92
    %s94 = sphi 0, %s92
    %s95 = sphi 0, %s94
    %s109 = sphi 0, %s95
    %s113 = sphi 0, %s113
    %s115 = sphi 0, %s113
    %s116 = sphi 0, %s115
    %s130 = sphi 0, %s116
    %s134 = sphi 0, %s134
    %s136 = sphi 0, %s134
    %s137 = sphi 0, %s136
    %s151 = sphi 0, %s137
    %s155 = sphi 0, %s155
    %s157 = sphi 0, %s155
    %s158 = sphi 0, %s157
    %s172 = sphi 0, %s158
    %s176 = sphi 0, %s176
    %s178 = sphi 0, %s176
    %s179 = sphi 0, %s178
    %s193 = sphi 0, %s179
    %s197 = sphi 0, %s197
    %s199 = sphi 0, %s197
    %s200 = sphi 0, %s199
    %s214 = sphi 0, %s200
    %s218 = sphi 0, %s218
    %s220 = sphi 0, %s218
    %s221 = sphi 0, %s220
    %s235 = sphi 0, %s221
    %s241 = sphi 0, %s243
    %s244 = sphi 0, %s241
    %s245 = sphi 0, %s244
    %s261 = sphi 0, %s245
  $region4: #{g21_forward.3} parent=0 // loop_header_branch
    %19 = sbr.rel (%p17) target = $region8
  $region5: #{g21_forward.3} parent=0 // loop_body
    %s21 = ssub.s32 %s16, 1
    %s22 = ssub.s32 %s16, 2
    %s23 = sadd.s32 %s16, 1
    %s24 = ssub.s32 %s16, %s23
    %p25 = scmp.eq.s32.totalorder %s24, 0
    %s27 = sadd.s32 %s26, 1
    %s28 = scalar_select %p25, %s26, %s27
    %p31 = pneg %p25
    %p32 = scmp.eq.s32.totalorder %s16, 1
    %p33 = por %p31, %p32
    %p34 = scmp.ne.s32.totalorder %s26, %s29
    %p35 = scmp.eq.s32.totalorder %s16, 0
    %p36 = por %p34, %p35
    %p37 = scmp.ne.s32.totalorder %s26, %s29
    %p38 = scmp.eq.s32.totalorder %s21, 1
    %p39 = por %p37, %p38
    %p40 = scmp.ne.s32.totalorder %s29, %s30
    %p41 = scmp.eq.s32.totalorder %s21, 0
    %p42 = por %p40, %p41
    %p43 = scmp.ne.s32.totalorder %s29, %s30
    %p44 = scmp.eq.s32.totalorder %s22, 1
    %p45 = por %p43, %p44
    %p47 = scmp.ne.s32.totalorder %s30, %s46
    %p48 = scmp.eq.s32.totalorder %s22, 0
    %p49 = por %p47, %p48
    %s51 = sadd.s32 %s50, 1
    %p54 = scmp.eq.s32.totalorder %s16, 1
    %p55 = scmp.ne.s32.totalorder %s50, %s52
    %p56 = scmp.eq.s32.totalorder %s16, 0
    %p57 = por %p55, %p56
    %p58 = scmp.ne.s32.totalorder %s50, %s52
    %p59 = scmp.eq.s32.totalorder %s21, 1
    %p60 = por %p58, %p59
    %p61 = scmp.ne.s32.totalorder %s52, %s53
    %p62 = scmp.eq.s32.totalorder %s21, 0
    %p63 = por %p61, %p62
    %p64 = scmp.ne.s32.totalorder %s52, %s53
    %p65 = scmp.eq.s32.totalorder %s22, 1
    %p66 = por %p64, %p65
    %p68 = scmp.ne.s32.totalorder %s53, %s67
    %p69 = scmp.eq.s32.totalorder %s22, 0
    %p70 = por %p68, %p69
    %s72 = sadd.s32 %s71, 1
    %p75 = scmp.eq.s32.totalorder %s16, 1
    %p76 = scmp.ne.s32.totalorder %s71, %s73
    %p77 = scmp.eq.s32.totalorder %s16, 0
    %p78 = por %p76, %p77
    %p79 = scmp.ne.s32.totalorder %s71, %s73
    %p80 = scmp.eq.s32.totalorder %s21, 1
    %p81 = por %p79, %p80
    %p82 = scmp.ne.s32.totalorder %s73, %s74
    %p83 = scmp.eq.s32.totalorder %s21, 0
    %p84 = por %p82, %p83
    %p85 = scmp.ne.s32.totalorder %s73, %s74
    %p86 = scmp.eq.s32.totalorder %s22, 1
    %p87 = por %p85, %p86
    %p89 = scmp.ne.s32.totalorder %s74, %s88
    %p90 = scmp.eq.s32.totalorder %s22, 0
    %p91 = por %p89, %p90
    %s93 = sadd.s32 %s92, 1
    %p96 = scmp.eq.s32.totalorder %s16, 1
    %p97 = scmp.ne.s32.totalorder %s92, %s94
    %p98 = scmp.eq.s32.totalorder %s16, 0
    %p99 = por %p97, %p98
    %p100 = scmp.ne.s32.totalorder %s92, %s94
    %p101 = scmp.eq.s32.totalorder %s21, 1
    %p102 = por %p100, %p101
    %p103 = scmp.ne.s32.totalorder %s94, %s95
    %p104 = scmp.eq.s32.totalorder %s21, 0
    %p105 = por %p103, %p104
    %p106 = scmp.ne.s32.totalorder %s94, %s95
    %p107 = scmp.eq.s32.totalorder %s22, 1
    %p108 = por %p106, %p107
    %p110 = scmp.ne.s32.totalorder %s95, %s109
    %p111 = scmp.eq.s32.totalorder %s22, 0
    %p112 = por %p110, %p111
    %s114 = sadd.s32 %s113, 1
    %p117 = scmp.eq.s32.totalorder %s16, 1
    %p118 = scmp.ne.s32.totalorder %s113, %s115
    %p119 = scmp.eq.s32.totalorder %s16, 0
    %p120 = por %p118, %p119
    %p121 = scmp.ne.s32.totalorder %s113, %s115
    %p122 = scmp.eq.s32.totalorder %s21, 1
    %p123 = por %p121, %p122
    %p124 = scmp.ne.s32.totalorder %s115, %s116
    %p125 = scmp.eq.s32.totalorder %s21, 0
    %p126 = por %p124, %p125
    %p127 = scmp.ne.s32.totalorder %s115, %s116
    %p128 = scmp.eq.s32.totalorder %s22, 1
    %p129 = por %p127, %p128
    %p131 = scmp.ne.s32.totalorder %s116, %s130
    %p132 = scmp.eq.s32.totalorder %s22, 0
    %p133 = por %p131, %p132
    %s135 = sadd.s32 %s134, 1
    %p138 = scmp.eq.s32.totalorder %s16, 1
    %p139 = scmp.ne.s32.totalorder %s134, %s136
    %p140 = scmp.eq.s32.totalorder %s16, 0
    %p141 = por %p139, %p140
    %p142 = scmp.ne.s32.totalorder %s134, %s136
    %p143 = scmp.eq.s32.totalorder %s21, 1
    %p144 = por %p142, %p143
    %p145 = scmp.ne.s32.totalorder %s136, %s137
    %p146 = scmp.eq.s32.totalorder %s21, 0
    %p147 = por %p145, %p146
    %p148 = scmp.ne.s32.totalorder %s136, %s137
    %p149 = scmp.eq.s32.totalorder %s22, 1
    %p150 = por %p148, %p149
    %p152 = scmp.ne.s32.totalorder %s137, %s151
    %p153 = scmp.eq.s32.totalorder %s22, 0
    %p154 = por %p152, %p153
    %s156 = sadd.s32 %s155, 1
    %p159 = scmp.eq.s32.totalorder %s16, 1
    %p160 = scmp.ne.s32.totalorder %s155, %s157
    %p161 = scmp.eq.s32.totalorder %s16, 0
    %p162 = por %p160, %p161
    %p163 = scmp.ne.s32.totalorder %s155, %s157
    %p164 = scmp.eq.s32.totalorder %s21, 1
    %p165 = por %p163, %p164
    %p166 = scmp.ne.s32.totalorder %s157, %s158
    %p167 = scmp.eq.s32.totalorder %s21, 0
    %p168 = por %p166, %p167
    %p169 = scmp.ne.s32.totalorder %s157, %s158
    %p170 = scmp.eq.s32.totalorder %s22, 1
    %p171 = por %p169, %p170
    %p173 = scmp.ne.s32.totalorder %s158, %s172
    %p174 = scmp.eq.s32.totalorder %s22, 0
    %p175 = por %p173, %p174
    %s177 = sadd.s32 %s176, 1
    %p180 = scmp.eq.s32.totalorder %s16, 1
    %p181 = scmp.ne.s32.totalorder %s176, %s178
    %p182 = scmp.eq.s32.totalorder %s16, 0
    %p183 = por %p181, %p182
    %p184 = scmp.ne.s32.totalorder %s176, %s178
    %p185 = scmp.eq.s32.totalorder %s21, 1
    %p186 = por %p184, %p185
    %p187 = scmp.ne.s32.totalorder %s178, %s179
    %p188 = scmp.eq.s32.totalorder %s21, 0
    %p189 = por %p187, %p188
    %p190 = scmp.ne.s32.totalorder %s178, %s179
    %p191 = scmp.eq.s32.totalorder %s22, 1
    %p192 = por %p190, %p191
    %p194 = scmp.ne.s32.totalorder %s179, %s193
    %p195 = scmp.eq.s32.totalorder %s22, 0
    %p196 = por %p194, %p195
    %s198 = sadd.s32 %s197, 1
    %p201 = scmp.eq.s32.totalorder %s16, 1
    %p202 = scmp.ne.s32.totalorder %s197, %s199
    %p203 = scmp.eq.s32.totalorder %s16, 0
    %p204 = por %p202, %p203
    %p205 = scmp.ne.s32.totalorder %s197, %s199
    %p206 = scmp.eq.s32.totalorder %s21, 1
    %p207 = por %p205, %p206
    %p208 = scmp.ne.s32.totalorder %s199, %s200
    %p209 = scmp.eq.s32.totalorder %s21, 0
    %p210 = por %p208, %p209
    %p211 = scmp.ne.s32.totalorder %s199, %s200
    %p212 = scmp.eq.s32.totalorder %s22, 1
    %p213 = por %p211, %p212
    %p215 = scmp.ne.s32.totalorder %s200, %s214
    %p216 = scmp.eq.s32.totalorder %s22, 0
    %p217 = por %p215, %p216
    %s219 = sadd.s32 %s218, 1
    %p222 = scmp.eq.s32.totalorder %s16, 1
    %p223 = scmp.ne.s32.totalorder %s218, %s220
    %p224 = scmp.eq.s32.totalorder %s16, 0
    %p225 = por %p223, %p224
    %p226 = scmp.ne.s32.totalorder %s218, %s220
    %p227 = scmp.eq.s32.totalorder %s21, 1
    %p228 = por %p226, %p227
    %p229 = scmp.ne.s32.totalorder %s220, %s221
    %p230 = scmp.eq.s32.totalorder %s21, 0
    %p231 = por %p229, %p230
    %p232 = scmp.ne.s32.totalorder %s220, %s221
    %p233 = scmp.eq.s32.totalorder %s22, 1
    %p234 = por %p232, %p233
    %p236 = scmp.ne.s32.totalorder %s221, %s235
    %p237 = scmp.eq.s32.totalorder %s22, 0
    %p238 = por %p236, %p237
    %s239 = ssub.s32 %s16, %s23
    %p240 = scmp.eq.s32.totalorder %s239, 0
    %s242 = sadd.s32 %s241, 1
    %s243 = scalar_select %p240, %s241, %s242
    %p246 = pneg %p240
    %p247 = scmp.eq.s32.totalorder %s16, 1
    %p248 = por %p246, %p247
    %p249 = scmp.ne.s32.totalorder %s241, %s244
    %p250 = scmp.eq.s32.totalorder %s16, 0
    %p251 = por %p249, %p250
    %p252 = scmp.ne.s32.totalorder %s241, %s244
    %p253 = scmp.eq.s32.totalorder %s21, 1
    %p254 = por %p252, %p253
    %p255 = scmp.ne.s32.totalorder %s244, %s245
    %p256 = scmp.eq.s32.totalorder %s21, 0
    %p257 = por %p255, %p256
    %p258 = scmp.ne.s32.totalorder %s244, %s245
    %p259 = scmp.eq.s32.totalorder %s22, 1
    %p260 = por %p258, %p259
    %p262 = scmp.ne.s32.totalorder %s245, %s261
    %p263 = scmp.eq.s32.totalorder %s22, 0
    %p264 = por %p262, %p263
    %p265 = scmp.le.s32.totalorder 1, %s16
    %p266 = scmp.lt.s32.totalorder %s16, 3
    %p267 = pnand %p265, %p266
    %p268 = pneg %p267
    // Predicated region
    $region9: #{g21_forward.3} parent=5 // pred_check
      _
    $region10: #{g21_forward.3} parent=5 // pred_check_branch
      %270 = sbr.rel (%p267) target = $region12
    $region11: #{g21_forward.3} parent=5 // pred_region
      %s271 = ssub.s32 %s16, 1
      // Predicated region
      $region13: #{g21_forward.3} parent=11 // pred_check
        %p272 = pneg %p63
      $region14: #{g21_forward.3} parent=11 // pred_check_branch
        %274 = sbr.rel (%p272) target = $region16
      $region15: #{g21_forward.3} parent=11 // pred_region
        _
      $region16: #{g21_forward.3} parent=11 // pred_fallthru
        _
      // Predicated region
      $region17: #{g21_forward.3} parent=11 // pred_check
        %p275 = pneg %p84
      $region18: #{g21_forward.3} parent=11 // pred_check_branch
        %277 = sbr.rel (%p275) target = $region20
      $region19: #{g21_forward.3} parent=11 // pred_region
        _
      $region20: #{g21_forward.3} parent=11 // pred_fallthru
        _
      // Predicated region
      $region21: #{g21_forward.3} parent=11 // pred_check
        %p278 = pneg %p105
      $region22: #{g21_forward.3} parent=11 // pred_check_branch
        %280 = sbr.rel (%p278) target = $region24
      $region23: #{g21_forward.3} parent=11 // pred_region
        _
      $region24: #{g21_forward.3} parent=11 // pred_fallthru
        _
      // Predicated region
      $region25: #{g21_forward.3} parent=11 // pred_check
        %p281 = pneg %p126
      $region26: #{g21_forward.3} parent=11 // pred_check_branch
        %283 = sbr.rel (%p281) target = $region28
      $region27: #{g21_forward.3} parent=11 // pred_region
        _
      $region28: #{g21_forward.3} parent=11 // pred_fallthru
        _
      // Predicated region
      $region29: #{g21_forward.3} parent=11 // pred_check
        %p284 = pneg %p147
      $region30: #{g21_forward.3} parent=11 // pred_check_branch
        %286 = sbr.rel (%p284) target = $region32
      $region31: #{g21_forward.3} parent=11 // pred_region
        _
      $region32: #{g21_forward.3} parent=11 // pred_fallthru
        _
      // Predicated region
      $region33: #{g21_forward.3} parent=11 // pred_check
        %p287 = pneg %p168
      $region34: #{g21_forward.3} parent=11 // pred_check_branch
        %289 = sbr.rel (%p287) target = $region36
      $region35: #{g21_forward.3} parent=11 // pred_region
        _
      $region36: #{g21_forward.3} parent=11 // pred_fallthru
        _
      // Predicated region
      $region37: #{g21_forward.3} parent=11 // pred_check
        %p290 = pneg %p189
      $region38: #{g21_forward.3} parent=11 // pred_check_branch
        %292 = sbr.rel (%p290) target = $region40
      $region39: #{g21_forward.3} parent=11 // pred_region
        _
      $region40: #{g21_forward.3} parent=11 // pred_fallthru
        _
      // Predicated region
      $region41: #{g21_forward.3} parent=11 // pred_check
        %p293 = pneg %p210
      $region42: #{g21_forward.3} parent=11 // pred_check_branch
        %295 = sbr.rel (%p293) target = $region44
      $region43: #{g21_forward.3} parent=11 // pred_region
        _
      $region44: #{g21_forward.3} parent=11 // pred_fallthru
        _
      // Predicated region
      $region45: #{g21_forward.3} parent=11 // pred_check
        %p296 = pneg %p231
      $region46: #{g21_forward.3} parent=11 // pred_check_branch
        %298 = sbr.rel (%p296) target = $region48
      $region47: #{g21_forward.3} parent=11 // pred_region
        _
      $region48: #{g21_forward.3} parent=11 // pred_fallthru
        _
    $region12: #{g21_forward.3} parent=5 // pred_fallthru
      _
    %p299 = scmp.lt.s32.totalorder %s16, 2
    // Predicated region
    $region49: #{g21_forward.3} parent=5 // pred_check
      %p300 = pneg %p299
    $region50: #{g21_forward.3} parent=5 // pred_check_branch
      %302 = sbr.rel (%p300) target = $region52
    $region51: #{g21_forward.3} parent=5 // pred_region
      // Predicated region
      $region53: #{g21_forward.3} parent=51 // pred_check
        %p303 = pneg %p36
      $region54: #{g21_forward.3} parent=51 // pred_check_branch
        %305 = sbr.rel (%p303) target = $region56
      $region55: #{g21_forward.3} parent=51 // pred_region
        %p306 = scmp.lt.s32.totalorder %s16, 1
        %s307 = scalar_select %p306, %s16, 1
        %s308 = smul.addr %s307, 36
        %s309 = smul.addr %s308, 4
        %s310 = scalar_lea.vmem %s0, %s309
      $region56: #{g21_forward.3} parent=51 // pred_fallthru
        _
    $region52: #{g21_forward.3} parent=5 // pred_fallthru
      _
    %p311 = scmp.le.s32.totalorder 1, %s16
    %p312 = scmp.lt.s32.totalorder %s16, 3
    %p313 = pnand %p311, %p312
    %p314 = pneg %p313
    // Predicated region
    $region57: #{g21_forward.3} parent=5 // pred_check
      _
    $region58: #{g21_forward.3} parent=5 // pred_check_branch
      %316 = sbr.rel (%p313) target = $region60
    $region59: #{g21_forward.3} parent=5 // pred_region
      %s317 = ssub.s32 %s16, 1
      %p318 = scmp.lt.s32.totalorder %s21, 1
      %s319 = scalar_select %p318, %s21, 1
      %s320 = smul.addr %s319, 36
      %s321 = smul.addr %s320, 4
      %s322 = scalar_lea.vmem %s0, %s321
      %p323 = pneg %p42
      %p324 = pneg %p39
      %p325 = pneg %p63
      %p326 = pneg %p60
      %p327 = pneg %p84
      %p328 = pneg %p81
      %p329 = pneg %p105
      %p330 = pneg %p102
      %p331 = pneg %p126
      %p332 = pneg %p123
      %p333 = pneg %p147
      %p334 = pneg %p144
      %p335 = pneg %p168
      %p336 = pneg %p165
      %p337 = pneg %p189
      %p338 = pneg %p186
      %p339 = pneg %p210
      %p340 = pneg %p207
      %p341 = pneg %p231
      %p342 = pneg %p228
      %p343 = pneg %p257
      %p344 = pneg %p254
      %s345 = smul.u32 8, %s21
      %p346 = scmp.lt.s32.totalorder %s345, 15
      %s347 = scalar_select %p346, %s345, 15
      %s348 = smul.addr %s347, 8
      %s349 = scalar_lea.vmem %s10, %s348
      %p350 = scmp.lt.s32.totalorder %s21, 1
      %s351 = scalar_select %p350, %s21, 1
      %s352 = smul.addr %s351, 36
      %s353 = smul.addr %s352, 4
      %s354 = scalar_lea.vmem %s0, %s353
      %s355 = smul.u32 8, %s21
      %p356 = scmp.lt.s32.totalorder %s355, 15
      %s357 = scalar_select %p356, %s355, 15
      %s358 = smul.addr %s357, 8
      %s359 = scalar_lea.vmem %s10, %s358
      %s360 = smul.u32 8, %s21
      %362 = vst [vmem:[#allocation2] sm:$0xf] 0
      %363 = vst [vmem:[#allocation2 + $0x4] sm:$0x1] 0
      %364 = vst [vmem:[#allocation2 + $0x8] sm:$0xf] 0
      %365 = vst [vmem:[#allocation2 + $0xc] sm:$0x1] 0
      %366 = vst [vmem:[#allocation2 + $0x10] sm:$0xf] 0
      %367 = vst [vmem:[#allocation2 + $0x14] sm:$0x1] 0
      %368 = vst [vmem:[#allocation2 + $0x18] sm:$0xf] 0
      %369 = vst [vmem:[#allocation2 + $0x1c] sm:$0x1] 0
      %370 = vst [vmem:[#allocation2 + $0x20] sm:$0xf] 0
      %371 = vst [vmem:[#allocation2 + $0x24] sm:$0x1] 0
      %372 = vst [vmem:[#allocation2 + $0x28] sm:$0xf] 0
      %373 = vst [vmem:[#allocation2 + $0x2c] sm:$0x1] 0
      %374 = vst [vmem:[#allocation2 + $0x30] sm:$0xf] 0
      %375 = vst [vmem:[#allocation2 + $0x34] sm:$0x1] 0
      %376 = vst [vmem:[#allocation2 + $0x38] sm:$0xf] 0
      %377 = vst [vmem:[#allocation2 + $0x3c] sm:$0x1] 0
      %378 = vst [vmem:[#allocation2 + $0x40] sm:$0xf] 0
      %379 = vst [vmem:[#allocation2 + $0x44] sm:$0x1] 0
      %380 = vst [vmem:[#allocation2 + $0x48] sm:$0xf] 0
      %381 = vst [vmem:[#allocation2 + $0x4c] sm:$0x1] 0
      %382 = vst [vmem:[#allocation3] sm:$0xff] 0
      %383 = vst [vmem:[#allocation3 + $0x8] sm:$0x11] 0
      %384 = vst [vmem:[#allocation3 + $0x10] sm:$0xff] 0
      %385 = vst [vmem:[#allocation3 + $0x18] sm:$0x11] 0
      %386 = vst [vmem:[#allocation3 + $0x20] sm:$0xff] 0
      %387 = vst [vmem:[#allocation3 + $0x28] sm:$0x11] 0
      %388 = vst [vmem:[#allocation3 + $0x30] sm:$0xff] 0
      %389 = vst [vmem:[#allocation3 + $0x38] sm:$0x11] 0
      %390 = vst [vmem:[#allocation3 + $0x40] sm:$0xff] 0
      %391 = vst [vmem:[#allocation3 + $0x48] sm:$0x11] 0
      %392 = vst [vmem:[#allocation3 + $0x50] sm:$0xff] 0
      %393 = vst [vmem:[#allocation3 + $0x58] sm:$0x11] 0
      %394 = vst [vmem:[#allocation3 + $0x60] sm:$0xff] 0
      %395 = vst [vmem:[#allocation3 + $0x68] sm:$0x11] 0
      %396 = vst [vmem:[#allocation3 + $0x70] sm:$0xff] 0
      %397 = vst [vmem:[#allocation3 + $0x78] sm:$0x11] 0
      %398 = vst [vmem:[#allocation3 + $0x80] sm:$0xff] 0
      %399 = vst [vmem:[#allocation3 + $0x88] sm:$0x11] 0
      %400 = vst [vmem:[#allocation3 + $0x90] sm:$0xff] 0
      %401 = vst [vmem:[#allocation3 + $0x98] sm:$0x11] 0
      %v402 = vld [vmem:[%s354] sm:$0xff]
      %v403 = vld [vmem:[%s354 + $0x10] sm:$0xff]
      %v404 = vld [vmem:[%s354 + $0x20] sm:$0xff]
      %v405 = vld [vmem:[%s354 + $0x30] sm:$0xff]
      %v406 = vld [vmem:[%s354 + $0x40] sm:$0xff]
      %v407 = vld [vmem:[%s354 + $0x50] sm:$0xff]
      %v408 = vld [vmem:[%s354 + $0x60] sm:$0xff]
      %v409 = vld [vmem:[%s354 + $0x70] sm:$0xff]
      %v410 = vld [vmem:[%s1] sm:$0xf]
      %v411 = vld [vmem:[%s1 + $0x4] sm:$0xf]
      %v412 = vld [vmem:[%s1 + $0x8] sm:$0xf]
      %v413 = vld [vmem:[%s1 + $0xc] sm:$0xf]
      %v414 = vld [vmem:[%s1 + $0x10] sm:$0xf]
      %v415 = vld [vmem:[%s1 + $0x14] sm:$0xf]
      %v416 = vld [vmem:[%s1 + $0x18] sm:$0xf]
      %v417 = vld [vmem:[%s1 + $0x1c] sm:$0xf]
      %v418 = vld [vmem:[%s1 + $0x20] sm:$0xf]
      %v419 = vld [vmem:[%s1 + $0x24] sm:$0xf]
      %v420 = vld [vmem:[%s1 + $0x28] sm:$0xf]
      %v421 = vld [vmem:[%s1 + $0x2c] sm:$0xf]
      %v422 = vld [vmem:[%s1 + $0x30] sm:$0xf]
      %v423 = vld [vmem:[%s1 + $0x34] sm:$0xf]
      %v424 = vld [vmem:[%s1 + $0x38] sm:$0xf]
      %v425 = vld [vmem:[%s1 + $0x3c] sm:$0xf]
      %v426 = vld [vmem:[%s1 + $0x40] sm:$0xf]
      %v427 = vld [vmem:[%s1 + $0x44] sm:$0xf]
      %v428 = vld [vmem:[%s1 + $0x48] sm:$0xf]
      %v429 = vld [vmem:[%s1 + $0x4c] sm:$0xf]
      %v430 = vld [vmem:[%s1 + $0x50] sm:$0xf]
      %v431 = vld [vmem:[%s1 + $0x54] sm:$0xf]
      %v432 = vld [vmem:[%s1 + $0x58] sm:$0xf]
      %v433 = vld [vmem:[%s1 + $0x5c] sm:$0xf]
      %v434 = vld [vmem:[%s1 + $0x60] sm:$0xf]
      %v435 = vld [vmem:[%s1 + $0x64] sm:$0xf]
      %v436 = vld [vmem:[%s1 + $0x68] sm:$0xf]
      %v437 = vld [vmem:[%s1 + $0x6c] sm:$0xf]
      %v438 = vld [vmem:[%s1 + $0x70] sm:$0xf]
      %v439 = vld [vmem:[%s1 + $0x74] sm:$0xf]
      %v440 = vld [vmem:[%s1 + $0x78] sm:$0xf]
      %v441 = vld [vmem:[%s1 + $0x7c] sm:$0xf]
      %v442 = vld [vmem:[%s354 + $0x8] sm:$0x11]
      %v443 = vld [vmem:[%s354 + $0x18] sm:$0x11]
      %v444 = vld [vmem:[%s354 + $0x28] sm:$0x11]
      %v445 = vld [vmem:[%s354 + $0x38] sm:$0x11]
      %v446 = vld [vmem:[%s354 + $0x48] sm:$0x11]
      %v447 = vld [vmem:[%s354 + $0x58] sm:$0x11]
      %v448 = vld [vmem:[%s354 + $0x68] sm:$0x11]
      %v449 = vld [vmem:[%s354 + $0x78] sm:$0x11]
      %vm450 = vsmask.f32 3328
      %vm451 = vsmask.f32 7440
      %vm452 = vmor %vm450, %vm451
      %v454 = vshrl.u32 %v402, 16
      %v456 = vrot.slane %v454, 4
      %v457 = vshll.u32 %v402, 16
      %v459 = vrot.slane %v457, 5
      %v460 = vor.u32 %v456, %v459
      %v461 = vrot.slane %v460, 4
      %v463 = vshll.u32 %v442, 16
      %v465 = vrot.slane %v463, 5
      %v466 = vsel %vm452, %v461, %v465
      %v468 = vshrl.u32 %v403, 16
      %v470 = vrot.slane %v468, 4
      %v471 = vshll.u32 %v403, 16
      %v473 = vrot.slane %v471, 5
      %v474 = vor.u32 %v470, %v473
      %v475 = vrot.slane %v474, 4
      %v477 = vshll.u32 %v443, 16
      %v479 = vrot.slane %v477, 5
      %v480 = vsel %vm452, %v475, %v479
      %v482 = vshrl.u32 %v404, 16
      %v484 = vrot.slane %v482, 4
      %v485 = vshll.u32 %v404, 16
      %v487 = vrot.slane %v485, 5
      %v488 = vor.u32 %v484, %v487
      %v489 = vrot.slane %v488, 4
      %v491 = vshll.u32 %v444, 16
      %v493 = vrot.slane %v491, 5
      %v494 = vsel %vm452, %v489, %v493
      %v496 = vshrl.u32 %v405, 16
      %v498 = vrot.slane %v496, 4
      %v499 = vshll.u32 %v405, 16
      %v501 = vrot.slane %v499, 5
      %v502 = vor.u32 %v498, %v501
      %v503 = vrot.slane %v502, 4
      %v505 = vshll.u32 %v445, 16
      %v507 = vrot.slane %v505, 5
      %v508 = vsel %vm452, %v503, %v507
      %v510 = vshrl.u32 %v406, 16
      %v512 = vrot.slane %v510, 4
      %v513 = vshll.u32 %v406, 16
      %v515 = vrot.slane %v513, 5
      %v516 = vor.u32 %v512, %v515
      %v517 = vrot.slane %v516, 4
      %v519 = vshll.u32 %v446, 16
      %v521 = vrot.slane %v519, 5
      %v522 = vsel %vm452, %v517, %v521
      %v524 = vshrl.u32 %v407, 16
      %v526 = vrot.slane %v524, 4
      %v527 = vshll.u32 %v407, 16
      %v529 = vrot.slane %v527, 5
      %v530 = vor.u32 %v526, %v529
      %v531 = vrot.slane %v530, 4
      %v533 = vshll.u32 %v447, 16
      %v535 = vrot.slane %v533, 5
      %v536 = vsel %vm452, %v531, %v535
      %v538 = vshrl.u32 %v408, 16
      %v540 = vrot.slane %v538, 4
      %v541 = vshll.u32 %v408, 16
      %v543 = vrot.slane %v541, 5
      %v544 = vor.u32 %v540, %v543
      %v545 = vrot.slane %v544, 4
      %v547 = vshll.u32 %v448, 16
      %v549 = vrot.slane %v547, 5
      %v550 = vsel %vm452, %v545, %v549
      %v552 = vshrl.u32 %v409, 16
      %v554 = vrot.slane %v552, 4
      %v555 = vshll.u32 %v409, 16
      %v557 = vrot.slane %v555, 5
      %v558 = vor.u32 %v554, %v557
      %v559 = vrot.slane %v558, 4
      %v561 = vshll.u32 %v449, 16
      %v563 = vrot.slane %v561, 5
      %v564 = vsel %vm452, %v559, %v563
      %v565 = vld [vmem:[%s1 + $0x80] sm:$0xf]
      %v566 = vld [vmem:[%s1 + $0x84] sm:$0xf]
      %v567 = vld [vmem:[%s1 + $0x88] sm:$0xf]
      %v568 = vld [vmem:[%s1 + $0x8c] sm:$0xf]
      %v569 = vld [vmem:[%s1 + $0x90] sm:$0xf]
      %v570 = vld [vmem:[%s1 + $0x94] sm:$0xf]
      %v571 = vld [vmem:[%s1 + $0x98] sm:$0xf]
      %v572 = vld [vmem:[%s1 + $0x9c] sm:$0xf]
      %v573 = vld [vmem:[%s1 + $0xa0] sm:$0xf]
      %v574 = vld [vmem:[%s1 + $0xa4] sm:$0xf]
      %v575 = vld [vmem:[%s1 + $0xa8] sm:$0xf]
      %v576 = vld [vmem:[%s1 + $0xac] sm:$0xf]
      %v577 = vld [vmem:[%s1 + $0xb0] sm:$0xf]
      %v578 = vld [vmem:[%s1 + $0xb4] sm:$0xf]
      %v579 = vld [vmem:[%s1 + $0xb8] sm:$0xf]
      %v580 = vld [vmem:[%s1 + $0xbc] sm:$0xf]
      %v581 = vld [vmem:[%s1 + $0xc0] sm:$0xf]
      %v582 = vld [vmem:[%s1 + $0xc4] sm:$0xf]
      %v583 = vld [vmem:[%s1 + $0xc8] sm:$0xf]
      %v584 = vld [vmem:[%s1 + $0xcc] sm:$0xf]
      %v585 = vld [vmem:[%s1 + $0xd0] sm:$0xf]
      %v586 = vld [vmem:[%s1 + $0xd4] sm:$0xf]
      %v587 = vld [vmem:[%s1 + $0xd8] sm:$0xf]
      %v588 = vld [vmem:[%s1 + $0xdc] sm:$0xf]
      %v589 = vld [vmem:[%s1 + $0xe0] sm:$0xf]
      %v590 = vld [vmem:[%s1 + $0xe4] sm:$0xf]
      %v591 = vld [vmem:[%s1 + $0xe8] sm:$0xf]
      %v592 = vld [vmem:[%s1 + $0xec] sm:$0xf]
      %v593 = vld [vmem:[%s1 + $0xf0] sm:$0xf]
      %v594 = vld [vmem:[%s1 + $0xf4] sm:$0xf]
      %v595 = vld [vmem:[%s1 + $0xf8] sm:$0xf]
      %v596 = vld [vmem:[%s1 + $0xfc] sm:$0xf]
      %v597 = vunpack.c.l.b16 %v466
      %v598 = vunpack.c.h.b16 %v466
      %v599 = vunpack.c.l.b16 %v480
      %v600 = vunpack.c.h.b16 %v480
      %v601 = vunpack.c.l.b16 %v494
      %v602 = vunpack.c.h.b16 %v494
      %v603 = vunpack.c.l.b16 %v508
      %v604 = vunpack.c.h.b16 %v508
      %v605 = vunpack.c.l.b16 %v522
      %v606 = vunpack.c.h.b16 %v522
      %v607 = vunpack.c.l.b16 %v536
      %v608 = vunpack.c.h.b16 %v536
      %v609 = vunpack.c.l.b16 %v550
      %v610 = vunpack.c.h.b16 %v550
      %v611 = vunpack.c.l.b16 %v564
      %v612 = vunpack.c.h.b16 %v564
      %v613 = vpack.c.b16 %v599, %v597
      %v614 = vpack.c.b16 %v600, %v598
      %v615 = vpack.c.b16 %v603, %v601
      %v616 = vpack.c.b16 %v604, %v602
      %v617 = vpack.c.b16 %v607, %v605
      %v618 = vpack.c.b16 %v608, %v606
      %v619 = vpack.c.b16 %v611, %v609
      %v620 = vpack.c.b16 %v612, %v610
      %v661 = vunpack.c.l.b16 %v565
      %v662 = vunpack.c.l.b16 %v566
      %v663 = vunpack.c.l.b16 %v567
      %v664 = vunpack.c.l.b16 %v568
      %v665 = vunpack.c.l.b16 %v569
      %v666 = vunpack.c.l.b16 %v570
      %v667 = vunpack.c.l.b16 %v571
      %v668 = vunpack.c.l.b16 %v572
      %v669 = vunpack.c.l.b16 %v573
      %v670 = vunpack.c.l.b16 %v574
      %v671 = vunpack.c.l.b16 %v575
      %v672 = vunpack.c.l.b16 %v576
      %v673 = vunpack.c.l.b16 %v577
      %v674 = vunpack.c.l.b16 %v578
      %v675 = vunpack.c.l.b16 %v579
      %v676 = vunpack.c.l.b16 %v580
      %v677 = vunpack.c.l.b16 %v581
      %v678 = vunpack.c.l.b16 %v582
      %v679 = vunpack.c.l.b16 %v583
      %v680 = vunpack.c.l.b16 %v584
      %v681 = vunpack.c.l.b16 %v585
      %v682 = vunpack.c.l.b16 %v586
      %v683 = vunpack.c.l.b16 %v587
      %v684 = vunpack.c.l.b16 %v588
      %v685 = vunpack.c.l.b16 %v589
      %v686 = vunpack.c.l.b16 %v590
      %v687 = vunpack.c.l.b16 %v591
      %v688 = vunpack.c.l.b16 %v592
      %v689 = vunpack.c.l.b16 %v593
      %v690 = vunpack.c.l.b16 %v594
      %v691 = vunpack.c.l.b16 %v595
      %v692 = vunpack.c.l.b16 %v596
      %v693 = vpack.c.b16 %v662, %v661
      %v694 = vpack.c.b16 %v664, %v663
      %v695 = vpack.c.b16 %v666, %v665
      %v696 = vpack.c.b16 %v668, %v667
      %v697 = vpack.c.b16 %v670, %v669
      %v698 = vpack.c.b16 %v672, %v671
      %v699 = vpack.c.b16 %v674, %v673
      %v700 = vpack.c.b16 %v676, %v675
      %v701 = vpack.c.b16 %v678, %v677
      %v702 = vpack.c.b16 %v680, %v679
      %v703 = vpack.c.b16 %v682, %v681
      %v704 = vpack.c.b16 %v684, %v683
      %v705 = vpack.c.b16 %v686, %v685
      %v706 = vpack.c.b16 %v688, %v687
      %v707 = vpack.c.b16 %v690, %v689
      %v708 = vpack.c.b16 %v692, %v691
      %725 = vmatprep.subr.bf16.mxu0 0
      %726 = vmatpush1.bf16.msra.mxu0 %v693
      %727 = vmatprep.subr.bf16.mxu0 0
      %728 = vmatpush1.bf16.msra.mxu0 %v694
      %729 = vmatprep.subr.bf16.mxu0 0
      %730 = vmatpush1.bf16.msra.mxu0 %v695
      %731 = vmatprep.subr.bf16.mxu0 0
      %732 = vmatpush1.bf16.msra.mxu0 %v696
      %733 = vmatprep.subr.bf16.mxu0 0
      %734 = vmatpush1.bf16.msra.mxu0 %v697
      %735 = vmatprep.subr.bf16.mxu0 0
      %736 = vmatpush1.bf16.msra.mxu0 %v698
      %737 = vmatprep.subr.bf16.mxu0 0
      %738 = vmatpush1.bf16.msra.mxu0 %v699
      %739 = vmatprep.subr.bf16.mxu0 0
      %740 = vmatpush1.bf16.msra.mxu0 %v700
      %741 = vmatprep.subr.bf16.mxu0 0
      %742 = vmatpush1.bf16.msra.mxu0 %v701
      %743 = vmatprep.subr.bf16.mxu0 0
      %744 = vmatpush1.bf16.msra.mxu0 %v702
      %745 = vmatprep.subr.bf16.mxu0 0
      %746 = vmatpush1.bf16.msra.mxu0 %v703
      %747 = vmatprep.subr.bf16.mxu0 0
      %748 = vmatpush1.bf16.msra.mxu0 %v704
      %749 = vmatprep.subr.bf16.mxu0 0
      %750 = vmatpush1.bf16.msra.mxu0 %v705
      %751 = vmatprep.subr.bf16.mxu0 0
      %752 = vmatpush1.bf16.msra.mxu0 %v706
      %753 = vmatprep.subr.bf16.mxu0 0
      %754 = vmatpush1.bf16.msra.mxu0 %v707
      %755 = vmatprep.subr.bf16.mxu0 0
      %756 = vmatpush1.bf16.msra.mxu0 %v708
      %757 = vmatprep.mubr.bf16.mxu0 %v614
      %758 = vmatmul.mubr.bf16.gmra.mrb[0].mxu0 %v613
      %v759 = vpop.f32.mrb[0].mxu0
      %v760 = vadd.f32 0.0, %v759
      %v761 = vpop.f32.mrb[0].mxu0
      %v762 = vpop.f32.mrb[0].mxu0
      %v763 = vadd.f32 0.0, %v762
      %v764 = vpop.f32.mrb[0].mxu0
      %765 = vmatprep.mubr.bf16.mxu0 %v616
      %766 = vmatmul.mubr.bf16.gmra.mrb[0].mxu0 %v615
      %v767 = vpop.f32.mrb[0].mxu0
      %v768 = vadd.f32 0.0, %v767
      %v769 = vpop.f32.mrb[0].mxu0
      %v770 = vpop.f32.mrb[0].mxu0
      %v771 = vadd.f32 0.0, %v770
      %v772 = vpop.f32.mrb[0].mxu0
      %773 = vmatprep.mubr.bf16.mxu0 %v618
      %774 = vmatmul.mubr.bf16.gmra.mrb[0].mxu0 %v617
      %v775 = vpop.f32.mrb[0].mxu0
      %v776 = vadd.f32 0.0, %v775
      %v777 = vpop.f32.mrb[0].mxu0
      %v778 = vpop.f32.mrb[0].mxu0
      %v779 = vadd.f32 0.0, %v778
      %v780 = vpop.f32.mrb[0].mxu0
      %781 = vmatprep.mubr.bf16.mxu0 %v620
      %782 = vmatmul.mubr.bf16.gmra.mrb[0].mxu0 %v619
      %v783 = vpop.f32.mrb[0].mxu0
      %v784 = vadd.f32 0.0, %v783
      %v785 = vpop.f32.mrb[0].mxu0
      %v786 = vpop.f32.mrb[0].mxu0
      %v787 = vadd.f32 0.0, %v786
      %v788 = vpop.f32.mrb[0].mxu0
      %789 = vdwg.mxu0
      %v798 = vunpack.c.l.b16 %v402
      %v799 = vunpack.c.h.b16 %v402
      %v800 = vunpack.c.l.b16 %v403
      %v801 = vunpack.c.h.b16 %v403
      %v802 = vunpack.c.l.b16 %v404
      %v803 = vunpack.c.h.b16 %v404
      %v804 = vunpack.c.l.b16 %v405
      %v805 = vunpack.c.h.b16 %v405
      %v806 = vunpack.c.l.b16 %v406
      %v807 = vunpack.c.h.b16 %v406
      %v808 = vunpack.c.l.b16 %v407
      %v809 = vunpack.c.h.b16 %v407
      %v810 = vunpack.c.l.b16 %v408
      %v811 = vunpack.c.h.b16 %v408
      %v812 = vunpack.c.l.b16 %v409
      %v813 = vunpack.c.h.b16 %v409
      %v814 = vpack.c.b16 %v800, %v798
      %v815 = vpack.c.b16 %v801, %v799
      %v816 = vpack.c.b16 %v804, %v802
      %v817 = vpack.c.b16 %v805, %v803
      %v818 = vpack.c.b16 %v808, %v806
      %v819 = vpack.c.b16 %v809, %v807
      %v820 = vpack.c.b16 %v812, %v810
      %v821 = vpack.c.b16 %v813, %v811
      %v862 = vunpack.c.l.b16 %v410
      %v863 = vunpack.c.l.b16 %v411
      %v864 = vunpack.c.l.b16 %v412
      %v865 = vunpack.c.l.b16 %v413
      %v866 = vunpack.c.l.b16 %v414
      %v867 = vunpack.c.l.b16 %v415
      %v868 = vunpack.c.l.b16 %v416
      %v869 = vunpack.c.l.b16 %v417
      %v870 = vunpack.c.l.b16 %v418
      %v871 = vunpack.c.l.b16 %v419
      %v872 = vunpack.c.l.b16 %v420
      %v873 = vunpack.c.l.b16 %v421
      %v874 = vunpack.c.l.b16 %v422
      %v875 = vunpack.c.l.b16 %v423
      %v876 = vunpack.c.l.b16 %v424
      %v877 = vunpack.c.l.b16 %v425
      %v878 = vunpack.c.l.b16 %v426
      %v879 = vunpack.c.l.b16 %v427
      %v880 = vunpack.c.l.b16 %v428
      %v881 = vunpack.c.l.b16 %v429
      %v882 = vunpack.c.l.b16 %v430
      %v883 = vunpack.c.l.b16 %v431
      %v884 = vunpack.c.l.b16 %v432
      %v885 = vunpack.c.l.b16 %v433
      %v886 = vunpack.c.l.b16 %v434
      %v887 = vunpack.c.l.b16 %v435
      %v888 = vunpack.c.l.b16 %v436
      %v889 = vunpack.c.l.b16 %v437
      %v890 = vunpack.c.l.b16 %v438
      %v891 = vunpack.c.l.b16 %v439
      %v892 = vunpack.c.l.b16 %v440
      %v893 = vunpack.c.l.b16 %v441
      %v894 = vpack.c.b16 %v863, %v862
      %v895 = vpack.c.b16 %v865, %v864
      %v896 = vpack.c.b16 %v867, %v866
      %v897 = vpack.c.b16 %v869, %v868
      %v898 = vpack.c.b16 %v871, %v870
      %v899 = vpack.c.b16 %v873, %v872
      %v900 = vpack.c.b16 %v875, %v874
      %v901 = vpack.c.b16 %v877, %v876
      %v902 = vpack.c.b16 %v879, %v878
      %v903 = vpack.c.b16 %v881, %v880
      %v904 = vpack.c.b16 %v883, %v882
      %v905 = vpack.c.b16 %v885, %v884
      %v906 = vpack.c.b16 %v887, %v886
      %v907 = vpack.c.b16 %v889, %v888
      %v908 = vpack.c.b16 %v891, %v890
      %v909 = vpack.c.b16 %v893, %v892
      %926 = vmatprep.subr.bf16.mxu0 0
      %927 = vmatpush1.bf16.msra.mxu0 %v894
      %928 = vmatprep.subr.bf16.mxu0 0
      %929 = vmatpush1.bf16.msra.mxu0 %v895
      %930 = vmatprep.subr.bf16.mxu0 0
      %931 = vmatpush1.bf16.msra.mxu0 %v896
      %932 = vmatprep.subr.bf16.mxu0 0
      %933 = vmatpush1.bf16.msra.mxu0 %v897
      %934 = vmatprep.subr.bf16.mxu0 0
      %935 = vmatpush1.bf16.msra.mxu0 %v898
      %936 = vmatprep.subr.bf16.mxu0 0
      %937 = vmatpush1.bf16.msra.mxu0 %v899
      %938 = vmatprep.subr.bf16.mxu0 0
      %939 = vmatpush1.bf16.msra.mxu0 %v900
      %940 = vmatprep.subr.bf16.mxu0 0
      %941 = vmatpush1.bf16.msra.mxu0 %v901
      %942 = vmatprep.subr.bf16.mxu0 0
      %943 = vmatpush1.bf16.msra.mxu0 %v902
      %944 = vmatprep.subr.bf16.mxu0 0
      %945 = vmatpush1.bf16.msra.mxu0 %v903
      %946 = vmatprep.subr.bf16.mxu0 0
      %947 = vmatpush1.bf16.msra.mxu0 %v904
      %948 = vmatprep.subr.bf16.mxu0 0
      %949 = vmatpush1.bf16.msra.mxu0 %v905
      %950 = vmatprep.subr.bf16.mxu0 0
      %951 = vmatpush1.bf16.msra.mxu0 %v906
      %952 = vmatprep.subr.bf16.mxu0 0
      %953 = vmatpush1.bf16.msra.mxu0 %v907
      %954 = vmatprep.subr.bf16.mxu0 0
      %955 = vmatpush1.bf16.msra.mxu0 %v908
      %956 = vmatprep.subr.bf16.mxu0 0
      %957 = vmatpush1.bf16.msra.mxu0 %v909
      %958 = vmatprep.mubr.bf16.mxu0 %v815
      %959 = vmatmul.mubr.bf16.gmra.mrb[0].mxu0 %v814
      %v960 = vpop.f32.mrb[0].mxu0
      %v961 = vadd.f32 %v760, %v960
      %v962 = vpop.f32.mrb[0].mxu0
      %v963 = vpop.f32.mrb[0].mxu0
      %v964 = vadd.f32 %v763, %v963
      %v965 = vpop.f32.mrb[0].mxu0
      %966 = vmatprep.mubr.bf16.mxu0 %v817
      %967 = vmatmul.mubr.bf16.gmra.mrb[0].mxu0 %v816
      %v968 = vpop.f32.mrb[0].mxu0
      %v969 = vadd.f32 %v768, %v968
      %v970 = vpop.f32.mrb[0].mxu0
      %v971 = vpop.f32.mrb[0].mxu0
      %v972 = vadd.f32 %v771, %v971
      %v973 = vpop.f32.mrb[0].mxu0
      %974 = vmatprep.mubr.bf16.mxu0 %v819
      %975 = vmatmul.mubr.bf16.gmra.mrb[0].mxu0 %v818
      %v976 = vpop.f32.mrb[0].mxu0
      %v977 = vadd.f32 %v776, %v976
      %v978 = vpop.f32.mrb[0].mxu0
      %v979 = vpop.f32.mrb[0].mxu0
      %v980 = vadd.f32 %v779, %v979
      %v981 = vpop.f32.mrb[0].mxu0
      %982 = vmatprep.mubr.bf16.mxu0 %v821
      %983 = vmatmul.mubr.bf16.gmra.mrb[0].mxu0 %v820
      %v984 = vpop.f32.mrb[0].mxu0
      %v985 = vadd.f32 %v784, %v984
      %v986 = vpop.f32.mrb[0].mxu0
      %v987 = vpop.f32.mrb[0].mxu0
      %v988 = vadd.f32 %v787, %v987
      %v989 = vpop.f32.mrb[0].mxu0
      %990 = vdwg.mxu0
      %s991 = scalar_lea.vmem %s354, 16
      %v992 = vld [vmem:[%s991] sm:$0xff]
      %v993 = vld [vmem:[%s991 + $0x10] sm:$0xff]
      %v994 = vld [vmem:[%s991 + $0x20] sm:$0xff]
      %v995 = vld [vmem:[%s991 + $0x30] sm:$0xff]
      %v996 = vld [vmem:[%s991 + $0x40] sm:$0xff]
      %v997 = vld [vmem:[%s991 + $0x50] sm:$0xff]
      %v998 = vld [vmem:[%s991 + $0x60] sm:$0xff]
      %v999 = vld [vmem:[%s991 + $0x70] sm:$0xff]
      %v1000 = vld [vmem:[%s1 + $0x100] sm:$0xf]
      %v1001 = vld [vmem:[%s1 + $0x104] sm:$0xf]
      %v1002 = vld [vmem:[%s1 + $0x108] sm:$0xf]
      %v1003 = vld [vmem:[%s1 + $0x10c] sm:$0xf]
      %v1004 = vld [vmem:[%s1 + $0x110] sm:$0xf]
      %v1005 = vld [vmem:[%s1 + $0x114] sm:$0xf]
      %v1006 = vld [vmem:[%s1 + $0x118] sm:$0xf]
      %v1007 = vld [vmem:[%s1 + $0x11c] sm:$0xf]
      %v1008 = vld [vmem:[%s1 + $0x120] sm:$0xf]
      %v1009 = vld [vmem:[%s1 + $0x124] sm:$0xf]
      %v1010 = vld [vmem:[%s1 + $0x128] sm:$0xf]
      %v1011 = vld [vmem:[%s1 + $0x12c] sm:$0xf]
      %v1012 = vld [vmem:[%s1 + $0x130] sm:$0xf]
      %v1013 = vld [vmem:[%s1 + $0x134] sm:$0xf]
      %v1014 = vld [vmem:[%s1 + $0x138] sm:$0xf]
      %v1015 = vld [vmem:[%s1 + $0x13c] sm:$0xf]
      %v1016 = vld [vmem:[%s1 + $0x140] sm:$0xf]
      %v1017 = vld [vmem:[%s1 + $0x144] sm:$0xf]
      %v1018 = vld [vmem:[%s1 + $0x148] sm:$0xf]
      %v1019 = vld [vmem:[%s1 + $0x14c] sm:$0xf]
      %v1020 = vld [vmem:[%s1 + $0x150] sm:$0xf]
      %v1021 = vld [vmem:[%s1 + $0x154] sm:$0xf]
      %v1022 = vld [vmem:[%s1 + $0x158] sm:$0xf]
      %v1023 = vld [vmem:[%s1 + $0x15c] sm:$0xf]
      %v1024 = vld [vmem:[%s1 + $0x160] sm:$0xf]
      %v1025 = vld [vmem:[%s1 + $0x164] sm:$0xf]
      %v1026 = vld [vmem:[%s1 + $0x168] sm:$0xf]
      %v1027 = vld [vmem:[%s1 + $0x16c] sm:$0xf]
      %v1028 = vld [vmem:[%s1 + $0x170] sm:$0xf]
      %v1029 = vld [vmem:[%s1 + $0x174] sm:$0xf]
      %v1030 = vld [vmem:[%s1 + $0x178] sm:$0xf]
      %v1031 = vld [vmem:[%s1 + $0x17c] sm:$0xf]
      %v1040 = vunpack.c.l.b16 %v992
      %v1041 = vunpack.c.h.b16 %v992
      %v1042 = vunpack.c.l.b16 %v993
      %v1043 = vunpack.c.h.b16 %v993
      %v1044 = vunpack.c.l.b16 %v994
      %v1045 = vunpack.c.h.b16 %v994
      %v1046 = vunpack.c.l.b16 %v995
      %v1047 = vunpack.c.h.b16 %v995
      %v1048 = vunpack.c.l.b16 %v996
      %v1049 = vunpack.c.h.b16 %v996
      %v1050 = vunpack.c.l.b16 %v997
      %v1051 = vunpack.c.h.b16 %v997
      %v1052 = vunpack.c.l.b16 %v998
      %v1053 = vunpack.c.h.b16 %v998
      %v1054 = vunpack.c.l.b16 %v999
      %v1055 = vunpack.c.h.b16 %v999
      %v1056 = vpack.c.b16 %v1042, %v1040
      %v1057 = vpack.c.b16 %v1043, %v1041
      %v1058 = vpack.c.b16 %v1046, %v1044
      %v1059 = vpack.c.b16 %v1047, %v1045
      %v1060 = vpack.c.b16 %v1050, %v1048
      %v1061 = vpack.c.b16 %v1051, %v1049
      %v1062 = vpack.c.b16 %v1054, %v1052
      %v1063 = vpack.c.b16 %v1055, %v1053
      %v1104 = vunpack.c.l.b16 %v1000
      %v1105 = vunpack.c.l.b16 %v1001
      %v1106 = vunpack.c.l.b16 %v1002
      %v1107 = vunpack.c.l.b16 %v1003
      %v1108 = vunpack.c.l.b16 %v1004
      %v1109 = vunpack.c.l.b16 %v1005
      %v1110 = vunpack.c.l.b16 %v1006
      %v1111 = vunpack.c.l.b16 %v1007
      %v1112 = vunpack.c.l.b16 %v1008
      %v1113 = vunpack.c.l.b16 %v1009
      %v1114 = vunpack.c.l.b16 %v1010
      %v1115 = vunpack.c.l.b16 %v1011
      %v1116 = vunpack.c.l.b16 %v1012
      %v1117 = vunpack.c.l.b16 %v1013
      %v1118 = vunpack.c.l.b16 %v1014
      %v1119 = vunpack.c.l.b16 %v1015
      %v1120 = vunpack.c.l.b16 %v1016
      %v1121 = vunpack.c.l.b16 %v1017
      %v1122 = vunpack.c.l.b16 %v1018
      %v1123 = vunpack.c.l.b16 %v1019
      %v1124 = vunpack.c.l.b16 %v1020
      %v1125 = vunpack.c.l.b16 %v1021
      %v1126 = vunpack.c.l.b16 %v1022
      %v1127 = vunpack.c.l.b16 %v1023
      %v1128 = vunpack.c.l.b16 %v1024
      %v1129 = vunpack.c.l.b16 %v1025
      %v1130 = vunpack.c.l.b16 %v1026
      %v1131 = vunpack.c.l.b16 %v1027
      %v1132 = vunpack.c.l.b16 %v1028
      %v1133 = vunpack.c.l.b16 %v1029
      %v1134 = vunpack.c.l.b16 %v1030
      %v1135 = vunpack.c.l.b16 %v1031
      %v1136 = vpack.c.b16 %v1105, %v1104
      %v1137 = vpack.c.b16 %v1107, %v1106
      %v1138 = vpack.c.b16 %v1109, %v1108
      %v1139 = vpack.c.b16 %v1111, %v1110
      %v1140 = vpack.c.b16 %v1113, %v1112
      %v1141 = vpack.c.b16 %v1115, %v1114
      %v1142 = vpack.c.b16 %v1117, %v1116
      %v1143 = vpack.c.b16 %v1119, %v1118
      %v1144 = vpack.c.b16 %v1121, %v1120
      %v1145 = vpack.c.b16 %v1123, %v1122
      %v1146 = vpack.c.b16 %v1125, %v1124
      %v1147 = vpack.c.b16 %v1127, %v1126
      %v1148 = vpack.c.b16 %v1129, %v1128
      %v1149 = vpack.c.b16 %v1131, %v1130
      %v1150 = vpack.c.b16 %v1133, %v1132
      %v1151 = vpack.c.b16 %v1135, %v1134
      %1168 = vmatprep.subr.bf16.mxu0 0
      %1169 = vmatpush1.bf16.msra.mxu0 %v1136
      %1170 = vmatprep.subr.bf16.mxu0 0
      %1171 = vmatpush1.bf16.msra.mxu0 %v1137
      %1172 = vmatprep.subr.bf16.mxu0 0
      %1173 = vmatpush1.bf16.msra.mxu0 %v1138
      %1174 = vmatprep.subr.bf16.mxu0 0
      %1175 = vmatpush1.bf16.msra.mxu0 %v1139
      %1176 = vmatprep.subr.bf16.mxu0 0
      %1177 = vmatpush1.bf16.msra.mxu0 %v1140
      %1178 = vmatprep.subr.bf16.mxu0 0
      %1179 = vmatpush1.bf16.msra.mxu0 %v1141
      %1180 = vmatprep.subr.bf16.mxu0 0
      %1181 = vmatpush1.bf16.msra.mxu0 %v1142
      %1182 = vmatprep.subr.bf16.mxu0 0
      %1183 = vmatpush1.bf16.msra.mxu0 %v1143
      %1184 = vmatprep.subr.bf16.mxu0 0
      %1185 = vmatpush1.bf16.msra.mxu0 %v1144
      %1186 = vmatprep.subr.bf16.mxu0 0
      %1187 = vmatpush1.bf16.msra.mxu0 %v1145
      %1188 = vmatprep.subr.bf16.mxu0 0
      %1189 = vmatpush1.bf16.msra.mxu0 %v1146
      %1190 = vmatprep.subr.bf16.mxu0 0
      %1191 = vmatpush1.bf16.msra.mxu0 %v1147
      %1192 = vmatprep.subr.bf16.mxu0 0
      %1193 = vmatpush1.bf16.msra.mxu0 %v1148
      %1194 = vmatprep.subr.bf16.mxu0 0
      %1195 = vmatpush1.bf16.msra.mxu0 %v1149
      %1196 = vmatprep.subr.bf16.mxu0 0
      %1197 = vmatpush1.bf16.msra.mxu0 %v1150
      %1198 = vmatprep.subr.bf16.mxu0 0
      %1199 = vmatpush1.bf16.msra.mxu0 %v1151
      %1200 = vmatprep.mubr.bf16.mxu0 %v1057
      %1201 = vmatmul.mubr.bf16.gmra.mrb[0].mxu0 %v1056
      %v1202 = vpop.f32.mrb[0].mxu0
      %v1203 = vadd.f32 0.0, %v1202
      %v1204 = vpop.f32.mrb[0].mxu0
      %v1205 = vpop.f32.mrb[0].mxu0
      %v1206 = vadd.f32 0.0, %v1205
      %v1207 = vpop.f32.mrb[0].mxu0
      %1208 = vmatprep.mubr.bf16.mxu0 %v1059
      %1209 = vmatmul.mubr.bf16.gmra.mrb[0].mxu0 %v1058
      %v1210 = vpop.f32.mrb[0].mxu0
      %v1211 = vadd.f32 0.0, %v1210
      %v1212 = vpop.f32.mrb[0].mxu0
      %v1213 = vpop.f32.mrb[0].mxu0
      %v1214 = vadd.f32 0.0, %v1213
      %v1215 = vpop.f32.mrb[0].mxu0
      %1216 = vmatprep.mubr.bf16.mxu0 %v1061
      %1217 = vmatmul.mubr.bf16.gmra.mrb[0].mxu0 %v1060
      %v1218 = vpop.f32.mrb[0].mxu0
      %v1219 = vadd.f32 0.0, %v1218
      %v1220 = vpop.f32.mrb[0].mxu0
      %v1221 = vpop.f32.mrb[0].mxu0
      %v1222 = vadd.f32 0.0, %v1221
      %v1223 = vpop.f32.mrb[0].mxu0
      %1224 = vmatprep.mubr.bf16.mxu0 %v1063
      %1225 = vmatmul.mubr.bf16.gmra.mrb[0].mxu0 %v1062
      %v1226 = vpop.f32.mrb[0].mxu0
      %v1227 = vadd.f32 0.0, %v1226
      %v1228 = vpop.f32.mrb[0].mxu0
      %v1229 = vpop.f32.mrb[0].mxu0
      %v1230 = vadd.f32 0.0, %v1229
      %v1231 = vpop.f32.mrb[0].mxu0
      %1232 = vdwg.mxu0
      %v1233 = vadd.f32 %v961, %v1203
      %v1234 = vadd.f32 %v964, %v1206
      %v1235 = vadd.f32 %v969, %v1211
      %v1236 = vadd.f32 %v972, %v1214
      %v1237 = vadd.f32 %v977, %v1219
      %v1238 = vadd.f32 %v980, %v1222
      %v1239 = vadd.f32 %v985, %v1227
      %v1240 = vadd.f32 %v988, %v1230
      %v1241 = vld [vmem:[%s991] sm:$0xff]
      %v1242 = vld [vmem:[%s991 + $0x8] sm:$0x11]
      %v1243 = vld [vmem:[%s991 + $0x10] sm:$0xff]
      %v1244 = vld [vmem:[%s991 + $0x18] sm:$0x11]
      %v1245 = vld [vmem:[%s991 + $0x20] sm:$0xff]
      %v1246 = vld [vmem:[%s991 + $0x28] sm:$0x11]
      %v1247 = vld [vmem:[%s991 + $0x30] sm:$0xff]
      %v1248 = vld [vmem:[%s991 + $0x38] sm:$0x11]
      %v1249 = vld [vmem:[%s991 + $0x40] sm:$0xff]
      %v1250 = vld [vmem:[%s991 + $0x48] sm:$0x11]
      %v1251 = vld [vmem:[%s991 + $0x50] sm:$0xff]
      %v1252 = vld [vmem:[%s991 + $0x58] sm:$0x11]
      %v1253 = vld [vmem:[%s991 + $0x60] sm:$0xff]
      %v1254 = vld [vmem:[%s991 + $0x68] sm:$0x11]
      %v1255 = vld [vmem:[%s991 + $0x70] sm:$0xff]
      %v1256 = vld [vmem:[%s991 + $0x78] sm:$0x11]
      %v1258 = vshrl.u32 %v1241, 16
      %v1260 = vrot.slane %v1258, 4
      %v1261 = vshll.u32 %v1241, 16
      %v1263 = vrot.slane %v1261, 5
      %v1264 = vor.u32 %v1260, %v1263
      %v1265 = vrot.slane %v1264, 4
      %v1267 = vshll.u32 %v1242, 16
      %v1269 = vrot.slane %v1267, 5
      %v1270 = vsel %vm452, %v1265, %v1269
      %v1272 = vshrl.u32 %v1243, 16
      %v1274 = vrot.slane %v1272, 4
      %v1275 = vshll.u32 %v1243, 16
      %v1277 = vrot.slane %v1275, 5
      %v1278 = vor.u32 %v1274, %v1277
      %v1279 = vrot.slane %v1278, 4
      %v1281 = vshll.u32 %v1244, 16
      %v1283 = vrot.slane %v1281, 5
      %v1284 = vsel %vm452, %v1279, %v1283
      %v1286 = vshrl.u32 %v1245, 16
      %v1288 = vrot.slane %v1286, 4
      %v1289 = vshll.u32 %v1245, 16
      %v1291 = vrot.slane %v1289, 5
      %v1292 = vor.u32 %v1288, %v1291
      %v1293 = vrot.slane %v1292, 4
      %v1295 = vshll.u32 %v1246, 16
      %v1297 = vrot.slane %v1295, 5
      %v1298 = vsel %vm452, %v1293, %v1297
      %v1300 = vshrl.u32 %v1247, 16
      %v1302 = vrot.slane %v1300, 4
      %v1303 = vshll.u32 %v1247, 16
      %v1305 = vrot.slane %v1303, 5
      %v1306 = vor.u32 %v1302, %v1305
      %v1307 = vrot.slane %v1306, 4
      %v1309 = vshll.u32 %v1248, 16
      %v1311 = vrot.slane %v1309, 5
      %v1312 = vsel %vm452, %v1307, %v1311
      %v1314 = vshrl.u32 %v1249, 16
      %v1316 = vrot.slane %v1314, 4
      %v1317 = vshll.u32 %v1249, 16
      %v1319 = vrot.slane %v1317, 5
      %v1320 = vor.u32 %v1316, %v1319
      %v1321 = vrot.slane %v1320, 4
      %v1323 = vshll.u32 %v1250, 16
      %v1325 = vrot.slane %v1323, 5
      %v1326 = vsel %vm452, %v1321, %v1325
      %v1328 = vshrl.u32 %v1251, 16
      %v1330 = vrot.slane %v1328, 4
      %v1331 = vshll.u32 %v1251, 16
      %v1333 = vrot.slane %v1331, 5
      %v1334 = vor.u32 %v1330, %v1333
      %v1335 = vrot.slane %v1334, 4
      %v1337 = vshll.u32 %v1252, 16
      %v1339 = vrot.slane %v1337, 5
      %v1340 = vsel %vm452, %v1335, %v1339
      %v1342 = vshrl.u32 %v1253, 16
      %v1344 = vrot.slane %v1342, 4
      %v1345 = vshll.u32 %v1253, 16
      %v1347 = vrot.slane %v1345, 5
      %v1348 = vor.u32 %v1344, %v1347
      %v1349 = vrot.slane %v1348, 4
      %v1351 = vshll.u32 %v1254, 16
      %v1353 = vrot.slane %v1351, 5
      %v1354 = vsel %vm452, %v1349, %v1353
      %v1356 = vshrl.u32 %v1255, 16
      %v1358 = vrot.slane %v1356, 4
      %v1359 = vshll.u32 %v1255, 16
      %v1361 = vrot.slane %v1359, 5
      %v1362 = vor.u32 %v1358, %v1361
      %v1363 = vrot.slane %v1362, 4
      %v1365 = vshll.u32 %v1256, 16
      %v1367 = vrot.slane %v1365, 5
      %v1368 = vsel %vm452, %v1363, %v1367
      %v1369 = vld [vmem:[%s1 + $0x180] sm:$0xf]
      %v1370 = vld [vmem:[%s1 + $0x184] sm:$0xf]
      %v1371 = vld [vmem:[%s1 + $0x188] sm:$0xf]
      %v1372 = vld [vmem:[%s1 + $0x18c] sm:$0xf]
      %v1373 = vld [vmem:[%s1 + $0x190] sm:$0xf]
      %v1374 = vld [vmem:[%s1 + $0x194] sm:$0xf]
      %v1375 = vld [vmem:[%s1 + $0x198] sm:$0xf]
      %v1376 = vld [vmem:[%s1 + $0x19c] sm:$0xf]
      %v1377 = vld [vmem:[%s1 + $0x1a0] sm:$0xf]
      %v1378 = vld [vmem:[%s1 + $0x1a4] sm:$0xf]
      %v1379 = vld [vmem:[%s1 + $0x1a8] sm:$0xf]
      %v1380 = vld [vmem:[%s1 + $0x1ac] sm:$0xf]
      %v1381 = vld [vmem:[%s1 + $0x1b0] sm:$0xf]
      %v1382 = vld [vmem:[%s1 + $0x1b4] sm:$0xf]
      %v1383 = vld [vmem:[%s1 + $0x1b8] sm:$0xf]
      %v1384 = vld [vmem:[%s1 + $0x1bc] sm:$0xf]
      %v1385 = vld [vmem:[%s1 + $0x1c0] sm:$0xf]
      %v1386 = vld [vmem:[%s1 + $0x1c4] sm:$0xf]
      %v1387 = vld [vmem:[%s1 + $0x1c8] sm:$0xf]
      %v1388 = vld [vmem:[%s1 + $0x1cc] sm:$0xf]
      %v1389 = vld [vmem:[%s1 + $0x1d0] sm:$0xf]
      %v1390 = vld [vmem:[%s1 + $0x1d4] sm:$0xf]
      %v1391 = vld [vmem:[%s1 + $0x1d8] sm:$0xf]
      %v1392 = vld [vmem:[%s1 + $0x1dc] sm:$0xf]
      %v1393 = vld [vmem:[%s1 + $0x1e0] sm:$0xf]
      %v1394 = vld [vmem:[%s1 + $0x1e4] sm:$0xf]
      %v1395 = vld [vmem:[%s1 + $0x1e8] sm:$0xf]
      %v1396 = vld [vmem:[%s1 + $0x1ec] sm:$0xf]
      %v1397 = vld [vmem:[%s1 + $0x1f0] sm:$0xf]
      %v1398 = vld [vmem:[%s1 + $0x1f4] sm:$0xf]
      %v1399 = vld [vmem:[%s1 + $0x1f8] sm:$0xf]
      %v1400 = vld [vmem:[%s1 + $0x1fc] sm:$0xf]
      %v1401 = vunpack.c.l.b16 %v1270
      %v1402 = vunpack.c.h.b16 %v1270
      %v1403 = vunpack.c.l.b16 %v1284
      %v1404 = vunpack.c.h.b16 %v1284
      %v1405 = vunpack.c.l.b16 %v1298
      %v1406 = vunpack.c.h.b16 %v1298
      %v1407 = vunpack.c.l.b16 %v1312
      %v1408 = vunpack.c.h.b16 %v1312
      %v1409 = vunpack.c.l.b16 %v1326
      %v1410 = vunpack.c.h.b16 %v1326
      %v1411 = vunpack.c.l.b16 %v1340
      %v1412 = vunpack.c.h.b16 %v1340
      %v1413 = vunpack.c.l.b16 %v1354
      %v1414 = vunpack.c.h.b16 %v1354
      %v1415 = vunpack.c.l.b16 %v1368
      %v1416 = vunpack.c.h.b16 %v1368
      %v1417 = vpack.c.b16 %v1403, %v1401
      %v1418 = vpack.c.b16 %v1404, %v1402
      %v1419 = vpack.c.b16 %v1407, %v1405
      %v1420 = vpack.c.b16 %v1408, %v1406
      %v1421 = vpack.c.b16 %v1411, %v1409
      %v1422 = vpack.c.b16 %v1412, %v1410
      %v1423 = vpack.c.b16 %v1415, %v1413
      %v1424 = vpack.c.b16 %v1416, %v1414
      %v1465 = vunpack.c.l.b16 %v1369
      %v1466 = vunpack.c.l.b16 %v1370
      %v1467 = vunpack.c.l.b16 %v1371
      %v1468 = vunpack.c.l.b16 %v1372
      %v1469 = vunpack.c.l.b16 %v1373
      %v1470 = vunpack.c.l.b16 %v1374
      %v1471 = vunpack.c.l.b16 %v1375
      %v1472 = vunpack.c.l.b16 %v1376
      %v1473 = vunpack.c.l.b16 %v1377
      %v1474 = vunpack.c.l.b16 %v1378
      %v1475 = vunpack.c.l.b16 %v1379
      %v1476 = vunpack.c.l.b16 %v1380
      %v1477 = vunpack.c.l.b16 %v1381
      %v1478 = vunpack.c.l.b16 %v1382
      %v1479 = vunpack.c.l.b16 %v1383
      %v1480 = vunpack.c.l.b16 %v1384
      %v1481 = vunpack.c.l.b16 %v1385
      %v1482 = vunpack.c.l.b16 %v1386
      %v1483 = vunpack.c.l.b16 %v1387
      %v1484 = vunpack.c.l.b16 %v1388
      %v1485 = vunpack.c.l.b16 %v1389
      %v1486 = vunpack.c.l.b16 %v1390
      %v1487 = vunpack.c.l.b16 %v1391
      %v1488 = vunpack.c.l.b16 %v1392
      %v1489 = vunpack.c.l.b16 %v1393
      %v1490 = vunpack.c.l.b16 %v1394
      %v1491 = vunpack.c.l.b16 %v1395
      %v1492 = vunpack.c.l.b16 %v1396
      %v1493 = vunpack.c.l.b16 %v1397
      %v1494 = vunpack.c.l.b16 %v1398
      %v1495 = vunpack.c.l.b16 %v1399
      %v1496 = vunpack.c.l.b16 %v1400
      %v1497 = vpack.c.b16 %v1466, %v1465
      %v1498 = vpack.c.b16 %v1468, %v1467
      %v1499 = vpack.c.b16 %v1470, %v1469
      %v1500 = vpack.c.b16 %v1472, %v1471
      %v1501 = vpack.c.b16 %v1474, %v1473
      %v1502 = vpack.c.b16 %v1476, %v1475
      %v1503 = vpack.c.b16 %v1478, %v1477
      %v1504 = vpack.c.b16 %v1480, %v1479
      %v1505 = vpack.c.b16 %v1482, %v1481
      %v1506 = vpack.c.b16 %v1484, %v1483
      %v1507 = vpack.c.b16 %v1486, %v1485
      %v1508 = vpack.c.b16 %v1488, %v1487
      %v1509 = vpack.c.b16 %v1490, %v1489
      %v1510 = vpack.c.b16 %v1492, %v1491
      %v1511 = vpack.c.b16 %v1494, %v1493
      %v1512 = vpack.c.b16 %v1496, %v1495
      %1529 = vmatprep.subr.bf16.mxu0 0
      %1530 = vmatpush1.bf16.msra.mxu0 %v1497
      %1531 = vmatprep.subr.bf16.mxu0 0
      %1532 = vmatpush1.bf16.msra.mxu0 %v1498
      %1533 = vmatprep.subr.bf16.mxu0 0
      %1534 = vmatpush1.bf16.msra.mxu0 %v1499
      %1535 = vmatprep.subr.bf16.mxu0 0
      %1536 = vmatpush1.bf16.msra.mxu0 %v1500
      %1537 = vmatprep.subr.bf16.mxu0 0
      %1538 = vmatpush1.bf16.msra.mxu0 %v1501
      %1539 = vmatprep.subr.bf16.mxu0 0
      %1540 = vmatpush1.bf16.msra.mxu0 %v1502
      %1541 = vmatprep.subr.bf16.mxu0 0
      %1542 = vmatpush1.bf16.msra.mxu0 %v1503
      %1543 = vmatprep.subr.bf16.mxu0 0
      %1544 = vmatpush1.bf16.msra.mxu0 %v1504
      %1545 = vmatprep.subr.bf16.mxu0 0
      %1546 = vmatpush1.bf16.msra.mxu0 %v1505
      %1547 = vmatprep.subr.bf16.mxu0 0
      %1548 = vmatpush1.bf16.msra.mxu0 %v1506
      %1549 = vmatprep.subr.bf16.mxu0 0
      %1550 = vmatpush1.bf16.msra.mxu0 %v1507
      %1551 = vmatprep.subr.bf16.mxu0 0
      %1552 = vmatpush1.bf16.msra.mxu0 %v1508
      %1553 = vmatprep.subr.bf16.mxu0 0
      %1554 = vmatpush1.bf16.msra.mxu0 %v1509
      %1555 = vmatprep.subr.bf16.mxu0 0
      %1556 = vmatpush1.bf16.msra.mxu0 %v1510
      %1557 = vmatprep.subr.bf16.mxu0 0
      %1558 = vmatpush1.bf16.msra.mxu0 %v1511
      %1559 = vmatprep.subr.bf16.mxu0 0
      %1560 = vmatpush1.bf16.msra.mxu0 %v1512
      %1561 = vmatprep.mubr.bf16.mxu0 %v1418
      %1562 = vmatmul.mubr.bf16.gmra.mrb[0].mxu0 %v1417
      %v1563 = vpop.f32.mrb[0].mxu0
      %v1564 = vadd.f32 0.0, %v1563
      %v1565 = vpop.f32.mrb[0].mxu0
      %v1566 = vpop.f32.mrb[0].mxu0
      %v1567 = vadd.f32 0.0, %v1566
      %v1568 = vpop.f32.mrb[0].mxu0
      %1569 = vmatprep.mubr.bf16.mxu0 %v1420
      %1570 = vmatmul.mubr.bf16.gmra.mrb[0].mxu0 %v1419
      %v1571 = vpop.f32.mrb[0].mxu0
      %v1572 = vadd.f32 0.0, %v1571
      %v1573 = vpop.f32.mrb[0].mxu0
      %v1574 = vpop.f32.mrb[0].mxu0
      %v1575 = vadd.f32 0.0, %v1574
      %v1576 = vpop.f32.mrb[0].mxu0
      %1577 = vmatprep.mubr.bf16.mxu0 %v1422
      %1578 = vmatmul.mubr.bf16.gmra.mrb[0].mxu0 %v1421
      %v1579 = vpop.f32.mrb[0].mxu0
      %v1580 = vadd.f32 0.0, %v1579
      %v1581 = vpop.f32.mrb[0].mxu0
      %v1582 = vpop.f32.mrb[0].mxu0
      %v1583 = vadd.f32 0.0, %v1582
      %v1584 = vpop.f32.mrb[0].mxu0
      %1585 = vmatprep.mubr.bf16.mxu0 %v1424
      %1586 = vmatmul.mubr.bf16.gmra.mrb[0].mxu0 %v1423
      %v1587 = vpop.f32.mrb[0].mxu0
      %v1588 = vadd.f32 0.0, %v1587
      %v1589 = vpop.f32.mrb[0].mxu0
      %v1590 = vpop.f32.mrb[0].mxu0
      %v1591 = vadd.f32 0.0, %v1590
      %v1592 = vpop.f32.mrb[0].mxu0
      %1593 = vdwg.mxu0
      %v1594 = vadd.f32 %v1233, %v1564
      %v1595 = vadd.f32 %v1234, %v1567
      %v1596 = vadd.f32 %v1235, %v1572
      %v1597 = vadd.f32 %v1236, %v1575
      %v1598 = vadd.f32 %v1237, %v1580
      %v1599 = vadd.f32 %v1238, %v1583
      %v1600 = vadd.f32 %v1239, %v1588
      %v1601 = vadd.f32 %v1240, %v1591
      %v1602 = vld [vmem:[%s2] sm:$0x1]
      %v1604 = vlaneseq
      %v1605 = vshrl.u32 %v1604, 7
      %v1606 = vsub.s32 0, %v1605
      %v1607 = vrot.slane %v1602, %v1606
      %v1609 = vadd.f32 %v1594, %v1607
      %v1610 = vadd.f32 %v1595, %v1607
      %v1611 = vadd.f32 %v1596, %v1607
      %v1612 = vadd.f32 %v1597, %v1607
      %v1613 = vadd.f32 %v1598, %v1607
      %v1614 = vadd.f32 %v1599, %v1607
      %v1615 = vadd.f32 %v1600, %v1607
      %v1616 = vadd.f32 %v1601, %v1607
      %vm1617 = vcmp.ge.f32.partialorder %v1609, 0.0
      %vm1618 = vcmp.ge.f32.partialorder %v1610, 0.0
      %vm1619 = vcmp.ge.f32.partialorder %v1611, 0.0
      %vm1620 = vcmp.ge.f32.partialorder %v1612, 0.0
      %vm1621 = vcmp.ge.f32.partialorder %v1613, 0.0
      %vm1622 = vcmp.ge.f32.partialorder %v1614, 0.0
      %vm1623 = vcmp.ge.f32.partialorder %v1615, 0.0
      %vm1624 = vcmp.ge.f32.partialorder %v1616, 0.0
      %v1625 = vmul.f32 %v1609, 0.05
      %v1626 = vmul.f32 %v1610, 0.05
      %v1627 = vmul.f32 %v1611, 0.05
      %v1628 = vmul.f32 %v1612, 0.05
      %v1629 = vmul.f32 %v1613, 0.05
      %v1630 = vmul.f32 %v1614, 0.05
      %v1631 = vmul.f32 %v1615, 0.05
      %v1632 = vmul.f32 %v1616, 0.05
      %v1633 = vsel %vm1617, %v1609, %v1625
      %v1634 = vsel %vm1618, %v1610, %v1626
      %v1635 = vsel %vm1619, %v1611, %v1627
      %v1636 = vsel %vm1620, %v1612, %v1628
      %v1637 = vsel %vm1621, %v1613, %v1629
      %v1638 = vsel %vm1622, %v1614, %v1630
      %v1639 = vsel %vm1623, %v1615, %v1631
      %v1640 = vsel %vm1624, %v1616, %v1632
      %v1641 = vpack.c.bf16 %v1634, %v1633
      %v1642 = vpack.c.bf16 %v1636, %v1635
      %v1643 = vpack.c.bf16 %v1638, %v1637
      %v1644 = vpack.c.bf16 %v1640, %v1639
      %v1649 = vunpack.c.l.b16 %v1641
      %v1650 = vunpack.c.h.b16 %v1641
      %v1651 = vunpack.c.l.b16 %v1642
      %v1652 = vunpack.c.h.b16 %v1642
      %v1653 = vunpack.c.l.b16 %v1643
      %v1654 = vunpack.c.h.b16 %v1643
      %v1655 = vunpack.c.l.b16 %v1644
      %v1656 = vunpack.c.h.b16 %v1644
      %v1657 = vpack.c.b16 %v1649, %v1649
      %v1658 = vpack.c.b16 %v1650, %v1650
      %v1659 = vpack.c.b16 %v1651, %v1651
      %v1660 = vpack.c.b16 %v1652, %v1652
      %v1661 = vpack.c.b16 %v1653, %v1653
      %v1662 = vpack.c.b16 %v1654, %v1654
      %v1663 = vpack.c.b16 %v1655, %v1655
      %v1664 = vpack.c.b16 %v1656, %v1656
      %v1666 = vshrl.u32 %v1657, 16
      %v1668 = vrot.slane %v1666, 7
      %v1669 = vshll.u32 %v1657, 16
      %v1671 = vor.u32 %v1668, %v1669
      %v1672 = vrot.slane %v1668, 4
      %v1674 = vshrl.u32 %v1658, 16
      %v1676 = vrot.slane %v1674, 7
      %v1677 = vshll.u32 %v1658, 16
      %v1679 = vor.u32 %v1676, %v1677
      %v1680 = vrot.slane %v1676, 4
      %v1682 = vshrl.u32 %v1659, 16
      %v1684 = vrot.slane %v1682, 7
      %v1685 = vshll.u32 %v1659, 16
      %v1687 = vor.u32 %v1684, %v1685
      %v1688 = vrot.slane %v1684, 4
      %v1690 = vshrl.u32 %v1660, 16
      %v1692 = vrot.slane %v1690, 7
      %v1693 = vshll.u32 %v1660, 16
      %v1695 = vor.u32 %v1692, %v1693
      %v1696 = vrot.slane %v1692, 4
      %v1698 = vshrl.u32 %v1661, 16
      %v1700 = vrot.slane %v1698, 7
      %v1701 = vshll.u32 %v1661, 16
      %v1703 = vor.u32 %v1700, %v1701
      %v1704 = vrot.slane %v1700, 4
      %v1706 = vshrl.u32 %v1662, 16
      %v1708 = vrot.slane %v1706, 7
      %v1709 = vshll.u32 %v1662, 16
      %v1711 = vor.u32 %v1708, %v1709
      %v1712 = vrot.slane %v1708, 4
      %v1714 = vshrl.u32 %v1663, 16
      %v1716 = vrot.slane %v1714, 7
      %v1717 = vshll.u32 %v1663, 16
      %v1719 = vor.u32 %v1716, %v1717
      %v1720 = vrot.slane %v1716, 4
      %v1722 = vshrl.u32 %v1664, 16
      %v1724 = vrot.slane %v1722, 7
      %v1725 = vshll.u32 %v1664, 16
      %v1727 = vor.u32 %v1724, %v1725
      %v1728 = vrot.slane %v1724, 4
      %s1745 = scalar_lea.vmem [#allocation2], 8
      %vm1746 = vcmask 1043456
      %vm1747 = vsmask.f32 7938
      %vm1748 = vmand %vm1746, %vm1747
      %v1749 = vld [vmem:[%s1745] sm:$0xf]
      %v1750 = vsel %vm1748, %v1671, %v1749
      %1751 = vst [vmem:[%s1745] sm:$0xf] %v1750
      %vm1752 = vcmask 1040384
      %vm1753 = vsmask.f32 256
      %vm1754 = vmand %vm1752, %vm1753
      %v1755 = vld [vmem:[%s1745 + $0x4] sm:$0x1]
      %v1756 = vsel %vm1754, %v1672, %v1755
      %1757 = vst [vmem:[%s1745 + $0x4] sm:$0x1] %v1756
      %v1758 = vld [vmem:[%s1745 + $0x8] sm:$0xf]
      %v1759 = vsel %vm1748, %v1679, %v1758
      %1760 = vst [vmem:[%s1745 + $0x8] sm:$0xf] %v1759
      %v1761 = vld [vmem:[%s1745 + $0xc] sm:$0x1]
      %v1762 = vsel %vm1754, %v1680, %v1761
      %1763 = vst [vmem:[%s1745 + $0xc] sm:$0x1] %v1762
      %v1764 = vld [vmem:[%s1745 + $0x10] sm:$0xf]
      %v1765 = vsel %vm1748, %v1687, %v1764
      %1766 = vst [vmem:[%s1745 + $0x10] sm:$0xf] %v1765
      %v1767 = vld [vmem:[%s1745 + $0x14] sm:$0x1]
      %v1768 = vsel %vm1754, %v1688, %v1767
      %1769 = vst [vmem:[%s1745 + $0x14] sm:$0x1] %v1768
      %v1770 = vld [vmem:[%s1745 + $0x18] sm:$0xf]
      %v1771 = vsel %vm1748, %v1695, %v1770
      %1772 = vst [vmem:[%s1745 + $0x18] sm:$0xf] %v1771
      %v1773 = vld [vmem:[%s1745 + $0x1c] sm:$0x1]
      %v1774 = vsel %vm1754, %v1696, %v1773
      %1775 = vst [vmem:[%s1745 + $0x1c] sm:$0x1] %v1774
      %v1776 = vld [vmem:[%s1745 + $0x20] sm:$0xf]
      %v1777 = vsel %vm1748, %v1703, %v1776
      %1778 = vst [vmem:[%s1745 + $0x20] sm:$0xf] %v1777
      %v1779 = vld [vmem:[%s1745 + $0x24] sm:$0x1]
      %v1780 = vsel %vm1754, %v1704, %v1779
      %1781 = vst [vmem:[%s1745 + $0x24] sm:$0x1] %v1780
      %v1782 = vld [vmem:[%s1745 + $0x28] sm:$0xf]
      %v1783 = vsel %vm1748, %v1711, %v1782
      %1784 = vst [vmem:[%s1745 + $0x28] sm:$0xf] %v1783
      %v1785 = vld [vmem:[%s1745 + $0x2c] sm:$0x1]
      %v1786 = vsel %vm1754, %v1712, %v1785
      %1787 = vst [vmem:[%s1745 + $0x2c] sm:$0x1] %v1786
      %v1788 = vld [vmem:[%s1745 + $0x30] sm:$0xf]
      %v1789 = vsel %vm1748, %v1719, %v1788
      %1790 = vst [vmem:[%s1745 + $0x30] sm:$0xf] %v1789
      %v1791 = vld [vmem:[%s1745 + $0x34] sm:$0x1]
      %v1792 = vsel %vm1754, %v1720, %v1791
      %1793 = vst [vmem:[%s1745 + $0x34] sm:$0x1] %v1792
      %v1794 = vld [vmem:[%s1745 + $0x38] sm:$0xf]
      %v1795 = vsel %vm1748, %v1727, %v1794
      %1796 = vst [vmem:[%s1745 + $0x38] sm:$0xf] %v1795
      %v1797 = vld [vmem:[%s1745 + $0x3c] sm:$0x1]
      %v1798 = vsel %vm1754, %v1728, %v1797
      %1799 = vst [vmem:[%s1745 + $0x3c] sm:$0x1] %v1798
      %v1800 = vld [vmem:[#allocation2] sm:$0xf]
      %v1801 = vld [vmem:[#allocation2 + $0x8] sm:$0xf]
      %v1802 = vld [vmem:[#allocation2 + $0x10] sm:$0xf]
      %v1803 = vld [vmem:[#allocation2 + $0x18] sm:$0xf]
      %v1804 = vld [vmem:[#allocation2 + $0x20] sm:$0xf]
      %v1805 = vld [vmem:[#allocation2 + $0x28] sm:$0xf]
      %v1806 = vld [vmem:[#allocation2 + $0x30] sm:$0xf]
      %v1807 = vld [vmem:[#allocation2 + $0x38] sm:$0xf]
      %v1808 = vld [vmem:[%s3] sm:$0xf]
      %v1809 = vld [vmem:[%s3 + $0x4] sm:$0xf]
      %v1810 = vld [vmem:[%s3 + $0x8] sm:$0xf]
      %v1811 = vld [vmem:[%s3 + $0xc] sm:$0xf]
      %v1812 = vld [vmem:[%s3 + $0x10] sm:$0xf]
      %v1813 = vld [vmem:[%s3 + $0x14] sm:$0xf]
      %v1814 = vld [vmem:[%s3 + $0x18] sm:$0xf]
      %v1815 = vld [vmem:[%s3 + $0x1c] sm:$0xf]
      %v1816 = vld [vmem:[%s3 + $0x20] sm:$0xf]
      %v1817 = vld [vmem:[%s3 + $0x24] sm:$0xf]
      %v1818 = vld [vmem:[%s3 + $0x28] sm:$0xf]
      %v1819 = vld [vmem:[%s3 + $0x2c] sm:$0xf]
      %v1820 = vld [vmem:[%s3 + $0x30] sm:$0xf]
      %v1821 = vld [vmem:[%s3 + $0x34] sm:$0xf]
      %v1822 = vld [vmem:[%s3 + $0x38] sm:$0xf]
      %v1823 = vld [vmem:[%s3 + $0x3c] sm:$0xf]
      %v1824 = vld [vmem:[#allocation2 + $0x4] sm:$0x1]
      %v1825 = vld [vmem:[#allocation2 + $0xc] sm:$0x1]
      %v1826 = vld [vmem:[#allocation2 + $0x14] sm:$0x1]
      %v1827 = vld [vmem:[#allocation2 + $0x1c] sm:$0x1]
      %v1828 = vld [vmem:[#allocation2 + $0x24] sm:$0x1]
      %v1829 = vld [vmem:[#allocation2 + $0x2c] sm:$0x1]
      %v1830 = vld [vmem:[#allocation2 + $0x34] sm:$0x1]
      %v1831 = vld [vmem:[#allocation2 + $0x3c] sm:$0x1]
      %v1833 = vshrl.u32 %v1800, 16
      %v1835 = vrot.slane %v1833, 4
      %v1836 = vshll.u32 %v1800, 16
      %v1838 = vrot.slane %v1836, 5
      %v1839 = vor.u32 %v1835, %v1838
      %v1840 = vrot.slane %v1839, 4
      %v1842 = vshll.u32 %v1824, 16
      %v1844 = vrot.slane %v1842, 5
      %v1845 = vsel %vm452, %v1840, %v1844
      %v1847 = vshrl.u32 %v1801, 16
      %v1849 = vrot.slane %v1847, 4
      %v1850 = vshll.u32 %v1801, 16
      %v1852 = vrot.slane %v1850, 5
      %v1853 = vor.u32 %v1849, %v1852
      %v1854 = vrot.slane %v1853, 4
      %v1856 = vshll.u32 %v1825, 16
      %v1858 = vrot.slane %v1856, 5
      %v1859 = vsel %vm452, %v1854, %v1858
      %v1861 = vshrl.u32 %v1802, 16
      %v1863 = vrot.slane %v1861, 4
      %v1864 = vshll.u32 %v1802, 16
      %v1866 = vrot.slane %v1864, 5
      %v1867 = vor.u32 %v1863, %v1866
      %v1868 = vrot.slane %v1867, 4
      %v1870 = vshll.u32 %v1826, 16
      %v1872 = vrot.slane %v1870, 5
      %v1873 = vsel %vm452, %v1868, %v1872
      %v1875 = vshrl.u32 %v1803, 16
      %v1877 = vrot.slane %v1875, 4
      %v1878 = vshll.u32 %v1803, 16
      %v1880 = vrot.slane %v1878, 5
      %v1881 = vor.u32 %v1877, %v1880
      %v1882 = vrot.slane %v1881, 4
      %v1884 = vshll.u32 %v1827, 16
      %v1886 = vrot.slane %v1884, 5
      %v1887 = vsel %vm452, %v1882, %v1886
      %v1889 = vshrl.u32 %v1804, 16
      %v1891 = vrot.slane %v1889, 4
      %v1892 = vshll.u32 %v1804, 16
      %v1894 = vrot.slane %v1892, 5
      %v1895 = vor.u32 %v1891, %v1894
      %v1896 = vrot.slane %v1895, 4
      %v1898 = vshll.u32 %v1828, 16
      %v1900 = vrot.slane %v1898, 5
      %v1901 = vsel %vm452, %v1896, %v1900
      %v1903 = vshrl.u32 %v1805, 16
      %v1905 = vrot.slane %v1903, 4
      %v1906 = vshll.u32 %v1805, 16
      %v1908 = vrot.slane %v1906, 5
      %v1909 = vor.u32 %v1905, %v1908
      %v1910 = vrot.slane %v1909, 4
      %v1912 = vshll.u32 %v1829, 16
      %v1914 = vrot.slane %v1912, 5
      %v1915 = vsel %vm452, %v1910, %v1914
      %v1917 = vshrl.u32 %v1806, 16
      %v1919 = vrot.slane %v1917, 4
      %v1920 = vshll.u32 %v1806, 16
      %v1922 = vrot.slane %v1920, 5
      %v1923 = vor.u32 %v1919, %v1922
      %v1924 = vrot.slane %v1923, 4
      %v1926 = vshll.u32 %v1830, 16
      %v1928 = vrot.slane %v1926, 5
      %v1929 = vsel %vm452, %v1924, %v1928
      %v1931 = vshrl.u32 %v1807, 16
      %v1933 = vrot.slane %v1931, 4
      %v1934 = vshll.u32 %v1807, 16
      %v1936 = vrot.slane %v1934, 5
      %v1937 = vor.u32 %v1933, %v1936
      %v1938 = vrot.slane %v1937, 4
      %v1940 = vshll.u32 %v1831, 16
      %v1942 = vrot.slane %v1940, 5
      %v1943 = vsel %vm452, %v1938, %v1942
      %v1944 = vld [vmem:[%s3 + $0x40] sm:$0xf]
      %v1945 = vld [vmem:[%s3 + $0x44] sm:$0xf]
      %v1946 = vld [vmem:[%s3 + $0x48] sm:$0xf]
      %v1947 = vld [vmem:[%s3 + $0x4c] sm:$0xf]
      %v1948 = vld [vmem:[%s3 + $0x50] sm:$0xf]
      %v1949 = vld [vmem:[%s3 + $0x54] sm:$0xf]
      %v1950 = vld [vmem:[%s3 + $0x58] sm:$0xf]
      %v1951 = vld [vmem:[%s3 + $0x5c] sm:$0xf]
      %v1952 = vld [vmem:[%s3 + $0x60] sm:$0xf]
      %v1953 = vld [vmem:[%s3 + $0x64] sm:$0xf]
      %v1954 = vld [vmem:[%s3 + $0x68] sm:$0xf]
      %v1955 = vld [vmem:[%s3 + $0x6c] sm:$0xf]
      %v1956 = vld [vmem:[%s3 + $0x70] sm:$0xf]
      %v1957 = vld [vmem:[%s3 + $0x74] sm:$0xf]
      %v1958 = vld [vmem:[%s3 + $0x78] sm:$0xf]
      %v1959 = vld [vmem:[%s3 + $0x7c] sm:$0xf]
      %v1960 = vunpack.c.l.b16 %v1845
      %v1961 = vunpack.c.l.b16 %v1859
      %v1962 = vunpack.c.l.b16 %v1873
      %v1963 = vunpack.c.l.b16 %v1887
      %v1964 = vunpack.c.l.b16 %v1901
      %v1965 = vunpack.c.l.b16 %v1915
      %v1966 = vunpack.c.l.b16 %v1929
      %v1967 = vunpack.c.l.b16 %v1943
      %v1968 = vpack.c.b16 %v1961, %v1960
      %v1969 = vpack.c.b16 %v1963, %v1962
      %v1970 = vpack.c.b16 %v1965, %v1964
      %v1971 = vpack.c.b16 %v1967, %v1966
      %v1992 = vunpack.c.l.b16 %v1944
      %v1993 = vunpack.c.l.b16 %v1945
      %v1994 = vunpack.c.l.b16 %v1946
      %v1995 = vunpack.c.l.b16 %v1947
      %v1996 = vunpack.c.l.b16 %v1948
      %v1997 = vunpack.c.l.b16 %v1949
      %v1998 = vunpack.c.l.b16 %v1950
      %v1999 = vunpack.c.l.b16 %v1951
      %v2000 = vunpack.c.l.b16 %v1952
      %v2001 = vunpack.c.l.b16 %v1953
      %v2002 = vunpack.c.l.b16 %v1954
      %v2003 = vunpack.c.l.b16 %v1955
      %v2004 = vunpack.c.l.b16 %v1956
      %v2005 = vunpack.c.l.b16 %v1957
      %v2006 = vunpack.c.l.b16 %v1958
      %v2007 = vunpack.c.l.b16 %v1959
      %v2008 = vpack.c.b16 %v1993, %v1992
      %v2009 = vpack.c.b16 %v1995, %v1994
      %v2010 = vpack.c.b16 %v1997, %v1996
      %v2011 = vpack.c.b16 %v1999, %v1998
      %v2012 = vpack.c.b16 %v2001, %v2000
      %v2013 = vpack.c.b16 %v2003, %v2002
      %v2014 = vpack.c.b16 %v2005, %v2004
      %v2015 = vpack.c.b16 %v2007, %v2006
      %2024 = vmatprep.subr.bf16.mxu0 0
      %2025 = vmatpush1.bf16.msra.mxu0 %v2008
      %2026 = vmatprep.subr.bf16.mxu0 0
      %2027 = vmatpush1.bf16.msra.mxu0 %v2009
      %2028 = vmatprep.subr.bf16.mxu0 0
      %2029 = vmatpush1.bf16.msra.mxu0 %v2010
      %2030 = vmatprep.subr.bf16.mxu0 0
      %2031 = vmatpush1.bf16.msra.mxu0 %v2011
      %2032 = vmatprep.subr.bf16.mxu0 0
      %2033 = vmatpush1.bf16.msra.mxu0 %v2012
      %2034 = vmatprep.subr.bf16.mxu0 0
      %2035 = vmatpush1.bf16.msra.mxu0 %v2013
      %2036 = vmatprep.subr.bf16.mxu0 0
      %2037 = vmatpush1.bf16.msra.mxu0 %v2014
      %2038 = vmatprep.subr.bf16.mxu0 0
      %2039 = vmatpush1.bf16.msra.mxu0 %v2015
      %2040 = vmatprep.subr.bf16.mxu0 0
      %2041 = vmatpush1.bf16.msra.mxu0 0
      %2042 = vmatprep.subr.bf16.mxu0 0
      %2043 = vmatpush1.bf16.msra.mxu0 0
      %2044 = vmatprep.subr.bf16.mxu0 0
      %2045 = vmatpush1.bf16.msra.mxu0 0
      %2046 = vmatprep.subr.bf16.mxu0 0
      %2047 = vmatpush1.bf16.msra.mxu0 0
      %2048 = vmatprep.subr.bf16.mxu0 0
      %2049 = vmatpush1.bf16.msra.mxu0 0
      %2050 = vmatprep.subr.bf16.mxu0 0
      %2051 = vmatpush1.bf16.msra.mxu0 0
      %2052 = vmatprep.subr.bf16.mxu0 0
      %2053 = vmatpush1.bf16.msra.mxu0 0
      %2054 = vmatprep.subr.bf16.mxu0 0
      %2055 = vmatpush1.bf16.msra.mxu0 0
      %2056 = vmatprep.mubr.bf16.mxu0 0
      %2057 = vmatmul.mubr.bf16.gmra.mrb[0].mxu0 %v1968
      %v2058 = vpop.f32.mrb[0].mxu0
      %v2059 = vadd.f32 0.0, %v2058
      %v2060 = vpop.f32.mrb[0].mxu0
      %v2061 = vpop.f32.mrb[0].mxu0
      %v2062 = vadd.f32 0.0, %v2061
      %v2063 = vpop.f32.mrb[0].mxu0
      %2064 = vmatprep.mubr.bf16.mxu0 0
      %2065 = vmatmul.mubr.bf16.gmra.mrb[0].mxu0 %v1969
      %v2066 = vpop.f32.mrb[0].mxu0
      %v2067 = vadd.f32 0.0, %v2066
      %v2068 = vpop.f32.mrb[0].mxu0
      %v2069 = vpop.f32.mrb[0].mxu0
      %v2070 = vadd.f32 0.0, %v2069
      %v2071 = vpop.f32.mrb[0].mxu0
      %2072 = vmatprep.mubr.bf16.mxu0 0
      %2073 = vmatmul.mubr.bf16.gmra.mrb[0].mxu0 %v1970
      %v2074 = vpop.f32.mrb[0].mxu0
      %v2075 = vadd.f32 0.0, %v2074
      %v2076 = vpop.f32.mrb[0].mxu0
      %v2077 = vpop.f32.mrb[0].mxu0
      %v2078 = vadd.f32 0.0, %v2077
      %v2079 = vpop.f32.mrb[0].mxu0
      %2080 = vmatprep.mubr.bf16.mxu0 0
      %2081 = vmatmul.mubr.bf16.gmra.mrb[0].mxu0 %v1971
      %v2082 = vpop.f32.mrb[0].mxu0
      %v2083 = vadd.f32 0.0, %v2082
      %v2084 = vpop.f32.mrb[0].mxu0
      %v2085 = vpop.f32.mrb[0].mxu0
      %v2086 = vadd.f32 0.0, %v2085
      %v2087 = vpop.f32.mrb[0].mxu0
      %2088 = vdwg.mxu0
      %v2097 = vunpack.c.l.b16 %v1800
      %v2098 = vunpack.c.l.b16 %v1801
      %v2099 = vunpack.c.l.b16 %v1802
      %v2100 = vunpack.c.l.b16 %v1803
      %v2101 = vunpack.c.l.b16 %v1804
      %v2102 = vunpack.c.l.b16 %v1805
      %v2103 = vunpack.c.l.b16 %v1806
      %v2104 = vunpack.c.l.b16 %v1807
      %v2105 = vpack.c.b16 %v2098, %v2097
      %v2106 = vpack.c.b16 %v2100, %v2099
      %v2107 = vpack.c.b16 %v2102, %v2101
      %v2108 = vpack.c.b16 %v2104, %v2103
      %v2129 = vunpack.c.l.b16 %v1808
      %v2130 = vunpack.c.l.b16 %v1809
      %v2131 = vunpack.c.l.b16 %v1810
      %v2132 = vunpack.c.l.b16 %v1811
      %v2133 = vunpack.c.l.b16 %v1812
      %v2134 = vunpack.c.l.b16 %v1813
      %v2135 = vunpack.c.l.b16 %v1814
      %v2136 = vunpack.c.l.b16 %v1815
      %v2137 = vunpack.c.l.b16 %v1816
      %v2138 = vunpack.c.l.b16 %v1817
      %v2139 = vunpack.c.l.b16 %v1818
      %v2140 = vunpack.c.l.b16 %v1819
      %v2141 = vunpack.c.l.b16 %v1820
      %v2142 = vunpack.c.l.b16 %v1821
      %v2143 = vunpack.c.l.b16 %v1822
      %v2144 = vunpack.c.l.b16 %v1823
      %v2145 = vpack.c.b16 %v2130, %v2129
      %v2146 = vpack.c.b16 %v2132, %v2131
      %v2147 = vpack.c.b16 %v2134, %v2133
      %v2148 = vpack.c.b16 %v2136, %v2135
      %v2149 = vpack.c.b16 %v2138, %v2137
      %v2150 = vpack.c.b16 %v2140, %v2139
      %v2151 = vpack.c.b16 %v2142, %v2141
      %v2152 = vpack.c.b16 %v2144, %v2143
      %2161 = vmatprep.subr.bf16.mxu0 0
      %2162 = vmatpush1.bf16.msra.mxu0 %v2145
      %2163 = vmatprep.subr.bf16.mxu0 0
      %2164 = vmatpush1.bf16.msra.mxu0 %v2146
      %2165 = vmatprep.subr.bf16.mxu0 0
      %2166 = vmatpush1.bf16.msra.mxu0 %v2147
      %2167 = vmatprep.subr.bf16.mxu0 0
      %2168 = vmatpush1.bf16.msra.mxu0 %v2148
      %2169 = vmatprep.subr.bf16.mxu0 0
      %2170 = vmatpush1.bf16.msra.mxu0 %v2149
      %2171 = vmatprep.subr.bf16.mxu0 0
      %2172 = vmatpush1.bf16.msra.mxu0 %v2150
      %2173 = vmatprep.subr.bf16.mxu0 0
      %2174 = vmatpush1.bf16.msra.mxu0 %v2151
      %2175 = vmatprep.subr.bf16.mxu0 0
      %2176 = vmatpush1.bf16.msra.mxu0 %v2152
      %2177 = vmatprep.subr.bf16.mxu0 0
      %2178 = vmatpush1.bf16.msra.mxu0 0
      %2179 = vmatprep.subr.bf16.mxu0 0
      %2180 = vmatpush1.bf16.msra.mxu0 0
      %2181 = vmatprep.subr.bf16.mxu0 0
      %2182 = vmatpush1.bf16.msra.mxu0 0
      %2183 = vmatprep.subr.bf16.mxu0 0
      %2184 = vmatpush1.bf16.msra.mxu0 0
      %2185 = vmatprep.subr.bf16.mxu0 0
      %2186 = vmatpush1.bf16.msra.mxu0 0
      %2187 = vmatprep.subr.bf16.mxu0 0
      %2188 = vmatpush1.bf16.msra.mxu0 0
      %2189 = vmatprep.subr.bf16.mxu0 0
      %2190 = vmatpush1.bf16.msra.mxu0 0
      %2191 = vmatprep.subr.bf16.mxu0 0
      %2192 = vmatpush1.bf16.msra.mxu0 0
      %2193 = vmatprep.mubr.bf16.mxu0 0
      %2194 = vmatmul.mubr.bf16.gmra.mrb[0].mxu0 %v2105
      %v2195 = vpop.f32.mrb[0].mxu0
      %v2196 = vadd.f32 %v2059, %v2195
      %v2197 = vpop.f32.mrb[0].mxu0
      %v2198 = vpop.f32.mrb[0].mxu0
      %v2199 = vadd.f32 %v2062, %v2198
      %v2200 = vpop.f32.mrb[0].mxu0
      %2201 = vmatprep.mubr.bf16.mxu0 0
      %2202 = vmatmul.mubr.bf16.gmra.mrb[0].mxu0 %v2106
      %v2203 = vpop.f32.mrb[0].mxu0
      %v2204 = vadd.f32 %v2067, %v2203
      %v2205 = vpop.f32.mrb[0].mxu0
      %v2206 = vpop.f32.mrb[0].mxu0
      %v2207 = vadd.f32 %v2070, %v2206
      %v2208 = vpop.f32.mrb[0].mxu0
      %2209 = vmatprep.mubr.bf16.mxu0 0
      %2210 = vmatmul.mubr.bf16.gmra.mrb[0].mxu0 %v2107
      %v2211 = vpop.f32.mrb[0].mxu0
      %v2212 = vadd.f32 %v2075, %v2211
      %v2213 = vpop.f32.mrb[0].mxu0
      %v2214 = vpop.f32.mrb[0].mxu0
      %v2215 = vadd.f32 %v2078, %v2214
      %v2216 = vpop.f32.mrb[0].mxu0
      %2217 = vmatprep.mubr.bf16.mxu0 0
      %2218 = vmatmul.mubr.bf16.gmra.mrb[0].mxu0 %v2108
      %v2219 = vpop.f32.mrb[0].mxu0
      %v2220 = vadd.f32 %v2083, %v2219
      %v2221 = vpop.f32.mrb[0].mxu0
      %v2222 = vpop.f32.mrb[0].mxu0
      %v2223 = vadd.f32 %v2086, %v2222
      %v2224 = vpop.f32.mrb[0].mxu0
      %2225 = vdwg.mxu0
      %v2226 = vld [vmem:[#allocation2] sm:$0xe]
      %v2227 = vld [vmem:[#allocation2 + $0x8] sm:$0xe]
      %v2228 = vld [vmem:[#allocation2 + $0x10] sm:$0xe]
      %v2229 = vld [vmem:[#allocation2 + $0x18] sm:$0xe]
      %v2230 = vld [vmem:[#allocation2 + $0x20] sm:$0xe]
      %v2231 = vld [vmem:[#allocation2 + $0x28] sm:$0xe]
      %v2232 = vld [vmem:[#allocation2 + $0x30] sm:$0xe]
      %v2233 = vld [vmem:[#allocation2 + $0x38] sm:$0xe]
      %vm2250 = vcmask 1042432
      %vm2251 = vcmask 1046532
      %vm2252 = vmor %vm2250, %vm2251
      %v2253 = vrot.slane %v2226, 5
      %v2254 = vrot.slane %v2253, 4
      %v2255 = vrot.slane %v1824, 5
      %v2256 = vsel %vm2252, %v2254, %v2255
      %v2257 = vrot.slane %v2227, 5
      %v2258 = vrot.slane %v2257, 4
      %v2259 = vrot.slane %v1825, 5
      %v2260 = vsel %vm2252, %v2258, %v2259
      %v2261 = vrot.slane %v2228, 5
      %v2262 = vrot.slane %v2261, 4
      %v2263 = vrot.slane %v1826, 5
      %v2264 = vsel %vm2252, %v2262, %v2263
      %v2265 = vrot.slane %v2229, 5
      %v2266 = vrot.slane %v2265, 4
      %v2267 = vrot.slane %v1827, 5
      %v2268 = vsel %vm2252, %v2266, %v2267
      %v2269 = vrot.slane %v2230, 5
      %v2270 = vrot.slane %v2269, 4
      %v2271 = vrot.slane %v1828, 5
      %v2272 = vsel %vm2252, %v2270, %v2271
      %v2273 = vrot.slane %v2231, 5
      %v2274 = vrot.slane %v2273, 4
      %v2275 = vrot.slane %v1829, 5
      %v2276 = vsel %vm2252, %v2274, %v2275
      %v2277 = vrot.slane %v2232, 5
      %v2278 = vrot.slane %v2277, 4
      %v2279 = vrot.slane %v1830, 5
      %v2280 = vsel %vm2252, %v2278, %v2279
      %v2281 = vrot.slane %v2233, 5
      %v2282 = vrot.slane %v2281, 4
      %v2283 = vrot.slane %v1831, 5
      %v2284 = vsel %vm2252, %v2282, %v2283
      %v2285 = vld [vmem:[%s3 + $0x80] sm:$0xf]
      %v2286 = vld [vmem:[%s3 + $0x84] sm:$0xf]
      %v2287 = vld [vmem:[%s3 + $0x88] sm:$0xf]
      %v2288 = vld [vmem:[%s3 + $0x8c] sm:$0xf]
      %v2289 = vld [vmem:[%s3 + $0x90] sm:$0xf]
      %v2290 = vld [vmem:[%s3 + $0x94] sm:$0xf]
      %v2291 = vld [vmem:[%s3 + $0x98] sm:$0xf]
      %v2292 = vld [vmem:[%s3 + $0x9c] sm:$0xf]
      %v2293 = vld [vmem:[%s3 + $0xa0] sm:$0xf]
      %v2294 = vld [vmem:[%s3 + $0xa4] sm:$0xf]
      %v2295 = vld [vmem:[%s3 + $0xa8] sm:$0xf]
      %v2296 = vld [vmem:[%s3 + $0xac] sm:$0xf]
      %v2297 = vld [vmem:[%s3 + $0xb0] sm:$0xf]
      %v2298 = vld [vmem:[%s3 + $0xb4] sm:$0xf]
      %v2299 = vld [vmem:[%s3 + $0xb8] sm:$0xf]
      %v2300 = vld [vmem:[%s3 + $0xbc] sm:$0xf]
      %v2301 = vunpack.c.l.b16 %v2256
      %v2302 = vunpack.c.l.b16 %v2260
      %v2303 = vunpack.c.l.b16 %v2264
      %v2304 = vunpack.c.l.b16 %v2268
      %v2305 = vunpack.c.l.b16 %v2272
      %v2306 = vunpack.c.l.b16 %v2276
      %v2307 = vunpack.c.l.b16 %v2280
      %v2308 = vunpack.c.l.b16 %v2284
      %v2309 = vpack.c.b16 %v2302, %v2301
      %v2310 = vpack.c.b16 %v2304, %v2303
      %v2311 = vpack.c.b16 %v2306, %v2305
      %v2312 = vpack.c.b16 %v2308, %v2307
      %v2333 = vunpack.c.l.b16 %v2285
      %v2334 = vunpack.c.l.b16 %v2286
      %v2335 = vunpack.c.l.b16 %v2287
      %v2336 = vunpack.c.l.b16 %v2288
      %v2337 = vunpack.c.l.b16 %v2289
      %v2338 = vunpack.c.l.b16 %v2290
      %v2339 = vunpack.c.l.b16 %v2291
      %v2340 = vunpack.c.l.b16 %v2292
      %v2341 = vunpack.c.l.b16 %v2293
      %v2342 = vunpack.c.l.b16 %v2294
      %v2343 = vunpack.c.l.b16 %v2295
      %v2344 = vunpack.c.l.b16 %v2296
      %v2345 = vunpack.c.l.b16 %v2297
      %v2346 = vunpack.c.l.b16 %v2298
      %v2347 = vunpack.c.l.b16 %v2299
      %v2348 = vunpack.c.l.b16 %v2300
      %v2349 = vpack.c.b16 %v2334, %v2333
      %v2350 = vpack.c.b16 %v2336, %v2335
      %v2351 = vpack.c.b16 %v2338, %v2337
      %v2352 = vpack.c.b16 %v2340, %v2339
      %v2353 = vpack.c.b16 %v2342, %v2341
      %v2354 = vpack.c.b16 %v2344, %v2343
      %v2355 = vpack.c.b16 %v2346, %v2345
      %v2356 = vpack.c.b16 %v2348, %v2347
      %2365 = vmatprep.subr.bf16.mxu0 0
      %2366 = vmatpush1.bf16.msra.mxu0 %v2349
      %2367 = vmatprep.subr.bf16.mxu0 0
      %2368 = vmatpush1.bf16.msra.mxu0 %v2350
      %2369 = vmatprep.subr.bf16.mxu0 0
      %2370 = vmatpush1.bf16.msra.mxu0 %v2351
      %2371 = vmatprep.subr.bf16.mxu0 0
      %2372 = vmatpush1.bf16.msra.mxu0 %v2352
      %2373 = vmatprep.subr.bf16.mxu0 0
      %2374 = vmatpush1.bf16.msra.mxu0 %v2353
      %2375 = vmatprep.subr.bf16.mxu0 0
      %2376 = vmatpush1.bf16.msra.mxu0 %v2354
      %2377 = vmatprep.subr.bf16.mxu0 0
      %2378 = vmatpush1.bf16.msra.mxu0 %v2355
      %2379 = vmatprep.subr.bf16.mxu0 0
      %2380 = vmatpush1.bf16.msra.mxu0 %v2356
      %2381 = vmatprep.subr.bf16.mxu0 0
      %2382 = vmatpush1.bf16.msra.mxu0 0
      %2383 = vmatprep.subr.bf16.mxu0 0
      %2384 = vmatpush1.bf16.msra.mxu0 0
      %2385 = vmatprep.subr.bf16.mxu0 0
      %2386 = vmatpush1.bf16.msra.mxu0 0
      %2387 = vmatprep.subr.bf16.mxu0 0
      %2388 = vmatpush1.bf16.msra.mxu0 0
      %2389 = vmatprep.subr.bf16.mxu0 0
      %2390 = vmatpush1.bf16.msra.mxu0 0
      %2391 = vmatprep.subr.bf16.mxu0 0
      %2392 = vmatpush1.bf16.msra.mxu0 0
      %2393 = vmatprep.subr.bf16.mxu0 0
      %2394 = vmatpush1.bf16.msra.mxu0 0
      %2395 = vmatprep.subr.bf16.mxu0 0
      %2396 = vmatpush1.bf16.msra.mxu0 0
      %2397 = vmatprep.mubr.bf16.mxu0 0
      %2398 = vmatmul.mubr.bf16.gmra.mrb[0].mxu0 %v2309
      %v2399 = vpop.f32.mrb[0].mxu0
      %v2400 = vadd.f32 0.0, %v2399
      %v2401 = vpop.f32.mrb[0].mxu0
      %v2402 = vpop.f32.mrb[0].mxu0
      %v2403 = vadd.f32 0.0, %v2402
      %v2404 = vpop.f32.mrb[0].mxu0
      %2405 = vmatprep.mubr.bf16.mxu0 0
      %2406 = vmatmul.mubr.bf16.gmra.mrb[0].mxu0 %v2310
      %v2407 = vpop.f32.mrb[0].mxu0
      %v2408 = vadd.f32 0.0, %v2407
      %v2409 = vpop.f32.mrb[0].mxu0
      %v2410 = vpop.f32.mrb[0].mxu0
      %v2411 = vadd.f32 0.0, %v2410
      %v2412 = vpop.f32.mrb[0].mxu0
      %2413 = vmatprep.mubr.bf16.mxu0 0
      %2414 = vmatmul.mubr.bf16.gmra.mrb[0].mxu0 %v2311
      %v2415 = vpop.f32.mrb[0].mxu0
      %v2416 = vadd.f32 0.0, %v2415
      %v2417 = vpop.f32.mrb[0].mxu0
      %v2418 = vpop.f32.mrb[0].mxu0
      %v2419 = vadd.f32 0.0, %v2418
      %v2420 = vpop.f32.mrb[0].mxu0
      %2421 = vmatprep.mubr.bf16.mxu0 0
      %2422 = vmatmul.mubr.bf16.gmra.mrb[0].mxu0 %v2312
      %v2423 = vpop.f32.mrb[0].mxu0
      %v2424 = vadd.f32 0.0, %v2423
      %v2425 = vpop.f32.mrb[0].mxu0
      %v2426 = vpop.f32.mrb[0].mxu0
      %v2427 = vadd.f32 0.0, %v2426
      %v2428 = vpop.f32.mrb[0].mxu0
      %2429 = vdwg.mxu0
      %v2430 = vadd.f32 %v2196, %v2400
      %v2431 = vadd.f32 %v2199, %v2403
      %v2432 = vadd.f32 %v2204, %v2408
      %v2433 = vadd.f32 %v2207, %v2411
      %v2434 = vadd.f32 %v2212, %v2416
      %v2435 = vadd.f32 %v2215, %v2419
      %v2436 = vadd.f32 %v2220, %v2424
      %v2437 = vadd.f32 %v2223, %v2427
      %v2438 = vld [vmem:[%s1745] sm:$0xf]
      %v2439 = vld [vmem:[%s1745 + $0x8] sm:$0xf]
      %v2440 = vld [vmem:[%s1745 + $0x10] sm:$0xf]
      %v2441 = vld [vmem:[%s1745 + $0x18] sm:$0xf]
      %v2442 = vld [vmem:[%s1745 + $0x20] sm:$0xf]
      %v2443 = vld [vmem:[%s1745 + $0x28] sm:$0xf]
      %v2444 = vld [vmem:[%s1745 + $0x30] sm:$0xf]
      %v2445 = vld [vmem:[%s1745 + $0x38] sm:$0xf]
      %v2446 = vld [vmem:[%s3 + $0xc0] sm:$0xf]
      %v2447 = vld [vmem:[%s3 + $0xc4] sm:$0xf]
      %v2448 = vld [vmem:[%s3 + $0xc8] sm:$0xf]
      %v2449 = vld [vmem:[%s3 + $0xcc] sm:$0xf]
      %v2450 = vld [vmem:[%s3 + $0xd0] sm:$0xf]
      %v2451 = vld [vmem:[%s3 + $0xd4] sm:$0xf]
      %v2452 = vld [vmem:[%s3 + $0xd8] sm:$0xf]
      %v2453 = vld [vmem:[%s3 + $0xdc] sm:$0xf]
      %v2454 = vld [vmem:[%s3 + $0xe0] sm:$0xf]
      %v2455 = vld [vmem:[%s3 + $0xe4] sm:$0xf]
      %v2456 = vld [vmem:[%s3 + $0xe8] sm:$0xf]
      %v2457 = vld [vmem:[%s3 + $0xec] sm:$0xf]
      %v2458 = vld [vmem:[%s3 + $0xf0] sm:$0xf]
      %v2459 = vld [vmem:[%s3 + $0xf4] sm:$0xf]
      %v2460 = vld [vmem:[%s3 + $0xf8] sm:$0xf]
      %v2461 = vld [vmem:[%s3 + $0xfc] sm:$0xf]
      %v2470 = vunpack.c.l.b16 %v2438
      %v2471 = vunpack.c.l.b16 %v2439
      %v2472 = vunpack.c.l.b16 %v2440
      %v2473 = vunpack.c.l.b16 %v2441
      %v2474 = vunpack.c.l.b16 %v2442
      %v2475 = vunpack.c.l.b16 %v2443
      %v2476 = vunpack.c.l.b16 %v2444
      %v2477 = vunpack.c.l.b16 %v2445
      %v2478 = vpack.c.b16 %v2471, %v2470
      %v2479 = vpack.c.b16 %v2473, %v2472
      %v2480 = vpack.c.b16 %v2475, %v2474
      %v2481 = vpack.c.b16 %v2477, %v2476
      %v2502 = vunpack.c.l.b16 %v2446
      %v2503 = vunpack.c.l.b16 %v2447
      %v2504 = vunpack.c.l.b16 %v2448
      %v2505 = vunpack.c.l.b16 %v2449
      %v2506 = vunpack.c.l.b16 %v2450
      %v2507 = vunpack.c.l.b16 %v2451
      %v2508 = vunpack.c.l.b16 %v2452
      %v2509 = vunpack.c.l.b16 %v2453
      %v2510 = vunpack.c.l.b16 %v2454
      %v2511 = vunpack.c.l.b16 %v2455
      %v2512 = vunpack.c.l.b16 %v2456
      %v2513 = vunpack.c.l.b16 %v2457
      %v2514 = vunpack.c.l.b16 %v2458
      %v2515 = vunpack.c.l.b16 %v2459
      %v2516 = vunpack.c.l.b16 %v2460
      %v2517 = vunpack.c.l.b16 %v2461
      %v2518 = vpack.c.b16 %v2503, %v2502
      %v2519 = vpack.c.b16 %v2505, %v2504
      %v2520 = vpack.c.b16 %v2507, %v2506
      %v2521 = vpack.c.b16 %v2509, %v2508
      %v2522 = vpack.c.b16 %v2511, %v2510
      %v2523 = vpack.c.b16 %v2513, %v2512
      %v2524 = vpack.c.b16 %v2515, %v2514
      %v2525 = vpack.c.b16 %v2517, %v2516
      %2534 = vmatprep.subr.bf16.mxu0 0
      %2535 = vmatpush1.bf16.msra.mxu0 %v2518
      %2536 = vmatprep.subr.bf16.mxu0 0
      %2537 = vmatpush1.bf16.msra.mxu0 %v2519
      %2538 = vmatprep.subr.bf16.mxu0 0
      %2539 = vmatpush1.bf16.msra.mxu0 %v2520
      %2540 = vmatprep.subr.bf16.mxu0 0
      %2541 = vmatpush1.bf16.msra.mxu0 %v2521
      %2542 = vmatprep.subr.bf16.mxu0 0
      %2543 = vmatpush1.bf16.msra.mxu0 %v2522
      %2544 = vmatprep.subr.bf16.mxu0 0
      %2545 = vmatpush1.bf16.msra.mxu0 %v2523
      %2546 = vmatprep.subr.bf16.mxu0 0
      %2547 = vmatpush1.bf16.msra.mxu0 %v2524
      %2548 = vmatprep.subr.bf16.mxu0 0
      %2549 = vmatpush1.bf16.msra.mxu0 %v2525
      %2550 = vmatprep.subr.bf16.mxu0 0
      %2551 = vmatpush1.bf16.msra.mxu0 0
      %2552 = vmatprep.subr.bf16.mxu0 0
      %2553 = vmatpush1.bf16.msra.mxu0 0
      %2554 = vmatprep.subr.bf16.mxu0 0
      %2555 = vmatpush1.bf16.msra.mxu0 0
      %2556 = vmatprep.subr.bf16.mxu0 0
      %2557 = vmatpush1.bf16.msra.mxu0 0
      %2558 = vmatprep.subr.bf16.mxu0 0
      %2559 = vmatpush1.bf16.msra.mxu0 0
      %2560 = vmatprep.subr.bf16.mxu0 0
      %2561 = vmatpush1.bf16.msra.mxu0 0
      %2562 = vmatprep.subr.bf16.mxu0 0
      %2563 = vmatpush1.bf16.msra.mxu0 0
      %2564 = vmatprep.subr.bf16.mxu0 0
      %2565 = vmatpush1.bf16.msra.mxu0 0
      %2566 = vmatprep.mubr.bf16.mxu0 0
      %2567 = vmatmul.mubr.bf16.gmra.mrb[0].mxu0 %v2478
      %v2568 = vpop.f32.mrb[0].mxu0
      %v2569 = vadd.f32 0.0, %v2568
      %v2570 = vpop.f32.mrb[0].mxu0
      %v2571 = vpop.f32.mrb[0].mxu0
      %v2572 = vadd.f32 0.0, %v2571
      %v2573 = vpop.f32.mrb[0].mxu0
      %2574 = vmatprep.mubr.bf16.mxu0 0
      %2575 = vmatmul.mubr.bf16.gmra.mrb[0].mxu0 %v2479
      %v2576 = vpop.f32.mrb[0].mxu0
      %v2577 = vadd.f32 0.0, %v2576
      %v2578 = vpop.f32.mrb[0].mxu0
      %v2579 = vpop.f32.mrb[0].mxu0
      %v2580 = vadd.f32 0.0, %v2579
      %v2581 = vpop.f32.mrb[0].mxu0
      %2582 = vmatprep.mubr.bf16.mxu0 0
      %2583 = vmatmul.mubr.bf16.gmra.mrb[0].mxu0 %v2480
      %v2584 = vpop.f32.mrb[0].mxu0
      %v2585 = vadd.f32 0.0, %v2584
      %v2586 = vpop.f32.mrb[0].mxu0
      %v2587 = vpop.f32.mrb[0].mxu0
      %v2588 = vadd.f32 0.0, %v2587
      %v2589 = vpop.f32.mrb[0].mxu0
      %2590 = vmatprep.mubr.bf16.mxu0 0
      %2591 = vmatmul.mubr.bf16.gmra.mrb[0].mxu0 %v2481
      %v2592 = vpop.f32.mrb[0].mxu0
      %v2593 = vadd.f32 0.0, %v2592
      %v2594 = vpop.f32.mrb[0].mxu0
      %v2595 = vpop.f32.mrb[0].mxu0
      %v2596 = vadd.f32 0.0, %v2595
      %v2597 = vpop.f32.mrb[0].mxu0
      %2598 = vdwg.mxu0
      %v2599 = vadd.f32 %v2430, %v2569
      %v2600 = vadd.f32 %v2431, %v2572
      %v2601 = vadd.f32 %v2432, %v2577
      %v2602 = vadd.f32 %v2433, %v2580
      %v2603 = vadd.f32 %v2434, %v2585
      %v2604 = vadd.f32 %v2435, %v2588
      %v2605 = vadd.f32 %v2436, %v2593
      %v2606 = vadd.f32 %v2437, %v2596
      %v2607 = vld [vmem:[%s1745] sm:$0xf]
      %v2608 = vld [vmem:[%s1745 + $0x4] sm:$0x1]
      %v2609 = vld [vmem:[%s1745 + $0x8] sm:$0xf]
      %v2610 = vld [vmem:[%s1745 + $0xc] sm:$0x1]
      %v2611 = vld [vmem:[%s1745 + $0x10] sm:$0xf]
      %v2612 = vld [vmem:[%s1745 + $0x14] sm:$0x1]
      %v2613 = vld [vmem:[%s1745 + $0x18] sm:$0xf]
      %v2614 = vld [vmem:[%s1745 + $0x1c] sm:$0x1]
      %v2615 = vld [vmem:[%s1745 + $0x20] sm:$0xf]
      %v2616 = vld [vmem:[%s1745 + $0x24] sm:$0x1]
      %v2617 = vld [vmem:[%s1745 + $0x28] sm:$0xf]
      %v2618 = vld [vmem:[%s1745 + $0x2c] sm:$0x1]
      %v2619 = vld [vmem:[%s1745 + $0x30] sm:$0xf]
      %v2620 = vld [vmem:[%s1745 + $0x34] sm:$0x1]
      %v2621 = vld [vmem:[%s1745 + $0x38] sm:$0xf]
      %v2622 = vld [vmem:[%s1745 + $0x3c] sm:$0x1]
      %v2624 = vshrl.u32 %v2607, 16
      %v2626 = vrot.slane %v2624, 4
      %v2627 = vshll.u32 %v2607, 16
      %v2629 = vrot.slane %v2627, 5
      %v2630 = vor.u32 %v2626, %v2629
      %v2631 = vrot.slane %v2630, 4
      %v2633 = vshll.u32 %v2608, 16
      %v2635 = vrot.slane %v2633, 5
      %v2636 = vsel %vm452, %v2631, %v2635
      %v2638 = vshrl.u32 %v2609, 16
      %v2640 = vrot.slane %v2638, 4
      %v2641 = vshll.u32 %v2609, 16
      %v2643 = vrot.slane %v2641, 5
      %v2644 = vor.u32 %v2640, %v2643
      %v2645 = vrot.slane %v2644, 4
      %v2647 = vshll.u32 %v2610, 16
      %v2649 = vrot.slane %v2647, 5
      %v2650 = vsel %vm452, %v2645, %v2649
      %v2652 = vshrl.u32 %v2611, 16
      %v2654 = vrot.slane %v2652, 4
      %v2655 = vshll.u32 %v2611, 16
      %v2657 = vrot.slane %v2655, 5
      %v2658 = vor.u32 %v2654, %v2657
      %v2659 = vrot.slane %v2658, 4
      %v2661 = vshll.u32 %v2612, 16
      %v2663 = vrot.slane %v2661, 5
      %v2664 = vsel %vm452, %v2659, %v2663
      %v2666 = vshrl.u32 %v2613, 16
      %v2668 = vrot.slane %v2666, 4
      %v2669 = vshll.u32 %v2613, 16
      %v2671 = vrot.slane %v2669, 5
      %v2672 = vor.u32 %v2668, %v2671
      %v2673 = vrot.slane %v2672, 4
      %v2675 = vshll.u32 %v2614, 16
      %v2677 = vrot.slane %v2675, 5
      %v2678 = vsel %vm452, %v2673, %v2677
      %v2680 = vshrl.u32 %v2615, 16
      %v2682 = vrot.slane %v2680, 4
      %v2683 = vshll.u32 %v2615, 16
      %v2685 = vrot.slane %v2683, 5
      %v2686 = vor.u32 %v2682, %v2685
      %v2687 = vrot.slane %v2686, 4
      %v2689 = vshll.u32 %v2616, 16
      %v2691 = vrot.slane %v2689, 5
      %v2692 = vsel %vm452, %v2687, %v2691
      %v2694 = vshrl.u32 %v2617, 16
      %v2696 = vrot.slane %v2694, 4
      %v2697 = vshll.u32 %v2617, 16
      %v2699 = vrot.slane %v2697, 5
      %v2700 = vor.u32 %v2696, %v2699
      %v2701 = vrot.slane %v2700, 4
      %v2703 = vshll.u32 %v2618, 16
      %v2705 = vrot.slane %v2703, 5
      %v2706 = vsel %vm452, %v2701, %v2705
      %v2708 = vshrl.u32 %v2619, 16
      %v2710 = vrot.slane %v2708, 4
      %v2711 = vshll.u32 %v2619, 16
      %v2713 = vrot.slane %v2711, 5
      %v2714 = vor.u32 %v2710, %v2713
      %v2715 = vrot.slane %v2714, 4
      %v2717 = vshll.u32 %v2620, 16
      %v2719 = vrot.slane %v2717, 5
      %v2720 = vsel %vm452, %v2715, %v2719
      %v2722 = vshrl.u32 %v2621, 16
      %v2724 = vrot.slane %v2722, 4
      %v2725 = vshll.u32 %v2621, 16
      %v2727 = vrot.slane %v2725, 5
      %v2728 = vor.u32 %v2724, %v2727
      %v2729 = vrot.slane %v2728, 4
      %v2731 = vshll.u32 %v2622, 16
      %v2733 = vrot.slane %v2731, 5
      %v2734 = vsel %vm452, %v2729, %v2733
      %v2735 = vld [vmem:[%s3 + $0x100] sm:$0xf]
      %v2736 = vld [vmem:[%s3 + $0x104] sm:$0xf]
      %v2737 = vld [vmem:[%s3 + $0x108] sm:$0xf]
      %v2738 = vld [vmem:[%s3 + $0x10c] sm:$0xf]
      %v2739 = vld [vmem:[%s3 + $0x110] sm:$0xf]
      %v2740 = vld [vmem:[%s3 + $0x114] sm:$0xf]
      %v2741 = vld [vmem:[%s3 + $0x118] sm:$0xf]
      %v2742 = vld [vmem:[%s3 + $0x11c] sm:$0xf]
      %v2743 = vld [vmem:[%s3 + $0x120] sm:$0xf]
      %v2744 = vld [vmem:[%s3 + $0x124] sm:$0xf]
      %v2745 = vld [vmem:[%s3 + $0x128] sm:$0xf]
      %v2746 = vld [vmem:[%s3 + $0x12c] sm:$0xf]
      %v2747 = vld [vmem:[%s3 + $0x130] sm:$0xf]
      %v2748 = vld [vmem:[%s3 + $0x134] sm:$0xf]
      %v2749 = vld [vmem:[%s3 + $0x138] sm:$0xf]
      %v2750 = vld [vmem:[%s3 + $0x13c] sm:$0xf]
      %v2751 = vunpack.c.l.b16 %v2636
      %v2752 = vunpack.c.l.b16 %v2650
      %v2753 = vunpack.c.l.b16 %v2664
      %v2754 = vunpack.c.l.b16 %v2678
      %v2755 = vunpack.c.l.b16 %v2692
      %v2756 = vunpack.c.l.b16 %v2706
      %v2757 = vunpack.c.l.b16 %v2720
      %v2758 = vunpack.c.l.b16 %v2734
      %v2759 = vpack.c.b16 %v2752, %v2751
      %v2760 = vpack.c.b16 %v2754, %v2753
      %v2761 = vpack.c.b16 %v2756, %v2755
      %v2762 = vpack.c.b16 %v2758, %v2757
      %v2783 = vunpack.c.l.b16 %v2735
      %v2784 = vunpack.c.l.b16 %v2736
      %v2785 = vunpack.c.l.b16 %v2737
      %v2786 = vunpack.c.l.b16 %v2738
      %v2787 = vunpack.c.l.b16 %v2739
      %v2788 = vunpack.c.l.b16 %v2740
      %v2789 = vunpack.c.l.b16 %v2741
      %v2790 = vunpack.c.l.b16 %v2742
      %v2791 = vunpack.c.l.b16 %v2743
      %v2792 = vunpack.c.l.b16 %v2744
      %v2793 = vunpack.c.l.b16 %v2745
      %v2794 = vunpack.c.l.b16 %v2746
      %v2795 = vunpack.c.l.b16 %v2747
      %v2796 = vunpack.c.l.b16 %v2748
      %v2797 = vunpack.c.l.b16 %v2749
      %v2798 = vunpack.c.l.b16 %v2750
      %v2799 = vpack.c.b16 %v2784, %v2783
      %v2800 = vpack.c.b16 %v2786, %v2785
      %v2801 = vpack.c.b16 %v2788, %v2787
      %v2802 = vpack.c.b16 %v2790, %v2789
      %v2803 = vpack.c.b16 %v2792, %v2791
      %v2804 = vpack.c.b16 %v2794, %v2793
      %v2805 = vpack.c.b16 %v2796, %v2795
      %v2806 = vpack.c.b16 %v2798, %v2797
      %2815 = vmatprep.subr.bf16.mxu0 0
      %2816 = vmatpush1.bf16.msra.mxu0 %v2799
      %2817 = vmatprep.subr.bf16.mxu0 0
      %2818 = vmatpush1.bf16.msra.mxu0 %v2800
      %2819 = vmatprep.subr.bf16.mxu0 0
      %2820 = vmatpush1.bf16.msra.mxu0 %v2801
      %2821 = vmatprep.subr.bf16.mxu0 0
      %2822 = vmatpush1.bf16.msra.mxu0 %v2802
      %2823 = vmatprep.subr.bf16.mxu0 0
      %2824 = vmatpush1.bf16.msra.mxu0 %v2803
      %2825 = vmatprep.subr.bf16.mxu0 0
      %2826 = vmatpush1.bf16.msra.mxu0 %v2804
      %2827 = vmatprep.subr.bf16.mxu0 0
      %2828 = vmatpush1.bf16.msra.mxu0 %v2805
      %2829 = vmatprep.subr.bf16.mxu0 0
      %2830 = vmatpush1.bf16.msra.mxu0 %v2806
      %2831 = vmatprep.subr.bf16.mxu0 0
      %2832 = vmatpush1.bf16.msra.mxu0 0
      %2833 = vmatprep.subr.bf16.mxu0 0
      %2834 = vmatpush1.bf16.msra.mxu0 0
      %2835 = vmatprep.subr.bf16.mxu0 0
      %2836 = vmatpush1.bf16.msra.mxu0 0
      %2837 = vmatprep.subr.bf16.mxu0 0
      %2838 = vmatpush1.bf16.msra.mxu0 0
      %2839 = vmatprep.subr.bf16.mxu0 0
      %2840 = vmatpush1.bf16.msra.mxu0 0
      %2841 = vmatprep.subr.bf16.mxu0 0
      %2842 = vmatpush1.bf16.msra.mxu0 0
      %2843 = vmatprep.subr.bf16.mxu0 0
      %2844 = vmatpush1.bf16.msra.mxu0 0
      %2845 = vmatprep.subr.bf16.mxu0 0
      %2846 = vmatpush1.bf16.msra.mxu0 0
      %2847 = vmatprep.mubr.bf16.mxu0 0
      %2848 = vmatmul.mubr.bf16.gmra.mrb[0].mxu0 %v2759
      %v2849 = vpop.f32.mrb[0].mxu0
      %v2850 = vadd.f32 0.0, %v2849
      %v2851 = vpop.f32.mrb[0].mxu0
      %v2852 = vpop.f32.mrb[0].mxu0
      %v2853 = vadd.f32 0.0, %v2852
      %v2854 = vpop.f32.mrb[0].mxu0
      %2855 = vmatprep.mubr.bf16.mxu0 0
      %2856 = vmatmul.mubr.bf16.gmra.mrb[0].mxu0 %v2760
      %v2857 = vpop.f32.mrb[0].mxu0
      %v2858 = vadd.f32 0.0, %v2857
      %v2859 = vpop.f32.mrb[0].mxu0
      %v2860 = vpop.f32.mrb[0].mxu0
      %v2861 = vadd.f32 0.0, %v2860
      %v2862 = vpop.f32.mrb[0].mxu0
      %2863 = vmatprep.mubr.bf16.mxu0 0
      %2864 = vmatmul.mubr.bf16.gmra.mrb[0].mxu0 %v2761
      %v2865 = vpop.f32.mrb[0].mxu0
      %v2866 = vadd.f32 0.0, %v2865
      %v2867 = vpop.f32.mrb[0].mxu0
      %v2868 = vpop.f32.mrb[0].mxu0
      %v2869 = vadd.f32 0.0, %v2868
      %v2870 = vpop.f32.mrb[0].mxu0
      %2871 = vmatprep.mubr.bf16.mxu0 0
      %2872 = vmatmul.mubr.bf16.gmra.mrb[0].mxu0 %v2762
      %v2873 = vpop.f32.mrb[0].mxu0
      %v2874 = vadd.f32 0.0, %v2873
      %v2875 = vpop.f32.mrb[0].mxu0
      %v2876 = vpop.f32.mrb[0].mxu0
      %v2877 = vadd.f32 0.0, %v2876
      %v2878 = vpop.f32.mrb[0].mxu0
      %2879 = vdwg.mxu0
      %v2880 = vadd.f32 %v2599, %v2850
      %v2881 = vadd.f32 %v2600, %v2853
      %v2882 = vadd.f32 %v2601, %v2858
      %v2883 = vadd.f32 %v2602, %v2861
      %v2884 = vadd.f32 %v2603, %v2866
      %v2885 = vadd.f32 %v2604, %v2869
      %v2886 = vadd.f32 %v2605, %v2874
      %v2887 = vadd.f32 %v2606, %v2877
      %v2888 = vld [vmem:[%s1745] sm:$0xe]
      %v2889 = vld [vmem:[%s1745 + $0x8] sm:$0xe]
      %v2890 = vld [vmem:[%s1745 + $0x10] sm:$0xe]
      %v2891 = vld [vmem:[%s1745 + $0x18] sm:$0xe]
      %v2892 = vld [vmem:[%s1745 + $0x20] sm:$0xe]
      %v2893 = vld [vmem:[%s1745 + $0x28] sm:$0xe]
      %v2894 = vld [vmem:[%s1745 + $0x30] sm:$0xe]
      %v2895 = vld [vmem:[%s1745 + $0x38] sm:$0xe]
      %v2912 = vrot.slane %v2888, 5
      %v2913 = vrot.slane %v2912, 4
      %v2914 = vrot.slane %v2608, 5
      %v2915 = vsel %vm2252, %v2913, %v2914
      %v2916 = vrot.slane %v2889, 5
      %v2917 = vrot.slane %v2916, 4
      %v2918 = vrot.slane %v2610, 5
      %v2919 = vsel %vm2252, %v2917, %v2918
      %v2920 = vrot.slane %v2890, 5
      %v2921 = vrot.slane %v2920, 4
      %v2922 = vrot.slane %v2612, 5
      %v2923 = vsel %vm2252, %v2921, %v2922
      %v2924 = vrot.slane %v2891, 5
      %v2925 = vrot.slane %v2924, 4
      %v2926 = vrot.slane %v2614, 5
      %v2927 = vsel %vm2252, %v2925, %v2926
      %v2928 = vrot.slane %v2892, 5
      %v2929 = vrot.slane %v2928, 4
      %v2930 = vrot.slane %v2616, 5
      %v2931 = vsel %vm2252, %v2929, %v2930
      %v2932 = vrot.slane %v2893, 5
      %v2933 = vrot.slane %v2932, 4
      %v2934 = vrot.slane %v2618, 5
      %v2935 = vsel %vm2252, %v2933, %v2934
      %v2936 = vrot.slane %v2894, 5
      %v2937 = vrot.slane %v2936, 4
      %v2938 = vrot.slane %v2620, 5
      %v2939 = vsel %vm2252, %v2937, %v2938
      %v2940 = vrot.slane %v2895, 5
      %v2941 = vrot.slane %v2940, 4
      %v2942 = vrot.slane %v2622, 5
      %v2943 = vsel %vm2252, %v2941, %v2942
      %v2944 = vld [vmem:[%s3 + $0x140] sm:$0xf]
      %v2945 = vld [vmem:[%s3 + $0x144] sm:$0xf]
      %v2946 = vld [vmem:[%s3 + $0x148] sm:$0xf]
      %v2947 = vld [vmem:[%s3 + $0x14c] sm:$0xf]
      %v2948 = vld [vmem:[%s3 + $0x150] sm:$0xf]
      %v2949 = vld [vmem:[%s3 + $0x154] sm:$0xf]
      %v2950 = vld [vmem:[%s3 + $0x158] sm:$0xf]
      %v2951 = vld [vmem:[%s3 + $0x15c] sm:$0xf]
      %v2952 = vld [vmem:[%s3 + $0x160] sm:$0xf]
      %v2953 = vld [vmem:[%s3 + $0x164] sm:$0xf]
      %v2954 = vld [vmem:[%s3 + $0x168] sm:$0xf]
      %v2955 = vld [vmem:[%s3 + $0x16c] sm:$0xf]
      %v2956 = vld [vmem:[%s3 + $0x170] sm:$0xf]
      %v2957 = vld [vmem:[%s3 + $0x174] sm:$0xf]
      %v2958 = vld [vmem:[%s3 + $0x178] sm:$0xf]
      %v2959 = vld [vmem:[%s3 + $0x17c] sm:$0xf]
      %v2960 = vunpack.c.l.b16 %v2915
      %v2961 = vunpack.c.l.b16 %v2919
      %v2962 = vunpack.c.l.b16 %v2923
      %v2963 = vunpack.c.l.b16 %v2927
      %v2964 = vunpack.c.l.b16 %v2931
      %v2965 = vunpack.c.l.b16 %v2935
      %v2966 = vunpack.c.l.b16 %v2939
      %v2967 = vunpack.c.l.b16 %v2943
      %v2968 = vpack.c.b16 %v2961, %v2960
      %v2969 = vpack.c.b16 %v2963, %v2962
      %v2970 = vpack.c.b16 %v2965, %v2964
      %v2971 = vpack.c.b16 %v2967, %v2966
      %v2992 = vunpack.c.l.b16 %v2944
      %v2993 = vunpack.c.l.b16 %v2945
      %v2994 = vunpack.c.l.b16 %v2946
      %v2995 = vunpack.c.l.b16 %v2947
      %v2996 = vunpack.c.l.b16 %v2948
      %v2997 = vunpack.c.l.b16 %v2949
      %v2998 = vunpack.c.l.b16 %v2950
      %v2999 = vunpack.c.l.b16 %v2951
      %v3000 = vunpack.c.l.b16 %v2952
      %v3001 = vunpack.c.l.b16 %v2953
      %v3002 = vunpack.c.l.b16 %v2954
      %v3003 = vunpack.c.l.b16 %v2955
      %v3004 = vunpack.c.l.b16 %v2956
      %v3005 = vunpack.c.l.b16 %v2957
      %v3006 = vunpack.c.l.b16 %v2958
      %v3007 = vunpack.c.l.b16 %v2959
      %v3008 = vpack.c.b16 %v2993, %v2992
      %v3009 = vpack.c.b16 %v2995, %v2994
      %v3010 = vpack.c.b16 %v2997, %v2996
      %v3011 = vpack.c.b16 %v2999, %v2998
      %v3012 = vpack.c.b16 %v3001, %v3000
      %v3013 = vpack.c.b16 %v3003, %v3002
      %v3014 = vpack.c.b16 %v3005, %v3004
      %v3015 = vpack.c.b16 %v3007, %v3006
      %3024 = vmatprep.subr.bf16.mxu0 0
      %3025 = vmatpush1.bf16.msra.mxu0 %v3008
      %3026 = vmatprep.subr.bf16.mxu0 0
      %3027 = vmatpush1.bf16.msra.mxu0 %v3009
      %3028 = vmatprep.subr.bf16.mxu0 0
      %3029 = vmatpush1.bf16.msra.mxu0 %v3010
      %3030 = vmatprep.subr.bf16.mxu0 0
      %3031 = vmatpush1.bf16.msra.mxu0 %v3011
      %3032 = vmatprep.subr.bf16.mxu0 0
      %3033 = vmatpush1.bf16.msra.mxu0 %v3012
      %3034 = vmatprep.subr.bf16.mxu0 0
      %3035 = vmatpush1.bf16.msra.mxu0 %v3013
      %3036 = vmatprep.subr.bf16.mxu0 0
      %3037 = vmatpush1.bf16.msra.mxu0 %v3014
      %3038 = vmatprep.subr.bf16.mxu0 0
      %3039 = vmatpush1.bf16.msra.mxu0 %v3015
      %3040 = vmatprep.subr.bf16.mxu0 0
      %3041 = vmatpush1.bf16.msra.mxu0 0
      %3042 = vmatprep.subr.bf16.mxu0 0
      %3043 = vmatpush1.bf16.msra.mxu0 0
      %3044 = vmatprep.subr.bf16.mxu0 0
      %3045 = vmatpush1.bf16.msra.mxu0 0
      %3046 = vmatprep.subr.bf16.mxu0 0
      %3047 = vmatpush1.bf16.msra.mxu0 0
      %3048 = vmatprep.subr.bf16.mxu0 0
      %3049 = vmatpush1.bf16.msra.mxu0 0
      %3050 = vmatprep.subr.bf16.mxu0 0
      %3051 = vmatpush1.bf16.msra.mxu0 0
      %3052 = vmatprep.subr.bf16.mxu0 0
      %3053 = vmatpush1.bf16.msra.mxu0 0
      %3054 = vmatprep.subr.bf16.mxu0 0
      %3055 = vmatpush1.bf16.msra.mxu0 0
      %3056 = vmatprep.mubr.bf16.mxu0 0
      %3057 = vmatmul.mubr.bf16.gmra.mrb[0].mxu0 %v2968
      %v3058 = vpop.f32.mrb[0].mxu0
      %v3059 = vadd.f32 0.0, %v3058
      %v3060 = vpop.f32.mrb[0].mxu0
      %v3061 = vpop.f32.mrb[0].mxu0
      %v3062 = vadd.f32 0.0, %v3061
      %v3063 = vpop.f32.mrb[0].mxu0
      %3064 = vmatprep.mubr.bf16.mxu0 0
      %3065 = vmatmul.mubr.bf16.gmra.mrb[0].mxu0 %v2969
      %v3066 = vpop.f32.mrb[0].mxu0
      %v3067 = vadd.f32 0.0, %v3066
      %v3068 = vpop.f32.mrb[0].mxu0
      %v3069 = vpop.f32.mrb[0].mxu0
      %v3070 = vadd.f32 0.0, %v3069
      %v3071 = vpop.f32.mrb[0].mxu0
      %3072 = vmatprep.mubr.bf16.mxu0 0
      %3073 = vmatmul.mubr.bf16.gmra.mrb[0].mxu0 %v2970
      %v3074 = vpop.f32.mrb[0].mxu0
      %v3075 = vadd.f32 0.0, %v3074
      %v3076 = vpop.f32.mrb[0].mxu0
      %v3077 = vpop.f32.mrb[0].mxu0
      %v3078 = vadd.f32 0.0, %v3077
      %v3079 = vpop.f32.mrb[0].mxu0
      %3080 = vmatprep.mubr.bf16.mxu0 0
      %3081 = vmatmul.mubr.bf16.gmra.mrb[0].mxu0 %v2971
      %v3082 = vpop.f32.mrb[0].mxu0
      %v3083 = vadd.f32 0.0, %v3082
      %v3084 = vpop.f32.mrb[0].mxu0
      %v3085 = vpop.f32.mrb[0].mxu0
      %v3086 = vadd.f32 0.0, %v3085
      %v3087 = vpop.f32.mrb[0].mxu0
      %3088 = vdwg.mxu0
      %v3089 = vadd.f32 %v2880, %v3059
      %v3090 = vadd.f32 %v2881, %v3062
      %v3091 = vadd.f32 %v2882, %v3067
      %v3092 = vadd.f32 %v2883, %v3070
      %v3093 = vadd.f32 %v2884, %v3075
      %v3094 = vadd.f32 %v2885, %v3078
      %v3095 = vadd.f32 %v2886, %v3083
      %v3096 = vadd.f32 %v2887, %v3086
      %s3097 = scalar_lea.vmem [#allocation2], 16
      %v3098 = vld [vmem:[%s3097] sm:$0xf]
      %v3099 = vld [vmem:[%s3097 + $0x8] sm:$0xf]
      %v3100 = vld [vmem:[%s3097 + $0x10] sm:$0xf]
      %v3101 = vld [vmem:[%s3097 + $0x18] sm:$0xf]
      %v3102 = vld [vmem:[%s3097 + $0x20] sm:$0xf]
      %v3103 = vld [vmem:[%s3097 + $0x28] sm:$0xf]
      %v3104 = vld [vmem:[%s3097 + $0x30] sm:$0xf]
      %v3105 = vld [vmem:[%s3097 + $0x38] sm:$0xf]
      %v3106 = vld [vmem:[%s3 + $0x180] sm:$0xf]
      %v3107 = vld [vmem:[%s3 + $0x184] sm:$0xf]
      %v3108 = vld [vmem:[%s3 + $0x188] sm:$0xf]
      %v3109 = vld [vmem:[%s3 + $0x18c] sm:$0xf]
      %v3110 = vld [vmem:[%s3 + $0x190] sm:$0xf]
      %v3111 = vld [vmem:[%s3 + $0x194] sm:$0xf]
      %v3112 = vld [vmem:[%s3 + $0x198] sm:$0xf]
      %v3113 = vld [vmem:[%s3 + $0x19c] sm:$0xf]
      %v3114 = vld [vmem:[%s3 + $0x1a0] sm:$0xf]
      %v3115 = vld [vmem:[%s3 + $0x1a4] sm:$0xf]
      %v3116 = vld [vmem:[%s3 + $0x1a8] sm:$0xf]
      %v3117 = vld [vmem:[%s3 + $0x1ac] sm:$0xf]
      %v3118 = vld [vmem:[%s3 + $0x1b0] sm:$0xf]
      %v3119 = vld [vmem:[%s3 + $0x1b4] sm:$0xf]
      %v3120 = vld [vmem:[%s3 + $0x1b8] sm:$0xf]
      %v3121 = vld [vmem:[%s3 + $0x1bc] sm:$0xf]
      %v3130 = vunpack.c.l.b16 %v3098
      %v3131 = vunpack.c.l.b16 %v3099
      %v3132 = vunpack.c.l.b16 %v3100
      %v3133 = vunpack.c.l.b16 %v3101
      %v3134 = vunpack.c.l.b16 %v3102
      %v3135 = vunpack.c.l.b16 %v3103
      %v3136 = vunpack.c.l.b16 %v3104
      %v3137 = vunpack.c.l.b16 %v3105
      %v3138 = vpack.c.b16 %v3131, %v3130
      %v3139 = vpack.c.b16 %v3133, %v3132
      %v3140 = vpack.c.b16 %v3135, %v3134
      %v3141 = vpack.c.b16 %v3137, %v3136
      %v3162 = vunpack.c.l.b16 %v3106
      %v3163 = vunpack.c.l.b16 %v3107
      %v3164 = vunpack.c.l.b16 %v3108
      %v3165 = vunpack.c.l.b16 %v3109
      %v3166 = vunpack.c.l.b16 %v3110
      %v3167 = vunpack.c.l.b16 %v3111
      %v3168 = vunpack.c.l.b16 %v3112
      %v3169 = vunpack.c.l.b16 %v3113
      %v3170 = vunpack.c.l.b16 %v3114
      %v3171 = vunpack.c.l.b16 %v3115
      %v3172 = vunpack.c.l.b16 %v3116
      %v3173 = vunpack.c.l.b16 %v3117
      %v3174 = vunpack.c.l.b16 %v3118
      %v3175 = vunpack.c.l.b16 %v3119
      %v3176 = vunpack.c.l.b16 %v3120
      %v3177 = vunpack.c.l.b16 %v3121
      %v3178 = vpack.c.b16 %v3163, %v3162
      %v3179 = vpack.c.b16 %v3165, %v3164
      %v3180 = vpack.c.b16 %v3167, %v3166
      %v3181 = vpack.c.b16 %v3169, %v3168
      %v3182 = vpack.c.b16 %v3171, %v3170
      %v3183 = vpack.c.b16 %v3173, %v3172
      %v3184 = vpack.c.b16 %v3175, %v3174
      %v3185 = vpack.c.b16 %v3177, %v3176
      %3194 = vmatprep.subr.bf16.mxu0 0
      %3195 = vmatpush1.bf16.msra.mxu0 %v3178
      %3196 = vmatprep.subr.bf16.mxu0 0
      %3197 = vmatpush1.bf16.msra.mxu0 %v3179
      %3198 = vmatprep.subr.bf16.mxu0 0
      %3199 = vmatpush1.bf16.msra.mxu0 %v3180
      %3200 = vmatprep.subr.bf16.mxu0 0
      %3201 = vmatpush1.bf16.msra.mxu0 %v3181
      %3202 = vmatprep.subr.bf16.mxu0 0
      %3203 = vmatpush1.bf16.msra.mxu0 %v3182
      %3204 = vmatprep.subr.bf16.mxu0 0
      %3205 = vmatpush1.bf16.msra.mxu0 %v3183
      %3206 = vmatprep.subr.bf16.mxu0 0
      %3207 = vmatpush1.bf16.msra.mxu0 %v3184
      %3208 = vmatprep.subr.bf16.mxu0 0
      %3209 = vmatpush1.bf16.msra.mxu0 %v3185
      %3210 = vmatprep.subr.bf16.mxu0 0
      %3211 = vmatpush1.bf16.msra.mxu0 0
      %3212 = vmatprep.subr.bf16.mxu0 0
      %3213 = vmatpush1.bf16.msra.mxu0 0
      %3214 = vmatprep.subr.bf16.mxu0 0
      %3215 = vmatpush1.bf16.msra.mxu0 0
      %3216 = vmatprep.subr.bf16.mxu0 0
      %3217 = vmatpush1.bf16.msra.mxu0 0
      %3218 = vmatprep.subr.bf16.mxu0 0
      %3219 = vmatpush1.bf16.msra.mxu0 0
      %3220 = vmatprep.subr.bf16.mxu0 0
      %3221 = vmatpush1.bf16.msra.mxu0 0
      %3222 = vmatprep.subr.bf16.mxu0 0
      %3223 = vmatpush1.bf16.msra.mxu0 0
      %3224 = vmatprep.subr.bf16.mxu0 0
      %3225 = vmatpush1.bf16.msra.mxu0 0
      %3226 = vmatprep.mubr.bf16.mxu0 0
      %3227 = vmatmul.mubr.bf16.gmra.mrb[0].mxu0 %v3138
      %v3228 = vpop.f32.mrb[0].mxu0
      %v3229 = vadd.f32 0.0, %v3228
      %v3230 = vpop.f32.mrb[0].mxu0
      %v3231 = vpop.f32.mrb[0].mxu0
      %v3232 = vadd.f32 0.0, %v3231
      %v3233 = vpop.f32.mrb[0].mxu0
      %3234 = vmatprep.mubr.bf16.mxu0 0
      %3235 = vmatmul.mubr.bf16.gmra.mrb[0].mxu0 %v3139
      %v3236 = vpop.f32.mrb[0].mxu0
      %v3237 = vadd.f32 0.0, %v3236
      %v3238 = vpop.f32.mrb[0].mxu0
      %v3239 = vpop.f32.mrb[0].mxu0
      %v3240 = vadd.f32 0.0, %v3239
      %v3241 = vpop.f32.mrb[0].mxu0
      %3242 = vmatprep.mubr.bf16.mxu0 0
      %3243 = vmatmul.mubr.bf16.gmra.mrb[0].mxu0 %v3140
      %v3244 = vpop.f32.mrb[0].mxu0
      %v3245 = vadd.f32 0.0, %v3244
      %v3246 = vpop.f32.mrb[0].mxu0
      %v3247 = vpop.f32.mrb[0].mxu0
      %v3248 = vadd.f32 0.0, %v3247
      %v3249 = vpop.f32.mrb[0].mxu0
      %3250 = vmatprep.mubr.bf16.mxu0 0
      %3251 = vmatmul.mubr.bf16.gmra.mrb[0].mxu0 %v3141
      %v3252 = vpop.f32.mrb[0].mxu0
      %v3253 = vadd.f32 0.0, %v3252
      %v3254 = vpop.f32.mrb[0].mxu0
      %v3255 = vpop.f32.mrb[0].mxu0
      %v3256 = vadd.f32 0.0, %v3255
      %v3257 = vpop.f32.mrb[0].mxu0
      %3258 = vdwg.mxu0
      %v3259 = vadd.f32 %v3089, %v3229
      %v3260 = vadd.f32 %v3090, %v3232
      %v3261 = vadd.f32 %v3091, %v3237
      %v3262 = vadd.f32 %v3092, %v3240
      %v3263 = vadd.f32 %v3093, %v3245
      %v3264 = vadd.f32 %v3094, %v3248
      %v3265 = vadd.f32 %v3095, %v3253
      %v3266 = vadd.f32 %v3096, %v3256
      %v3267 = vld [vmem:[%s3097] sm:$0xf]
      %v3268 = vld [vmem:[%s3097 + $0x4] sm:$0x1]
      %v3269 = vld [vmem:[%s3097 + $0x8] sm:$0xf]
      %v3270 = vld [vmem:[%s3097 + $0xc] sm:$0x1]
      %v3271 = vld [vmem:[%s3097 + $0x10] sm:$0xf]
      %v3272 = vld [vmem:[%s3097 + $0x14] sm:$0x1]
      %v3273 = vld [vmem:[%s3097 + $0x18] sm:$0xf]
      %v3274 = vld [vmem:[%s3097 + $0x1c] sm:$0x1]
      %v3275 = vld [vmem:[%s3097 + $0x20] sm:$0xf]
      %v3276 = vld [vmem:[%s3097 + $0x24] sm:$0x1]
      %v3277 = vld [vmem:[%s3097 + $0x28] sm:$0xf]
      %v3278 = vld [vmem:[%s3097 + $0x2c] sm:$0x1]
      %v3279 = vld [vmem:[%s3097 + $0x30] sm:$0xf]
      %v3280 = vld [vmem:[%s3097 + $0x34] sm:$0x1]
      %v3281 = vld [vmem:[%s3097 + $0x38] sm:$0xf]
      %v3282 = vld [vmem:[%s3097 + $0x3c] sm:$0x1]
      %v3284 = vshrl.u32 %v3267, 16
      %v3286 = vrot.slane %v3284, 4
      %v3287 = vshll.u32 %v3267, 16
      %v3289 = vrot.slane %v3287, 5
      %v3290 = vor.u32 %v3286, %v3289
      %v3291 = vrot.slane %v3290, 4
      %v3293 = vshll.u32 %v3268, 16
      %v3295 = vrot.slane %v3293, 5
      %v3296 = vsel %vm452, %v3291, %v3295
      %v3298 = vshrl.u32 %v3269, 16
      %v3300 = vrot.slane %v3298, 4
      %v3301 = vshll.u32 %v3269, 16
      %v3303 = vrot.slane %v3301, 5
      %v3304 = vor.u32 %v3300, %v3303
      %v3305 = vrot.slane %v3304, 4
      %v3307 = vshll.u32 %v3270, 16
      %v3309 = vrot.slane %v3307, 5
      %v3310 = vsel %vm452, %v3305, %v3309
      %v3312 = vshrl.u32 %v3271, 16
      %v3314 = vrot.slane %v3312, 4
      %v3315 = vshll.u32 %v3271, 16
      %v3317 = vrot.slane %v3315, 5
      %v3318 = vor.u32 %v3314, %v3317
      %v3319 = vrot.slane %v3318, 4
      %v3321 = vshll.u32 %v3272, 16
      %v3323 = vrot.slane %v3321, 5
      %v3324 = vsel %vm452, %v3319, %v3323
      %v3326 = vshrl.u32 %v3273, 16
      %v3328 = vrot.slane %v3326, 4
      %v3329 = vshll.u32 %v3273, 16
      %v3331 = vrot.slane %v3329, 5
      %v3332 = vor.u32 %v3328, %v3331
      %v3333 = vrot.slane %v3332, 4
      %v3335 = vshll.u32 %v3274, 16
      %v3337 = vrot.slane %v3335, 5
      %v3338 = vsel %vm452, %v3333, %v3337
      %v3340 = vshrl.u32 %v3275, 16
      %v3342 = vrot.slane %v3340, 4
      %v3343 = vshll.u32 %v3275, 16
      %v3345 = vrot.slane %v3343, 5
      %v3346 = vor.u32 %v3342, %v3345
      %v3347 = vrot.slane %v3346, 4
      %v3349 = vshll.u32 %v3276, 16
      %v3351 = vrot.slane %v3349, 5
      %v3352 = vsel %vm452, %v3347, %v3351
      %v3354 = vshrl.u32 %v3277, 16
      %v3356 = vrot.slane %v3354, 4
      %v3357 = vshll.u32 %v3277, 16
      %v3359 = vrot.slane %v3357, 5
      %v3360 = vor.u32 %v3356, %v3359
      %v3361 = vrot.slane %v3360, 4
      %v3363 = vshll.u32 %v3278, 16
      %v3365 = vrot.slane %v3363, 5
      %v3366 = vsel %vm452, %v3361, %v3365
      %v3368 = vshrl.u32 %v3279, 16
      %v3370 = vrot.slane %v3368, 4
      %v3371 = vshll.u32 %v3279, 16
      %v3373 = vrot.slane %v3371, 5
      %v3374 = vor.u32 %v3370, %v3373
      %v3375 = vrot.slane %v3374, 4
      %v3377 = vshll.u32 %v3280, 16
      %v3379 = vrot.slane %v3377, 5
      %v3380 = vsel %vm452, %v3375, %v3379
      %v3382 = vshrl.u32 %v3281, 16
      %v3384 = vrot.slane %v3382, 4
      %v3385 = vshll.u32 %v3281, 16
      %v3387 = vrot.slane %v3385, 5
      %v3388 = vor.u32 %v3384, %v3387
      %v3389 = vrot.slane %v3388, 4
      %v3391 = vshll.u32 %v3282, 16
      %v3393 = vrot.slane %v3391, 5
      %v3394 = vsel %vm452, %v3389, %v3393
      %v3395 = vld [vmem:[%s3 + $0x1c0] sm:$0xf]
      %v3396 = vld [vmem:[%s3 + $0x1c4] sm:$0xf]
      %v3397 = vld [vmem:[%s3 + $0x1c8] sm:$0xf]
      %v3398 = vld [vmem:[%s3 + $0x1cc] sm:$0xf]
      %v3399 = vld [vmem:[%s3 + $0x1d0] sm:$0xf]
      %v3400 = vld [vmem:[%s3 + $0x1d4] sm:$0xf]
      %v3401 = vld [vmem:[%s3 + $0x1d8] sm:$0xf]
      %v3402 = vld [vmem:[%s3 + $0x1dc] sm:$0xf]
      %v3403 = vld [vmem:[%s3 + $0x1e0] sm:$0xf]
      %v3404 = vld [vmem:[%s3 + $0x1e4] sm:$0xf]
      %v3405 = vld [vmem:[%s3 + $0x1e8] sm:$0xf]
      %v3406 = vld [vmem:[%s3 + $0x1ec] sm:$0xf]
      %v3407 = vld [vmem:[%s3 + $0x1f0] sm:$0xf]
      %v3408 = vld [vmem:[%s3 + $0x1f4] sm:$0xf]
      %v3409 = vld [vmem:[%s3 + $0x1f8] sm:$0xf]
      %v3410 = vld [vmem:[%s3 + $0x1fc] sm:$0xf]
      %v3411 = vunpack.c.l.b16 %v3296
      %v3412 = vunpack.c.l.b16 %v3310
      %v3413 = vunpack.c.l.b16 %v3324
      %v3414 = vunpack.c.l.b16 %v3338
      %v3415 = vunpack.c.l.b16 %v3352
      %v3416 = vunpack.c.l.b16 %v3366
      %v3417 = vunpack.c.l.b16 %v3380
      %v3418 = vunpack.c.l.b16 %v3394
      %v3419 = vpack.c.b16 %v3412, %v3411
      %v3420 = vpack.c.b16 %v3414, %v3413
      %v3421 = vpack.c.b16 %v3416, %v3415
      %v3422 = vpack.c.b16 %v3418, %v3417
      %v3443 = vunpack.c.l.b16 %v3395
      %v3444 = vunpack.c.l.b16 %v3396
      %v3445 = vunpack.c.l.b16 %v3397
      %v3446 = vunpack.c.l.b16 %v3398
      %v3447 = vunpack.c.l.b16 %v3399
      %v3448 = vunpack.c.l.b16 %v3400
      %v3449 = vunpack.c.l.b16 %v3401
      %v3450 = vunpack.c.l.b16 %v3402
      %v3451 = vunpack.c.l.b16 %v3403
      %v3452 = vunpack.c.l.b16 %v3404
      %v3453 = vunpack.c.l.b16 %v3405
      %v3454 = vunpack.c.l.b16 %v3406
      %v3455 = vunpack.c.l.b16 %v3407
      %v3456 = vunpack.c.l.b16 %v3408
      %v3457 = vunpack.c.l.b16 %v3409
      %v3458 = vunpack.c.l.b16 %v3410
      %v3459 = vpack.c.b16 %v3444, %v3443
      %v3460 = vpack.c.b16 %v3446, %v3445
      %v3461 = vpack.c.b16 %v3448, %v3447
      %v3462 = vpack.c.b16 %v3450, %v3449
      %v3463 = vpack.c.b16 %v3452, %v3451
      %v3464 = vpack.c.b16 %v3454, %v3453
      %v3465 = vpack.c.b16 %v3456, %v3455
      %v3466 = vpack.c.b16 %v3458, %v3457
      %3475 = vmatprep.subr.bf16.mxu0 0
      %3476 = vmatpush1.bf16.msra.mxu0 %v3459
      %3477 = vmatprep.subr.bf16.mxu0 0
      %3478 = vmatpush1.bf16.msra.mxu0 %v3460
      %3479 = vmatprep.subr.bf16.mxu0 0
      %3480 = vmatpush1.bf16.msra.mxu0 %v3461
      %3481 = vmatprep.subr.bf16.mxu0 0
      %3482 = vmatpush1.bf16.msra.mxu0 %v3462
      %3483 = vmatprep.subr.bf16.mxu0 0
      %3484 = vmatpush1.bf16.msra.mxu0 %v3463
      %3485 = vmatprep.subr.bf16.mxu0 0
      %3486 = vmatpush1.bf16.msra.mxu0 %v3464
      %3487 = vmatprep.subr.bf16.mxu0 0
      %3488 = vmatpush1.bf16.msra.mxu0 %v3465
      %3489 = vmatprep.subr.bf16.mxu0 0
      %3490 = vmatpush1.bf16.msra.mxu0 %v3466
      %3491 = vmatprep.subr.bf16.mxu0 0
      %3492 = vmatpush1.bf16.msra.mxu0 0
      %3493 = vmatprep.subr.bf16.mxu0 0
      %3494 = vmatpush1.bf16.msra.mxu0 0
      %3495 = vmatprep.subr.bf16.mxu0 0
      %3496 = vmatpush1.bf16.msra.mxu0 0
      %3497 = vmatprep.subr.bf16.mxu0 0
      %3498 = vmatpush1.bf16.msra.mxu0 0
      %3499 = vmatprep.subr.bf16.mxu0 0
      %3500 = vmatpush1.bf16.msra.mxu0 0
      %3501 = vmatprep.subr.bf16.mxu0 0
      %3502 = vmatpush1.bf16.msra.mxu0 0
      %3503 = vmatprep.subr.bf16.mxu0 0
      %3504 = vmatpush1.bf16.msra.mxu0 0
      %3505 = vmatprep.subr.bf16.mxu0 0
      %3506 = vmatpush1.bf16.msra.mxu0 0
      %3507 = vmatprep.mubr.bf16.mxu0 0
      %3508 = vmatmul.mubr.bf16.gmra.mrb[0].mxu0 %v3419
      %v3509 = vpop.f32.mrb[0].mxu0
      %v3510 = vadd.f32 0.0, %v3509
      %v3511 = vpop.f32.mrb[0].mxu0
      %v3512 = vpop.f32.mrb[0].mxu0
      %v3513 = vadd.f32 0.0, %v3512
      %v3514 = vpop.f32.mrb[0].mxu0
      %3515 = vmatprep.mubr.bf16.mxu0 0
      %3516 = vmatmul.mubr.bf16.gmra.mrb[0].mxu0 %v3420
      %v3517 = vpop.f32.mrb[0].mxu0
      %v3518 = vadd.f32 0.0, %v3517
      %v3519 = vpop.f32.mrb[0].mxu0
      %v3520 = vpop.f32.mrb[0].mxu0
      %v3521 = vadd.f32 0.0, %v3520
      %v3522 = vpop.f32.mrb[0].mxu0
      %3523 = vmatprep.mubr.bf16.mxu0 0
      %3524 = vmatmul.mubr.bf16.gmra.mrb[0].mxu0 %v3421
      %v3525 = vpop.f32.mrb[0].mxu0
      %v3526 = vadd.f32 0.0, %v3525
      %v3527 = vpop.f32.mrb[0].mxu0
      %v3528 = vpop.f32.mrb[0].mxu0
      %v3529 = vadd.f32 0.0, %v3528
      %v3530 = vpop.f32.mrb[0].mxu0
      %3531 = vmatprep.mubr.bf16.mxu0 0
      %3532 = vmatmul.mubr.bf16.gmra.mrb[0].mxu0 %v3422
      %v3533 = vpop.f32.mrb[0].mxu0
      %v3534 = vadd.f32 0.0, %v3533
      %v3535 = vpop.f32.mrb[0].mxu0
      %v3536 = vpop.f32.mrb[0].mxu0
      %v3537 = vadd.f32 0.0, %v3536
      %v3538 = vpop.f32.mrb[0].mxu0
      %3539 = vdwg.mxu0
      %v3540 = vadd.f32 %v3259, %v3510
      %v3541 = vadd.f32 %v3260, %v3513
      %v3542 = vadd.f32 %v3261, %v3518
      %v3543 = vadd.f32 %v3262, %v3521
      %v3544 = vadd.f32 %v3263, %v3526
      %v3545 = vadd.f32 %v3264, %v3529
      %v3546 = vadd.f32 %v3265, %v3534
      %v3547 = vadd.f32 %v3266, %v3537
      %v3548 = vld [vmem:[%s3097] sm:$0xe]
      %v3549 = vld [vmem:[%s3097 + $0x8] sm:$0xe]
      %v3550 = vld [vmem:[%s3097 + $0x10] sm:$0xe]
      %v3551 = vld [vmem:[%s3097 + $0x18] sm:$0xe]
      %v3552 = vld [vmem:[%s3097 + $0x20] sm:$0xe]
      %v3553 = vld [vmem:[%s3097 + $0x28] sm:$0xe]
      %v3554 = vld [vmem:[%s3097 + $0x30] sm:$0xe]
      %v3555 = vld [vmem:[%s3097 + $0x38] sm:$0xe]
      %v3572 = vrot.slane %v3548, 5
      %v3573 = vrot.slane %v3572, 4
      %v3574 = vrot.slane %v3268, 5
      %v3575 = vsel %vm2252, %v3573, %v3574
      %v3576 = vrot.slane %v3549, 5
      %v3577 = vrot.slane %v3576, 4
      %v3578 = vrot.slane %v3270, 5
      %v3579 = vsel %vm2252, %v3577, %v3578
      %v3580 = vrot.slane %v3550, 5
      %v3581 = vrot.slane %v3580, 4
      %v3582 = vrot.slane %v3272, 5
      %v3583 = vsel %vm2252, %v3581, %v3582
      %v3584 = vrot.slane %v3551, 5
      %v3585 = vrot.slane %v3584, 4
      %v3586 = vrot.slane %v3274, 5
      %v3587 = vsel %vm2252, %v3585, %v3586
      %v3588 = vrot.slane %v3552, 5
      %v3589 = vrot.slane %v3588, 4
      %v3590 = vrot.slane %v3276, 5
      %v3591 = vsel %vm2252, %v3589, %v3590
      %v3592 = vrot.slane %v3553, 5
      %v3593 = vrot.slane %v3592, 4
      %v3594 = vrot.slane %v3278, 5
      %v3595 = vsel %vm2252, %v3593, %v3594
      %v3596 = vrot.slane %v3554, 5
      %v3597 = vrot.slane %v3596, 4
      %v3598 = vrot.slane %v3280, 5
      %v3599 = vsel %vm2252, %v3597, %v3598
      %v3600 = vrot.slane %v3555, 5
      %v3601 = vrot.slane %v3600, 4
      %v3602 = vrot.slane %v3282, 5
      %v3603 = vsel %vm2252, %v3601, %v3602
      %v3604 = vld [vmem:[%s3 + $0x200] sm:$0xf]
      %v3605 = vld [vmem:[%s3 + $0x204] sm:$0xf]
      %v3606 = vld [vmem:[%s3 + $0x208] sm:$0xf]
      %v3607 = vld [vmem:[%s3 + $0x20c] sm:$0xf]
      %v3608 = vld [vmem:[%s3 + $0x210] sm:$0xf]
      %v3609 = vld [vmem:[%s3 + $0x214] sm:$0xf]
      %v3610 = vld [vmem:[%s3 + $0x218] sm:$0xf]
      %v3611 = vld [vmem:[%s3 + $0x21c] sm:$0xf]
      %v3612 = vld [vmem:[%s3 + $0x220] sm:$0xf]
      %v3613 = vld [vmem:[%s3 + $0x224] sm:$0xf]
      %v3614 = vld [vmem:[%s3 + $0x228] sm:$0xf]
      %v3615 = vld [vmem:[%s3 + $0x22c] sm:$0xf]
      %v3616 = vld [vmem:[%s3 + $0x230] sm:$0xf]
      %v3617 = vld [vmem:[%s3 + $0x234] sm:$0xf]
      %v3618 = vld [vmem:[%s3 + $0x238] sm:$0xf]
      %v3619 = vld [vmem:[%s3 + $0x23c] sm:$0xf]
      %v3620 = vunpack.c.l.b16 %v3575
      %v3621 = vunpack.c.l.b16 %v3579
      %v3622 = vunpack.c.l.b16 %v3583
      %v3623 = vunpack.c.l.b16 %v3587
      %v3624 = vunpack.c.l.b16 %v3591
      %v3625 = vunpack.c.l.b16 %v3595
      %v3626 = vunpack.c.l.b16 %v3599
      %v3627 = vunpack.c.l.b16 %v3603
      %v3628 = vpack.c.b16 %v3621, %v3620
      %v3629 = vpack.c.b16 %v3623, %v3622
      %v3630 = vpack.c.b16 %v3625, %v3624
      %v3631 = vpack.c.b16 %v3627, %v3626
      %v3652 = vunpack.c.l.b16 %v3604
      %v3653 = vunpack.c.l.b16 %v3605
      %v3654 = vunpack.c.l.b16 %v3606
      %v3655 = vunpack.c.l.b16 %v3607
      %v3656 = vunpack.c.l.b16 %v3608
      %v3657 = vunpack.c.l.b16 %v3609
      %v3658 = vunpack.c.l.b16 %v3610
      %v3659 = vunpack.c.l.b16 %v3611
      %v3660 = vunpack.c.l.b16 %v3612
      %v3661 = vunpack.c.l.b16 %v3613
      %v3662 = vunpack.c.l.b16 %v3614
      %v3663 = vunpack.c.l.b16 %v3615
      %v3664 = vunpack.c.l.b16 %v3616
      %v3665 = vunpack.c.l.b16 %v3617
      %v3666 = vunpack.c.l.b16 %v3618
      %v3667 = vunpack.c.l.b16 %v3619
      %v3668 = vpack.c.b16 %v3653, %v3652
      %v3669 = vpack.c.b16 %v3655, %v3654
      %v3670 = vpack.c.b16 %v3657, %v3656
      %v3671 = vpack.c.b16 %v3659, %v3658
      %v3672 = vpack.c.b16 %v3661, %v3660
      %v3673 = vpack.c.b16 %v3663, %v3662
      %v3674 = vpack.c.b16 %v3665, %v3664
      %v3675 = vpack.c.b16 %v3667, %v3666
      %3684 = vmatprep.subr.bf16.mxu0 0
      %3685 = vmatpush1.bf16.msra.mxu0 %v3668
      %3686 = vmatprep.subr.bf16.mxu0 0
      %3687 = vmatpush1.bf16.msra.mxu0 %v3669
      %3688 = vmatprep.subr.bf16.mxu0 0
      %3689 = vmatpush1.bf16.msra.mxu0 %v3670
      %3690 = vmatprep.subr.bf16.mxu0 0
      %3691 = vmatpush1.bf16.msra.mxu0 %v3671
      %3692 = vmatprep.subr.bf16.mxu0 0
      %3693 = vmatpush1.bf16.msra.mxu0 %v3672
      %3694 = vmatprep.subr.bf16.mxu0 0
      %3695 = vmatpush1.bf16.msra.mxu0 %v3673
      %3696 = vmatprep.subr.bf16.mxu0 0
      %3697 = vmatpush1.bf16.msra.mxu0 %v3674
      %3698 = vmatprep.subr.bf16.mxu0 0
      %3699 = vmatpush1.bf16.msra.mxu0 %v3675
      %3700 = vmatprep.subr.bf16.mxu0 0
      %3701 = vmatpush1.bf16.msra.mxu0 0
      %3702 = vmatprep.subr.bf16.mxu0 0
      %3703 = vmatpush1.bf16.msra.mxu0 0
      %3704 = vmatprep.subr.bf16.mxu0 0
      %3705 = vmatpush1.bf16.msra.mxu0 0
      %3706 = vmatprep.subr.bf16.mxu0 0
      %3707 = vmatpush1.bf16.msra.mxu0 0
      %3708 = vmatprep.subr.bf16.mxu0 0
      %3709 = vmatpush1.bf16.msra.mxu0 0
      %3710 = vmatprep.subr.bf16.mxu0 0
      %3711 = vmatpush1.bf16.msra.mxu0 0
      %3712 = vmatprep.subr.bf16.mxu0 0
      %3713 = vmatpush1.bf16.msra.mxu0 0
      %3714 = vmatprep.subr.bf16.mxu0 0
      %3715 = vmatpush1.bf16.msra.mxu0 0
      %3716 = vmatprep.mubr.bf16.mxu0 0
      %3717 = vmatmul.mubr.bf16.gmra.mrb[0].mxu0 %v3628
      %v3718 = vpop.f32.mrb[0].mxu0
      %v3719 = vadd.f32 0.0, %v3718
      %v3720 = vpop.f32.mrb[0].mxu0
      %v3721 = vpop.f32.mrb[0].mxu0
      %v3722 = vadd.f32 0.0, %v3721
      %v3723 = vpop.f32.mrb[0].mxu0
      %3724 = vmatprep.mubr.bf16.mxu0 0
      %3725 = vmatmul.mubr.bf16.gmra.mrb[0].mxu0 %v3629
      %v3726 = vpop.f32.mrb[0].mxu0
      %v3727 = vadd.f32 0.0, %v3726
      %v3728 = vpop.f32.mrb[0].mxu0
      %v3729 = vpop.f32.mrb[0].mxu0
      %v3730 = vadd.f32 0.0, %v3729
      %v3731 = vpop.f32.mrb[0].mxu0
      %3732 = vmatprep.mubr.bf16.mxu0 0
      %3733 = vmatmul.mubr.bf16.gmra.mrb[0].mxu0 %v3630
      %v3734 = vpop.f32.mrb[0].mxu0
      %v3735 = vadd.f32 0.0, %v3734
      %v3736 = vpop.f32.mrb[0].mxu0
      %v3737 = vpop.f32.mrb[0].mxu0
      %v3738 = vadd.f32 0.0, %v3737
      %v3739 = vpop.f32.mrb[0].mxu0
      %3740 = vmatprep.mubr.bf16.mxu0 0
      %3741 = vmatmul.mubr.bf16.gmra.mrb[0].mxu0 %v3631
      %v3742 = vpop.f32.mrb[0].mxu0
      %v3743 = vadd.f32 0.0, %v3742
      %v3744 = vpop.f32.mrb[0].mxu0
      %v3745 = vpop.f32.mrb[0].mxu0
      %v3746 = vadd.f32 0.0, %v3745
      %v3747 = vpop.f32.mrb[0].mxu0
      %3748 = vdwg.mxu0
      %v3749 = vadd.f32 %v3540, %v3719
      %v3750 = vadd.f32 %v3541, %v3722
      %v3751 = vadd.f32 %v3542, %v3727
      %v3752 = vadd.f32 %v3543, %v3730
      %v3753 = vadd.f32 %v3544, %v3735
      %v3754 = vadd.f32 %v3545, %v3738
      %v3755 = vadd.f32 %v3546, %v3743
      %v3756 = vadd.f32 %v3547, %v3746
      %v3757 = vld [vmem:[%s4] sm:$0x1]
      %v3759 = vlaneseq
      %v3760 = vshrl.u32 %v3759, 7
      %v3761 = vsub.s32 0, %v3760
      %v3762 = vrot.slane %v3757, %v3761
      %v3764 = vadd.f32 %v3749, %v3762
      %v3765 = vadd.f32 %v3750, %v3762
      %v3766 = vadd.f32 %v3751, %v3762
      %v3767 = vadd.f32 %v3752, %v3762
      %v3768 = vadd.f32 %v3753, %v3762
      %v3769 = vadd.f32 %v3754, %v3762
      %v3770 = vadd.f32 %v3755, %v3762
      %v3771 = vadd.f32 %v3756, %v3762
      %vm3772 = vcmp.ge.f32.partialorder %v3764, 0.0
      %vm3773 = vcmp.ge.f32.partialorder %v3765, 0.0
      %vm3774 = vcmp.ge.f32.partialorder %v3766, 0.0
      %vm3775 = vcmp.ge.f32.partialorder %v3767, 0.0
      %vm3776 = vcmp.ge.f32.partialorder %v3768, 0.0
      %vm3777 = vcmp.ge.f32.partialorder %v3769, 0.0
      %vm3778 = vcmp.ge.f32.partialorder %v3770, 0.0
      %vm3779 = vcmp.ge.f32.partialorder %v3771, 0.0
      %v3780 = vmul.f32 %v3764, 0.05
      %v3781 = vmul.f32 %v3765, 0.05
      %v3782 = vmul.f32 %v3766, 0.05
      %v3783 = vmul.f32 %v3767, 0.05
      %v3784 = vmul.f32 %v3768, 0.05
      %v3785 = vmul.f32 %v3769, 0.05
      %v3786 = vmul.f32 %v3770, 0.05
      %v3787 = vmul.f32 %v3771, 0.05
      %v3788 = vsel %vm3772, %v3764, %v3780
      %v3789 = vsel %vm3773, %v3765, %v3781
      %v3790 = vsel %vm3774, %v3766, %v3782
      %v3791 = vsel %vm3775, %v3767, %v3783
      %v3792 = vsel %vm3776, %v3768, %v3784
      %v3793 = vsel %vm3777, %v3769, %v3785
      %v3794 = vsel %vm3778, %v3770, %v3786
      %v3795 = vsel %vm3779, %v3771, %v3787
      %v3796 = vpack.c.bf16 %v3789, %v3788
      %v3797 = vpack.c.bf16 %v3791, %v3790
      %v3798 = vpack.c.bf16 %v3793, %v3792
      %v3799 = vpack.c.bf16 %v3795, %v3794
      %v3804 = vunpack.c.l.b16 %v3796
      %v3805 = vunpack.c.h.b16 %v3796
      %v3806 = vunpack.c.l.b16 %v3797
      %v3807 = vunpack.c.h.b16 %v3797
      %v3808 = vunpack.c.l.b16 %v3798
      %v3809 = vunpack.c.h.b16 %v3798
      %v3810 = vunpack.c.l.b16 %v3799
      %v3811 = vunpack.c.h.b16 %v3799
      %v3812 = vpack.c.b16 %v3804, %v3804
      %v3813 = vpack.c.b16 %v3805, %v3805
      %v3814 = vpack.c.b16 %v3806, %v3806
      %v3815 = vpack.c.b16 %v3807, %v3807
      %v3816 = vpack.c.b16 %v3808, %v3808
      %v3817 = vpack.c.b16 %v3809, %v3809
      %v3818 = vpack.c.b16 %v3810, %v3810
      %v3819 = vpack.c.b16 %v3811, %v3811
      %v3821 = vshrl.u32 %v3812, 16
      %v3823 = vrot.slane %v3821, 7
      %v3824 = vshll.u32 %v3812, 16
      %v3826 = vor.u32 %v3823, %v3824
      %v3827 = vrot.slane %v3823, 4
      %v3829 = vshrl.u32 %v3813, 16
      %v3831 = vrot.slane %v3829, 7
      %v3832 = vshll.u32 %v3813, 16
      %v3834 = vor.u32 %v3831, %v3832
      %v3835 = vrot.slane %v3831, 4
      %v3837 = vshrl.u32 %v3814, 16
      %v3839 = vrot.slane %v3837, 7
      %v3840 = vshll.u32 %v3814, 16
      %v3842 = vor.u32 %v3839, %v3840
      %v3843 = vrot.slane %v3839, 4
      %v3845 = vshrl.u32 %v3815, 16
      %v3847 = vrot.slane %v3845, 7
      %v3848 = vshll.u32 %v3815, 16
      %v3850 = vor.u32 %v3847, %v3848
      %v3851 = vrot.slane %v3847, 4
      %v3853 = vshrl.u32 %v3816, 16
      %v3855 = vrot.slane %v3853, 7
      %v3856 = vshll.u32 %v3816, 16
      %v3858 = vor.u32 %v3855, %v3856
      %v3859 = vrot.slane %v3855, 4
      %v3861 = vshrl.u32 %v3817, 16
      %v3863 = vrot.slane %v3861, 7
      %v3864 = vshll.u32 %v3817, 16
      %v3866 = vor.u32 %v3863, %v3864
      %v3867 = vrot.slane %v3863, 4
      %v3869 = vshrl.u32 %v3818, 16
      %v3871 = vrot.slane %v3869, 7
      %v3872 = vshll.u32 %v3818, 16
      %v3874 = vor.u32 %v3871, %v3872
      %v3875 = vrot.slane %v3871, 4
      %v3877 = vshrl.u32 %v3819, 16
      %v3879 = vrot.slane %v3877, 7
      %v3880 = vshll.u32 %v3819, 16
      %v3882 = vor.u32 %v3879, %v3880
      %v3883 = vrot.slane %v3879, 4
      %v3900 = vsel %vm1748, %v3826, %v2607
      %3901 = vst [vmem:[%s1745] sm:$0xf] %v3900
      %v3902 = vld [vmem:[%s1745 + $0x4] sm:$0x1]
      %v3903 = vsel %vm1754, %v3827, %v3902
      %3904 = vst [vmem:[%s1745 + $0x4] sm:$0x1] %v3903
      %v3905 = vld [vmem:[%s1745 + $0x8] sm:$0xf]
      %v3906 = vsel %vm1748, %v3834, %v3905
      %3907 = vst [vmem:[%s1745 + $0x8] sm:$0xf] %v3906
      %v3908 = vld [vmem:[%s1745 + $0xc] sm:$0x1]
      %v3909 = vsel %vm1754, %v3835, %v3908
      %3910 = vst [vmem:[%s1745 + $0xc] sm:$0x1] %v3909
      %v3911 = vld [vmem:[%s1745 + $0x10] sm:$0xf]
      %v3912 = vsel %vm1748, %v3842, %v3911
      %3913 = vst [vmem:[%s1745 + $0x10] sm:$0xf] %v3912
      %v3914 = vld [vmem:[%s1745 + $0x14] sm:$0x1]
      %v3915 = vsel %vm1754, %v3843, %v3914
      %3916 = vst [vmem:[%s1745 + $0x14] sm:$0x1] %v3915
      %v3917 = vld [vmem:[%s1745 + $0x18] sm:$0xf]
      %v3918 = vsel %vm1748, %v3850, %v3917
      %3919 = vst [vmem:[%s1745 + $0x18] sm:$0xf] %v3918
      %v3920 = vld [vmem:[%s1745 + $0x1c] sm:$0x1]
      %v3921 = vsel %vm1754, %v3851, %v3920
      %3922 = vst [vmem:[%s1745 + $0x1c] sm:$0x1] %v3921
      %v3923 = vld [vmem:[%s1745 + $0x20] sm:$0xf]
      %v3924 = vsel %vm1748, %v3858, %v3923
      %3925 = vst [vmem:[%s1745 + $0x20] sm:$0xf] %v3924
      %v3926 = vld [vmem:[%s1745 + $0x24] sm:$0x1]
      %v3927 = vsel %vm1754, %v3859, %v3926
      %3928 = vst [vmem:[%s1745 + $0x24] sm:$0x1] %v3927
      %v3929 = vld [vmem:[%s1745 + $0x28] sm:$0xf]
      %v3930 = vsel %vm1748, %v3866, %v3929
      %3931 = vst [vmem:[%s1745 + $0x28] sm:$0xf] %v3930
      %v3932 = vld [vmem:[%s1745 + $0x2c] sm:$0x1]
      %v3933 = vsel %vm1754, %v3867, %v3932
      %3934 = vst [vmem:[%s1745 + $0x2c] sm:$0x1] %v3933
      %v3935 = vld [vmem:[%s1745 + $0x30] sm:$0xf]
      %v3936 = vsel %vm1748, %v3874, %v3935
      %3937 = vst [vmem:[%s1745 + $0x30] sm:$0xf] %v3936
      %v3938 = vld [vmem:[%s1745 + $0x34] sm:$0x1]
      %v3939 = vsel %vm1754, %v3875, %v3938
      %3940 = vst [vmem:[%s1745 + $0x34] sm:$0x1] %v3939
      %v3941 = vld [vmem:[%s1745 + $0x38] sm:$0xf]
      %v3942 = vsel %vm1748, %v3882, %v3941
      %3943 = vst [vmem:[%s1745 + $0x38] sm:$0xf] %v3942
      %v3944 = vld [vmem:[%s1745 + $0x3c] sm:$0x1]
      %v3945 = vsel %vm1754, %v3883, %v3944
      %3946 = vst [vmem:[%s1745 + $0x3c] sm:$0x1] %v3945
      %v3947 = vld [vmem:[#allocation2] sm:$0xf]
      %v3948 = vld [vmem:[#allocation2 + $0x8] sm:$0xf]
      %v3949 = vld [vmem:[#allocation2 + $0x10] sm:$0xf]
      %v3950 = vld [vmem:[#allocation2 + $0x18] sm:$0xf]
      %v3951 = vld [vmem:[#allocation2 + $0x20] sm:$0xf]
      %v3952 = vld [vmem:[#allocation2 + $0x28] sm:$0xf]
      %v3953 = vld [vmem:[#allocation2 + $0x30] sm:$0xf]
      %v3954 = vld [vmem:[#allocation2 + $0x38] sm:$0xf]
      %v3955 = vld [vmem:[%s5] sm:$0xf]
      %v3956 = vld [vmem:[%s5 + $0x4] sm:$0xf]
      %v3957 = vld [vmem:[%s5 + $0x8] sm:$0xf]
      %v3958 = vld [vmem:[%s5 + $0xc] sm:$0xf]
      %v3959 = vld [vmem:[%s5 + $0x10] sm:$0xf]
      %v3960 = vld [vmem:[%s5 + $0x14] sm:$0xf]
      %v3961 = vld [vmem:[%s5 + $0x18] sm:$0xf]
      %v3962 = vld [vmem:[%s5 + $0x1c] sm:$0xf]
      %v3963 = vld [vmem:[%s5 + $0x20] sm:$0xf]
      %v3964 = vld [vmem:[%s5 + $0x24] sm:$0xf]
      %v3965 = vld [vmem:[%s5 + $0x28] sm:$0xf]
      %v3966 = vld [vmem:[%s5 + $0x2c] sm:$0xf]
      %v3967 = vld [vmem:[%s5 + $0x30] sm:$0xf]
      %v3968 = vld [vmem:[%s5 + $0x34] sm:$0xf]
      %v3969 = vld [vmem:[%s5 + $0x38] sm:$0xf]
      %v3970 = vld [vmem:[%s5 + $0x3c] sm:$0xf]
      %v3971 = vld [vmem:[#allocation2 + $0x4] sm:$0x1]
      %v3972 = vld [vmem:[#allocation2 + $0xc] sm:$0x1]
      %v3973 = vld [vmem:[#allocation2 + $0x14] sm:$0x1]
      %v3974 = vld [vmem:[#allocation2 + $0x1c] sm:$0x1]
      %v3975 = vld [vmem:[#allocation2 + $0x24] sm:$0x1]
      %v3976 = vld [vmem:[#allocation2 + $0x2c] sm:$0x1]
      %v3977 = vld [vmem:[#allocation2 + $0x34] sm:$0x1]
      %v3978 = vld [vmem:[#allocation2 + $0x3c] sm:$0x1]
      %v3980 = vshrl.u32 %v3947, 16
      %v3982 = vrot.slane %v3980, 4
      %v3983 = vshll.u32 %v3947, 16
      %v3985 = vrot.slane %v3983, 5
      %v3986 = vor.u32 %v3982, %v3985
      %v3987 = vrot.slane %v3986, 4
      %v3989 = vshll.u32 %v3971, 16
      %v3991 = vrot.slane %v3989, 5
      %v3992 = vsel %vm452, %v3987, %v3991
      %v3994 = vshrl.u32 %v3948, 16
      %v3996 = vrot.slane %v3994, 4
      %v3997 = vshll.u32 %v3948, 16
      %v3999 = vrot.slane %v3997, 5
      %v4000 = vor.u32 %v3996, %v3999
      %v4001 = vrot.slane %v4000, 4
      %v4003 = vshll.u32 %v3972, 16
      %v4005 = vrot.slane %v4003, 5
      %v4006 = vsel %vm452, %v4001, %v4005
      %v4008 = vshrl.u32 %v3949, 16
      %v4010 = vrot.slane %v4008, 4
      %v4011 = vshll.u32 %v3949, 16
      %v4013 = vrot.slane %v4011, 5
      %v4014 = vor.u32 %v4010, %v4013
      %v4015 = vrot.slane %v4014, 4
      %v4017 = vshll.u32 %v3973, 16
      %v4019 = vrot.slane %v4017, 5
      %v4020 = vsel %vm452, %v4015, %v4019
      %v4022 = vshrl.u32 %v3950, 16
      %v4024 = vrot.slane %v4022, 4
      %v4025 = vshll.u32 %v3950, 16
      %v4027 = vrot.slane %v4025, 5
      %v4028 = vor.u32 %v4024, %v4027
      %v4029 = vrot.slane %v4028, 4
      %v4031 = vshll.u32 %v3974, 16
      %v4033 = vrot.slane %v4031, 5
      %v4034 = vsel %vm452, %v4029, %v4033
      %v4036 = vshrl.u32 %v3951, 16
      %v4038 = vrot.slane %v4036, 4
      %v4039 = vshll.u32 %v3951, 16
      %v4041 = vrot.slane %v4039, 5
      %v4042 = vor.u32 %v4038, %v4041
      %v4043 = vrot.slane %v4042, 4
      %v4045 = vshll.u32 %v3975, 16
      %v4047 = vrot.slane %v4045, 5
      %v4048 = vsel %vm452, %v4043, %v4047
      %v4050 = vshrl.u32 %v3952, 16
      %v4052 = vrot.slane %v4050, 4
      %v4053 = vshll.u32 %v3952, 16
      %v4055 = vrot.slane %v4053, 5
      %v4056 = vor.u32 %v4052, %v4055
      %v4057 = vrot.slane %v4056, 4
      %v4059 = vshll.u32 %v3976, 16
      %v4061 = vrot.slane %v4059, 5
      %v4062 = vsel %vm452, %v4057, %v4061
      %v4064 = vshrl.u32 %v3953, 16
      %v4066 = vrot.slane %v4064, 4
      %v4067 = vshll.u32 %v3953, 16
      %v4069 = vrot.slane %v4067, 5
      %v4070 = vor.u32 %v4066, %v4069
      %v4071 = vrot.slane %v4070, 4
      %v4073 = vshll.u32 %v3977, 16
      %v4075 = vrot.slane %v4073, 5
      %v4076 = vsel %vm452, %v4071, %v4075
      %v4078 = vshrl.u32 %v3954, 16
      %v4080 = vrot.slane %v4078, 4
      %v4081 = vshll.u32 %v3954, 16
      %v4083 = vrot.slane %v4081, 5
      %v4084 = vor.u32 %v4080, %v4083
      %v4085 = vrot.slane %v4084, 4
      %v4087 = vshll.u32 %v3978, 16
      %v4089 = vrot.slane %v4087, 5
      %v4090 = vsel %vm452, %v4085, %v4089
      %v4091 = vld [vmem:[%s5 + $0x40] sm:$0xf]
      %v4092 = vld [vmem:[%s5 + $0x44] sm:$0xf]
      %v4093 = vld [vmem:[%s5 + $0x48] sm:$0xf]
      %v4094 = vld [vmem:[%s5 + $0x4c] sm:$0xf]
      %v4095 = vld [vmem:[%s5 + $0x50] sm:$0xf]
      %v4096 = vld [vmem:[%s5 + $0x54] sm:$0xf]
      %v4097 = vld [vmem:[%s5 + $0x58] sm:$0xf]
      %v4098 = vld [vmem:[%s5 + $0x5c] sm:$0xf]
      %v4099 = vld [vmem:[%s5 + $0x60] sm:$0xf]
      %v4100 = vld [vmem:[%s5 + $0x64] sm:$0xf]
      %v4101 = vld [vmem:[%s5 + $0x68] sm:$0xf]
      %v4102 = vld [vmem:[%s5 + $0x6c] sm:$0xf]
      %v4103 = vld [vmem:[%s5 + $0x70] sm:$0xf]
      %v4104 = vld [vmem:[%s5 + $0x74] sm:$0xf]
      %v4105 = vld [vmem:[%s5 + $0x78] sm:$0xf]
      %v4106 = vld [vmem:[%s5 + $0x7c] sm:$0xf]
      %v4107 = vunpack.c.l.b16 %v3992
      %v4108 = vunpack.c.l.b16 %v4006
      %v4109 = vunpack.c.l.b16 %v4020
      %v4110 = vunpack.c.l.b16 %v4034
      %v4111 = vunpack.c.l.b16 %v4048
      %v4112 = vunpack.c.l.b16 %v4062
      %v4113 = vunpack.c.l.b16 %v4076
      %v4114 = vunpack.c.l.b16 %v4090
      %v4115 = vpack.c.b16 %v4108, %v4107
      %v4116 = vpack.c.b16 %v4110, %v4109
      %v4117 = vpack.c.b16 %v4112, %v4111
      %v4118 = vpack.c.b16 %v4114, %v4113
      %v4139 = vunpack.c.l.b16 %v4091
      %v4140 = vunpack.c.l.b16 %v4092
      %v4141 = vunpack.c.l.b16 %v4093
      %v4142 = vunpack.c.l.b16 %v4094
      %v4143 = vunpack.c.l.b16 %v4095
      %v4144 = vunpack.c.l.b16 %v4096
      %v4145 = vunpack.c.l.b16 %v4097
      %v4146 = vunpack.c.l.b16 %v4098
      %v4147 = vunpack.c.l.b16 %v4099
      %v4148 = vunpack.c.l.b16 %v4100
      %v4149 = vunpack.c.l.b16 %v4101
      %v4150 = vunpack.c.l.b16 %v4102
      %v4151 = vunpack.c.l.b16 %v4103
      %v4152 = vunpack.c.l.b16 %v4104
      %v4153 = vunpack.c.l.b16 %v4105
      %v4154 = vunpack.c.l.b16 %v4106
      %v4155 = vpack.c.b16 %v4140, %v4139
      %v4156 = vpack.c.b16 %v4142, %v4141
      %v4157 = vpack.c.b16 %v4144, %v4143
      %v4158 = vpack.c.b16 %v4146, %v4145
      %v4159 = vpack.c.b16 %v4148, %v4147
      %v4160 = vpack.c.b16 %v4150, %v4149
      %v4161 = vpack.c.b16 %v4152, %v4151
      %v4162 = vpack.c.b16 %v4154, %v4153
      %4171 = vmatprep.subr.bf16.mxu0 0
      %4172 = vmatpush1.bf16.msra.mxu0 %v4155
      %4173 = vmatprep.subr.bf16.mxu0 0
      %4174 = vmatpush1.bf16.msra.mxu0 %v4156
      %4175 = vmatprep.subr.bf16.mxu0 0
      %4176 = vmatpush1.bf16.msra.mxu0 %v4157
      %4177 = vmatprep.subr.bf16.mxu0 0
      %4178 = vmatpush1.bf16.msra.mxu0 %v4158
      %4179 = vmatprep.subr.bf16.mxu0 0
      %4180 = vmatpush1.bf16.msra.mxu0 %v4159
      %4181 = vmatprep.subr.bf16.mxu0 0
      %4182 = vmatpush1.bf16.msra.mxu0 %v4160
      %4183 = vmatprep.subr.bf16.mxu0 0
      %4184 = vmatpush1.bf16.msra.mxu0 %v4161
      %4185 = vmatprep.subr.bf16.mxu0 0
      %4186 = vmatpush1.bf16.msra.mxu0 %v4162
      %4187 = vmatprep.subr.bf16.mxu0 0
      %4188 = vmatpush1.bf16.msra.mxu0 0
      %4189 = vmatprep.subr.bf16.mxu0 0
      %4190 = vmatpush1.bf16.msra.mxu0 0
      %4191 = vmatprep.subr.bf16.mxu0 0
      %4192 = vmatpush1.bf16.msra.mxu0 0
      %4193 = vmatprep.subr.bf16.mxu0 0
      %4194 = vmatpush1.bf16.msra.mxu0 0
      %4195 = vmatprep.subr.bf16.mxu0 0
      %4196 = vmatpush1.bf16.msra.mxu0 0
      %4197 = vmatprep.subr.bf16.mxu0 0
      %4198 = vmatpush1.bf16.msra.mxu0 0
      %4199 = vmatprep.subr.bf16.mxu0 0
      %4200 = vmatpush1.bf16.msra.mxu0 0
      %4201 = vmatprep.subr.bf16.mxu0 0
      %4202 = vmatpush1.bf16.msra.mxu0 0
      %4203 = vmatprep.mubr.bf16.mxu0 0
      %4204 = vmatmul.mubr.bf16.gmra.mrb[0].mxu0 %v4115
      %v4205 = vpop.f32.mrb[0].mxu0
      %v4206 = vadd.f32 0.0, %v4205
      %v4207 = vpop.f32.mrb[0].mxu0
      %v4208 = vpop.f32.mrb[0].mxu0
      %v4209 = vadd.f32 0.0, %v4208
      %v4210 = vpop.f32.mrb[0].mxu0
      %4211 = vmatprep.mubr.bf16.mxu0 0
      %4212 = vmatmul.mubr.bf16.gmra.mrb[0].mxu0 %v4116
      %v4213 = vpop.f32.mrb[0].mxu0
      %v4214 = vadd.f32 0.0, %v4213
      %v4215 = vpop.f32.mrb[0].mxu0
      %v4216 = vpop.f32.mrb[0].mxu0
      %v4217 = vadd.f32 0.0, %v4216
      %v4218 = vpop.f32.mrb[0].mxu0
      %4219 = vmatprep.mubr.bf16.mxu0 0
      %4220 = vmatmul.mubr.bf16.gmra.mrb[0].mxu0 %v4117
      %v4221 = vpop.f32.mrb[0].mxu0
      %v4222 = vadd.f32 0.0, %v4221
      %v4223 = vpop.f32.mrb[0].mxu0
      %v4224 = vpop.f32.mrb[0].mxu0
      %v4225 = vadd.f32 0.0, %v4224
      %v4226 = vpop.f32.mrb[0].mxu0
      %4227 = vmatprep.mubr.bf16.mxu0 0
      %4228 = vmatmul.mubr.bf16.gmra.mrb[0].mxu0 %v4118
      %v4229 = vpop.f32.mrb[0].mxu0
      %v4230 = vadd.f32 0.0, %v4229
      %v4231 = vpop.f32.mrb[0].mxu0
      %v4232 = vpop.f32.mrb[0].mxu0
      %v4233 = vadd.f32 0.0, %v4232
      %v4234 = vpop.f32.mrb[0].mxu0
      %4235 = vdwg.mxu0
      %v4244 = vunpack.c.l.b16 %v3947
      %v4245 = vunpack.c.l.b16 %v3948
      %v4246 = vunpack.c.l.b16 %v3949
      %v4247 = vunpack.c.l.b16 %v3950
      %v4248 = vunpack.c.l.b16 %v3951
      %v4249 = vunpack.c.l.b16 %v3952
      %v4250 = vunpack.c.l.b16 %v3953
      %v4251 = vunpack.c.l.b16 %v3954
      %v4252 = vpack.c.b16 %v4245, %v4244
      %v4253 = vpack.c.b16 %v4247, %v4246
      %v4254 = vpack.c.b16 %v4249, %v4248
      %v4255 = vpack.c.b16 %v4251, %v4250
      %v4276 = vunpack.c.l.b16 %v3955
      %v4277 = vunpack.c.l.b16 %v3956
      %v4278 = vunpack.c.l.b16 %v3957
      %v4279 = vunpack.c.l.b16 %v3958
      %v4280 = vunpack.c.l.b16 %v3959
      %v4281 = vunpack.c.l.b16 %v3960
      %v4282 = vunpack.c.l.b16 %v3961
      %v4283 = vunpack.c.l.b16 %v3962
      %v4284 = vunpack.c.l.b16 %v3963
      %v4285 = vunpack.c.l.b16 %v3964
      %v4286 = vunpack.c.l.b16 %v3965
      %v4287 = vunpack.c.l.b16 %v3966
      %v4288 = vunpack.c.l.b16 %v3967
      %v4289 = vunpack.c.l.b16 %v3968
      %v4290 = vunpack.c.l.b16 %v3969
      %v4291 = vunpack.c.l.b16 %v3970
      %v4292 = vpack.c.b16 %v4277, %v4276
      %v4293 = vpack.c.b16 %v4279, %v4278
      %v4294 = vpack.c.b16 %v4281, %v4280
      %v4295 = vpack.c.b16 %v4283, %v4282
      %v4296 = vpack.c.b16 %v4285, %v4284
      %v4297 = vpack.c.b16 %v4287, %v4286
      %v4298 = vpack.c.b16 %v4289, %v4288
      %v4299 = vpack.c.b16 %v4291, %v4290
      %4308 = vmatprep.subr.bf16.mxu0 0
      %4309 = vmatpush1.bf16.msra.mxu0 %v4292
      %4310 = vmatprep.subr.bf16.mxu0 0
      %4311 = vmatpush1.bf16.msra.mxu0 %v4293
      %4312 = vmatprep.subr.bf16.mxu0 0
      %4313 = vmatpush1.bf16.msra.mxu0 %v4294
      %4314 = vmatprep.subr.bf16.mxu0 0
      %4315 = vmatpush1.bf16.msra.mxu0 %v4295
      %4316 = vmatprep.subr.bf16.mxu0 0
      %4317 = vmatpush1.bf16.msra.mxu0 %v4296
      %4318 = vmatprep.subr.bf16.mxu0 0
      %4319 = vmatpush1.bf16.msra.mxu0 %v4297
      %4320 = vmatprep.subr.bf16.mxu0 0
      %4321 = vmatpush1.bf16.msra.mxu0 %v4298
      %4322 = vmatprep.subr.bf16.mxu0 0
      %4323 = vmatpush1.bf16.msra.mxu0 %v4299
      %4324 = vmatprep.subr.bf16.mxu0 0
      %4325 = vmatpush1.bf16.msra.mxu0 0
      %4326 = vmatprep.subr.bf16.mxu0 0
      %4327 = vmatpush1.bf16.msra.mxu0 0
      %4328 = vmatprep.subr.bf16.mxu0 0
      %4329 = vmatpush1.bf16.msra.mxu0 0
      %4330 = vmatprep.subr.bf16.mxu0 0
      %4331 = vmatpush1.bf16.msra.mxu0 0
      %4332 = vmatprep.subr.bf16.mxu0 0
      %4333 = vmatpush1.bf16.msra.mxu0 0
      %4334 = vmatprep.subr.bf16.mxu0 0
      %4335 = vmatpush1.bf16.msra.mxu0 0
      %4336 = vmatprep.subr.bf16.mxu0 0
      %4337 = vmatpush1.bf16.msra.mxu0 0
      %4338 = vmatprep.subr.bf16.mxu0 0
      %4339 = vmatpush1.bf16.msra.mxu0 0
      %4340 = vmatprep.mubr.bf16.mxu0 0
      %4341 = vmatmul.mubr.bf16.gmra.mrb[0].mxu0 %v4252
      %v4342 = vpop.f32.mrb[0].mxu0
      %v4343 = vadd.f32 %v4206, %v4342
      %v4344 = vpop.f32.mrb[0].mxu0
      %v4345 = vpop.f32.mrb[0].mxu0
      %v4346 = vadd.f32 %v4209, %v4345
      %v4347 = vpop.f32.mrb[0].mxu0
      %4348 = vmatprep.mubr.bf16.mxu0 0
      %4349 = vmatmul.mubr.bf16.gmra.mrb[0].mxu0 %v4253
      %v4350 = vpop.f32.mrb[0].mxu0
      %v4351 = vadd.f32 %v4214, %v4350
      %v4352 = vpop.f32.mrb[0].mxu0
      %v4353 = vpop.f32.mrb[0].mxu0
      %v4354 = vadd.f32 %v4217, %v4353
      %v4355 = vpop.f32.mrb[0].mxu0
      %4356 = vmatprep.mubr.bf16.mxu0 0
      %4357 = vmatmul.mubr.bf16.gmra.mrb[0].mxu0 %v4254
      %v4358 = vpop.f32.mrb[0].mxu0
      %v4359 = vadd.f32 %v4222, %v4358
      %v4360 = vpop.f32.mrb[0].mxu0
      %v4361 = vpop.f32.mrb[0].mxu0
      %v4362 = vadd.f32 %v4225, %v4361
      %v4363 = vpop.f32.mrb[0].mxu0
      %4364 = vmatprep.mubr.bf16.mxu0 0
      %4365 = vmatmul.mubr.bf16.gmra.mrb[0].mxu0 %v4255
      %v4366 = vpop.f32.mrb[0].mxu0
      %v4367 = vadd.f32 %v4230, %v4366
      %v4368 = vpop.f32.mrb[0].mxu0
      %v4369 = vpop.f32.mrb[0].mxu0
      %v4370 = vadd.f32 %v4233, %v4369
      %v4371 = vpop.f32.mrb[0].mxu0
      %4372 = vdwg.mxu0
      %v4373 = vld [vmem:[#allocation2] sm:$0xe]
      %v4374 = vld [vmem:[#allocation2 + $0x8] sm:$0xe]
      %v4375 = vld [vmem:[#allocation2 + $0x10] sm:$0xe]
      %v4376 = vld [vmem:[#allocation2 + $0x18] sm:$0xe]
      %v4377 = vld [vmem:[#allocation2 + $0x20] sm:$0xe]
      %v4378 = vld [vmem:[#allocation2 + $0x28] sm:$0xe]
      %v4379 = vld [vmem:[#allocation2 + $0x30] sm:$0xe]
      %v4380 = vld [vmem:[#allocation2 + $0x38] sm:$0xe]
      %v4397 = vrot.slane %v4373, 5
      %v4398 = vrot.slane %v4397, 4
      %v4399 = vrot.slane %v3971, 5
      %v4400 = vsel %vm2252, %v4398, %v4399
      %v4401 = vrot.slane %v4374, 5
      %v4402 = vrot.slane %v4401, 4
      %v4403 = vrot.slane %v3972, 5
      %v4404 = vsel %vm2252, %v4402, %v4403
      %v4405 = vrot.slane %v4375, 5
      %v4406 = vrot.slane %v4405, 4
      %v4407 = vrot.slane %v3973, 5
      %v4408 = vsel %vm2252, %v4406, %v4407
      %v4409 = vrot.slane %v4376, 5
      %v4410 = vrot.slane %v4409, 4
      %v4411 = vrot.slane %v3974, 5
      %v4412 = vsel %vm2252, %v4410, %v4411
      %v4413 = vrot.slane %v4377, 5
      %v4414 = vrot.slane %v4413, 4
      %v4415 = vrot.slane %v3975, 5
      %v4416 = vsel %vm2252, %v4414, %v4415
      %v4417 = vrot.slane %v4378, 5
      %v4418 = vrot.slane %v4417, 4
      %v4419 = vrot.slane %v3976, 5
      %v4420 = vsel %vm2252, %v4418, %v4419
      %v4421 = vrot.slane %v4379, 5
      %v4422 = vrot.slane %v4421, 4
      %v4423 = vrot.slane %v3977, 5
      %v4424 = vsel %vm2252, %v4422, %v4423
      %v4425 = vrot.slane %v4380, 5
      %v4426 = vrot.slane %v4425, 4
      %v4427 = vrot.slane %v3978, 5
      %v4428 = vsel %vm2252, %v4426, %v4427
      %v4429 = vld [vmem:[%s5 + $0x80] sm:$0xf]
      %v4430 = vld [vmem:[%s5 + $0x84] sm:$0xf]
      %v4431 = vld [vmem:[%s5 + $0x88] sm:$0xf]
      %v4432 = vld [vmem:[%s5 + $0x8c] sm:$0xf]
      %v4433 = vld [vmem:[%s5 + $0x90] sm:$0xf]
      %v4434 = vld [vmem:[%s5 + $0x94] sm:$0xf]
      %v4435 = vld [vmem:[%s5 + $0x98] sm:$0xf]
      %v4436 = vld [vmem:[%s5 + $0x9c] sm:$0xf]
      %v4437 = vld [vmem:[%s5 + $0xa0] sm:$0xf]
      %v4438 = vld [vmem:[%s5 + $0xa4] sm:$0xf]
      %v4439 = vld [vmem:[%s5 + $0xa8] sm:$0xf]
      %v4440 = vld [vmem:[%s5 + $0xac] sm:$0xf]
      %v4441 = vld [vmem:[%s5 + $0xb0] sm:$0xf]
      %v4442 = vld [vmem:[%s5 + $0xb4] sm:$0xf]
      %v4443 = vld [vmem:[%s5 + $0xb8] sm:$0xf]
      %v4444 = vld [vmem:[%s5 + $0xbc] sm:$0xf]
      %v4445 = vunpack.c.l.b16 %v4400
      %v4446 = vunpack.c.l.b16 %v4404
      %v4447 = vunpack.c.l.b16 %v4408
      %v4448 = vunpack.c.l.b16 %v4412
      %v4449 = vunpack.c.l.b16 %v4416
      %v4450 = vunpack.c.l.b16 %v4420
      %v4451 = vunpack.c.l.b16 %v4424
      %v4452 = vunpack.c.l.b16 %v4428
      %v4453 = vpack.c.b16 %v4446, %v4445
      %v4454 = vpack.c.b16 %v4448, %v4447
      %v4455 = vpack.c.b16 %v4450, %v4449
      %v4456 = vpack.c.b16 %v4452, %v4451
      %v4477 = vunpack.c.l.b16 %v4429
      %v4478 = vunpack.c.l.b16 %v4430
      %v4479 = vunpack.c.l.b16 %v4431
      %v4480 = vunpack.c.l.b16 %v4432
      %v4481 = vunpack.c.l.b16 %v4433
      %v4482 = vunpack.c.l.b16 %v4434
      %v4483 = vunpack.c.l.b16 %v4435
      %v4484 = vunpack.c.l.b16 %v4436
      %v4485 = vunpack.c.l.b16 %v4437
      %v4486 = vunpack.c.l.b16 %v4438
      %v4487 = vunpack.c.l.b16 %v4439
      %v4488 = vunpack.c.l.b16 %v4440
      %v4489 = vunpack.c.l.b16 %v4441
      %v4490 = vunpack.c.l.b16 %v4442
      %v4491 = vunpack.c.l.b16 %v4443
      %v4492 = vunpack.c.l.b16 %v4444
      %v4493 = vpack.c.b16 %v4478, %v4477
      %v4494 = vpack.c.b16 %v4480, %v4479
      %v4495 = vpack.c.b16 %v4482, %v4481
      %v4496 = vpack.c.b16 %v4484, %v4483
      %v4497 = vpack.c.b16 %v4486, %v4485
      %v4498 = vpack.c.b16 %v4488, %v4487
      %v4499 = vpack.c.b16 %v4490, %v4489
      %v4500 = vpack.c.b16 %v4492, %v4491
      %4509 = vmatprep.subr.bf16.mxu0 0
      %4510 = vmatpush1.bf16.msra.mxu0 %v4493
      %4511 = vmatprep.subr.bf16.mxu0 0
      %4512 = vmatpush1.bf16.msra.mxu0 %v4494
      %4513 = vmatprep.subr.bf16.mxu0 0
      %4514 = vmatpush1.bf16.msra.mxu0 %v4495
      %4515 = vmatprep.subr.bf16.mxu0 0
      %4516 = vmatpush1.bf16.msra.mxu0 %v4496
      %4517 = vmatprep.subr.bf16.mxu0 0
      %4518 = vmatpush1.bf16.msra.mxu0 %v4497
      %4519 = vmatprep.subr.bf16.mxu0 0
      %4520 = vmatpush1.bf16.msra.mxu0 %v4498
      %4521 = vmatprep.subr.bf16.mxu0 0
      %4522 = vmatpush1.bf16.msra.mxu0 %v4499
      %4523 = vmatprep.subr.bf16.mxu0 0
      %4524 = vmatpush1.bf16.msra.mxu0 %v4500
      %4525 = vmatprep.subr.bf16.mxu0 0
      %4526 = vmatpush1.bf16.msra.mxu0 0
      %4527 = vmatprep.subr.bf16.mxu0 0
      %4528 = vmatpush1.bf16.msra.mxu0 0
      %4529 = vmatprep.subr.bf16.mxu0 0
      %4530 = vmatpush1.bf16.msra.mxu0 0
      %4531 = vmatprep.subr.bf16.mxu0 0
      %4532 = vmatpush1.bf16.msra.mxu0 0
      %4533 = vmatprep.subr.bf16.mxu0 0
      %4534 = vmatpush1.bf16.msra.mxu0 0
      %4535 = vmatprep.subr.bf16.mxu0 0
      %4536 = vmatpush1.bf16.msra.mxu0 0
      %4537 = vmatprep.subr.bf16.mxu0 0
      %4538 = vmatpush1.bf16.msra.mxu0 0
      %4539 = vmatprep.subr.bf16.mxu0 0
      %4540 = vmatpush1.bf16.msra.mxu0 0
      %4541 = vmatprep.mubr.bf16.mxu0 0
      %4542 = vmatmul.mubr.bf16.gmra.mrb[0].mxu0 %v4453
      %v4543 = vpop.f32.mrb[0].mxu0
      %v4544 = vadd.f32 0.0, %v4543
      %v4545 = vpop.f32.mrb[0].mxu0
      %v4546 = vpop.f32.mrb[0].mxu0
      %v4547 = vadd.f32 0.0, %v4546
      %v4548 = vpop.f32.mrb[0].mxu0
      %4549 = vmatprep.mubr.bf16.mxu0 0
      %4550 = vmatmul.mubr.bf16.gmra.mrb[0].mxu0 %v4454
      %v4551 = vpop.f32.mrb[0].mxu0
      %v4552 = vadd.f32 0.0, %v4551
      %v4553 = vpop.f32.mrb[0].mxu0
      %v4554 = vpop.f32.mrb[0].mxu0
      %v4555 = vadd.f32 0.0, %v4554
      %v4556 = vpop.f32.mrb[0].mxu0
      %4557 = vmatprep.mubr.bf16.mxu0 0
      %4558 = vmatmul.mubr.bf16.gmra.mrb[0].mxu0 %v4455
      %v4559 = vpop.f32.mrb[0].mxu0
      %v4560 = vadd.f32 0.0, %v4559
      %v4561 = vpop.f32.mrb[0].mxu0
      %v4562 = vpop.f32.mrb[0].mxu0
      %v4563 = vadd.f32 0.0, %v4562
      %v4564 = vpop.f32.mrb[0].mxu0
      %4565 = vmatprep.mubr.bf16.mxu0 0
      %4566 = vmatmul.mubr.bf16.gmra.mrb[0].mxu0 %v4456
      %v4567 = vpop.f32.mrb[0].mxu0
      %v4568 = vadd.f32 0.0, %v4567
      %v4569 = vpop.f32.mrb[0].mxu0
      %v4570 = vpop.f32.mrb[0].mxu0
      %v4571 = vadd.f32 0.0, %v4570
      %v4572 = vpop.f32.mrb[0].mxu0
      %4573 = vdwg.mxu0
      %v4574 = vadd.f32 %v4343, %v4544
      %v4575 = vadd.f32 %v4346, %v4547
      %v4576 = vadd.f32 %v4351, %v4552
      %v4577 = vadd.f32 %v4354, %v4555
      %v4578 = vadd.f32 %v4359, %v4560
      %v4579 = vadd.f32 %v4362, %v4563
      %v4580 = vadd.f32 %v4367, %v4568
      %v4581 = vadd.f32 %v4370, %v4571
      %v4582 = vld [vmem:[%s1745] sm:$0xf]
      %v4583 = vld [vmem:[%s1745 + $0x8] sm:$0xf]
      %v4584 = vld [vmem:[%s1745 + $0x10] sm:$0xf]
      %v4585 = vld [vmem:[%s1745 + $0x18] sm:$0xf]
      %v4586 = vld [vmem:[%s1745 + $0x20] sm:$0xf]
      %v4587 = vld [vmem:[%s1745 + $0x28] sm:$0xf]
      %v4588 = vld [vmem:[%s1745 + $0x30] sm:$0xf]
      %v4589 = vld [vmem:[%s1745 + $0x38] sm:$0xf]
      %v4590 = vld [vmem:[%s5 + $0xc0] sm:$0xf]
      %v4591 = vld [vmem:[%s5 + $0xc4] sm:$0xf]
      %v4592 = vld [vmem:[%s5 + $0xc8] sm:$0xf]
      %v4593 = vld [vmem:[%s5 + $0xcc] sm:$0xf]
      %v4594 = vld [vmem:[%s5 + $0xd0] sm:$0xf]
      %v4595 = vld [vmem:[%s5 + $0xd4] sm:$0xf]
      %v4596 = vld [vmem:[%s5 + $0xd8] sm:$0xf]
      %v4597 = vld [vmem:[%s5 + $0xdc] sm:$0xf]
      %v4598 = vld [vmem:[%s5 + $0xe0] sm:$0xf]
      %v4599 = vld [vmem:[%s5 + $0xe4] sm:$0xf]
      %v4600 = vld [vmem:[%s5 + $0xe8] sm:$0xf]
      %v4601 = vld [vmem:[%s5 + $0xec] sm:$0xf]
      %v4602 = vld [vmem:[%s5 + $0xf0] sm:$0xf]
      %v4603 = vld [vmem:[%s5 + $0xf4] sm:$0xf]
      %v4604 = vld [vmem:[%s5 + $0xf8] sm:$0xf]
      %v4605 = vld [vmem:[%s5 + $0xfc] sm:$0xf]
      %v4614 = vunpack.c.l.b16 %v4582
      %v4615 = vunpack.c.l.b16 %v4583
      %v4616 = vunpack.c.l.b16 %v4584
      %v4617 = vunpack.c.l.b16 %v4585
      %v4618 = vunpack.c.l.b16 %v4586
      %v4619 = vunpack.c.l.b16 %v4587
      %v4620 = vunpack.c.l.b16 %v4588
      %v4621 = vunpack.c.l.b16 %v4589
      %v4622 = vpack.c.b16 %v4615, %v4614
      %v4623 = vpack.c.b16 %v4617, %v4616
      %v4624 = vpack.c.b16 %v4619, %v4618
      %v4625 = vpack.c.b16 %v4621, %v4620
      %v4646 = vunpack.c.l.b16 %v4590
      %v4647 = vunpack.c.l.b16 %v4591
      %v4648 = vunpack.c.l.b16 %v4592
      %v4649 = vunpack.c.l.b16 %v4593
      %v4650 = vunpack.c.l.b16 %v4594
      %v4651 = vunpack.c.l.b16 %v4595
      %v4652 = vunpack.c.l.b16 %v4596
      %v4653 = vunpack.c.l.b16 %v4597
      %v4654 = vunpack.c.l.b16 %v4598
      %v4655 = vunpack.c.l.b16 %v4599
      %v4656 = vunpack.c.l.b16 %v4600
      %v4657 = vunpack.c.l.b16 %v4601
      %v4658 = vunpack.c.l.b16 %v4602
      %v4659 = vunpack.c.l.b16 %v4603
      %v4660 = vunpack.c.l.b16 %v4604
      %v4661 = vunpack.c.l.b16 %v4605
      %v4662 = vpack.c.b16 %v4647, %v4646
      %v4663 = vpack.c.b16 %v4649, %v4648
      %v4664 = vpack.c.b16 %v4651, %v4650
      %v4665 = vpack.c.b16 %v4653, %v4652
      %v4666 = vpack.c.b16 %v4655, %v4654
      %v4667 = vpack.c.b16 %v4657, %v4656
      %v4668 = vpack.c.b16 %v4659, %v4658
      %v4669 = vpack.c.b16 %v4661, %v4660
      %4678 = vmatprep.subr.bf16.mxu0 0
      %4679 = vmatpush1.bf16.msra.mxu0 %v4662
      %4680 = vmatprep.subr.bf16.mxu0 0
      %4681 = vmatpush1.bf16.msra.mxu0 %v4663
      %4682 = vmatprep.subr.bf16.mxu0 0
      %4683 = vmatpush1.bf16.msra.mxu0 %v4664
      %4684 = vmatprep.subr.bf16.mxu0 0
      %4685 = vmatpush1.bf16.msra.mxu0 %v4665
      %4686 = vmatprep.subr.bf16.mxu0 0
      %4687 = vmatpush1.bf16.msra.mxu0 %v4666
      %4688 = vmatprep.subr.bf16.mxu0 0
      %4689 = vmatpush1.bf16.msra.mxu0 %v4667
      %4690 = vmatprep.subr.bf16.mxu0 0
      %4691 = vmatpush1.bf16.msra.mxu0 %v4668
      %4692 = vmatprep.subr.bf16.mxu0 0
      %4693 = vmatpush1.bf16.msra.mxu0 %v4669
      %4694 = vmatprep.subr.bf16.mxu0 0
      %4695 = vmatpush1.bf16.msra.mxu0 0
      %4696 = vmatprep.subr.bf16.mxu0 0
      %4697 = vmatpush1.bf16.msra.mxu0 0
      %4698 = vmatprep.subr.bf16.mxu0 0
      %4699 = vmatpush1.bf16.msra.mxu0 0
      %4700 = vmatprep.subr.bf16.mxu0 0
      %4701 = vmatpush1.bf16.msra.mxu0 0
      %4702 = vmatprep.subr.bf16.mxu0 0
      %4703 = vmatpush1.bf16.msra.mxu0 0
      %4704 = vmatprep.subr.bf16.mxu0 0
      %4705 = vmatpush1.bf16.msra.mxu0 0
      %4706 = vmatprep.subr.bf16.mxu0 0
      %4707 = vmatpush1.bf16.msra.mxu0 0
      %4708 = vmatprep.subr.bf16.mxu0 0
      %4709 = vmatpush1.bf16.msra.mxu0 0
      %4710 = vmatprep.mubr.bf16.mxu0 0
      %4711 = vmatmul.mubr.bf16.gmra.mrb[0].mxu0 %v4622
      %v4712 = vpop.f32.mrb[0].mxu0
      %v4713 = vadd.f32 0.0, %v4712
      %v4714 = vpop.f32.mrb[0].mxu0
      %v4715 = vpop.f32.mrb[0].mxu0
      %v4716 = vadd.f32 0.0, %v4715
      %v4717 = vpop.f32.mrb[0].mxu0
      %4718 = vmatprep.mubr.bf16.mxu0 0
      %4719 = vmatmul.mubr.bf16.gmra.mrb[0].mxu0 %v4623
      %v4720 = vpop.f32.mrb[0].mxu0
      %v4721 = vadd.f32 0.0, %v4720
      %v4722 = vpop.f32.mrb[0].mxu0
      %v4723 = vpop.f32.mrb[0].mxu0
      %v4724 = vadd.f32 0.0, %v4723
      %v4725 = vpop.f32.mrb[0].mxu0
      %4726 = vmatprep.mubr.bf16.mxu0 0
      %4727 = vmatmul.mubr.bf16.gmra.mrb[0].mxu0 %v4624
      %v4728 = vpop.f32.mrb[0].mxu0
      %v4729 = vadd.f32 0.0, %v4728
      %v4730 = vpop.f32.mrb[0].mxu0
      %v4731 = vpop.f32.mrb[0].mxu0
      %v4732 = vadd.f32 0.0, %v4731
      %v4733 = vpop.f32.mrb[0].mxu0
      %4734 = vmatprep.mubr.bf16.mxu0 0
      %4735 = vmatmul.mubr.bf16.gmra.mrb[0].mxu0 %v4625
      %v4736 = vpop.f32.mrb[0].mxu0
      %v4737 = vadd.f32 0.0, %v4736
      %v4738 = vpop.f32.mrb[0].mxu0
      %v4739 = vpop.f32.mrb[0].mxu0
      %v4740 = vadd.f32 0.0, %v4739
      %v4741 = vpop.f32.mrb[0].mxu0
      %4742 = vdwg.mxu0
      %v4743 = vadd.f32 %v4574, %v4713
      %v4744 = vadd.f32 %v4575, %v4716
      %v4745 = vadd.f32 %v4576, %v4721
      %v4746 = vadd.f32 %v4577, %v4724
      %v4747 = vadd.f32 %v4578, %v4729
      %v4748 = vadd.f32 %v4579, %v4732
      %v4749 = vadd.f32 %v4580, %v4737
      %v4750 = vadd.f32 %v4581, %v4740
      %v4751 = vld [vmem:[%s1745] sm:$0xf]
      %v4752 = vld [vmem:[%s1745 + $0x4] sm:$0x1]
      %v4753 = vld [vmem:[%s1745 + $0x8] sm:$0xf]
      %v4754 = vld [vmem:[%s1745 + $0xc] sm:$0x1]
      %v4755 = vld [vmem:[%s1745 + $0x10] sm:$0xf]
      %v4756 = vld [vmem:[%s1745 + $0x14] sm:$0x1]
      %v4757 = vld [vmem:[%s1745 + $0x18] sm:$0xf]
      %v4758 = vld [vmem:[%s1745 + $0x1c] sm:$0x1]
      %v4759 = vld [vmem:[%s1745 + $0x20] sm:$0xf]
      %v4760 = vld [vmem:[%s1745 + $0x24] sm:$0x1]
      %v4761 = vld [vmem:[%s1745 + $0x28] sm:$0xf]
      %v4762 = vld [vmem:[%s1745 + $0x2c] sm:$0x1]
      %v4763 = vld [vmem:[%s1745 + $0x30] sm:$0xf]
      %v4764 = vld [vmem:[%s1745 + $0x34] sm:$0x1]
      %v4765 = vld [vmem:[%s1745 + $0x38] sm:$0xf]
      %v4766 = vld [vmem:[%s1745 + $0x3c] sm:$0x1]
      %v4768 = vshrl.u32 %v4751, 16
      %v4770 = vrot.slane %v4768, 4
      %v4771 = vshll.u32 %v4751, 16
      %v4773 = vrot.slane %v4771, 5
      %v4774 = vor.u32 %v4770, %v4773
      %v4775 = vrot.slane %v4774, 4
      %v4777 = vshll.u32 %v4752, 16
      %v4779 = vrot.slane %v4777, 5
      %v4780 = vsel %vm452, %v4775, %v4779
      %v4782 = vshrl.u32 %v4753, 16
      %v4784 = vrot.slane %v4782, 4
      %v4785 = vshll.u32 %v4753, 16
      %v4787 = vrot.slane %v4785, 5
      %v4788 = vor.u32 %v4784, %v4787
      %v4789 = vrot.slane %v4788, 4
      %v4791 = vshll.u32 %v4754, 16
      %v4793 = vrot.slane %v4791, 5
      %v4794 = vsel %vm452, %v4789, %v4793
      %v4796 = vshrl.u32 %v4755, 16
      %v4798 = vrot.slane %v4796, 4
      %v4799 = vshll.u32 %v4755, 16
      %v4801 = vrot.slane %v4799, 5
      %v4802 = vor.u32 %v4798, %v4801
      %v4803 = vrot.slane %v4802, 4
      %v4805 = vshll.u32 %v4756, 16
      %v4807 = vrot.slane %v4805, 5
      %v4808 = vsel %vm452, %v4803, %v4807
      %v4810 = vshrl.u32 %v4757, 16
      %v4812 = vrot.slane %v4810, 4
      %v4813 = vshll.u32 %v4757, 16
      %v4815 = vrot.slane %v4813, 5
      %v4816 = vor.u32 %v4812, %v4815
      %v4817 = vrot.slane %v4816, 4
      %v4819 = vshll.u32 %v4758, 16
      %v4821 = vrot.slane %v4819, 5
      %v4822 = vsel %vm452, %v4817, %v4821
      %v4824 = vshrl.u32 %v4759, 16
      %v4826 = vrot.slane %v4824, 4
      %v4827 = vshll.u32 %v4759, 16
      %v4829 = vrot.slane %v4827, 5
      %v4830 = vor.u32 %v4826, %v4829
      %v4831 = vrot.slane %v4830, 4
      %v4833 = vshll.u32 %v4760, 16
      %v4835 = vrot.slane %v4833, 5
      %v4836 = vsel %vm452, %v4831, %v4835
      %v4838 = vshrl.u32 %v4761, 16
      %v4840 = vrot.slane %v4838, 4
      %v4841 = vshll.u32 %v4761, 16
      %v4843 = vrot.slane %v4841, 5
      %v4844 = vor.u32 %v4840, %v4843
      %v4845 = vrot.slane %v4844, 4
      %v4847 = vshll.u32 %v4762, 16
      %v4849 = vrot.slane %v4847, 5
      %v4850 = vsel %vm452, %v4845, %v4849
      %v4852 = vshrl.u32 %v4763, 16
      %v4854 = vrot.slane %v4852, 4
      %v4855 = vshll.u32 %v4763, 16
      %v4857 = vrot.slane %v4855, 5
      %v4858 = vor.u32 %v4854, %v4857
      %v4859 = vrot.slane %v4858, 4
      %v4861 = vshll.u32 %v4764, 16
      %v4863 = vrot.slane %v4861, 5
      %v4864 = vsel %vm452, %v4859, %v4863
      %v4866 = vshrl.u32 %v4765, 16
      %v4868 = vrot.slane %v4866, 4
      %v4869 = vshll.u32 %v4765, 16
      %v4871 = vrot.slane %v4869, 5
      %v4872 = vor.u32 %v4868, %v4871
      %v4873 = vrot.slane %v4872, 4
      %v4875 = vshll.u32 %v4766, 16
      %v4877 = vrot.slane %v4875, 5
      %v4878 = vsel %vm452, %v4873, %v4877
      %v4879 = vld [vmem:[%s5 + $0x100] sm:$0xf]
      %v4880 = vld [vmem:[%s5 + $0x104] sm:$0xf]
      %v4881 = vld [vmem:[%s5 + $0x108] sm:$0xf]
      %v4882 = vld [vmem:[%s5 + $0x10c] sm:$0xf]
      %v4883 = vld [vmem:[%s5 + $0x110] sm:$0xf]
      %v4884 = vld [vmem:[%s5 + $0x114] sm:$0xf]
      %v4885 = vld [vmem:[%s5 + $0x118] sm:$0xf]
      %v4886 = vld [vmem:[%s5 + $0x11c] sm:$0xf]
      %v4887 = vld [vmem:[%s5 + $0x120] sm:$0xf]
      %v4888 = vld [vmem:[%s5 + $0x124] sm:$0xf]
      %v4889 = vld [vmem:[%s5 + $0x128] sm:$0xf]
      %v4890 = vld [vmem:[%s5 + $0x12c] sm:$0xf]
      %v4891 = vld [vmem:[%s5 + $0x130] sm:$0xf]
      %v4892 = vld [vmem:[%s5 + $0x134] sm:$0xf]
      %v4893 = vld [vmem:[%s5 + $0x138] sm:$0xf]
      %v4894 = vld [vmem:[%s5 + $0x13c] sm:$0xf]
      %v4895 = vunpack.c.l.b16 %v4780
      %v4896 = vunpack.c.l.b16 %v4794
      %v4897 = vunpack.c.l.b16 %v4808
      %v4898 = vunpack.c.l.b16 %v4822
      %v4899 = vunpack.c.l.b16 %v4836
      %v4900 = vunpack.c.l.b16 %v4850
      %v4901 = vunpack.c.l.b16 %v4864
      %v4902 = vunpack.c.l.b16 %v4878
      %v4903 = vpack.c.b16 %v4896, %v4895
      %v4904 = vpack.c.b16 %v4898, %v4897
      %v4905 = vpack.c.b16 %v4900, %v4899
      %v4906 = vpack.c.b16 %v4902, %v4901
      %v4927 = vunpack.c.l.b16 %v4879
      %v4928 = vunpack.c.l.b16 %v4880
      %v4929 = vunpack.c.l.b16 %v4881
      %v4930 = vunpack.c.l.b16 %v4882
      %v4931 = vunpack.c.l.b16 %v4883
      %v4932 = vunpack.c.l.b16 %v4884
      %v4933 = vunpack.c.l.b16 %v4885
      %v4934 = vunpack.c.l.b16 %v4886
      %v4935 = vunpack.c.l.b16 %v4887
      %v4936 = vunpack.c.l.b16 %v4888
      %v4937 = vunpack.c.l.b16 %v4889
      %v4938 = vunpack.c.l.b16 %v4890
      %v4939 = vunpack.c.l.b16 %v4891
      %v4940 = vunpack.c.l.b16 %v4892
      %v4941 = vunpack.c.l.b16 %v4893
      %v4942 = vunpack.c.l.b16 %v4894
      %v4943 = vpack.c.b16 %v4928, %v4927
      %v4944 = vpack.c.b16 %v4930, %v4929
      %v4945 = vpack.c.b16 %v4932, %v4931
      %v4946 = vpack.c.b16 %v4934, %v4933
      %v4947 = vpack.c.b16 %v4936, %v4935
      %v4948 = vpack.c.b16 %v4938, %v4937
      %v4949 = vpack.c.b16 %v4940, %v4939
      %v4950 = vpack.c.b16 %v4942, %v4941
      %4959 = vmatprep.subr.bf16.mxu0 0
      %4960 = vmatpush1.bf16.msra.mxu0 %v4943
      %4961 = vmatprep.subr.bf16.mxu0 0
      %4962 = vmatpush1.bf16.msra.mxu0 %v4944
      %4963 = vmatprep.subr.bf16.mxu0 0
      %4964 = vmatpush1.bf16.msra.mxu0 %v4945
      %4965 = vmatprep.subr.bf16.mxu0 0
      %4966 = vmatpush1.bf16.msra.mxu0 %v4946
      %4967 = vmatprep.subr.bf16.mxu0 0
      %4968 = vmatpush1.bf16.msra.mxu0 %v4947
      %4969 = vmatprep.subr.bf16.mxu0 0
      %4970 = vmatpush1.bf16.msra.mxu0 %v4948
      %4971 = vmatprep.subr.bf16.mxu0 0
      %4972 = vmatpush1.bf16.msra.mxu0 %v4949
      %4973 = vmatprep.subr.bf16.mxu0 0
      %4974 = vmatpush1.bf16.msra.mxu0 %v4950
      %4975 = vmatprep.subr.bf16.mxu0 0
      %4976 = vmatpush1.bf16.msra.mxu0 0
      %4977 = vmatprep.subr.bf16.mxu0 0
      %4978 = vmatpush1.bf16.msra.mxu0 0
      %4979 = vmatprep.subr.bf16.mxu0 0
      %4980 = vmatpush1.bf16.msra.mxu0 0
      %4981 = vmatprep.subr.bf16.mxu0 0
      %4982 = vmatpush1.bf16.msra.mxu0 0
      %4983 = vmatprep.subr.bf16.mxu0 0
      %4984 = vmatpush1.bf16.msra.mxu0 0
      %4985 = vmatprep.subr.bf16.mxu0 0
      %4986 = vmatpush1.bf16.msra.mxu0 0
      %4987 = vmatprep.subr.bf16.mxu0 0
      %4988 = vmatpush1.bf16.msra.mxu0 0
      %4989 = vmatprep.subr.bf16.mxu0 0
      %4990 = vmatpush1.bf16.msra.mxu0 0
      %4991 = vmatprep.mubr.bf16.mxu0 0
      %4992 = vmatmul.mubr.bf16.gmra.mrb[0].mxu0 %v4903
      %v4993 = vpop.f32.mrb[0].mxu0
      %v4994 = vadd.f32 0.0, %v4993
      %v4995 = vpop.f32.mrb[0].mxu0
      %v4996 = vpop.f32.mrb[0].mxu0
      %v4997 = vadd.f32 0.0, %v4996
      %v4998 = vpop.f32.mrb[0].mxu0
      %4999 = vmatprep.mubr.bf16.mxu0 0
      %5000 = vmatmul.mubr.bf16.gmra.mrb[0].mxu0 %v4904
      %v5001 = vpop.f32.mrb[0].mxu0
      %v5002 = vadd.f32 0.0, %v5001
      %v5003 = vpop.f32.mrb[0].mxu0
      %v5004 = vpop.f32.mrb[0].mxu0
      %v5005 = vadd.f32 0.0, %v5004
      %v5006 = vpop.f32.mrb[0].mxu0
      %5007 = vmatprep.mubr.bf16.mxu0 0
      %5008 = vmatmul.mubr.bf16.gmra.mrb[0].mxu0 %v4905
      %v5009 = vpop.f32.mrb[0].mxu0
      %v5010 = vadd.f32 0.0, %v5009
      %v5011 = vpop.f32.mrb[0].mxu0
      %v5012 = vpop.f32.mrb[0].mxu0
      %v5013 = vadd.f32 0.0, %v5012
      %v5014 = vpop.f32.mrb[0].mxu0
      %5015 = vmatprep.mubr.bf16.mxu0 0
      %5016 = vmatmul.mubr.bf16.gmra.mrb[0].mxu0 %v4906
      %v5017 = vpop.f32.mrb[0].mxu0
      %v5018 = vadd.f32 0.0, %v5017
      %v5019 = vpop.f32.mrb[0].mxu0
      %v5020 = vpop.f32.mrb[0].mxu0
      %v5021 = vadd.f32 0.0, %v5020
      %v5022 = vpop.f32.mrb[0].mxu0
      %5023 = vdwg.mxu0
      %v5024 = vadd.f32 %v4743, %v4994
      %v5025 = vadd.f32 %v4744, %v4997
      %v5026 = vadd.f32 %v4745, %v5002
      %v5027 = vadd.f32 %v4746, %v5005
      %v5028 = vadd.f32 %v4747, %v5010
      %v5029 = vadd.f32 %v4748, %v5013
      %v5030 = vadd.f32 %v4749, %v5018
      %v5031 = vadd.f32 %v4750, %v5021
      %v5032 = vld [vmem:[%s1745] sm:$0xe]
      %v5033 = vld [vmem:[%s1745 + $0x8] sm:$0xe]
      %v5034 = vld [vmem:[%s1745 + $0x10] sm:$0xe]
      %v5035 = vld [vmem:[%s1745 + $0x18] sm:$0xe]
      %v5036 = vld [vmem:[%s1745 + $0x20] sm:$0xe]
      %v5037 = vld [vmem:[%s1745 + $0x28] sm:$0xe]
      %v5038 = vld [vmem:[%s1745 + $0x30] sm:$0xe]
      %v5039 = vld [vmem:[%s1745 + $0x38] sm:$0xe]
      %v5056 = vrot.slane %v5032, 5
      %v5057 = vrot.slane %v5056, 4
      %v5058 = vrot.slane %v4752, 5
      %v5059 = vsel %vm2252, %v5057, %v5058
      %v5060 = vrot.slane %v5033, 5
      %v5061 = vrot.slane %v5060, 4
      %v5062 = vrot.slane %v4754, 5
      %v5063 = vsel %vm2252, %v5061, %v5062
      %v5064 = vrot.slane %v5034, 5
      %v5065 = vrot.slane %v5064, 4
      %v5066 = vrot.slane %v4756, 5
      %v5067 = vsel %vm2252, %v5065, %v5066
      %v5068 = vrot.slane %v5035, 5
      %v5069 = vrot.slane %v5068, 4
      %v5070 = vrot.slane %v4758, 5
      %v5071 = vsel %vm2252, %v5069, %v5070
      %v5072 = vrot.slane %v5036, 5
      %v5073 = vrot.slane %v5072, 4
      %v5074 = vrot.slane %v4760, 5
      %v5075 = vsel %vm2252, %v5073, %v5074
      %v5076 = vrot.slane %v5037, 5
      %v5077 = vrot.slane %v5076, 4
      %v5078 = vrot.slane %v4762, 5
      %v5079 = vsel %vm2252, %v5077, %v5078
      %v5080 = vrot.slane %v5038, 5
      %v5081 = vrot.slane %v5080, 4
      %v5082 = vrot.slane %v4764, 5
      %v5083 = vsel %vm2252, %v5081, %v5082
      %v5084 = vrot.slane %v5039, 5
      %v5085 = vrot.slane %v5084, 4
      %v5086 = vrot.slane %v4766, 5
      %v5087 = vsel %vm2252, %v5085, %v5086
      %v5088 = vld [vmem:[%s5 + $0x140] sm:$0xf]
      %v5089 = vld [vmem:[%s5 + $0x144] sm:$0xf]
      %v5090 = vld [vmem:[%s5 + $0x148] sm:$0xf]
      %v5091 = vld [vmem:[%s5 + $0x14c] sm:$0xf]
      %v5092 = vld [vmem:[%s5 + $0x150] sm:$0xf]
      %v5093 = vld [vmem:[%s5 + $0x154] sm:$0xf]
      %v5094 = vld [vmem:[%s5 + $0x158] sm:$0xf]
      %v5095 = vld [vmem:[%s5 + $0x15c] sm:$0xf]
      %v5096 = vld [vmem:[%s5 + $0x160] sm:$0xf]
      %v5097 = vld [vmem:[%s5 + $0x164] sm:$0xf]
      %v5098 = vld [vmem:[%s5 + $0x168] sm:$0xf]
      %v5099 = vld [vmem:[%s5 + $0x16c] sm:$0xf]
      %v5100 = vld [vmem:[%s5 + $0x170] sm:$0xf]
      %v5101 = vld [vmem:[%s5 + $0x174] sm:$0xf]
      %v5102 = vld [vmem:[%s5 + $0x178] sm:$0xf]
      %v5103 = vld [vmem:[%s5 + $0x17c] sm:$0xf]
      %v5104 = vunpack.c.l.b16 %v5059
      %v5105 = vunpack.c.l.b16 %v5063
      %v5106 = vunpack.c.l.b16 %v5067
      %v5107 = vunpack.c.l.b16 %v5071
      %v5108 = vunpack.c.l.b16 %v5075
      %v5109 = vunpack.c.l.b16 %v5079
      %v5110 = vunpack.c.l.b16 %v5083
      %v5111 = vunpack.c.l.b16 %v5087
      %v5112 = vpack.c.b16 %v5105, %v5104
      %v5113 = vpack.c.b16 %v5107, %v5106
      %v5114 = vpack.c.b16 %v5109, %v5108
      %v5115 = vpack.c.b16 %v5111, %v5110
      %v5136 = vunpack.c.l.b16 %v5088
      %v5137 = vunpack.c.l.b16 %v5089
      %v5138 = vunpack.c.l.b16 %v5090
      %v5139 = vunpack.c.l.b16 %v5091
      %v5140 = vunpack.c.l.b16 %v5092
      %v5141 = vunpack.c.l.b16 %v5093
      %v5142 = vunpack.c.l.b16 %v5094
      %v5143 = vunpack.c.l.b16 %v5095
      %v5144 = vunpack.c.l.b16 %v5096
      %v5145 = vunpack.c.l.b16 %v5097
      %v5146 = vunpack.c.l.b16 %v5098
      %v5147 = vunpack.c.l.b16 %v5099
      %v5148 = vunpack.c.l.b16 %v5100
      %v5149 = vunpack.c.l.b16 %v5101
      %v5150 = vunpack.c.l.b16 %v5102
      %v5151 = vunpack.c.l.b16 %v5103
      %v5152 = vpack.c.b16 %v5137, %v5136
      %v5153 = vpack.c.b16 %v5139, %v5138
      %v5154 = vpack.c.b16 %v5141, %v5140
      %v5155 = vpack.c.b16 %v5143, %v5142
      %v5156 = vpack.c.b16 %v5145, %v5144
      %v5157 = vpack.c.b16 %v5147, %v5146
      %v5158 = vpack.c.b16 %v5149, %v5148
      %v5159 = vpack.c.b16 %v5151, %v5150
      %5168 = vmatprep.subr.bf16.mxu0 0
      %5169 = vmatpush1.bf16.msra.mxu0 %v5152
      %5170 = vmatprep.subr.bf16.mxu0 0
      %5171 = vmatpush1.bf16.msra.mxu0 %v5153
      %5172 = vmatprep.subr.bf16.mxu0 0
      %5173 = vmatpush1.bf16.msra.mxu0 %v5154
      %5174 = vmatprep.subr.bf16.mxu0 0
      %5175 = vmatpush1.bf16.msra.mxu0 %v5155
      %5176 = vmatprep.subr.bf16.mxu0 0
      %5177 = vmatpush1.bf16.msra.mxu0 %v5156
      %5178 = vmatprep.subr.bf16.mxu0 0
      %5179 = vmatpush1.bf16.msra.mxu0 %v5157
      %5180 = vmatprep.subr.bf16.mxu0 0
      %5181 = vmatpush1.bf16.msra.mxu0 %v5158
      %5182 = vmatprep.subr.bf16.mxu0 0
      %5183 = vmatpush1.bf16.msra.mxu0 %v5159
      %5184 = vmatprep.subr.bf16.mxu0 0
      %5185 = vmatpush1.bf16.msra.mxu0 0
      %5186 = vmatprep.subr.bf16.mxu0 0
      %5187 = vmatpush1.bf16.msra.mxu0 0
      %5188 = vmatprep.subr.bf16.mxu0 0
      %5189 = vmatpush1.bf16.msra.mxu0 0
      %5190 = vmatprep.subr.bf16.mxu0 0
      %5191 = vmatpush1.bf16.msra.mxu0 0
      %5192 = vmatprep.subr.bf16.mxu0 0
      %5193 = vmatpush1.bf16.msra.mxu0 0
      %5194 = vmatprep.subr.bf16.mxu0 0
      %5195 = vmatpush1.bf16.msra.mxu0 0
      %5196 = vmatprep.subr.bf16.mxu0 0
      %5197 = vmatpush1.bf16.msra.mxu0 0
      %5198 = vmatprep.subr.bf16.mxu0 0
      %5199 = vmatpush1.bf16.msra.mxu0 0
      %5200 = vmatprep.mubr.bf16.mxu0 0
      %5201 = vmatmul.mubr.bf16.gmra.mrb[0].mxu0 %v5112
      %v5202 = vpop.f32.mrb[0].mxu0
      %v5203 = vadd.f32 0.0, %v5202
      %v5204 = vpop.f32.mrb[0].mxu0
      %v5205 = vpop.f32.mrb[0].mxu0
      %v5206 = vadd.f32 0.0, %v5205
      %v5207 = vpop.f32.mrb[0].mxu0
      %5208 = vmatprep.mubr.bf16.mxu0 0
      %5209 = vmatmul.mubr.bf16.gmra.mrb[0].mxu0 %v5113
      %v5210 = vpop.f32.mrb[0].mxu0
      %v5211 = vadd.f32 0.0, %v5210
      %v5212 = vpop.f32.mrb[0].mxu0
      %v5213 = vpop.f32.mrb[0].mxu0
      %v5214 = vadd.f32 0.0, %v5213
      %v5215 = vpop.f32.mrb[0].mxu0
      %5216 = vmatprep.mubr.bf16.mxu0 0
      %5217 = vmatmul.mubr.bf16.gmra.mrb[0].mxu0 %v5114
      %v5218 = vpop.f32.mrb[0].mxu0
      %v5219 = vadd.f32 0.0, %v5218
      %v5220 = vpop.f32.mrb[0].mxu0
      %v5221 = vpop.f32.mrb[0].mxu0
      %v5222 = vadd.f32 0.0, %v5221
      %v5223 = vpop.f32.mrb[0].mxu0
      %5224 = vmatprep.mubr.bf16.mxu0 0
      %5225 = vmatmul.mubr.bf16.gmra.mrb[0].mxu0 %v5115
      %v5226 = vpop.f32.mrb[0].mxu0
      %v5227 = vadd.f32 0.0, %v5226
      %v5228 = vpop.f32.mrb[0].mxu0
      %v5229 = vpop.f32.mrb[0].mxu0
      %v5230 = vadd.f32 0.0, %v5229
      %v5231 = vpop.f32.mrb[0].mxu0
      %5232 = vdwg.mxu0
      %v5233 = vadd.f32 %v5024, %v5203
      %v5234 = vadd.f32 %v5025, %v5206
      %v5235 = vadd.f32 %v5026, %v5211
      %v5236 = vadd.f32 %v5027, %v5214
      %v5237 = vadd.f32 %v5028, %v5219
      %v5238 = vadd.f32 %v5029, %v5222
      %v5239 = vadd.f32 %v5030, %v5227
      %v5240 = vadd.f32 %v5031, %v5230
      %v5241 = vld [vmem:[%s3097] sm:$0xf]
      %v5242 = vld [vmem:[%s3097 + $0x8] sm:$0xf]
      %v5243 = vld [vmem:[%s3097 + $0x10] sm:$0xf]
      %v5244 = vld [vmem:[%s3097 + $0x18] sm:$0xf]
      %v5245 = vld [vmem:[%s3097 + $0x20] sm:$0xf]
      %v5246 = vld [vmem:[%s3097 + $0x28] sm:$0xf]
      %v5247 = vld [vmem:[%s3097 + $0x30] sm:$0xf]
      %v5248 = vld [vmem:[%s3097 + $0x38] sm:$0xf]
      %v5249 = vld [vmem:[%s5 + $0x180] sm:$0xf]
      %v5250 = vld [vmem:[%s5 + $0x184] sm:$0xf]
      %v5251 = vld [vmem:[%s5 + $0x188] sm:$0xf]
      %v5252 = vld [vmem:[%s5 + $0x18c] sm:$0xf]
      %v5253 = vld [vmem:[%s5 + $0x190] sm:$0xf]
      %v5254 = vld [vmem:[%s5 + $0x194] sm:$0xf]
      %v5255 = vld [vmem:[%s5 + $0x198] sm:$0xf]
      %v5256 = vld [vmem:[%s5 + $0x19c] sm:$0xf]
      %v5257 = vld [vmem:[%s5 + $0x1a0] sm:$0xf]
      %v5258 = vld [vmem:[%s5 + $0x1a4] sm:$0xf]
      %v5259 = vld [vmem:[%s5 + $0x1a8] sm:$0xf]
      %v5260 = vld [vmem:[%s5 + $0x1ac] sm:$0xf]
      %v5261 = vld [vmem:[%s5 + $0x1b0] sm:$0xf]
      %v5262 = vld [vmem:[%s5 + $0x1b4] sm:$0xf]
      %v5263 = vld [vmem:[%s5 + $0x1b8] sm:$0xf]
      %v5264 = vld [vmem:[%s5 + $0x1bc] sm:$0xf]
      %v5273 = vunpack.c.l.b16 %v5241
      %v5274 = vunpack.c.l.b16 %v5242
      %v5275 = vunpack.c.l.b16 %v5243
      %v5276 = vunpack.c.l.b16 %v5244
      %v5277 = vunpack.c.l.b16 %v5245
      %v5278 = vunpack.c.l.b16 %v5246
      %v5279 = vunpack.c.l.b16 %v5247
      %v5280 = vunpack.c.l.b16 %v5248
      %v5281 = vpack.c.b16 %v5274, %v5273
      %v5282 = vpack.c.b16 %v5276, %v5275
      %v5283 = vpack.c.b16 %v5278, %v5277
      %v5284 = vpack.c.b16 %v5280, %v5279
      %v5305 = vunpack.c.l.b16 %v5249
      %v5306 = vunpack.c.l.b16 %v5250
      %v5307 = vunpack.c.l.b16 %v5251
      %v5308 = vunpack.c.l.b16 %v5252
      %v5309 = vunpack.c.l.b16 %v5253
      %v5310 = vunpack.c.l.b16 %v5254
      %v5311 = vunpack.c.l.b16 %v5255
      %v5312 = vunpack.c.l.b16 %v5256
      %v5313 = vunpack.c.l.b16 %v5257
      %v5314 = vunpack.c.l.b16 %v5258
      %v5315 = vunpack.c.l.b16 %v5259
      %v5316 = vunpack.c.l.b16 %v5260
      %v5317 = vunpack.c.l.b16 %v5261
      %v5318 = vunpack.c.l.b16 %v5262
      %v5319 = vunpack.c.l.b16 %v5263
      %v5320 = vunpack.c.l.b16 %v5264
      %v5321 = vpack.c.b16 %v5306, %v5305
      %v5322 = vpack.c.b16 %v5308, %v5307
      %v5323 = vpack.c.b16 %v5310, %v5309
      %v5324 = vpack.c.b16 %v5312, %v5311
      %v5325 = vpack.c.b16 %v5314, %v5313
      %v5326 = vpack.c.b16 %v5316, %v5315
      %v5327 = vpack.c.b16 %v5318, %v5317
      %v5328 = vpack.c.b16 %v5320, %v5319
      %5337 = vmatprep.subr.bf16.mxu0 0
      %5338 = vmatpush1.bf16.msra.mxu0 %v5321
      %5339 = vmatprep.subr.bf16.mxu0 0
      %5340 = vmatpush1.bf16.msra.mxu0 %v5322
      %5341 = vmatprep.subr.bf16.mxu0 0
      %5342 = vmatpush1.bf16.msra.mxu0 %v5323
      %5343 = vmatprep.subr.bf16.mxu0 0
      %5344 = vmatpush1.bf16.msra.mxu0 %v5324
      %5345 = vmatprep.subr.bf16.mxu0 0
      %5346 = vmatpush1.bf16.msra.mxu0 %v5325
      %5347 = vmatprep.subr.bf16.mxu0 0
      %5348 = vmatpush1.bf16.msra.mxu0 %v5326
      %5349 = vmatprep.subr.bf16.mxu0 0
      %5350 = vmatpush1.bf16.msra.mxu0 %v5327
      %5351 = vmatprep.subr.bf16.mxu0 0
      %5352 = vmatpush1.bf16.msra.mxu0 %v5328
      %5353 = vmatprep.subr.bf16.mxu0 0
      %5354 = vmatpush1.bf16.msra.mxu0 0
      %5355 = vmatprep.subr.bf16.mxu0 0
      %5356 = vmatpush1.bf16.msra.mxu0 0
      %5357 = vmatprep.subr.bf16.mxu0 0
      %5358 = vmatpush1.bf16.msra.mxu0 0
      %5359 = vmatprep.subr.bf16.mxu0 0
      %5360 = vmatpush1.bf16.msra.mxu0 0
      %5361 = vmatprep.subr.bf16.mxu0 0
      %5362 = vmatpush1.bf16.msra.mxu0 0
      %5363 = vmatprep.subr.bf16.mxu0 0
      %5364 = vmatpush1.bf16.msra.mxu0 0
      %5365 = vmatprep.subr.bf16.mxu0 0
      %5366 = vmatpush1.bf16.msra.mxu0 0
      %5367 = vmatprep.subr.bf16.mxu0 0
      %5368 = vmatpush1.bf16.msra.mxu0 0
      %5369 = vmatprep.mubr.bf16.mxu0 0
      %5370 = vmatmul.mubr.bf16.gmra.mrb[0].mxu0 %v5281
      %v5371 = vpop.f32.mrb[0].mxu0
      %v5372 = vadd.f32 0.0, %v5371
      %v5373 = vpop.f32.mrb[0].mxu0
      %v5374 = vpop.f32.mrb[0].mxu0
      %v5375 = vadd.f32 0.0, %v5374
      %v5376 = vpop.f32.mrb[0].mxu0
      %5377 = vmatprep.mubr.bf16.mxu0 0
      %5378 = vmatmul.mubr.bf16.gmra.mrb[0].mxu0 %v5282
      %v5379 = vpop.f32.mrb[0].mxu0
      %v5380 = vadd.f32 0.0, %v5379
      %v5381 = vpop.f32.mrb[0].mxu0
      %v5382 = vpop.f32.mrb[0].mxu0
      %v5383 = vadd.f32 0.0, %v5382
      %v5384 = vpop.f32.mrb[0].mxu0
      %5385 = vmatprep.mubr.bf16.mxu0 0
      %5386 = vmatmul.mubr.bf16.gmra.mrb[0].mxu0 %v5283
      %v5387 = vpop.f32.mrb[0].mxu0
      %v5388 = vadd.f32 0.0, %v5387
      %v5389 = vpop.f32.mrb[0].mxu0
      %v5390 = vpop.f32.mrb[0].mxu0
      %v5391 = vadd.f32 0.0, %v5390
      %v5392 = vpop.f32.mrb[0].mxu0
      %5393 = vmatprep.mubr.bf16.mxu0 0
      %5394 = vmatmul.mubr.bf16.gmra.mrb[0].mxu0 %v5284
      %v5395 = vpop.f32.mrb[0].mxu0
      %v5396 = vadd.f32 0.0, %v5395
      %v5397 = vpop.f32.mrb[0].mxu0
      %v5398 = vpop.f32.mrb[0].mxu0
      %v5399 = vadd.f32 0.0, %v5398
      %v5400 = vpop.f32.mrb[0].mxu0
      %5401 = vdwg.mxu0
      %v5402 = vadd.f32 %v5233, %v5372
      %v5403 = vadd.f32 %v5234, %v5375
      %v5404 = vadd.f32 %v5235, %v5380
      %v5405 = vadd.f32 %v5236, %v5383
      %v5406 = vadd.f32 %v5237, %v5388
      %v5407 = vadd.f32 %v5238, %v5391
      %v5408 = vadd.f32 %v5239, %v5396
      %v5409 = vadd.f32 %v5240, %v5399
      %v5410 = vld [vmem:[%s3097] sm:$0xf]
      %v5411 = vld [vmem:[%s3097 + $0x4] sm:$0x1]
      %v5412 = vld [vmem:[%s3097 + $0x8] sm:$0xf]
      %v5413 = vld [vmem:[%s3097 + $0xc] sm:$0x1]
      %v5414 = vld [vmem:[%s3097 + $0x10] sm:$0xf]
      %v5415 = vld [vmem:[%s3097 + $0x14] sm:$0x1]
      %v5416 = vld [vmem:[%s3097 + $0x18] sm:$0xf]
      %v5417 = vld [vmem:[%s3097 + $0x1c] sm:$0x1]
      %v5418 = vld [vmem:[%s3097 + $0x20] sm:$0xf]
      %v5419 = vld [vmem:[%s3097 + $0x24] sm:$0x1]
      %v5420 = vld [vmem:[%s3097 + $0x28] sm:$0xf]
      %v5421 = vld [vmem:[%s3097 + $0x2c] sm:$0x1]
      %v5422 = vld [vmem:[%s3097 + $0x30] sm:$0xf]
      %v5423 = vld [vmem:[%s3097 + $0x34] sm:$0x1]
      %v5424 = vld [vmem:[%s3097 + $0x38] sm:$0xf]
      %v5425 = vld [vmem:[%s3097 + $0x3c] sm:$0x1]
      %v5427 = vshrl.u32 %v5410, 16
      %v5429 = vrot.slane %v5427, 4
      %v5430 = vshll.u32 %v5410, 16
      %v5432 = vrot.slane %v5430, 5
      %v5433 = vor.u32 %v5429, %v5432
      %v5434 = vrot.slane %v5433, 4
      %v5436 = vshll.u32 %v5411, 16
      %v5438 = vrot.slane %v5436, 5
      %v5439 = vsel %vm452, %v5434, %v5438
      %v5441 = vshrl.u32 %v5412, 16
      %v5443 = vrot.slane %v5441, 4
      %v5444 = vshll.u32 %v5412, 16
      %v5446 = vrot.slane %v5444, 5
      %v5447 = vor.u32 %v5443, %v5446
      %v5448 = vrot.slane %v5447, 4
      %v5450 = vshll.u32 %v5413, 16
      %v5452 = vrot.slane %v5450, 5
      %v5453 = vsel %vm452, %v5448, %v5452
      %v5455 = vshrl.u32 %v5414, 16
      %v5457 = vrot.slane %v5455, 4
      %v5458 = vshll.u32 %v5414, 16
      %v5460 = vrot.slane %v5458, 5
      %v5461 = vor.u32 %v5457, %v5460
      %v5462 = vrot.slane %v5461, 4
      %v5464 = vshll.u32 %v5415, 16
      %v5466 = vrot.slane %v5464, 5
      %v5467 = vsel %vm452, %v5462, %v5466
      %v5469 = vshrl.u32 %v5416, 16
      %v5471 = vrot.slane %v5469, 4
      %v5472 = vshll.u32 %v5416, 16
      %v5474 = vrot.slane %v5472, 5
      %v5475 = vor.u32 %v5471, %v5474
      %v5476 = vrot.slane %v5475, 4
      %v5478 = vshll.u32 %v5417, 16
      %v5480 = vrot.slane %v5478, 5
      %v5481 = vsel %vm452, %v5476, %v5480
      %v5483 = vshrl.u32 %v5418, 16
      %v5485 = vrot.slane %v5483, 4
      %v5486 = vshll.u32 %v5418, 16
      %v5488 = vrot.slane %v5486, 5
      %v5489 = vor.u32 %v5485, %v5488
      %v5490 = vrot.slane %v5489, 4
      %v5492 = vshll.u32 %v5419, 16
      %v5494 = vrot.slane %v5492, 5
      %v5495 = vsel %vm452, %v5490, %v5494
      %v5497 = vshrl.u32 %v5420, 16
      %v5499 = vrot.slane %v5497, 4
      %v5500 = vshll.u32 %v5420, 16
      %v5502 = vrot.slane %v5500, 5
      %v5503 = vor.u32 %v5499, %v5502
      %v5504 = vrot.slane %v5503, 4
      %v5506 = vshll.u32 %v5421, 16
      %v5508 = vrot.slane %v5506, 5
      %v5509 = vsel %vm452, %v5504, %v5508
      %v5511 = vshrl.u32 %v5422, 16
      %v5513 = vrot.slane %v5511, 4
      %v5514 = vshll.u32 %v5422, 16
      %v5516 = vrot.slane %v5514, 5
      %v5517 = vor.u32 %v5513, %v5516
      %v5518 = vrot.slane %v5517, 4
      %v5520 = vshll.u32 %v5423, 16
      %v5522 = vrot.slane %v5520, 5
      %v5523 = vsel %vm452, %v5518, %v5522
      %v5525 = vshrl.u32 %v5424, 16
      %v5527 = vrot.slane %v5525, 4
      %v5528 = vshll.u32 %v5424, 16
      %v5530 = vrot.slane %v5528, 5
      %v5531 = vor.u32 %v5527, %v5530
      %v5532 = vrot.slane %v5531, 4
      %v5534 = vshll.u32 %v5425, 16
      %v5536 = vrot.slane %v5534, 5
      %v5537 = vsel %vm452, %v5532, %v5536
      %v5538 = vld [vmem:[%s5 + $0x1c0] sm:$0xf]
      %v5539 = vld [vmem:[%s5 + $0x1c4] sm:$0xf]
      %v5540 = vld [vmem:[%s5 + $0x1c8] sm:$0xf]
      %v5541 = vld [vmem:[%s5 + $0x1cc] sm:$0xf]
      %v5542 = vld [vmem:[%s5 + $0x1d0] sm:$0xf]
      %v5543 = vld [vmem:[%s5 + $0x1d4] sm:$0xf]
      %v5544 = vld [vmem:[%s5 + $0x1d8] sm:$0xf]
      %v5545 = vld [vmem:[%s5 + $0x1dc] sm:$0xf]
      %v5546 = vld [vmem:[%s5 + $0x1e0] sm:$0xf]
      %v5547 = vld [vmem:[%s5 + $0x1e4] sm:$0xf]
      %v5548 = vld [vmem:[%s5 + $0x1e8] sm:$0xf]
      %v5549 = vld [vmem:[%s5 + $0x1ec] sm:$0xf]
      %v5550 = vld [vmem:[%s5 + $0x1f0] sm:$0xf]
      %v5551 = vld [vmem:[%s5 + $0x1f4] sm:$0xf]
      %v5552 = vld [vmem:[%s5 + $0x1f8] sm:$0xf]
      %v5553 = vld [vmem:[%s5 + $0x1fc] sm:$0xf]
      %v5554 = vunpack.c.l.b16 %v5439
      %v5555 = vunpack.c.l.b16 %v5453
      %v5556 = vunpack.c.l.b16 %v5467
      %v5557 = vunpack.c.l.b16 %v5481
      %v5558 = vunpack.c.l.b16 %v5495
      %v5559 = vunpack.c.l.b16 %v5509
      %v5560 = vunpack.c.l.b16 %v5523
      %v5561 = vunpack.c.l.b16 %v5537
      %v5562 = vpack.c.b16 %v5555, %v5554
      %v5563 = vpack.c.b16 %v5557, %v5556
      %v5564 = vpack.c.b16 %v5559, %v5558
      %v5565 = vpack.c.b16 %v5561, %v5560
      %v5586 = vunpack.c.l.b16 %v5538
      %v5587 = vunpack.c.l.b16 %v5539
      %v5588 = vunpack.c.l.b16 %v5540
      %v5589 = vunpack.c.l.b16 %v5541
      %v5590 = vunpack.c.l.b16 %v5542
      %v5591 = vunpack.c.l.b16 %v5543
      %v5592 = vunpack.c.l.b16 %v5544
      %v5593 = vunpack.c.l.b16 %v5545
      %v5594 = vunpack.c.l.b16 %v5546
      %v5595 = vunpack.c.l.b16 %v5547
      %v5596 = vunpack.c.l.b16 %v5548
      %v5597 = vunpack.c.l.b16 %v5549
      %v5598 = vunpack.c.l.b16 %v5550
      %v5599 = vunpack.c.l.b16 %v5551
      %v5600 = vunpack.c.l.b16 %v5552
      %v5601 = vunpack.c.l.b16 %v5553
      %v5602 = vpack.c.b16 %v5587, %v5586
      %v5603 = vpack.c.b16 %v5589, %v5588
      %v5604 = vpack.c.b16 %v5591, %v5590
      %v5605 = vpack.c.b16 %v5593, %v5592
      %v5606 = vpack.c.b16 %v5595, %v5594
      %v5607 = vpack.c.b16 %v5597, %v5596
      %v5608 = vpack.c.b16 %v5599, %v5598
      %v5609 = vpack.c.b16 %v5601, %v5600
      %5618 = vmatprep.subr.bf16.mxu0 0
      %5619 = vmatpush1.bf16.msra.mxu0 %v5602
      %5620 = vmatprep.subr.bf16.mxu0 0
      %5621 = vmatpush1.bf16.msra.mxu0 %v5603
      %5622 = vmatprep.subr.bf16.mxu0 0
      %5623 = vmatpush1.bf16.msra.mxu0 %v5604
      %5624 = vmatprep.subr.bf16.mxu0 0
      %5625 = vmatpush1.bf16.msra.mxu0 %v5605
      %5626 = vmatprep.subr.bf16.mxu0 0
      %5627 = vmatpush1.bf16.msra.mxu0 %v5606
      %5628 = vmatprep.subr.bf16.mxu0 0
      %5629 = vmatpush1.bf16.msra.mxu0 %v5607
      %5630 = vmatprep.subr.bf16.mxu0 0
      %5631 = vmatpush1.bf16.msra.mxu0 %v5608
      %5632 = vmatprep.subr.bf16.mxu0 0
      %5633 = vmatpush1.bf16.msra.mxu0 %v5609
      %5634 = vmatprep.subr.bf16.mxu0 0
      %5635 = vmatpush1.bf16.msra.mxu0 0
      %5636 = vmatprep.subr.bf16.mxu0 0
      %5637 = vmatpush1.bf16.msra.mxu0 0
      %5638 = vmatprep.subr.bf16.mxu0 0
      %5639 = vmatpush1.bf16.msra.mxu0 0
      %5640 = vmatprep.subr.bf16.mxu0 0
      %5641 = vmatpush1.bf16.msra.mxu0 0
      %5642 = vmatprep.subr.bf16.mxu0 0
      %5643 = vmatpush1.bf16.msra.mxu0 0
      %5644 = vmatprep.subr.bf16.mxu0 0
      %5645 = vmatpush1.bf16.msra.mxu0 0
      %5646 = vmatprep.subr.bf16.mxu0 0
      %5647 = vmatpush1.bf16.msra.mxu0 0
      %5648 = vmatprep.subr.bf16.mxu0 0
      %5649 = vmatpush1.bf16.msra.mxu0 0
      %5650 = vmatprep.mubr.bf16.mxu0 0
      %5651 = vmatmul.mubr.bf16.gmra.mrb[0].mxu0 %v5562
      %v5652 = vpop.f32.mrb[0].mxu0
      %v5653 = vadd.f32 0.0, %v5652
      %v5654 = vpop.f32.mrb[0].mxu0
      %v5655 = vpop.f32.mrb[0].mxu0
      %v5656 = vadd.f32 0.0, %v5655
      %v5657 = vpop.f32.mrb[0].mxu0
      %5658 = vmatprep.mubr.bf16.mxu0 0
      %5659 = vmatmul.mubr.bf16.gmra.mrb[0].mxu0 %v5563
      %v5660 = vpop.f32.mrb[0].mxu0
      %v5661 = vadd.f32 0.0, %v5660
      %v5662 = vpop.f32.mrb[0].mxu0
      %v5663 = vpop.f32.mrb[0].mxu0
      %v5664 = vadd.f32 0.0, %v5663
      %v5665 = vpop.f32.mrb[0].mxu0
      %5666 = vmatprep.mubr.bf16.mxu0 0
      %5667 = vmatmul.mubr.bf16.gmra.mrb[0].mxu0 %v5564
      %v5668 = vpop.f32.mrb[0].mxu0
      %v5669 = vadd.f32 0.0, %v5668
      %v5670 = vpop.f32.mrb[0].mxu0
      %v5671 = vpop.f32.mrb[0].mxu0
      %v5672 = vadd.f32 0.0, %v5671
      %v5673 = vpop.f32.mrb[0].mxu0
      %5674 = vmatprep.mubr.bf16.mxu0 0
      %5675 = vmatmul.mubr.bf16.gmra.mrb[0].mxu0 %v5565
      %v5676 = vpop.f32.mrb[0].mxu0
      %v5677 = vadd.f32 0.0, %v5676
      %v5678 = vpop.f32.mrb[0].mxu0
      %v5679 = vpop.f32.mrb[0].mxu0
      %v5680 = vadd.f32 0.0, %v5679
      %v5681 = vpop.f32.mrb[0].mxu0
      %5682 = vdwg.mxu0
      %v5683 = vadd.f32 %v5402, %v5653
      %v5684 = vadd.f32 %v5403, %v5656
      %v5685 = vadd.f32 %v5404, %v5661
      %v5686 = vadd.f32 %v5405, %v5664
      %v5687 = vadd.f32 %v5406, %v5669
      %v5688 = vadd.f32 %v5407, %v5672
      %v5689 = vadd.f32 %v5408, %v5677
      %v5690 = vadd.f32 %v5409, %v5680
      %v5691 = vld [vmem:[%s3097] sm:$0xe]
      %v5692 = vld [vmem:[%s3097 + $0x8] sm:$0xe]
      %v5693 = vld [vmem:[%s3097 + $0x10] sm:$0xe]
      %v5694 = vld [vmem:[%s3097 + $0x18] sm:$0xe]
      %v5695 = vld [vmem:[%s3097 + $0x20] sm:$0xe]
      %v5696 = vld [vmem:[%s3097 + $0x28] sm:$0xe]
      %v5697 = vld [vmem:[%s3097 + $0x30] sm:$0xe]
      %v5698 = vld [vmem:[%s3097 + $0x38] sm:$0xe]
      %v5715 = vrot.slane %v5691, 5
      %v5716 = vrot.slane %v5715, 4
      %v5717 = vrot.slane %v5411, 5
      %v5718 = vsel %vm2252, %v5716, %v5717
      %v5719 = vrot.slane %v5692, 5
      %v5720 = vrot.slane %v5719, 4
      %v5721 = vrot.slane %v5413, 5
      %v5722 = vsel %vm2252, %v5720, %v5721
      %v5723 = vrot.slane %v5693, 5
      %v5724 = vrot.slane %v5723, 4
      %v5725 = vrot.slane %v5415, 5
      %v5726 = vsel %vm2252, %v5724, %v5725
      %v5727 = vrot.slane %v5694, 5
      %v5728 = vrot.slane %v5727, 4
      %v5729 = vrot.slane %v5417, 5
      %v5730 = vsel %vm2252, %v5728, %v5729
      %v5731 = vrot.slane %v5695, 5
      %v5732 = vrot.slane %v5731, 4
      %v5733 = vrot.slane %v5419, 5
      %v5734 = vsel %vm2252, %v5732, %v5733
      %v5735 = vrot.slane %v5696, 5
      %v5736 = vrot.slane %v5735, 4
      %v5737 = vrot.slane %v5421, 5
      %v5738 = vsel %vm2252, %v5736, %v5737
      %v5739 = vrot.slane %v5697, 5
      %v5740 = vrot.slane %v5739, 4
      %v5741 = vrot.slane %v5423, 5
      %v5742 = vsel %vm2252, %v5740, %v5741
      %v5743 = vrot.slane %v5698, 5
      %v5744 = vrot.slane %v5743, 4
      %v5745 = vrot.slane %v5425, 5
      %v5746 = vsel %vm2252, %v5744, %v5745
      %v5747 = vld [vmem:[%s5 + $0x200] sm:$0xf]
      %v5748 = vld [vmem:[%s5 + $0x204] sm:$0xf]
      %v5749 = vld [vmem:[%s5 + $0x208] sm:$0xf]
      %v5750 = vld [vmem:[%s5 + $0x20c] sm:$0xf]
      %v5751 = vld [vmem:[%s5 + $0x210] sm:$0xf]
      %v5752 = vld [vmem:[%s5 + $0x214] sm:$0xf]
      %v5753 = vld [vmem:[%s5 + $0x218] sm:$0xf]
      %v5754 = vld [vmem:[%s5 + $0x21c] sm:$0xf]
      %v5755 = vld [vmem:[%s5 + $0x220] sm:$0xf]
      %v5756 = vld [vmem:[%s5 + $0x224] sm:$0xf]
      %v5757 = vld [vmem:[%s5 + $0x228] sm:$0xf]
      %v5758 = vld [vmem:[%s5 + $0x22c] sm:$0xf]
      %v5759 = vld [vmem:[%s5 + $0x230] sm:$0xf]
      %v5760 = vld [vmem:[%s5 + $0x234] sm:$0xf]
      %v5761 = vld [vmem:[%s5 + $0x238] sm:$0xf]
      %v5762 = vld [vmem:[%s5 + $0x23c] sm:$0xf]
      %v5763 = vunpack.c.l.b16 %v5718
      %v5764 = vunpack.c.l.b16 %v5722
      %v5765 = vunpack.c.l.b16 %v5726
      %v5766 = vunpack.c.l.b16 %v5730
      %v5767 = vunpack.c.l.b16 %v5734
      %v5768 = vunpack.c.l.b16 %v5738
      %v5769 = vunpack.c.l.b16 %v5742
      %v5770 = vunpack.c.l.b16 %v5746
      %v5771 = vpack.c.b16 %v5764, %v5763
      %v5772 = vpack.c.b16 %v5766, %v5765
      %v5773 = vpack.c.b16 %v5768, %v5767
      %v5774 = vpack.c.b16 %v5770, %v5769
      %v5795 = vunpack.c.l.b16 %v5747
      %v5796 = vunpack.c.l.b16 %v5748
      %v5797 = vunpack.c.l.b16 %v5749
      %v5798 = vunpack.c.l.b16 %v5750
      %v5799 = vunpack.c.l.b16 %v5751
      %v5800 = vunpack.c.l.b16 %v5752
      %v5801 = vunpack.c.l.b16 %v5753
      %v5802 = vunpack.c.l.b16 %v5754
      %v5803 = vunpack.c.l.b16 %v5755
      %v5804 = vunpack.c.l.b16 %v5756
      %v5805 = vunpack.c.l.b16 %v5757
      %v5806 = vunpack.c.l.b16 %v5758
      %v5807 = vunpack.c.l.b16 %v5759
      %v5808 = vunpack.c.l.b16 %v5760
      %v5809 = vunpack.c.l.b16 %v5761
      %v5810 = vunpack.c.l.b16 %v5762
      %v5811 = vpack.c.b16 %v5796, %v5795
      %v5812 = vpack.c.b16 %v5798, %v5797
      %v5813 = vpack.c.b16 %v5800, %v5799
      %v5814 = vpack.c.b16 %v5802, %v5801
      %v5815 = vpack.c.b16 %v5804, %v5803
      %v5816 = vpack.c.b16 %v5806, %v5805
      %v5817 = vpack.c.b16 %v5808, %v5807
      %v5818 = vpack.c.b16 %v5810, %v5809
      %5827 = vmatprep.subr.bf16.mxu0 0
      %5828 = vmatpush1.bf16.msra.mxu0 %v5811
      %5829 = vmatprep.subr.bf16.mxu0 0
      %5830 = vmatpush1.bf16.msra.mxu0 %v5812
      %5831 = vmatprep.subr.bf16.mxu0 0
      %5832 = vmatpush1.bf16.msra.mxu0 %v5813
      %5833 = vmatprep.subr.bf16.mxu0 0
      %5834 = vmatpush1.bf16.msra.mxu0 %v5814
      %5835 = vmatprep.subr.bf16.mxu0 0
      %5836 = vmatpush1.bf16.msra.mxu0 %v5815
      %5837 = vmatprep.subr.bf16.mxu0 0
      %5838 = vmatpush1.bf16.msra.mxu0 %v5816
      %5839 = vmatprep.subr.bf16.mxu0 0
      %5840 = vmatpush1.bf16.msra.mxu0 %v5817
      %5841 = vmatprep.subr.bf16.mxu0 0
      %5842 = vmatpush1.bf16.msra.mxu0 %v5818
      %5843 = vmatprep.subr.bf16.mxu0 0
      %5844 = vmatpush1.bf16.msra.mxu0 0
      %5845 = vmatprep.subr.bf16.mxu0 0
      %5846 = vmatpush1.bf16.msra.mxu0 0
      %5847 = vmatprep.subr.bf16.mxu0 0
      %5848 = vmatpush1.bf16.msra.mxu0 0
      %5849 = vmatprep.subr.bf16.mxu0 0
      %5850 = vmatpush1.bf16.msra.mxu0 0
      %5851 = vmatprep.subr.bf16.mxu0 0
      %5852 = vmatpush1.bf16.msra.mxu0 0
      %5853 = vmatprep.subr.bf16.mxu0 0
      %5854 = vmatpush1.bf16.msra.mxu0 0
      %5855 = vmatprep.subr.bf16.mxu0 0
      %5856 = vmatpush1.bf16.msra.mxu0 0
      %5857 = vmatprep.subr.bf16.mxu0 0
      %5858 = vmatpush1.bf16.msra.mxu0 0
      %5859 = vmatprep.mubr.bf16.mxu0 0
      %5860 = vmatmul.mubr.bf16.gmra.mrb[0].mxu0 %v5771
      %v5861 = vpop.f32.mrb[0].mxu0
      %v5862 = vadd.f32 0.0, %v5861
      %v5863 = vpop.f32.mrb[0].mxu0
      %v5864 = vpop.f32.mrb[0].mxu0
      %v5865 = vadd.f32 0.0, %v5864
      %v5866 = vpop.f32.mrb[0].mxu0
      %5867 = vmatprep.mubr.bf16.mxu0 0
      %5868 = vmatmul.mubr.bf16.gmra.mrb[0].mxu0 %v5772
      %v5869 = vpop.f32.mrb[0].mxu0
      %v5870 = vadd.f32 0.0, %v5869
      %v5871 = vpop.f32.mrb[0].mxu0
      %v5872 = vpop.f32.mrb[0].mxu0
      %v5873 = vadd.f32 0.0, %v5872
      %v5874 = vpop.f32.mrb[0].mxu0
      %5875 = vmatprep.mubr.bf16.mxu0 0
      %5876 = vmatmul.mubr.bf16.gmra.mrb[0].mxu0 %v5773
      %v5877 = vpop.f32.mrb[0].mxu0
      %v5878 = vadd.f32 0.0, %v5877
      %v5879 = vpop.f32.mrb[0].mxu0
      %v5880 = vpop.f32.mrb[0].mxu0
      %v5881 = vadd.f32 0.0, %v5880
      %v5882 = vpop.f32.mrb[0].mxu0
      %5883 = vmatprep.mubr.bf16.mxu0 0
      %5884 = vmatmul.mubr.bf16.gmra.mrb[0].mxu0 %v5774
      %v5885 = vpop.f32.mrb[0].mxu0
      %v5886 = vadd.f32 0.0, %v5885
      %v5887 = vpop.f32.mrb[0].mxu0
      %v5888 = vpop.f32.mrb[0].mxu0
      %v5889 = vadd.f32 0.0, %v5888
      %v5890 = vpop.f32.mrb[0].mxu0
      %5891 = vdwg.mxu0
      %v5892 = vadd.f32 %v5683, %v5862
      %v5893 = vadd.f32 %v5684, %v5865
      %v5894 = vadd.f32 %v5685, %v5870
      %v5895 = vadd.f32 %v5686, %v5873
      %v5896 = vadd.f32 %v5687, %v5878
      %v5897 = vadd.f32 %v5688, %v5881
      %v5898 = vadd.f32 %v5689, %v5886
      %v5899 = vadd.f32 %v5690, %v5889
      %v5900 = vld [vmem:[%s6] sm:$0x1]
      %v5902 = vlaneseq
      %v5903 = vshrl.u32 %v5902, 7
      %v5904 = vsub.s32 0, %v5903
      %v5905 = vrot.slane %v5900, %v5904
      %v5907 = vadd.f32 %v5892, %v5905
      %v5908 = vadd.f32 %v5893, %v5905
      %v5909 = vadd.f32 %v5894, %v5905
      %v5910 = vadd.f32 %v5895, %v5905
      %v5911 = vadd.f32 %v5896, %v5905
      %v5912 = vadd.f32 %v5897, %v5905
      %v5913 = vadd.f32 %v5898, %v5905
      %v5914 = vadd.f32 %v5899, %v5905
      %vm5915 = vcmp.ge.f32.partialorder %v5907, 0.0
      %vm5916 = vcmp.ge.f32.partialorder %v5908, 0.0
      %vm5917 = vcmp.ge.f32.partialorder %v5909, 0.0
      %vm5918 = vcmp.ge.f32.partialorder %v5910, 0.0
      %vm5919 = vcmp.ge.f32.partialorder %v5911, 0.0
      %vm5920 = vcmp.ge.f32.partialorder %v5912, 0.0
      %vm5921 = vcmp.ge.f32.partialorder %v5913, 0.0
      %vm5922 = vcmp.ge.f32.partialorder %v5914, 0.0
      %v5923 = vmul.f32 %v5907, 0.05
      %v5924 = vmul.f32 %v5908, 0.05
      %v5925 = vmul.f32 %v5909, 0.05
      %v5926 = vmul.f32 %v5910, 0.05
      %v5927 = vmul.f32 %v5911, 0.05
      %v5928 = vmul.f32 %v5912, 0.05
      %v5929 = vmul.f32 %v5913, 0.05
      %v5930 = vmul.f32 %v5914, 0.05
      %v5931 = vsel %vm5915, %v5907, %v5923
      %v5932 = vsel %vm5916, %v5908, %v5924
      %v5933 = vsel %vm5917, %v5909, %v5925
      %v5934 = vsel %vm5918, %v5910, %v5926
      %v5935 = vsel %vm5919, %v5911, %v5927
      %v5936 = vsel %vm5920, %v5912, %v5928
      %v5937 = vsel %vm5921, %v5913, %v5929
      %v5938 = vsel %vm5922, %v5914, %v5930
      %v5939 = vpack.c.bf16 %v5932, %v5931
      %v5940 = vpack.c.bf16 %v5934, %v5933
      %v5941 = vpack.c.bf16 %v5936, %v5935
      %v5942 = vpack.c.bf16 %v5938, %v5937
      %v5947 = vunpack.c.l.b16 %v5939
      %v5948 = vunpack.c.h.b16 %v5939
      %v5949 = vunpack.c.l.b16 %v5940
      %v5950 = vunpack.c.h.b16 %v5940
      %v5951 = vunpack.c.l.b16 %v5941
      %v5952 = vunpack.c.h.b16 %v5941
      %v5953 = vunpack.c.l.b16 %v5942
      %v5954 = vunpack.c.h.b16 %v5942
      %v5955 = vpack.c.b16 %v5947, %v5947
      %v5956 = vpack.c.b16 %v5948, %v5948
      %v5957 = vpack.c.b16 %v5949, %v5949
      %v5958 = vpack.c.b16 %v5950, %v5950
      %v5959 = vpack.c.b16 %v5951, %v5951
      %v5960 = vpack.c.b16 %v5952, %v5952
      %v5961 = vpack.c.b16 %v5953, %v5953
      %v5962 = vpack.c.b16 %v5954, %v5954
      %v5964 = vshrl.u32 %v5955, 16
      %v5966 = vrot.slane %v5964, 7
      %v5967 = vshll.u32 %v5955, 16
      %v5969 = vor.u32 %v5966, %v5967
      %v5970 = vrot.slane %v5966, 4
      %v5972 = vshrl.u32 %v5956, 16
      %v5974 = vrot.slane %v5972, 7
      %v5975 = vshll.u32 %v5956, 16
      %v5977 = vor.u32 %v5974, %v5975
      %v5978 = vrot.slane %v5974, 4
      %v5980 = vshrl.u32 %v5957, 16
      %v5982 = vrot.slane %v5980, 7
      %v5983 = vshll.u32 %v5957, 16
      %v5985 = vor.u32 %v5982, %v5983
      %v5986 = vrot.slane %v5982, 4
      %v5988 = vshrl.u32 %v5958, 16
      %v5990 = vrot.slane %v5988, 7
      %v5991 = vshll.u32 %v5958, 16
      %v5993 = vor.u32 %v5990, %v5991
      %v5994 = vrot.slane %v5990, 4
      %v5996 = vshrl.u32 %v5959, 16
      %v5998 = vrot.slane %v5996, 7
      %v5999 = vshll.u32 %v5959, 16
      %v6001 = vor.u32 %v5998, %v5999
      %v6002 = vrot.slane %v5998, 4
      %v6004 = vshrl.u32 %v5960, 16
      %v6006 = vrot.slane %v6004, 7
      %v6007 = vshll.u32 %v5960, 16
      %v6009 = vor.u32 %v6006, %v6007
      %v6010 = vrot.slane %v6006, 4
      %v6012 = vshrl.u32 %v5961, 16
      %v6014 = vrot.slane %v6012, 7
      %v6015 = vshll.u32 %v5961, 16
      %v6017 = vor.u32 %v6014, %v6015
      %v6018 = vrot.slane %v6014, 4
      %v6020 = vshrl.u32 %v5962, 16
      %v6022 = vrot.slane %v6020, 7
      %v6023 = vshll.u32 %v5962, 16
      %v6025 = vor.u32 %v6022, %v6023
      %v6026 = vrot.slane %v6022, 4
      %v6043 = vsel %vm1748, %v5969, %v4751
      %6044 = vst [vmem:[%s1745] sm:$0xf] %v6043
      %v6045 = vld [vmem:[%s1745 + $0x4] sm:$0x1]
      %v6046 = vsel %vm1754, %v5970, %v6045
      %6047 = vst [vmem:[%s1745 + $0x4] sm:$0x1] %v6046
      %v6048 = vld [vmem:[%s1745 + $0x8] sm:$0xf]
      %v6049 = vsel %vm1748, %v5977, %v6048
      %6050 = vst [vmem:[%s1745 + $0x8] sm:$0xf] %v6049
      %v6051 = vld [vmem:[%s1745 + $0xc] sm:$0x1]
      %v6052 = vsel %vm1754, %v5978, %v6051
      %6053 = vst [vmem:[%s1745 + $0xc] sm:$0x1] %v6052
      %v6054 = vld [vmem:[%s1745 + $0x10] sm:$0xf]
      %v6055 = vsel %vm1748, %v5985, %v6054
      %6056 = vst [vmem:[%s1745 + $0x10] sm:$0xf] %v6055
      %v6057 = vld [vmem:[%s1745 + $0x14] sm:$0x1]
      %v6058 = vsel %vm1754, %v5986, %v6057
      %6059 = vst [vmem:[%s1745 + $0x14] sm:$0x1] %v6058
      %v6060 = vld [vmem:[%s1745 + $0x18] sm:$0xf]
      %v6061 = vsel %vm1748, %v5993, %v6060
      %6062 = vst [vmem:[%s1745 + $0x18] sm:$0xf] %v6061
      %v6063 = vld [vmem:[%s1745 + $0x1c] sm:$0x1]
      %v6064 = vsel %vm1754, %v5994, %v6063
      %6065 = vst [vmem:[%s1745 + $0x1c] sm:$0x1] %v6064
      %v6066 = vld [vmem:[%s1745 + $0x20] sm:$0xf]
      %v6067 = vsel %vm1748, %v6001, %v6066
      %6068 = vst [vmem:[%s1745 + $0x20] sm:$0xf] %v6067
      %v6069 = vld [vmem:[%s1745 + $0x24] sm:$0x1]
      %v6070 = vsel %vm1754, %v6002, %v6069
      %6071 = vst [vmem:[%s1745 + $0x24] sm:$0x1] %v6070
      %v6072 = vld [vmem:[%s1745 + $0x28] sm:$0xf]
      %v6073 = vsel %vm1748, %v6009, %v6072
      %6074 = vst [vmem:[%s1745 + $0x28] sm:$0xf] %v6073
      %v6075 = vld [vmem:[%s1745 + $0x2c] sm:$0x1]
      %v6076 = vsel %vm1754, %v6010, %v6075
      %6077 = vst [vmem:[%s1745 + $0x2c] sm:$0x1] %v6076
      %v6078 = vld [vmem:[%s1745 + $0x30] sm:$0xf]
      %v6079 = vsel %vm1748, %v6017, %v6078
      %6080 = vst [vmem:[%s1745 + $0x30] sm:$0xf] %v6079
      %v6081 = vld [vmem:[%s1745 + $0x34] sm:$0x1]
      %v6082 = vsel %vm1754, %v6018, %v6081
      %6083 = vst [vmem:[%s1745 + $0x34] sm:$0x1] %v6082
      %v6084 = vld [vmem:[%s1745 + $0x38] sm:$0xf]
      %v6085 = vsel %vm1748, %v6025, %v6084
      %6086 = vst [vmem:[%s1745 + $0x38] sm:$0xf] %v6085
      %v6087 = vld [vmem:[%s1745 + $0x3c] sm:$0x1]
      %v6088 = vsel %vm1754, %v6026, %v6087
      %6089 = vst [vmem:[%s1745 + $0x3c] sm:$0x1] %v6088
      %v6090 = vld [vmem:[#allocation2] sm:$0xf]
      %v6091 = vld [vmem:[#allocation2 + $0x8] sm:$0xf]
      %v6092 = vld [vmem:[#allocation2 + $0x10] sm:$0xf]
      %v6093 = vld [vmem:[#allocation2 + $0x18] sm:$0xf]
      %v6094 = vld [vmem:[#allocation2 + $0x20] sm:$0xf]
      %v6095 = vld [vmem:[#allocation2 + $0x28] sm:$0xf]
      %v6096 = vld [vmem:[#allocation2 + $0x30] sm:$0xf]
      %v6097 = vld [vmem:[#allocation2 + $0x38] sm:$0xf]
      %v6098 = vld [vmem:[%s7] sm:$0xff]
      %v6099 = vld [vmem:[%s7 + $0x8] sm:$0xff]
      %v6100 = vld [vmem:[%s7 + $0x10] sm:$0xff]
      %v6101 = vld [vmem:[%s7 + $0x18] sm:$0xff]
      %v6102 = vld [vmem:[%s7 + $0x20] sm:$0xff]
      %v6103 = vld [vmem:[%s7 + $0x28] sm:$0xff]
      %v6104 = vld [vmem:[%s7 + $0x30] sm:$0xff]
      %v6105 = vld [vmem:[%s7 + $0x38] sm:$0xff]
      %v6106 = vld [vmem:[%s7 + $0x40] sm:$0xff]
      %v6107 = vld [vmem:[%s7 + $0x48] sm:$0xff]
      %v6108 = vld [vmem:[%s7 + $0x50] sm:$0xff]
      %v6109 = vld [vmem:[%s7 + $0x58] sm:$0xff]
      %v6110 = vld [vmem:[%s7 + $0x60] sm:$0xff]
      %v6111 = vld [vmem:[%s7 + $0x68] sm:$0xff]
      %v6112 = vld [vmem:[%s7 + $0x70] sm:$0xff]
      %v6113 = vld [vmem:[%s7 + $0x78] sm:$0xff]
      %v6114 = vld [vmem:[#allocation2 + $0x4] sm:$0x1]
      %v6115 = vld [vmem:[#allocation2 + $0xc] sm:$0x1]
      %v6116 = vld [vmem:[#allocation2 + $0x14] sm:$0x1]
      %v6117 = vld [vmem:[#allocation2 + $0x1c] sm:$0x1]
      %v6118 = vld [vmem:[#allocation2 + $0x24] sm:$0x1]
      %v6119 = vld [vmem:[#allocation2 + $0x2c] sm:$0x1]
      %v6120 = vld [vmem:[#allocation2 + $0x34] sm:$0x1]
      %v6121 = vld [vmem:[#allocation2 + $0x3c] sm:$0x1]
      %v6123 = vshrl.u32 %v6090, 16
      %v6125 = vrot.slane %v6123, 4
      %v6126 = vshll.u32 %v6090, 16
      %v6128 = vrot.slane %v6126, 5
      %v6129 = vor.u32 %v6125, %v6128
      %v6130 = vrot.slane %v6129, 4
      %v6132 = vshll.u32 %v6114, 16
      %v6134 = vrot.slane %v6132, 5
      %v6135 = vsel %vm452, %v6130, %v6134
      %v6137 = vshrl.u32 %v6091, 16
      %v6139 = vrot.slane %v6137, 4
      %v6140 = vshll.u32 %v6091, 16
      %v6142 = vrot.slane %v6140, 5
      %v6143 = vor.u32 %v6139, %v6142
      %v6144 = vrot.slane %v6143, 4
      %v6146 = vshll.u32 %v6115, 16
      %v6148 = vrot.slane %v6146, 5
      %v6149 = vsel %vm452, %v6144, %v6148
      %v6151 = vshrl.u32 %v6092, 16
      %v6153 = vrot.slane %v6151, 4
      %v6154 = vshll.u32 %v6092, 16
      %v6156 = vrot.slane %v6154, 5
      %v6157 = vor.u32 %v6153, %v6156
      %v6158 = vrot.slane %v6157, 4
      %v6160 = vshll.u32 %v6116, 16
      %v6162 = vrot.slane %v6160, 5
      %v6163 = vsel %vm452, %v6158, %v6162
      %v6165 = vshrl.u32 %v6093, 16
      %v6167 = vrot.slane %v6165, 4
      %v6168 = vshll.u32 %v6093, 16
      %v6170 = vrot.slane %v6168, 5
      %v6171 = vor.u32 %v6167, %v6170
      %v6172 = vrot.slane %v6171, 4
      %v6174 = vshll.u32 %v6117, 16
      %v6176 = vrot.slane %v6174, 5
      %v6177 = vsel %vm452, %v6172, %v6176
      %v6179 = vshrl.u32 %v6094, 16
      %v6181 = vrot.slane %v6179, 4
      %v6182 = vshll.u32 %v6094, 16
      %v6184 = vrot.slane %v6182, 5
      %v6185 = vor.u32 %v6181, %v6184
      %v6186 = vrot.slane %v6185, 4
      %v6188 = vshll.u32 %v6118, 16
      %v6190 = vrot.slane %v6188, 5
      %v6191 = vsel %vm452, %v6186, %v6190
      %v6193 = vshrl.u32 %v6095, 16
      %v6195 = vrot.slane %v6193, 4
      %v6196 = vshll.u32 %v6095, 16
      %v6198 = vrot.slane %v6196, 5
      %v6199 = vor.u32 %v6195, %v6198
      %v6200 = vrot.slane %v6199, 4
      %v6202 = vshll.u32 %v6119, 16
      %v6204 = vrot.slane %v6202, 5
      %v6205 = vsel %vm452, %v6200, %v6204
      %v6207 = vshrl.u32 %v6096, 16
      %v6209 = vrot.slane %v6207, 4
      %v6210 = vshll.u32 %v6096, 16
      %v6212 = vrot.slane %v6210, 5
      %v6213 = vor.u32 %v6209, %v6212
      %v6214 = vrot.slane %v6213, 4
      %v6216 = vshll.u32 %v6120, 16
      %v6218 = vrot.slane %v6216, 5
      %v6219 = vsel %vm452, %v6214, %v6218
      %v6221 = vshrl.u32 %v6097, 16
      %v6223 = vrot.slane %v6221, 4
      %v6224 = vshll.u32 %v6097, 16
      %v6226 = vrot.slane %v6224, 5
      %v6227 = vor.u32 %v6223, %v6226
      %v6228 = vrot.slane %v6227, 4
      %v6230 = vshll.u32 %v6121, 16
      %v6232 = vrot.slane %v6230, 5
      %v6233 = vsel %vm452, %v6228, %v6232
      %v6234 = vld [vmem:[%s7 + $0x80] sm:$0xff]
      %v6235 = vld [vmem:[%s7 + $0x88] sm:$0xff]
      %v6236 = vld [vmem:[%s7 + $0x90] sm:$0xff]
      %v6237 = vld [vmem:[%s7 + $0x98] sm:$0xff]
      %v6238 = vld [vmem:[%s7 + $0xa0] sm:$0xff]
      %v6239 = vld [vmem:[%s7 + $0xa8] sm:$0xff]
      %v6240 = vld [vmem:[%s7 + $0xb0] sm:$0xff]
      %v6241 = vld [vmem:[%s7 + $0xb8] sm:$0xff]
      %v6242 = vld [vmem:[%s7 + $0xc0] sm:$0xff]
      %v6243 = vld [vmem:[%s7 + $0xc8] sm:$0xff]
      %v6244 = vld [vmem:[%s7 + $0xd0] sm:$0xff]
      %v6245 = vld [vmem:[%s7 + $0xd8] sm:$0xff]
      %v6246 = vld [vmem:[%s7 + $0xe0] sm:$0xff]
      %v6247 = vld [vmem:[%s7 + $0xe8] sm:$0xff]
      %v6248 = vld [vmem:[%s7 + $0xf0] sm:$0xff]
      %v6249 = vld [vmem:[%s7 + $0xf8] sm:$0xff]
      %v6250 = vunpack.c.l.b16 %v6135
      %v6251 = vunpack.c.l.b16 %v6149
      %v6252 = vunpack.c.l.b16 %v6163
      %v6253 = vunpack.c.l.b16 %v6177
      %v6254 = vunpack.c.l.b16 %v6191
      %v6255 = vunpack.c.l.b16 %v6205
      %v6256 = vunpack.c.l.b16 %v6219
      %v6257 = vunpack.c.l.b16 %v6233
      %v6258 = vpack.c.b16 %v6251, %v6250
      %v6259 = vpack.c.b16 %v6253, %v6252
      %v6260 = vpack.c.b16 %v6255, %v6254
      %v6261 = vpack.c.b16 %v6257, %v6256
      %v6282 = vunpack.c.l.b16 %v6234
      %v6283 = vunpack.c.h.b16 %v6234
      %v6284 = vunpack.c.l.b16 %v6235
      %v6285 = vunpack.c.h.b16 %v6235
      %v6286 = vunpack.c.l.b16 %v6236
      %v6287 = vunpack.c.h.b16 %v6236
      %v6288 = vunpack.c.l.b16 %v6237
      %v6289 = vunpack.c.h.b16 %v6237
      %v6290 = vunpack.c.l.b16 %v6238
      %v6291 = vunpack.c.h.b16 %v6238
      %v6292 = vunpack.c.l.b16 %v6239
      %v6293 = vunpack.c.h.b16 %v6239
      %v6294 = vunpack.c.l.b16 %v6240
      %v6295 = vunpack.c.h.b16 %v6240
      %v6296 = vunpack.c.l.b16 %v6241
      %v6297 = vunpack.c.h.b16 %v6241
      %v6298 = vunpack.c.l.b16 %v6242
      %v6299 = vunpack.c.h.b16 %v6242
      %v6300 = vunpack.c.l.b16 %v6243
      %v6301 = vunpack.c.h.b16 %v6243
      %v6302 = vunpack.c.l.b16 %v6244
      %v6303 = vunpack.c.h.b16 %v6244
      %v6304 = vunpack.c.l.b16 %v6245
      %v6305 = vunpack.c.h.b16 %v6245
      %v6306 = vunpack.c.l.b16 %v6246
      %v6307 = vunpack.c.h.b16 %v6246
      %v6308 = vunpack.c.l.b16 %v6247
      %v6309 = vunpack.c.h.b16 %v6247
      %v6310 = vunpack.c.l.b16 %v6248
      %v6311 = vunpack.c.h.b16 %v6248
      %v6312 = vunpack.c.l.b16 %v6249
      %v6313 = vunpack.c.h.b16 %v6249
      %v6314 = vpack.c.b16 %v6284, %v6282
      %v6315 = vpack.c.b16 %v6285, %v6283
      %v6316 = vpack.c.b16 %v6288, %v6286
      %v6317 = vpack.c.b16 %v6289, %v6287
      %v6318 = vpack.c.b16 %v6292, %v6290
      %v6319 = vpack.c.b16 %v6293, %v6291
      %v6320 = vpack.c.b16 %v6296, %v6294
      %v6321 = vpack.c.b16 %v6297, %v6295
      %v6322 = vpack.c.b16 %v6300, %v6298
      %v6323 = vpack.c.b16 %v6301, %v6299
      %v6324 = vpack.c.b16 %v6304, %v6302
      %v6325 = vpack.c.b16 %v6305, %v6303
      %v6326 = vpack.c.b16 %v6308, %v6306
      %v6327 = vpack.c.b16 %v6309, %v6307
      %v6328 = vpack.c.b16 %v6312, %v6310
      %v6329 = vpack.c.b16 %v6313, %v6311
      %6346 = vmatprep.subr.bf16.mxu0 %v6315
      %6347 = vmatpush1.bf16.msra.mxu0 %v6314
      %6348 = vmatprep.subr.bf16.mxu0 %v6317
      %6349 = vmatpush1.bf16.msra.mxu0 %v6316
      %6350 = vmatprep.subr.bf16.mxu0 %v6319
      %6351 = vmatpush1.bf16.msra.mxu0 %v6318
      %6352 = vmatprep.subr.bf16.mxu0 %v6321
      %6353 = vmatpush1.bf16.msra.mxu0 %v6320
      %6354 = vmatprep.subr.bf16.mxu0 %v6323
      %6355 = vmatpush1.bf16.msra.mxu0 %v6322
      %6356 = vmatprep.subr.bf16.mxu0 %v6325
      %6357 = vmatpush1.bf16.msra.mxu0 %v6324
      %6358 = vmatprep.subr.bf16.mxu0 %v6327
      %6359 = vmatpush1.bf16.msra.mxu0 %v6326
      %6360 = vmatprep.subr.bf16.mxu0 %v6329
      %6361 = vmatpush1.bf16.msra.mxu0 %v6328
      %6362 = vmatprep.subr.bf16.mxu0 0
      %6363 = vmatpush1.bf16.msra.mxu0 0
      %6364 = vmatprep.subr.bf16.mxu0 0
      %6365 = vmatpush1.bf16.msra.mxu0 0
      %6366 = vmatprep.subr.bf16.mxu0 0
      %6367 = vmatpush1.bf16.msra.mxu0 0
      %6368 = vmatprep.subr.bf16.mxu0 0
      %6369 = vmatpush1.bf16.msra.mxu0 0
      %6370 = vmatprep.subr.bf16.mxu0 0
      %6371 = vmatpush1.bf16.msra.mxu0 0
      %6372 = vmatprep.subr.bf16.mxu0 0
      %6373 = vmatpush1.bf16.msra.mxu0 0
      %6374 = vmatprep.subr.bf16.mxu0 0
      %6375 = vmatpush1.bf16.msra.mxu0 0
      %6376 = vmatprep.subr.bf16.mxu0 0
      %6377 = vmatpush1.bf16.msra.mxu0 0
      %6378 = vmatprep.mubr.bf16.mxu0 0
      %6379 = vmatmul.mubr.bf16.gmra.mrb[0].mxu0 %v6258
      %v6380 = vpop.f32.mrb[0].mxu0
      %v6381 = vadd.f32 0.0, %v6380
      %v6382 = vpop.f32.mrb[0].mxu0
      %v6383 = vadd.f32 0.0, %v6382
      %v6384 = vpop.f32.mrb[0].mxu0
      %v6385 = vadd.f32 0.0, %v6384
      %v6386 = vpop.f32.mrb[0].mxu0
      %v6387 = vadd.f32 0.0, %v6386
      %6388 = vmatprep.mubr.bf16.mxu0 0
      %6389 = vmatmul.mubr.bf16.gmra.mrb[0].mxu0 %v6259
      %v6390 = vpop.f32.mrb[0].mxu0
      %v6391 = vadd.f32 0.0, %v6390
      %v6392 = vpop.f32.mrb[0].mxu0
      %v6393 = vadd.f32 0.0, %v6392
      %v6394 = vpop.f32.mrb[0].mxu0
      %v6395 = vadd.f32 0.0, %v6394
      %v6396 = vpop.f32.mrb[0].mxu0
      %v6397 = vadd.f32 0.0, %v6396
      %6398 = vmatprep.mubr.bf16.mxu0 0
      %6399 = vmatmul.mubr.bf16.gmra.mrb[0].mxu0 %v6260
      %v6400 = vpop.f32.mrb[0].mxu0
      %v6401 = vadd.f32 0.0, %v6400
      %v6402 = vpop.f32.mrb[0].mxu0
      %v6403 = vadd.f32 0.0, %v6402
      %v6404 = vpop.f32.mrb[0].mxu0
      %v6405 = vadd.f32 0.0, %v6404
      %v6406 = vpop.f32.mrb[0].mxu0
      %v6407 = vadd.f32 0.0, %v6406
      %6408 = vmatprep.mubr.bf16.mxu0 0
      %6409 = vmatmul.mubr.bf16.gmra.mrb[0].mxu0 %v6261
      %v6410 = vpop.f32.mrb[0].mxu0
      %v6411 = vadd.f32 0.0, %v6410
      %v6412 = vpop.f32.mrb[0].mxu0
      %v6413 = vadd.f32 0.0, %v6412
      %v6414 = vpop.f32.mrb[0].mxu0
      %v6415 = vadd.f32 0.0, %v6414
      %v6416 = vpop.f32.mrb[0].mxu0
      %v6417 = vadd.f32 0.0, %v6416
      %6418 = vdwg.mxu0
      %v6427 = vunpack.c.l.b16 %v6090
      %v6428 = vunpack.c.l.b16 %v6091
      %v6429 = vunpack.c.l.b16 %v6092
      %v6430 = vunpack.c.l.b16 %v6093
      %v6431 = vunpack.c.l.b16 %v6094
      %v6432 = vunpack.c.l.b16 %v6095
      %v6433 = vunpack.c.l.b16 %v6096
      %v6434 = vunpack.c.l.b16 %v6097
      %v6435 = vpack.c.b16 %v6428, %v6427
      %v6436 = vpack.c.b16 %v6430, %v6429
      %v6437 = vpack.c.b16 %v6432, %v6431
      %v6438 = vpack.c.b16 %v6434, %v6433
      %v6459 = vunpack.c.l.b16 %v6098
      %v6460 = vunpack.c.h.b16 %v6098
      %v6461 = vunpack.c.l.b16 %v6099
      %v6462 = vunpack.c.h.b16 %v6099
      %v6463 = vunpack.c.l.b16 %v6100
      %v6464 = vunpack.c.h.b16 %v6100
      %v6465 = vunpack.c.l.b16 %v6101
      %v6466 = vunpack.c.h.b16 %v6101
      %v6467 = vunpack.c.l.b16 %v6102
      %v6468 = vunpack.c.h.b16 %v6102
      %v6469 = vunpack.c.l.b16 %v6103
      %v6470 = vunpack.c.h.b16 %v6103
      %v6471 = vunpack.c.l.b16 %v6104
      %v6472 = vunpack.c.h.b16 %v6104
      %v6473 = vunpack.c.l.b16 %v6105
      %v6474 = vunpack.c.h.b16 %v6105
      %v6475 = vunpack.c.l.b16 %v6106
      %v6476 = vunpack.c.h.b16 %v6106
      %v6477 = vunpack.c.l.b16 %v6107
      %v6478 = vunpack.c.h.b16 %v6107
      %v6479 = vunpack.c.l.b16 %v6108
      %v6480 = vunpack.c.h.b16 %v6108
      %v6481 = vunpack.c.l.b16 %v6109
      %v6482 = vunpack.c.h.b16 %v6109
      %v6483 = vunpack.c.l.b16 %v6110
      %v6484 = vunpack.c.h.b16 %v6110
      %v6485 = vunpack.c.l.b16 %v6111
      %v6486 = vunpack.c.h.b16 %v6111
      %v6487 = vunpack.c.l.b16 %v6112
      %v6488 = vunpack.c.h.b16 %v6112
      %v6489 = vunpack.c.l.b16 %v6113
      %v6490 = vunpack.c.h.b16 %v6113
      %v6491 = vpack.c.b16 %v6461, %v6459
      %v6492 = vpack.c.b16 %v6462, %v6460
      %v6493 = vpack.c.b16 %v6465, %v6463
      %v6494 = vpack.c.b16 %v6466, %v6464
      %v6495 = vpack.c.b16 %v6469, %v6467
      %v6496 = vpack.c.b16 %v6470, %v6468
      %v6497 = vpack.c.b16 %v6473, %v6471
      %v6498 = vpack.c.b16 %v6474, %v6472
      %v6499 = vpack.c.b16 %v6477, %v6475
      %v6500 = vpack.c.b16 %v6478, %v6476
      %v6501 = vpack.c.b16 %v6481, %v6479
      %v6502 = vpack.c.b16 %v6482, %v6480
      %v6503 = vpack.c.b16 %v6485, %v6483
      %v6504 = vpack.c.b16 %v6486, %v6484
      %v6505 = vpack.c.b16 %v6489, %v6487
      %v6506 = vpack.c.b16 %v6490, %v6488
      %6523 = vmatprep.subr.bf16.mxu0 %v6492
      %6524 = vmatpush1.bf16.msra.mxu0 %v6491
      %6525 = vmatprep.subr.bf16.mxu0 %v6494
      %6526 = vmatpush1.bf16.msra.mxu0 %v6493
      %6527 = vmatprep.subr.bf16.mxu0 %v6496
      %6528 = vmatpush1.bf16.msra.mxu0 %v6495
      %6529 = vmatprep.subr.bf16.mxu0 %v6498
      %6530 = vmatpush1.bf16.msra.mxu0 %v6497
      %6531 = vmatprep.subr.bf16.mxu0 %v6500
      %6532 = vmatpush1.bf16.msra.mxu0 %v6499
      %6533 = vmatprep.subr.bf16.mxu0 %v6502
      %6534 = vmatpush1.bf16.msra.mxu0 %v6501
      %6535 = vmatprep.subr.bf16.mxu0 %v6504
      %6536 = vmatpush1.bf16.msra.mxu0 %v6503
      %6537 = vmatprep.subr.bf16.mxu0 %v6506
      %6538 = vmatpush1.bf16.msra.mxu0 %v6505
      %6539 = vmatprep.subr.bf16.mxu0 0
      %6540 = vmatpush1.bf16.msra.mxu0 0
      %6541 = vmatprep.subr.bf16.mxu0 0
      %6542 = vmatpush1.bf16.msra.mxu0 0
      %6543 = vmatprep.subr.bf16.mxu0 0
      %6544 = vmatpush1.bf16.msra.mxu0 0
      %6545 = vmatprep.subr.bf16.mxu0 0
      %6546 = vmatpush1.bf16.msra.mxu0 0
      %6547 = vmatprep.subr.bf16.mxu0 0
      %6548 = vmatpush1.bf16.msra.mxu0 0
      %6549 = vmatprep.subr.bf16.mxu0 0
      %6550 = vmatpush1.bf16.msra.mxu0 0
      %6551 = vmatprep.subr.bf16.mxu0 0
      %6552 = vmatpush1.bf16.msra.mxu0 0
      %6553 = vmatprep.subr.bf16.mxu0 0
      %6554 = vmatpush1.bf16.msra.mxu0 0
      %6555 = vmatprep.mubr.bf16.mxu0 0
      %6556 = vmatmul.mubr.bf16.gmra.mrb[0].mxu0 %v6435
      %v6557 = vpop.f32.mrb[0].mxu0
      %v6558 = vadd.f32 %v6381, %v6557
      %v6559 = vpop.f32.mrb[0].mxu0
      %v6560 = vadd.f32 %v6383, %v6559
      %v6561 = vpop.f32.mrb[0].mxu0
      %v6562 = vadd.f32 %v6385, %v6561
      %v6563 = vpop.f32.mrb[0].mxu0
      %v6564 = vadd.f32 %v6387, %v6563
      %6565 = vmatprep.mubr.bf16.mxu0 0
      %6566 = vmatmul.mubr.bf16.gmra.mrb[0].mxu0 %v6436
      %v6567 = vpop.f32.mrb[0].mxu0
      %v6568 = vadd.f32 %v6391, %v6567
      %v6569 = vpop.f32.mrb[0].mxu0
      %v6570 = vadd.f32 %v6393, %v6569
      %v6571 = vpop.f32.mrb[0].mxu0
      %v6572 = vadd.f32 %v6395, %v6571
      %v6573 = vpop.f32.mrb[0].mxu0
      %v6574 = vadd.f32 %v6397, %v6573
      %6575 = vmatprep.mubr.bf16.mxu0 0
      %6576 = vmatmul.mubr.bf16.gmra.mrb[0].mxu0 %v6437
      %v6577 = vpop.f32.mrb[0].mxu0
      %v6578 = vadd.f32 %v6401, %v6577
      %v6579 = vpop.f32.mrb[0].mxu0
      %v6580 = vadd.f32 %v6403, %v6579
      %v6581 = vpop.f32.mrb[0].mxu0
      %v6582 = vadd.f32 %v6405, %v6581
      %v6583 = vpop.f32.mrb[0].mxu0
      %v6584 = vadd.f32 %v6407, %v6583
      %6585 = vmatprep.mubr.bf16.mxu0 0
      %6586 = vmatmul.mubr.bf16.gmra.mrb[0].mxu0 %v6438
      %v6587 = vpop.f32.mrb[0].mxu0
      %v6588 = vadd.f32 %v6411, %v6587
      %v6589 = vpop.f32.mrb[0].mxu0
      %v6590 = vadd.f32 %v6413, %v6589
      %v6591 = vpop.f32.mrb[0].mxu0
      %v6592 = vadd.f32 %v6415, %v6591
      %v6593 = vpop.f32.mrb[0].mxu0
      %v6594 = vadd.f32 %v6417, %v6593
      %6595 = vdwg.mxu0
      %v6596 = vld [vmem:[#allocation2] sm:$0xe]
      %v6597 = vld [vmem:[#allocation2 + $0x8] sm:$0xe]
      %v6598 = vld [vmem:[#allocation2 + $0x10] sm:$0xe]
      %v6599 = vld [vmem:[#allocation2 + $0x18] sm:$0xe]
      %v6600 = vld [vmem:[#allocation2 + $0x20] sm:$0xe]
      %v6601 = vld [vmem:[#allocation2 + $0x28] sm:$0xe]
      %v6602 = vld [vmem:[#allocation2 + $0x30] sm:$0xe]
      %v6603 = vld [vmem:[#allocation2 + $0x38] sm:$0xe]
      %v6620 = vrot.slane %v6596, 5
      %v6621 = vrot.slane %v6620, 4
      %v6622 = vrot.slane %v6114, 5
      %v6623 = vsel %vm2252, %v6621, %v6622
      %v6624 = vrot.slane %v6597, 5
      %v6625 = vrot.slane %v6624, 4
      %v6626 = vrot.slane %v6115, 5
      %v6627 = vsel %vm2252, %v6625, %v6626
      %v6628 = vrot.slane %v6598, 5
      %v6629 = vrot.slane %v6628, 4
      %v6630 = vrot.slane %v6116, 5
      %v6631 = vsel %vm2252, %v6629, %v6630
      %v6632 = vrot.slane %v6599, 5
      %v6633 = vrot.slane %v6632, 4
      %v6634 = vrot.slane %v6117, 5
      %v6635 = vsel %vm2252, %v6633, %v6634
      %v6636 = vrot.slane %v6600, 5
      %v6637 = vrot.slane %v6636, 4
      %v6638 = vrot.slane %v6118, 5
      %v6639 = vsel %vm2252, %v6637, %v6638
      %v6640 = vrot.slane %v6601, 5
      %v6641 = vrot.slane %v6640, 4
      %v6642 = vrot.slane %v6119, 5
      %v6643 = vsel %vm2252, %v6641, %v6642
      %v6644 = vrot.slane %v6602, 5
      %v6645 = vrot.slane %v6644, 4
      %v6646 = vrot.slane %v6120, 5
      %v6647 = vsel %vm2252, %v6645, %v6646
      %v6648 = vrot.slane %v6603, 5
      %v6649 = vrot.slane %v6648, 4
      %v6650 = vrot.slane %v6121, 5
      %v6651 = vsel %vm2252, %v6649, %v6650
      %v6652 = vld [vmem:[%s7 + $0x100] sm:$0xff]
      %v6653 = vld [vmem:[%s7 + $0x108] sm:$0xff]
      %v6654 = vld [vmem:[%s7 + $0x110] sm:$0xff]
      %v6655 = vld [vmem:[%s7 + $0x118] sm:$0xff]
      %v6656 = vld [vmem:[%s7 + $0x120] sm:$0xff]
      %v6657 = vld [vmem:[%s7 + $0x128] sm:$0xff]
      %v6658 = vld [vmem:[%s7 + $0x130] sm:$0xff]
      %v6659 = vld [vmem:[%s7 + $0x138] sm:$0xff]
      %v6660 = vld [vmem:[%s7 + $0x140] sm:$0xff]
      %v6661 = vld [vmem:[%s7 + $0x148] sm:$0xff]
      %v6662 = vld [vmem:[%s7 + $0x150] sm:$0xff]
      %v6663 = vld [vmem:[%s7 + $0x158] sm:$0xff]
      %v6664 = vld [vmem:[%s7 + $0x160] sm:$0xff]
      %v6665 = vld [vmem:[%s7 + $0x168] sm:$0xff]
      %v6666 = vld [vmem:[%s7 + $0x170] sm:$0xff]
      %v6667 = vld [vmem:[%s7 + $0x178] sm:$0xff]
      %v6668 = vunpack.c.l.b16 %v6623
      %v6669 = vunpack.c.l.b16 %v6627
      %v6670 = vunpack.c.l.b16 %v6631
      %v6671 = vunpack.c.l.b16 %v6635
      %v6672 = vunpack.c.l.b16 %v6639
      %v6673 = vunpack.c.l.b16 %v6643
      %v6674 = vunpack.c.l.b16 %v6647
      %v6675 = vunpack.c.l.b16 %v6651
      %v6676 = vpack.c.b16 %v6669, %v6668
      %v6677 = vpack.c.b16 %v6671, %v6670
      %v6678 = vpack.c.b16 %v6673, %v6672
      %v6679 = vpack.c.b16 %v6675, %v6674
      %v6700 = vunpack.c.l.b16 %v6652
      %v6701 = vunpack.c.h.b16 %v6652
      %v6702 = vunpack.c.l.b16 %v6653
      %v6703 = vunpack.c.h.b16 %v6653
      %v6704 = vunpack.c.l.b16 %v6654
      %v6705 = vunpack.c.h.b16 %v6654
      %v6706 = vunpack.c.l.b16 %v6655
      %v6707 = vunpack.c.h.b16 %v6655
      %v6708 = vunpack.c.l.b16 %v6656
      %v6709 = vunpack.c.h.b16 %v6656
      %v6710 = vunpack.c.l.b16 %v6657
      %v6711 = vunpack.c.h.b16 %v6657
      %v6712 = vunpack.c.l.b16 %v6658
      %v6713 = vunpack.c.h.b16 %v6658
      %v6714 = vunpack.c.l.b16 %v6659
      %v6715 = vunpack.c.h.b16 %v6659
      %v6716 = vunpack.c.l.b16 %v6660
      %v6717 = vunpack.c.h.b16 %v6660
      %v6718 = vunpack.c.l.b16 %v6661
      %v6719 = vunpack.c.h.b16 %v6661
      %v6720 = vunpack.c.l.b16 %v6662
      %v6721 = vunpack.c.h.b16 %v6662
      %v6722 = vunpack.c.l.b16 %v6663
      %v6723 = vunpack.c.h.b16 %v6663
      %v6724 = vunpack.c.l.b16 %v6664
      %v6725 = vunpack.c.h.b16 %v6664
      %v6726 = vunpack.c.l.b16 %v6665
      %v6727 = vunpack.c.h.b16 %v6665
      %v6728 = vunpack.c.l.b16 %v6666
      %v6729 = vunpack.c.h.b16 %v6666
      %v6730 = vunpack.c.l.b16 %v6667
      %v6731 = vunpack.c.h.b16 %v6667
      %v6732 = vpack.c.b16 %v6702, %v6700
      %v6733 = vpack.c.b16 %v6703, %v6701
      %v6734 = vpack.c.b16 %v6706, %v6704
      %v6735 = vpack.c.b16 %v6707, %v6705
      %v6736 = vpack.c.b16 %v6710, %v6708
      %v6737 = vpack.c.b16 %v6711, %v6709
      %v6738 = vpack.c.b16 %v6714, %v6712
      %v6739 = vpack.c.b16 %v6715, %v6713
      %v6740 = vpack.c.b16 %v6718, %v6716
      %v6741 = vpack.c.b16 %v6719, %v6717
      %v6742 = vpack.c.b16 %v6722, %v6720
      %v6743 = vpack.c.b16 %v6723, %v6721
      %v6744 = vpack.c.b16 %v6726, %v6724
      %v6745 = vpack.c.b16 %v6727, %v6725
      %v6746 = vpack.c.b16 %v6730, %v6728
      %v6747 = vpack.c.b16 %v6731, %v6729
      %6764 = vmatprep.subr.bf16.mxu0 %v6733
      %6765 = vmatpush1.bf16.msra.mxu0 %v6732
      %6766 = vmatprep.subr.bf16.mxu0 %v6735
      %6767 = vmatpush1.bf16.msra.mxu0 %v6734
      %6768 = vmatprep.subr.bf16.mxu0 %v6737
      %6769 = vmatpush1.bf16.msra.mxu0 %v6736
      %6770 = vmatprep.subr.bf16.mxu0 %v6739
      %6771 = vmatpush1.bf16.msra.mxu0 %v6738
      %6772 = vmatprep.subr.bf16.mxu0 %v6741
      %6773 = vmatpush1.bf16.msra.mxu0 %v6740
      %6774 = vmatprep.subr.bf16.mxu0 %v6743
      %6775 = vmatpush1.bf16.msra.mxu0 %v6742
      %6776 = vmatprep.subr.bf16.mxu0 %v6745
      %6777 = vmatpush1.bf16.msra.mxu0 %v6744
      %6778 = vmatprep.subr.bf16.mxu0 %v6747
      %6779 = vmatpush1.bf16.msra.mxu0 %v6746
      %6780 = vmatprep.subr.bf16.mxu0 0
      %6781 = vmatpush1.bf16.msra.mxu0 0
      %6782 = vmatprep.subr.bf16.mxu0 0
      %6783 = vmatpush1.bf16.msra.mxu0 0
      %6784 = vmatprep.subr.bf16.mxu0 0
      %6785 = vmatpush1.bf16.msra.mxu0 0
      %6786 = vmatprep.subr.bf16.mxu0 0
      %6787 = vmatpush1.bf16.msra.mxu0 0
      %6788 = vmatprep.subr.bf16.mxu0 0
      %6789 = vmatpush1.bf16.msra.mxu0 0
      %6790 = vmatprep.subr.bf16.mxu0 0
      %6791 = vmatpush1.bf16.msra.mxu0 0
      %6792 = vmatprep.subr.bf16.mxu0 0
      %6793 = vmatpush1.bf16.msra.mxu0 0
      %6794 = vmatprep.subr.bf16.mxu0 0
      %6795 = vmatpush1.bf16.msra.mxu0 0
      %6796 = vmatprep.mubr.bf16.mxu0 0
      %6797 = vmatmul.mubr.bf16.gmra.mrb[0].mxu0 %v6676
      %v6798 = vpop.f32.mrb[0].mxu0
      %v6799 = vadd.f32 0.0, %v6798
      %v6800 = vpop.f32.mrb[0].mxu0
      %v6801 = vadd.f32 0.0, %v6800
      %v6802 = vpop.f32.mrb[0].mxu0
      %v6803 = vadd.f32 0.0, %v6802
      %v6804 = vpop.f32.mrb[0].mxu0
      %v6805 = vadd.f32 0.0, %v6804
      %6806 = vmatprep.mubr.bf16.mxu0 0
      %6807 = vmatmul.mubr.bf16.gmra.mrb[0].mxu0 %v6677
      %v6808 = vpop.f32.mrb[0].mxu0
      %v6809 = vadd.f32 0.0, %v6808
      %v6810 = vpop.f32.mrb[0].mxu0
      %v6811 = vadd.f32 0.0, %v6810
      %v6812 = vpop.f32.mrb[0].mxu0
      %v6813 = vadd.f32 0.0, %v6812
      %v6814 = vpop.f32.mrb[0].mxu0
      %v6815 = vadd.f32 0.0, %v6814
      %6816 = vmatprep.mubr.bf16.mxu0 0
      %6817 = vmatmul.mubr.bf16.gmra.mrb[0].mxu0 %v6678
      %v6818 = vpop.f32.mrb[0].mxu0
      %v6819 = vadd.f32 0.0, %v6818
      %v6820 = vpop.f32.mrb[0].mxu0
      %v6821 = vadd.f32 0.0, %v6820
      %v6822 = vpop.f32.mrb[0].mxu0
      %v6823 = vadd.f32 0.0, %v6822
      %v6824 = vpop.f32.mrb[0].mxu0
      %v6825 = vadd.f32 0.0, %v6824
      %6826 = vmatprep.mubr.bf16.mxu0 0
      %6827 = vmatmul.mubr.bf16.gmra.mrb[0].mxu0 %v6679
      %v6828 = vpop.f32.mrb[0].mxu0
      %v6829 = vadd.f32 0.0, %v6828
      %v6830 = vpop.f32.mrb[0].mxu0
      %v6831 = vadd.f32 0.0, %v6830
      %v6832 = vpop.f32.mrb[0].mxu0
      %v6833 = vadd.f32 0.0, %v6832
      %v6834 = vpop.f32.mrb[0].mxu0
      %v6835 = vadd.f32 0.0, %v6834
      %6836 = vdwg.mxu0
      %v6837 = vadd.f32 %v6558, %v6799
      %v6838 = vadd.f32 %v6560, %v6801
      %v6839 = vadd.f32 %v6562, %v6803
      %v6840 = vadd.f32 %v6564, %v6805
      %v6841 = vadd.f32 %v6568, %v6809
      %v6842 = vadd.f32 %v6570, %v6811
      %v6843 = vadd.f32 %v6572, %v6813
      %v6844 = vadd.f32 %v6574, %v6815
      %v6845 = vadd.f32 %v6578, %v6819
      %v6846 = vadd.f32 %v6580, %v6821
      %v6847 = vadd.f32 %v6582, %v6823
      %v6848 = vadd.f32 %v6584, %v6825
      %v6849 = vadd.f32 %v6588, %v6829
      %v6850 = vadd.f32 %v6590, %v6831
      %v6851 = vadd.f32 %v6592, %v6833
      %v6852 = vadd.f32 %v6594, %v6835
      %v6853 = vld [vmem:[%s1745] sm:$0xf]
      %v6854 = vld [vmem:[%s1745 + $0x8] sm:$0xf]
      %v6855 = vld [vmem:[%s1745 + $0x10] sm:$0xf]
      %v6856 = vld [vmem:[%s1745 + $0x18] sm:$0xf]
      %v6857 = vld [vmem:[%s1745 + $0x20] sm:$0xf]
      %v6858 = vld [vmem:[%s1745 + $0x28] sm:$0xf]
      %v6859 = vld [vmem:[%s1745 + $0x30] sm:$0xf]
      %v6860 = vld [vmem:[%s1745 + $0x38] sm:$0xf]
      %v6861 = vld [vmem:[%s7 + $0x180] sm:$0xff]
      %v6862 = vld [vmem:[%s7 + $0x188] sm:$0xff]
      %v6863 = vld [vmem:[%s7 + $0x190] sm:$0xff]
      %v6864 = vld [vmem:[%s7 + $0x198] sm:$0xff]
      %v6865 = vld [vmem:[%s7 + $0x1a0] sm:$0xff]
      %v6866 = vld [vmem:[%s7 + $0x1a8] sm:$0xff]
      %v6867 = vld [vmem:[%s7 + $0x1b0] sm:$0xff]
      %v6868 = vld [vmem:[%s7 + $0x1b8] sm:$0xff]
      %v6869 = vld [vmem:[%s7 + $0x1c0] sm:$0xff]
      %v6870 = vld [vmem:[%s7 + $0x1c8] sm:$0xff]
      %v6871 = vld [vmem:[%s7 + $0x1d0] sm:$0xff]
      %v6872 = vld [vmem:[%s7 + $0x1d8] sm:$0xff]
      %v6873 = vld [vmem:[%s7 + $0x1e0] sm:$0xff]
      %v6874 = vld [vmem:[%s7 + $0x1e8] sm:$0xff]
      %v6875 = vld [vmem:[%s7 + $0x1f0] sm:$0xff]
      %v6876 = vld [vmem:[%s7 + $0x1f8] sm:$0xff]
      %v6885 = vunpack.c.l.b16 %v6853
      %v6886 = vunpack.c.l.b16 %v6854
      %v6887 = vunpack.c.l.b16 %v6855
      %v6888 = vunpack.c.l.b16 %v6856
      %v6889 = vunpack.c.l.b16 %v6857
      %v6890 = vunpack.c.l.b16 %v6858
      %v6891 = vunpack.c.l.b16 %v6859
      %v6892 = vunpack.c.l.b16 %v6860
      %v6893 = vpack.c.b16 %v6886, %v6885
      %v6894 = vpack.c.b16 %v6888, %v6887
      %v6895 = vpack.c.b16 %v6890, %v6889
      %v6896 = vpack.c.b16 %v6892, %v6891
      %v6917 = vunpack.c.l.b16 %v6861
      %v6918 = vunpack.c.h.b16 %v6861
      %v6919 = vunpack.c.l.b16 %v6862
      %v6920 = vunpack.c.h.b16 %v6862
      %v6921 = vunpack.c.l.b16 %v6863
      %v6922 = vunpack.c.h.b16 %v6863
      %v6923 = vunpack.c.l.b16 %v6864
      %v6924 = vunpack.c.h.b16 %v6864
      %v6925 = vunpack.c.l.b16 %v6865
      %v6926 = vunpack.c.h.b16 %v6865
      %v6927 = vunpack.c.l.b16 %v6866
      %v6928 = vunpack.c.h.b16 %v6866
      %v6929 = vunpack.c.l.b16 %v6867
      %v6930 = vunpack.c.h.b16 %v6867
      %v6931 = vunpack.c.l.b16 %v6868
      %v6932 = vunpack.c.h.b16 %v6868
      %v6933 = vunpack.c.l.b16 %v6869
      %v6934 = vunpack.c.h.b16 %v6869
      %v6935 = vunpack.c.l.b16 %v6870
      %v6936 = vunpack.c.h.b16 %v6870
      %v6937 = vunpack.c.l.b16 %v6871
      %v6938 = vunpack.c.h.b16 %v6871
      %v6939 = vunpack.c.l.b16 %v6872
      %v6940 = vunpack.c.h.b16 %v6872
      %v6941 = vunpack.c.l.b16 %v6873
      %v6942 = vunpack.c.h.b16 %v6873
      %v6943 = vunpack.c.l.b16 %v6874
      %v6944 = vunpack.c.h.b16 %v6874
      %v6945 = vunpack.c.l.b16 %v6875
      %v6946 = vunpack.c.h.b16 %v6875
      %v6947 = vunpack.c.l.b16 %v6876
      %v6948 = vunpack.c.h.b16 %v6876
      %v6949 = vpack.c.b16 %v6919, %v6917
      %v6950 = vpack.c.b16 %v6920, %v6918
      %v6951 = vpack.c.b16 %v6923, %v6921
      %v6952 = vpack.c.b16 %v6924, %v6922
      %v6953 = vpack.c.b16 %v6927, %v6925
      %v6954 = vpack.c.b16 %v6928, %v6926
      %v6955 = vpack.c.b16 %v6931, %v6929
      %v6956 = vpack.c.b16 %v6932, %v6930
      %v6957 = vpack.c.b16 %v6935, %v6933
      %v6958 = vpack.c.b16 %v6936, %v6934
      %v6959 = vpack.c.b16 %v6939, %v6937
      %v6960 = vpack.c.b16 %v6940, %v6938
      %v6961 = vpack.c.b16 %v6943, %v6941
      %v6962 = vpack.c.b16 %v6944, %v6942
      %v6963 = vpack.c.b16 %v6947, %v6945
      %v6964 = vpack.c.b16 %v6948, %v6946
      %6981 = vmatprep.subr.bf16.mxu0 %v6950
      %6982 = vmatpush1.bf16.msra.mxu0 %v6949
      %6983 = vmatprep.subr.bf16.mxu0 %v6952
      %6984 = vmatpush1.bf16.msra.mxu0 %v6951
      %6985 = vmatprep.subr.bf16.mxu0 %v6954
      %6986 = vmatpush1.bf16.msra.mxu0 %v6953
      %6987 = vmatprep.subr.bf16.mxu0 %v6956
      %6988 = vmatpush1.bf16.msra.mxu0 %v6955
      %6989 = vmatprep.subr.bf16.mxu0 %v6958
      %6990 = vmatpush1.bf16.msra.mxu0 %v6957
      %6991 = vmatprep.subr.bf16.mxu0 %v6960
      %6992 = vmatpush1.bf16.msra.mxu0 %v6959
      %6993 = vmatprep.subr.bf16.mxu0 %v6962
      %6994 = vmatpush1.bf16.msra.mxu0 %v6961
      %6995 = vmatprep.subr.bf16.mxu0 %v6964
      %6996 = vmatpush1.bf16.msra.mxu0 %v6963
      %6997 = vmatprep.subr.bf16.mxu0 0
      %6998 = vmatpush1.bf16.msra.mxu0 0
      %6999 = vmatprep.subr.bf16.mxu0 0
      %7000 = vmatpush1.bf16.msra.mxu0 0
      %7001 = vmatprep.subr.bf16.mxu0 0
      %7002 = vmatpush1.bf16.msra.mxu0 0
      %7003 = vmatprep.subr.bf16.mxu0 0
      %7004 = vmatpush1.bf16.msra.mxu0 0
      %7005 = vmatprep.subr.bf16.mxu0 0
      %7006 = vmatpush1.bf16.msra.mxu0 0
      %7007 = vmatprep.subr.bf16.mxu0 0
      %7008 = vmatpush1.bf16.msra.mxu0 0
      %7009 = vmatprep.subr.bf16.mxu0 0
      %7010 = vmatpush1.bf16.msra.mxu0 0
      %7011 = vmatprep.subr.bf16.mxu0 0
      %7012 = vmatpush1.bf16.msra.mxu0 0
      %7013 = vmatprep.mubr.bf16.mxu0 0
      %7014 = vmatmul.mubr.bf16.gmra.mrb[0].mxu0 %v6893
      %v7015 = vpop.f32.mrb[0].mxu0
      %v7016 = vadd.f32 0.0, %v7015
      %v7017 = vpop.f32.mrb[0].mxu0
      %v7018 = vadd.f32 0.0, %v7017
      %v7019 = vpop.f32.mrb[0].mxu0
      %v7020 = vadd.f32 0.0, %v7019
      %v7021 = vpop.f32.mrb[0].mxu0
      %v7022 = vadd.f32 0.0, %v7021
      %7023 = vmatprep.mubr.bf16.mxu0 0
      %7024 = vmatmul.mubr.bf16.gmra.mrb[0].mxu0 %v6894
      %v7025 = vpop.f32.mrb[0].mxu0
      %v7026 = vadd.f32 0.0, %v7025
      %v7027 = vpop.f32.mrb[0].mxu0
      %v7028 = vadd.f32 0.0, %v7027
      %v7029 = vpop.f32.mrb[0].mxu0
      %v7030 = vadd.f32 0.0, %v7029
      %v7031 = vpop.f32.mrb[0].mxu0
      %v7032 = vadd.f32 0.0, %v7031
      %7033 = vmatprep.mubr.bf16.mxu0 0
      %7034 = vmatmul.mubr.bf16.gmra.mrb[0].mxu0 %v6895
      %v7035 = vpop.f32.mrb[0].mxu0
      %v7036 = vadd.f32 0.0, %v7035
      %v7037 = vpop.f32.mrb[0].mxu0
      %v7038 = vadd.f32 0.0, %v7037
      %v7039 = vpop.f32.mrb[0].mxu0
      %v7040 = vadd.f32 0.0, %v7039
      %v7041 = vpop.f32.mrb[0].mxu0
      %v7042 = vadd.f32 0.0, %v7041
      %7043 = vmatprep.mubr.bf16.mxu0 0
      %7044 = vmatmul.mubr.bf16.gmra.mrb[0].mxu0 %v6896
      %v7045 = vpop.f32.mrb[0].mxu0
      %v7046 = vadd.f32 0.0, %v7045
      %v7047 = vpop.f32.mrb[0].mxu0
      %v7048 = vadd.f32 0.0, %v7047
      %v7049 = vpop.f32.mrb[0].mxu0
      %v7050 = vadd.f32 0.0, %v7049
      %v7051 = vpop.f32.mrb[0].mxu0
      %v7052 = vadd.f32 0.0, %v7051
      %7053 = vdwg.mxu0
      %v7054 = vadd.f32 %v6837, %v7016
      %v7055 = vadd.f32 %v6838, %v7018
      %v7056 = vadd.f32 %v6839, %v7020
      %v7057 = vadd.f32 %v6840, %v7022
      %v7058 = vadd.f32 %v6841, %v7026
      %v7059 = vadd.f32 %v6842, %v7028
      %v7060 = vadd.f32 %v6843, %v7030
      %v7061 = vadd.f32 %v6844, %v7032
      %v7062 = vadd.f32 %v6845, %v7036
      %v7063 = vadd.f32 %v6846, %v7038
      %v7064 = vadd.f32 %v6847, %v7040
      %v7065 = vadd.f32 %v6848, %v7042
      %v7066 = vadd.f32 %v6849, %v7046
      %v7067 = vadd.f32 %v6850, %v7048
      %v7068 = vadd.f32 %v6851, %v7050
      %v7069 = vadd.f32 %v6852, %v7052
      %v7070 = vld [vmem:[%s1745] sm:$0xf]
      %v7071 = vld [vmem:[%s1745 + $0x4] sm:$0x1]
      %v7072 = vld [vmem:[%s1745 + $0x8] sm:$0xf]
      %v7073 = vld [vmem:[%s1745 + $0xc] sm:$0x1]
      %v7074 = vld [vmem:[%s1745 + $0x10] sm:$0xf]
      %v7075 = vld [vmem:[%s1745 + $0x14] sm:$0x1]
      %v7076 = vld [vmem:[%s1745 + $0x18] sm:$0xf]
      %v7077 = vld [vmem:[%s1745 + $0x1c] sm:$0x1]
      %v7078 = vld [vmem:[%s1745 + $0x20] sm:$0xf]
      %v7079 = vld [vmem:[%s1745 + $0x24] sm:$0x1]
      %v7080 = vld [vmem:[%s1745 + $0x28] sm:$0xf]
      %v7081 = vld [vmem:[%s1745 + $0x2c] sm:$0x1]
      %v7082 = vld [vmem:[%s1745 + $0x30] sm:$0xf]
      %v7083 = vld [vmem:[%s1745 + $0x34] sm:$0x1]
      %v7084 = vld [vmem:[%s1745 + $0x38] sm:$0xf]
      %v7085 = vld [vmem:[%s1745 + $0x3c] sm:$0x1]
      %v7087 = vshrl.u32 %v7070, 16
      %v7089 = vrot.slane %v7087, 4
      %v7090 = vshll.u32 %v7070, 16
      %v7092 = vrot.slane %v7090, 5
      %v7093 = vor.u32 %v7089, %v7092
      %v7094 = vrot.slane %v7093, 4
      %v7096 = vshll.u32 %v7071, 16
      %v7098 = vrot.slane %v7096, 5
      %v7099 = vsel %vm452, %v7094, %v7098
      %v7101 = vshrl.u32 %v7072, 16
      %v7103 = vrot.slane %v7101, 4
      %v7104 = vshll.u32 %v7072, 16
      %v7106 = vrot.slane %v7104, 5
      %v7107 = vor.u32 %v7103, %v7106
      %v7108 = vrot.slane %v7107, 4
      %v7110 = vshll.u32 %v7073, 16
      %v7112 = vrot.slane %v7110, 5
      %v7113 = vsel %vm452, %v7108, %v7112
      %v7115 = vshrl.u32 %v7074, 16
      %v7117 = vrot.slane %v7115, 4
      %v7118 = vshll.u32 %v7074, 16
      %v7120 = vrot.slane %v7118, 5
      %v7121 = vor.u32 %v7117, %v7120
      %v7122 = vrot.slane %v7121, 4
      %v7124 = vshll.u32 %v7075, 16
      %v7126 = vrot.slane %v7124, 5
      %v7127 = vsel %vm452, %v7122, %v7126
      %v7129 = vshrl.u32 %v7076, 16
      %v7131 = vrot.slane %v7129, 4
      %v7132 = vshll.u32 %v7076, 16
      %v7134 = vrot.slane %v7132, 5
      %v7135 = vor.u32 %v7131, %v7134
      %v7136 = vrot.slane %v7135, 4
      %v7138 = vshll.u32 %v7077, 16
      %v7140 = vrot.slane %v7138, 5
      %v7141 = vsel %vm452, %v7136, %v7140
      %v7143 = vshrl.u32 %v7078, 16
      %v7145 = vrot.slane %v7143, 4
      %v7146 = vshll.u32 %v7078, 16
      %v7148 = vrot.slane %v7146, 5
      %v7149 = vor.u32 %v7145, %v7148
      %v7150 = vrot.slane %v7149, 4
      %v7152 = vshll.u32 %v7079, 16
      %v7154 = vrot.slane %v7152, 5
      %v7155 = vsel %vm452, %v7150, %v7154
      %v7157 = vshrl.u32 %v7080, 16
      %v7159 = vrot.slane %v7157, 4
      %v7160 = vshll.u32 %v7080, 16
      %v7162 = vrot.slane %v7160, 5
      %v7163 = vor.u32 %v7159, %v7162
      %v7164 = vrot.slane %v7163, 4
      %v7166 = vshll.u32 %v7081, 16
      %v7168 = vrot.slane %v7166, 5
      %v7169 = vsel %vm452, %v7164, %v7168
      %v7171 = vshrl.u32 %v7082, 16
      %v7173 = vrot.slane %v7171, 4
      %v7174 = vshll.u32 %v7082, 16
      %v7176 = vrot.slane %v7174, 5
      %v7177 = vor.u32 %v7173, %v7176
      %v7178 = vrot.slane %v7177, 4
      %v7180 = vshll.u32 %v7083, 16
      %v7182 = vrot.slane %v7180, 5
      %v7183 = vsel %vm452, %v7178, %v7182
      %v7185 = vshrl.u32 %v7084, 16
      %v7187 = vrot.slane %v7185, 4
      %v7188 = vshll.u32 %v7084, 16
      %v7190 = vrot.slane %v7188, 5
      %v7191 = vor.u32 %v7187, %v7190
      %v7192 = vrot.slane %v7191, 4
      %v7194 = vshll.u32 %v7085, 16
      %v7196 = vrot.slane %v7194, 5
      %v7197 = vsel %vm452, %v7192, %v7196
      %v7198 = vld [vmem:[%s7 + $0x200] sm:$0xff]
      %v7199 = vld [vmem:[%s7 + $0x208] sm:$0xff]
      %v7200 = vld [vmem:[%s7 + $0x210] sm:$0xff]
      %v7201 = vld [vmem:[%s7 + $0x218] sm:$0xff]
      %v7202 = vld [vmem:[%s7 + $0x220] sm:$0xff]
      %v7203 = vld [vmem:[%s7 + $0x228] sm:$0xff]
      %v7204 = vld [vmem:[%s7 + $0x230] sm:$0xff]
      %v7205 = vld [vmem:[%s7 + $0x238] sm:$0xff]
      %v7206 = vld [vmem:[%s7 + $0x240] sm:$0xff]
      %v7207 = vld [vmem:[%s7 + $0x248] sm:$0xff]
      %v7208 = vld [vmem:[%s7 + $0x250] sm:$0xff]
      %v7209 = vld [vmem:[%s7 + $0x258] sm:$0xff]
      %v7210 = vld [vmem:[%s7 + $0x260] sm:$0xff]
      %v7211 = vld [vmem:[%s7 + $0x268] sm:$0xff]
      %v7212 = vld [vmem:[%s7 + $0x270] sm:$0xff]
      %v7213 = vld [vmem:[%s7 + $0x278] sm:$0xff]
      %v7214 = vunpack.c.l.b16 %v7099
      %v7215 = vunpack.c.l.b16 %v7113
      %v7216 = vunpack.c.l.b16 %v7127
      %v7217 = vunpack.c.l.b16 %v7141
      %v7218 = vunpack.c.l.b16 %v7155
      %v7219 = vunpack.c.l.b16 %v7169
      %v7220 = vunpack.c.l.b16 %v7183
      %v7221 = vunpack.c.l.b16 %v7197
      %v7222 = vpack.c.b16 %v7215, %v7214
      %v7223 = vpack.c.b16 %v7217, %v7216
      %v7224 = vpack.c.b16 %v7219, %v7218
      %v7225 = vpack.c.b16 %v7221, %v7220
      %v7246 = vunpack.c.l.b16 %v7198
      %v7247 = vunpack.c.h.b16 %v7198
      %v7248 = vunpack.c.l.b16 %v7199
      %v7249 = vunpack.c.h.b16 %v7199
      %v7250 = vunpack.c.l.b16 %v7200
      %v7251 = vunpack.c.h.b16 %v7200
      %v7252 = vunpack.c.l.b16 %v7201
      %v7253 = vunpack.c.h.b16 %v7201
      %v7254 = vunpack.c.l.b16 %v7202
      %v7255 = vunpack.c.h.b16 %v7202
      %v7256 = vunpack.c.l.b16 %v7203
      %v7257 = vunpack.c.h.b16 %v7203
      %v7258 = vunpack.c.l.b16 %v7204
      %v7259 = vunpack.c.h.b16 %v7204
      %v7260 = vunpack.c.l.b16 %v7205
      %v7261 = vunpack.c.h.b16 %v7205
      %v7262 = vunpack.c.l.b16 %v7206
      %v7263 = vunpack.c.h.b16 %v7206
      %v7264 = vunpack.c.l.b16 %v7207
      %v7265 = vunpack.c.h.b16 %v7207
      %v7266 = vunpack.c.l.b16 %v7208
      %v7267 = vunpack.c.h.b16 %v7208
      %v7268 = vunpack.c.l.b16 %v7209
      %v7269 = vunpack.c.h.b16 %v7209
      %v7270 = vunpack.c.l.b16 %v7210
      %v7271 = vunpack.c.h.b16 %v7210
      %v7272 = vunpack.c.l.b16 %v7211
      %v7273 = vunpack.c.h.b16 %v7211
      %v7274 = vunpack.c.l.b16 %v7212
      %v7275 = vunpack.c.h.b16 %v7212
      %v7276 = vunpack.c.l.b16 %v7213
      %v7277 = vunpack.c.h.b16 %v7213
      %v7278 = vpack.c.b16 %v7248, %v7246
      %v7279 = vpack.c.b16 %v7249, %v7247
      %v7280 = vpack.c.b16 %v7252, %v7250
      %v7281 = vpack.c.b16 %v7253, %v7251
      %v7282 = vpack.c.b16 %v7256, %v7254
      %v7283 = vpack.c.b16 %v7257, %v7255
      %v7284 = vpack.c.b16 %v7260, %v7258
      %v7285 = vpack.c.b16 %v7261, %v7259
      %v7286 = vpack.c.b16 %v7264, %v7262
      %v7287 = vpack.c.b16 %v7265, %v7263
      %v7288 = vpack.c.b16 %v7268, %v7266
      %v7289 = vpack.c.b16 %v7269, %v7267
      %v7290 = vpack.c.b16 %v7272, %v7270
      %v7291 = vpack.c.b16 %v7273, %v7271
      %v7292 = vpack.c.b16 %v7276, %v7274
      %v7293 = vpack.c.b16 %v7277, %v7275
      %7310 = vmatprep.subr.bf16.mxu0 %v7279
      %7311 = vmatpush1.bf16.msra.mxu0 %v7278
      %7312 = vmatprep.subr.bf16.mxu0 %v7281
      %7313 = vmatpush1.bf16.msra.mxu0 %v7280
      %7314 = vmatprep.subr.bf16.mxu0 %v7283
      %7315 = vmatpush1.bf16.msra.mxu0 %v7282
      %7316 = vmatprep.subr.bf16.mxu0 %v7285
      %7317 = vmatpush1.bf16.msra.mxu0 %v7284
      %7318 = vmatprep.subr.bf16.mxu0 %v7287
      %7319 = vmatpush1.bf16.msra.mxu0 %v7286
      %7320 = vmatprep.subr.bf16.mxu0 %v7289
      %7321 = vmatpush1.bf16.msra.mxu0 %v7288
      %7322 = vmatprep.subr.bf16.mxu0 %v7291
      %7323 = vmatpush1.bf16.msra.mxu0 %v7290
      %7324 = vmatprep.subr.bf16.mxu0 %v7293
      %7325 = vmatpush1.bf16.msra.mxu0 %v7292
      %7326 = vmatprep.subr.bf16.mxu0 0
      %7327 = vmatpush1.bf16.msra.mxu0 0
      %7328 = vmatprep.subr.bf16.mxu0 0
      %7329 = vmatpush1.bf16.msra.mxu0 0
      %7330 = vmatprep.subr.bf16.mxu0 0
      %7331 = vmatpush1.bf16.msra.mxu0 0
      %7332 = vmatprep.subr.bf16.mxu0 0
      %7333 = vmatpush1.bf16.msra.mxu0 0
      %7334 = vmatprep.subr.bf16.mxu0 0
      %7335 = vmatpush1.bf16.msra.mxu0 0
      %7336 = vmatprep.subr.bf16.mxu0 0
      %7337 = vmatpush1.bf16.msra.mxu0 0
      %7338 = vmatprep.subr.bf16.mxu0 0
      %7339 = vmatpush1.bf16.msra.mxu0 0
      %7340 = vmatprep.subr.bf16.mxu0 0
      %7341 = vmatpush1.bf16.msra.mxu0 0
      %7342 = vmatprep.mubr.bf16.mxu0 0
      %7343 = vmatmul.mubr.bf16.gmra.mrb[0].mxu0 %v7222
      %v7344 = vpop.f32.mrb[0].mxu0
      %v7345 = vadd.f32 0.0, %v7344
      %v7346 = vpop.f32.mrb[0].mxu0
      %v7347 = vadd.f32 0.0, %v7346
      %v7348 = vpop.f32.mrb[0].mxu0
      %v7349 = vadd.f32 0.0, %v7348
      %v7350 = vpop.f32.mrb[0].mxu0
      %v7351 = vadd.f32 0.0, %v7350
      %7352 = vmatprep.mubr.bf16.mxu0 0
      %7353 = vmatmul.mubr.bf16.gmra.mrb[0].mxu0 %v7223
      %v7354 = vpop.f32.mrb[0].mxu0
      %v7355 = vadd.f32 0.0, %v7354
      %v7356 = vpop.f32.mrb[0].mxu0
      %v7357 = vadd.f32 0.0, %v7356
      %v7358 = vpop.f32.mrb[0].mxu0
      %v7359 = vadd.f32 0.0, %v7358
      %v7360 = vpop.f32.mrb[0].mxu0
      %v7361 = vadd.f32 0.0, %v7360
      %7362 = vmatprep.mubr.bf16.mxu0 0
      %7363 = vmatmul.mubr.bf16.gmra.mrb[0].mxu0 %v7224
      %v7364 = vpop.f32.mrb[0].mxu0
      %v7365 = vadd.f32 0.0, %v7364
      %v7366 = vpop.f32.mrb[0].mxu0
      %v7367 = vadd.f32 0.0, %v7366
      %v7368 = vpop.f32.mrb[0].mxu0
      %v7369 = vadd.f32 0.0, %v7368
      %v7370 = vpop.f32.mrb[0].mxu0
      %v7371 = vadd.f32 0.0, %v7370
      %7372 = vmatprep.mubr.bf16.mxu0 0
      %7373 = vmatmul.mubr.bf16.gmra.mrb[0].mxu0 %v7225
      %v7374 = vpop.f32.mrb[0].mxu0
      %v7375 = vadd.f32 0.0, %v7374
      %v7376 = vpop.f32.mrb[0].mxu0
      %v7377 = vadd.f32 0.0, %v7376
      %v7378 = vpop.f32.mrb[0].mxu0
      %v7379 = vadd.f32 0.0, %v7378
      %v7380 = vpop.f32.mrb[0].mxu0
      %v7381 = vadd.f32 0.0, %v7380
      %7382 = vdwg.mxu0
      %v7383 = vadd.f32 %v7054, %v7345
      %v7384 = vadd.f32 %v7055, %v7347
      %v7385 = vadd.f32 %v7056, %v7349
      %v7386 = vadd.f32 %v7057, %v7351
      %v7387 = vadd.f32 %v7058, %v7355
      %v7388 = vadd.f32 %v7059, %v7357
      %v7389 = vadd.f32 %v7060, %v7359
      %v7390 = vadd.f32 %v7061, %v7361
      %v7391 = vadd.f32 %v7062, %v7365
      %v7392 = vadd.f32 %v7063, %v7367
      %v7393 = vadd.f32 %v7064, %v7369
      %v7394 = vadd.f32 %v7065, %v7371
      %v7395 = vadd.f32 %v7066, %v7375
      %v7396 = vadd.f32 %v7067, %v7377
      %v7397 = vadd.f32 %v7068, %v7379
      %v7398 = vadd.f32 %v7069, %v7381
      %v7399 = vld [vmem:[%s1745] sm:$0xe]
      %v7400 = vld [vmem:[%s1745 + $0x8] sm:$0xe]
      %v7401 = vld [vmem:[%s1745 + $0x10] sm:$0xe]
      %v7402 = vld [vmem:[%s1745 + $0x18] sm:$0xe]
      %v7403 = vld [vmem:[%s1745 + $0x20] sm:$0xe]
      %v7404 = vld [vmem:[%s1745 + $0x28] sm:$0xe]
      %v7405 = vld [vmem:[%s1745 + $0x30] sm:$0xe]
      %v7406 = vld [vmem:[%s1745 + $0x38] sm:$0xe]
      %v7423 = vrot.slane %v7399, 5
      %v7424 = vrot.slane %v7423, 4
      %v7425 = vrot.slane %v7071, 5
      %v7426 = vsel %vm2252, %v7424, %v7425
      %v7427 = vrot.slane %v7400, 5
      %v7428 = vrot.slane %v7427, 4
      %v7429 = vrot.slane %v7073, 5
      %v7430 = vsel %vm2252, %v7428, %v7429
      %v7431 = vrot.slane %v7401, 5
      %v7432 = vrot.slane %v7431, 4
      %v7433 = vrot.slane %v7075, 5
      %v7434 = vsel %vm2252, %v7432, %v7433
      %v7435 = vrot.slane %v7402, 5
      %v7436 = vrot.slane %v7435, 4
      %v7437 = vrot.slane %v7077, 5
      %v7438 = vsel %vm2252, %v7436, %v7437
      %v7439 = vrot.slane %v7403, 5
      %v7440 = vrot.slane %v7439, 4
      %v7441 = vrot.slane %v7079, 5
      %v7442 = vsel %vm2252, %v7440, %v7441
      %v7443 = vrot.slane %v7404, 5
      %v7444 = vrot.slane %v7443, 4
      %v7445 = vrot.slane %v7081, 5
      %v7446 = vsel %vm2252, %v7444, %v7445
      %v7447 = vrot.slane %v7405, 5
      %v7448 = vrot.slane %v7447, 4
      %v7449 = vrot.slane %v7083, 5
      %v7450 = vsel %vm2252, %v7448, %v7449
      %v7451 = vrot.slane %v7406, 5
      %v7452 = vrot.slane %v7451, 4
      %v7453 = vrot.slane %v7085, 5
      %v7454 = vsel %vm2252, %v7452, %v7453
      %v7455 = vld [vmem:[%s7 + $0x280] sm:$0xff]
      %v7456 = vld [vmem:[%s7 + $0x288] sm:$0xff]
      %v7457 = vld [vmem:[%s7 + $0x290] sm:$0xff]
      %v7458 = vld [vmem:[%s7 + $0x298] sm:$0xff]
      %v7459 = vld [vmem:[%s7 + $0x2a0] sm:$0xff]
      %v7460 = vld [vmem:[%s7 + $0x2a8] sm:$0xff]
      %v7461 = vld [vmem:[%s7 + $0x2b0] sm:$0xff]
      %v7462 = vld [vmem:[%s7 + $0x2b8] sm:$0xff]
      %v7463 = vld [vmem:[%s7 + $0x2c0] sm:$0xff]
      %v7464 = vld [vmem:[%s7 + $0x2c8] sm:$0xff]
      %v7465 = vld [vmem:[%s7 + $0x2d0] sm:$0xff]
      %v7466 = vld [vmem:[%s7 + $0x2d8] sm:$0xff]
      %v7467 = vld [vmem:[%s7 + $0x2e0] sm:$0xff]
      %v7468 = vld [vmem:[%s7 + $0x2e8] sm:$0xff]
      %v7469 = vld [vmem:[%s7 + $0x2f0] sm:$0xff]
      %v7470 = vld [vmem:[%s7 + $0x2f8] sm:$0xff]
      %v7471 = vunpack.c.l.b16 %v7426
      %v7472 = vunpack.c.l.b16 %v7430
      %v7473 = vunpack.c.l.b16 %v7434
      %v7474 = vunpack.c.l.b16 %v7438
      %v7475 = vunpack.c.l.b16 %v7442
      %v7476 = vunpack.c.l.b16 %v7446
      %v7477 = vunpack.c.l.b16 %v7450
      %v7478 = vunpack.c.l.b16 %v7454
      %v7479 = vpack.c.b16 %v7472, %v7471
      %v7480 = vpack.c.b16 %v7474, %v7473
      %v7481 = vpack.c.b16 %v7476, %v7475
      %v7482 = vpack.c.b16 %v7478, %v7477
      %v7503 = vunpack.c.l.b16 %v7455
      %v7504 = vunpack.c.h.b16 %v7455
      %v7505 = vunpack.c.l.b16 %v7456
      %v7506 = vunpack.c.h.b16 %v7456
      %v7507 = vunpack.c.l.b16 %v7457
      %v7508 = vunpack.c.h.b16 %v7457
      %v7509 = vunpack.c.l.b16 %v7458
      %v7510 = vunpack.c.h.b16 %v7458
      %v7511 = vunpack.c.l.b16 %v7459
      %v7512 = vunpack.c.h.b16 %v7459
      %v7513 = vunpack.c.l.b16 %v7460
      %v7514 = vunpack.c.h.b16 %v7460
      %v7515 = vunpack.c.l.b16 %v7461
      %v7516 = vunpack.c.h.b16 %v7461
      %v7517 = vunpack.c.l.b16 %v7462
      %v7518 = vunpack.c.h.b16 %v7462
      %v7519 = vunpack.c.l.b16 %v7463
      %v7520 = vunpack.c.h.b16 %v7463
      %v7521 = vunpack.c.l.b16 %v7464
      %v7522 = vunpack.c.h.b16 %v7464
      %v7523 = vunpack.c.l.b16 %v7465
      %v7524 = vunpack.c.h.b16 %v7465
      %v7525 = vunpack.c.l.b16 %v7466
      %v7526 = vunpack.c.h.b16 %v7466
      %v7527 = vunpack.c.l.b16 %v7467
      %v7528 = vunpack.c.h.b16 %v7467
      %v7529 = vunpack.c.l.b16 %v7468
      %v7530 = vunpack.c.h.b16 %v7468
      %v7531 = vunpack.c.l.b16 %v7469
      %v7532 = vunpack.c.h.b16 %v7469
      %v7533 = vunpack.c.l.b16 %v7470
      %v7534 = vunpack.c.h.b16 %v7470
      %v7535 = vpack.c.b16 %v7505, %v7503
      %v7536 = vpack.c.b16 %v7506, %v7504
      %v7537 = vpack.c.b16 %v7509, %v7507
      %v7538 = vpack.c.b16 %v7510, %v7508
      %v7539 = vpack.c.b16 %v7513, %v7511
      %v7540 = vpack.c.b16 %v7514, %v7512
      %v7541 = vpack.c.b16 %v7517, %v7515
      %v7542 = vpack.c.b16 %v7518, %v7516
      %v7543 = vpack.c.b16 %v7521, %v7519
      %v7544 = vpack.c.b16 %v7522, %v7520
      %v7545 = vpack.c.b16 %v7525, %v7523
      %v7546 = vpack.c.b16 %v7526, %v7524
      %v7547 = vpack.c.b16 %v7529, %v7527
      %v7548 = vpack.c.b16 %v7530, %v7528
      %v7549 = vpack.c.b16 %v7533, %v7531
      %v7550 = vpack.c.b16 %v7534, %v7532
      %7567 = vmatprep.subr.bf16.mxu0 %v7536
      %7568 = vmatpush1.bf16.msra.mxu0 %v7535
      %7569 = vmatprep.subr.bf16.mxu0 %v7538
      %7570 = vmatpush1.bf16.msra.mxu0 %v7537
      %7571 = vmatprep.subr.bf16.mxu0 %v7540
      %7572 = vmatpush1.bf16.msra.mxu0 %v7539
      %7573 = vmatprep.subr.bf16.mxu0 %v7542
      %7574 = vmatpush1.bf16.msra.mxu0 %v7541
      %7575 = vmatprep.subr.bf16.mxu0 %v7544
      %7576 = vmatpush1.bf16.msra.mxu0 %v7543
      %7577 = vmatprep.subr.bf16.mxu0 %v7546
      %7578 = vmatpush1.bf16.msra.mxu0 %v7545
      %7579 = vmatprep.subr.bf16.mxu0 %v7548
      %7580 = vmatpush1.bf16.msra.mxu0 %v7547
      %7581 = vmatprep.subr.bf16.mxu0 %v7550
      %7582 = vmatpush1.bf16.msra.mxu0 %v7549
      %7583 = vmatprep.subr.bf16.mxu0 0
      %7584 = vmatpush1.bf16.msra.mxu0 0
      %7585 = vmatprep.subr.bf16.mxu0 0
      %7586 = vmatpush1.bf16.msra.mxu0 0
      %7587 = vmatprep.subr.bf16.mxu0 0
      %7588 = vmatpush1.bf16.msra.mxu0 0
      %7589 = vmatprep.subr.bf16.mxu0 0
      %7590 = vmatpush1.bf16.msra.mxu0 0
      %7591 = vmatprep.subr.bf16.mxu0 0
      %7592 = vmatpush1.bf16.msra.mxu0 0
      %7593 = vmatprep.subr.bf16.mxu0 0
      %7594 = vmatpush1.bf16.msra.mxu0 0
      %7595 = vmatprep.subr.bf16.mxu0 0
      %7596 = vmatpush1.bf16.msra.mxu0 0
      %7597 = vmatprep.subr.bf16.mxu0 0
      %7598 = vmatpush1.bf16.msra.mxu0 0
      %7599 = vmatprep.mubr.bf16.mxu0 0
      %7600 = vmatmul.mubr.bf16.gmra.mrb[0].mxu0 %v7479
      %v7601 = vpop.f32.mrb[0].mxu0
      %v7602 = vadd.f32 0.0, %v7601
      %v7603 = vpop.f32.mrb[0].mxu0
      %v7604 = vadd.f32 0.0, %v7603
      %v7605 = vpop.f32.mrb[0].mxu0
      %v7606 = vadd.f32 0.0, %v7605
      %v7607 = vpop.f32.mrb[0].mxu0
      %v7608 = vadd.f32 0.0, %v7607
      %7609 = vmatprep.mubr.bf16.mxu0 0
      %7610 = vmatmul.mubr.bf16.gmra.mrb[0].mxu0 %v7480
      %v7611 = vpop.f32.mrb[0].mxu0
      %v7612 = vadd.f32 0.0, %v7611
      %v7613 = vpop.f32.mrb[0].mxu0
      %v7614 = vadd.f32 0.0, %v7613
      %v7615 = vpop.f32.mrb[0].mxu0
      %v7616 = vadd.f32 0.0, %v7615
      %v7617 = vpop.f32.mrb[0].mxu0
      %v7618 = vadd.f32 0.0, %v7617
      %7619 = vmatprep.mubr.bf16.mxu0 0
      %7620 = vmatmul.mubr.bf16.gmra.mrb[0].mxu0 %v7481
      %v7621 = vpop.f32.mrb[0].mxu0
      %v7622 = vadd.f32 0.0, %v7621
      %v7623 = vpop.f32.mrb[0].mxu0
      %v7624 = vadd.f32 0.0, %v7623
      %v7625 = vpop.f32.mrb[0].mxu0
      %v7626 = vadd.f32 0.0, %v7625
      %v7627 = vpop.f32.mrb[0].mxu0
      %v7628 = vadd.f32 0.0, %v7627
      %7629 = vmatprep.mubr.bf16.mxu0 0
      %7630 = vmatmul.mubr.bf16.gmra.mrb[0].mxu0 %v7482
      %v7631 = vpop.f32.mrb[0].mxu0
      %v7632 = vadd.f32 0.0, %v7631
      %v7633 = vpop.f32.mrb[0].mxu0
      %v7634 = vadd.f32 0.0, %v7633
      %v7635 = vpop.f32.mrb[0].mxu0
      %v7636 = vadd.f32 0.0, %v7635
      %v7637 = vpop.f32.mrb[0].mxu0
      %v7638 = vadd.f32 0.0, %v7637
      %7639 = vdwg.mxu0
      %v7640 = vadd.f32 %v7383, %v7602
      %v7641 = vadd.f32 %v7384, %v7604
      %v7642 = vadd.f32 %v7385, %v7606
      %v7643 = vadd.f32 %v7386, %v7608
      %v7644 = vadd.f32 %v7387, %v7612
      %v7645 = vadd.f32 %v7388, %v7614
      %v7646 = vadd.f32 %v7389, %v7616
      %v7647 = vadd.f32 %v7390, %v7618
      %v7648 = vadd.f32 %v7391, %v7622
      %v7649 = vadd.f32 %v7392, %v7624
      %v7650 = vadd.f32 %v7393, %v7626
      %v7651 = vadd.f32 %v7394, %v7628
      %v7652 = vadd.f32 %v7395, %v7632
      %v7653 = vadd.f32 %v7396, %v7634
      %v7654 = vadd.f32 %v7397, %v7636
      %v7655 = vadd.f32 %v7398, %v7638
      %v7656 = vld [vmem:[%s3097] sm:$0xf]
      %v7657 = vld [vmem:[%s3097 + $0x8] sm:$0xf]
      %v7658 = vld [vmem:[%s3097 + $0x10] sm:$0xf]
      %v7659 = vld [vmem:[%s3097 + $0x18] sm:$0xf]
      %v7660 = vld [vmem:[%s3097 + $0x20] sm:$0xf]
      %v7661 = vld [vmem:[%s3097 + $0x28] sm:$0xf]
      %v7662 = vld [vmem:[%s3097 + $0x30] sm:$0xf]
      %v7663 = vld [vmem:[%s3097 + $0x38] sm:$0xf]
      %v7664 = vld [vmem:[%s7 + $0x300] sm:$0xff]
      %v7665 = vld [vmem:[%s7 + $0x308] sm:$0xff]
      %v7666 = vld [vmem:[%s7 + $0x310] sm:$0xff]
      %v7667 = vld [vmem:[%s7 + $0x318] sm:$0xff]
      %v7668 = vld [vmem:[%s7 + $0x320] sm:$0xff]
      %v7669 = vld [vmem:[%s7 + $0x328] sm:$0xff]
      %v7670 = vld [vmem:[%s7 + $0x330] sm:$0xff]
      %v7671 = vld [vmem:[%s7 + $0x338] sm:$0xff]
      %v7672 = vld [vmem:[%s7 + $0x340] sm:$0xff]
      %v7673 = vld [vmem:[%s7 + $0x348] sm:$0xff]
      %v7674 = vld [vmem:[%s7 + $0x350] sm:$0xff]
      %v7675 = vld [vmem:[%s7 + $0x358] sm:$0xff]
      %v7676 = vld [vmem:[%s7 + $0x360] sm:$0xff]
      %v7677 = vld [vmem:[%s7 + $0x368] sm:$0xff]
      %v7678 = vld [vmem:[%s7 + $0x370] sm:$0xff]
      %v7679 = vld [vmem:[%s7 + $0x378] sm:$0xff]
      %v7688 = vunpack.c.l.b16 %v7656
      %v7689 = vunpack.c.l.b16 %v7657
      %v7690 = vunpack.c.l.b16 %v7658
      %v7691 = vunpack.c.l.b16 %v7659
      %v7692 = vunpack.c.l.b16 %v7660
      %v7693 = vunpack.c.l.b16 %v7661
      %v7694 = vunpack.c.l.b16 %v7662
      %v7695 = vunpack.c.l.b16 %v7663
      %v7696 = vpack.c.b16 %v7689, %v7688
      %v7697 = vpack.c.b16 %v7691, %v7690
      %v7698 = vpack.c.b16 %v7693, %v7692
      %v7699 = vpack.c.b16 %v7695, %v7694
      %v7720 = vunpack.c.l.b16 %v7664
      %v7721 = vunpack.c.h.b16 %v7664
      %v7722 = vunpack.c.l.b16 %v7665
      %v7723 = vunpack.c.h.b16 %v7665
      %v7724 = vunpack.c.l.b16 %v7666
      %v7725 = vunpack.c.h.b16 %v7666
      %v7726 = vunpack.c.l.b16 %v7667
      %v7727 = vunpack.c.h.b16 %v7667
      %v7728 = vunpack.c.l.b16 %v7668
      %v7729 = vunpack.c.h.b16 %v7668
      %v7730 = vunpack.c.l.b16 %v7669
      %v7731 = vunpack.c.h.b16 %v7669
      %v7732 = vunpack.c.l.b16 %v7670
      %v7733 = vunpack.c.h.b16 %v7670
      %v7734 = vunpack.c.l.b16 %v7671
      %v7735 = vunpack.c.h.b16 %v7671
      %v7736 = vunpack.c.l.b16 %v7672
      %v7737 = vunpack.c.h.b16 %v7672
      %v7738 = vunpack.c.l.b16 %v7673
      %v7739 = vunpack.c.h.b16 %v7673
      %v7740 = vunpack.c.l.b16 %v7674
      %v7741 = vunpack.c.h.b16 %v7674
      %v7742 = vunpack.c.l.b16 %v7675
      %v7743 = vunpack.c.h.b16 %v7675
      %v7744 = vunpack.c.l.b16 %v7676
      %v7745 = vunpack.c.h.b16 %v7676
      %v7746 = vunpack.c.l.b16 %v7677
      %v7747 = vunpack.c.h.b16 %v7677
      %v7748 = vunpack.c.l.b16 %v7678
      %v7749 = vunpack.c.h.b16 %v7678
      %v7750 = vunpack.c.l.b16 %v7679
      %v7751 = vunpack.c.h.b16 %v7679
      %v7752 = vpack.c.b16 %v7722, %v7720
      %v7753 = vpack.c.b16 %v7723, %v7721
      %v7754 = vpack.c.b16 %v7726, %v7724
      %v7755 = vpack.c.b16 %v7727, %v7725
      %v7756 = vpack.c.b16 %v7730, %v7728
      %v7757 = vpack.c.b16 %v7731, %v7729
      %v7758 = vpack.c.b16 %v7734, %v7732
      %v7759 = vpack.c.b16 %v7735, %v7733
      %v7760 = vpack.c.b16 %v7738, %v7736
      %v7761 = vpack.c.b16 %v7739, %v7737
      %v7762 = vpack.c.b16 %v7742, %v7740
      %v7763 = vpack.c.b16 %v7743, %v7741
      %v7764 = vpack.c.b16 %v7746, %v7744
      %v7765 = vpack.c.b16 %v7747, %v7745
      %v7766 = vpack.c.b16 %v7750, %v7748
      %v7767 = vpack.c.b16 %v7751, %v7749
      %7784 = vmatprep.subr.bf16.mxu0 %v7753
      %7785 = vmatpush1.bf16.msra.mxu0 %v7752
      %7786 = vmatprep.subr.bf16.mxu0 %v7755
      %7787 = vmatpush1.bf16.msra.mxu0 %v7754
      %7788 = vmatprep.subr.bf16.mxu0 %v7757
      %7789 = vmatpush1.bf16.msra.mxu0 %v7756
      %7790 = vmatprep.subr.bf16.mxu0 %v7759
      %7791 = vmatpush1.bf16.msra.mxu0 %v7758
      %7792 = vmatprep.subr.bf16.mxu0 %v7761
      %7793 = vmatpush1.bf16.msra.mxu0 %v7760
      %7794 = vmatprep.subr.bf16.mxu0 %v7763
      %7795 = vmatpush1.bf16.msra.mxu0 %v7762
      %7796 = vmatprep.subr.bf16.mxu0 %v7765
      %7797 = vmatpush1.bf16.msra.mxu0 %v7764
      %7798 = vmatprep.subr.bf16.mxu0 %v7767
      %7799 = vmatpush1.bf16.msra.mxu0 %v7766
      %7800 = vmatprep.subr.bf16.mxu0 0
      %7801 = vmatpush1.bf16.msra.mxu0 0
      %7802 = vmatprep.subr.bf16.mxu0 0
      %7803 = vmatpush1.bf16.msra.mxu0 0
      %7804 = vmatprep.subr.bf16.mxu0 0
      %7805 = vmatpush1.bf16.msra.mxu0 0
      %7806 = vmatprep.subr.bf16.mxu0 0
      %7807 = vmatpush1.bf16.msra.mxu0 0
      %7808 = vmatprep.subr.bf16.mxu0 0
      %7809 = vmatpush1.bf16.msra.mxu0 0
      %7810 = vmatprep.subr.bf16.mxu0 0
      %7811 = vmatpush1.bf16.msra.mxu0 0
      %7812 = vmatprep.subr.bf16.mxu0 0
      %7813 = vmatpush1.bf16.msra.mxu0 0
      %7814 = vmatprep.subr.bf16.mxu0 0
      %7815 = vmatpush1.bf16.msra.mxu0 0
      %7816 = vmatprep.mubr.bf16.mxu0 0
      %7817 = vmatmul.mubr.bf16.gmra.mrb[0].mxu0 %v7696
      %v7818 = vpop.f32.mrb[0].mxu0
      %v7819 = vadd.f32 0.0, %v7818
      %v7820 = vpop.f32.mrb[0].mxu0
      %v7821 = vadd.f32 0.0, %v7820
      %v7822 = vpop.f32.mrb[0].mxu0
      %v7823 = vadd.f32 0.0, %v7822
      %v7824 = vpop.f32.mrb[0].mxu0
      %v7825 = vadd.f32 0.0, %v7824
      %7826 = vmatprep.mubr.bf16.mxu0 0
      %7827 = vmatmul.mubr.bf16.gmra.mrb[0].mxu0 %v7697
      %v7828 = vpop.f32.mrb[0].mxu0
      %v7829 = vadd.f32 0.0, %v7828
      %v7830 = vpop.f32.mrb[0].mxu0
      %v7831 = vadd.f32 0.0, %v7830
      %v7832 = vpop.f32.mrb[0].mxu0
      %v7833 = vadd.f32 0.0, %v7832
      %v7834 = vpop.f32.mrb[0].mxu0
      %v7835 = vadd.f32 0.0, %v7834
      %7836 = vmatprep.mubr.bf16.mxu0 0
      %7837 = vmatmul.mubr.bf16.gmra.mrb[0].mxu0 %v7698
      %v7838 = vpop.f32.mrb[0].mxu0
      %v7839 = vadd.f32 0.0, %v7838
      %v7840 = vpop.f32.mrb[0].mxu0
      %v7841 = vadd.f32 0.0, %v7840
      %v7842 = vpop.f32.mrb[0].mxu0
      %v7843 = vadd.f32 0.0, %v7842
      %v7844 = vpop.f32.mrb[0].mxu0
      %v7845 = vadd.f32 0.0, %v7844
      %7846 = vmatprep.mubr.bf16.mxu0 0
      %7847 = vmatmul.mubr.bf16.gmra.mrb[0].mxu0 %v7699
      %v7848 = vpop.f32.mrb[0].mxu0
      %v7849 = vadd.f32 0.0, %v7848
      %v7850 = vpop.f32.mrb[0].mxu0
      %v7851 = vadd.f32 0.0, %v7850
      %v7852 = vpop.f32.mrb[0].mxu0
      %v7853 = vadd.f32 0.0, %v7852
      %v7854 = vpop.f32.mrb[0].mxu0
      %v7855 = vadd.f32 0.0, %v7854
      %7856 = vdwg.mxu0
      %v7857 = vadd.f32 %v7640, %v7819
      %v7858 = vadd.f32 %v7641, %v7821
      %v7859 = vadd.f32 %v7642, %v7823
      %v7860 = vadd.f32 %v7643, %v7825
      %v7861 = vadd.f32 %v7644, %v7829
      %v7862 = vadd.f32 %v7645, %v7831
      %v7863 = vadd.f32 %v7646, %v7833
      %v7864 = vadd.f32 %v7647, %v7835
      %v7865 = vadd.f32 %v7648, %v7839
      %v7866 = vadd.f32 %v7649, %v7841
      %v7867 = vadd.f32 %v7650, %v7843
      %v7868 = vadd.f32 %v7651, %v7845
      %v7869 = vadd.f32 %v7652, %v7849
      %v7870 = vadd.f32 %v7653, %v7851
      %v7871 = vadd.f32 %v7654, %v7853
      %v7872 = vadd.f32 %v7655, %v7855
      %v7873 = vld [vmem:[%s3097] sm:$0xf]
      %v7874 = vld [vmem:[%s3097 + $0x4] sm:$0x1]
      %v7875 = vld [vmem:[%s3097 + $0x8] sm:$0xf]
      %v7876 = vld [vmem:[%s3097 + $0xc] sm:$0x1]
      %v7877 = vld [vmem:[%s3097 + $0x10] sm:$0xf]
      %v7878 = vld [vmem:[%s3097 + $0x14] sm:$0x1]
      %v7879 = vld [vmem:[%s3097 + $0x18] sm:$0xf]
      %v7880 = vld [vmem:[%s3097 + $0x1c] sm:$0x1]
      %v7881 = vld [vmem:[%s3097 + $0x20] sm:$0xf]
      %v7882 = vld [vmem:[%s3097 + $0x24] sm:$0x1]
      %v7883 = vld [vmem:[%s3097 + $0x28] sm:$0xf]
      %v7884 = vld [vmem:[%s3097 + $0x2c] sm:$0x1]
      %v7885 = vld [vmem:[%s3097 + $0x30] sm:$0xf]
      %v7886 = vld [vmem:[%s3097 + $0x34] sm:$0x1]
      %v7887 = vld [vmem:[%s3097 + $0x38] sm:$0xf]
      %v7888 = vld [vmem:[%s3097 + $0x3c] sm:$0x1]
      %v7890 = vshrl.u32 %v7873, 16
      %v7892 = vrot.slane %v7890, 4
      %v7893 = vshll.u32 %v7873, 16
      %v7895 = vrot.slane %v7893, 5
      %v7896 = vor.u32 %v7892, %v7895
      %v7897 = vrot.slane %v7896, 4
      %v7899 = vshll.u32 %v7874, 16
      %v7901 = vrot.slane %v7899, 5
      %v7902 = vsel %vm452, %v7897, %v7901
      %v7904 = vshrl.u32 %v7875, 16
      %v7906 = vrot.slane %v7904, 4
      %v7907 = vshll.u32 %v7875, 16
      %v7909 = vrot.slane %v7907, 5
      %v7910 = vor.u32 %v7906, %v7909
      %v7911 = vrot.slane %v7910, 4
      %v7913 = vshll.u32 %v7876, 16
      %v7915 = vrot.slane %v7913, 5
      %v7916 = vsel %vm452, %v7911, %v7915
      %v7918 = vshrl.u32 %v7877, 16
      %v7920 = vrot.slane %v7918, 4
      %v7921 = vshll.u32 %v7877, 16
      %v7923 = vrot.slane %v7921, 5
      %v7924 = vor.u32 %v7920, %v7923
      %v7925 = vrot.slane %v7924, 4
      %v7927 = vshll.u32 %v7878, 16
      %v7929 = vrot.slane %v7927, 5
      %v7930 = vsel %vm452, %v7925, %v7929
      %v7932 = vshrl.u32 %v7879, 16
      %v7934 = vrot.slane %v7932, 4
      %v7935 = vshll.u32 %v7879, 16
      %v7937 = vrot.slane %v7935, 5
      %v7938 = vor.u32 %v7934, %v7937
      %v7939 = vrot.slane %v7938, 4
      %v7941 = vshll.u32 %v7880, 16
      %v7943 = vrot.slane %v7941, 5
      %v7944 = vsel %vm452, %v7939, %v7943
      %v7946 = vshrl.u32 %v7881, 16
      %v7948 = vrot.slane %v7946, 4
      %v7949 = vshll.u32 %v7881, 16
      %v7951 = vrot.slane %v7949, 5
      %v7952 = vor.u32 %v7948, %v7951
      %v7953 = vrot.slane %v7952, 4
      %v7955 = vshll.u32 %v7882, 16
      %v7957 = vrot.slane %v7955, 5
      %v7958 = vsel %vm452, %v7953, %v7957
      %v7960 = vshrl.u32 %v7883, 16
      %v7962 = vrot.slane %v7960, 4
      %v7963 = vshll.u32 %v7883, 16
      %v7965 = vrot.slane %v7963, 5
      %v7966 = vor.u32 %v7962, %v7965
      %v7967 = vrot.slane %v7966, 4
      %v7969 = vshll.u32 %v7884, 16
      %v7971 = vrot.slane %v7969, 5
      %v7972 = vsel %vm452, %v7967, %v7971
      %v7974 = vshrl.u32 %v7885, 16
      %v7976 = vrot.slane %v7974, 4
      %v7977 = vshll.u32 %v7885, 16
      %v7979 = vrot.slane %v7977, 5
      %v7980 = vor.u32 %v7976, %v7979
      %v7981 = vrot.slane %v7980, 4
      %v7983 = vshll.u32 %v7886, 16
      %v7985 = vrot.slane %v7983, 5
      %v7986 = vsel %vm452, %v7981, %v7985
      %v7988 = vshrl.u32 %v7887, 16
      %v7990 = vrot.slane %v7988, 4
      %v7991 = vshll.u32 %v7887, 16
      %v7993 = vrot.slane %v7991, 5
      %v7994 = vor.u32 %v7990, %v7993
      %v7995 = vrot.slane %v7994, 4
      %v7997 = vshll.u32 %v7888, 16
      %v7999 = vrot.slane %v7997, 5
      %v8000 = vsel %vm452, %v7995, %v7999
      %v8001 = vld [vmem:[%s7 + $0x380] sm:$0xff]
      %v8002 = vld [vmem:[%s7 + $0x388] sm:$0xff]
      %v8003 = vld [vmem:[%s7 + $0x390] sm:$0xff]
      %v8004 = vld [vmem:[%s7 + $0x398] sm:$0xff]
      %v8005 = vld [vmem:[%s7 + $0x3a0] sm:$0xff]
      %v8006 = vld [vmem:[%s7 + $0x3a8] sm:$0xff]
      %v8007 = vld [vmem:[%s7 + $0x3b0] sm:$0xff]
      %v8008 = vld [vmem:[%s7 + $0x3b8] sm:$0xff]
      %v8009 = vld [vmem:[%s7 + $0x3c0] sm:$0xff]
      %v8010 = vld [vmem:[%s7 + $0x3c8] sm:$0xff]
      %v8011 = vld [vmem:[%s7 + $0x3d0] sm:$0xff]
      %v8012 = vld [vmem:[%s7 + $0x3d8] sm:$0xff]
      %v8013 = vld [vmem:[%s7 + $0x3e0] sm:$0xff]
      %v8014 = vld [vmem:[%s7 + $0x3e8] sm:$0xff]
      %v8015 = vld [vmem:[%s7 + $0x3f0] sm:$0xff]
      %v8016 = vld [vmem:[%s7 + $0x3f8] sm:$0xff]
      %v8017 = vunpack.c.l.b16 %v7902
      %v8018 = vunpack.c.l.b16 %v7916
      %v8019 = vunpack.c.l.b16 %v7930
      %v8020 = vunpack.c.l.b16 %v7944
      %v8021 = vunpack.c.l.b16 %v7958
      %v8022 = vunpack.c.l.b16 %v7972
      %v8023 = vunpack.c.l.b16 %v7986
      %v8024 = vunpack.c.l.b16 %v8000
      %v8025 = vpack.c.b16 %v8018, %v8017
      %v8026 = vpack.c.b16 %v8020, %v8019
      %v8027 = vpack.c.b16 %v8022, %v8021
      %v8028 = vpack.c.b16 %v8024, %v8023
      %v8049 = vunpack.c.l.b16 %v8001
      %v8050 = vunpack.c.h.b16 %v8001
      %v8051 = vunpack.c.l.b16 %v8002
      %v8052 = vunpack.c.h.b16 %v8002
      %v8053 = vunpack.c.l.b16 %v8003
      %v8054 = vunpack.c.h.b16 %v8003
      %v8055 = vunpack.c.l.b16 %v8004
      %v8056 = vunpack.c.h.b16 %v8004
      %v8057 = vunpack.c.l.b16 %v8005
      %v8058 = vunpack.c.h.b16 %v8005
      %v8059 = vunpack.c.l.b16 %v8006
      %v8060 = vunpack.c.h.b16 %v8006
      %v8061 = vunpack.c.l.b16 %v8007
      %v8062 = vunpack.c.h.b16 %v8007
      %v8063 = vunpack.c.l.b16 %v8008
      %v8064 = vunpack.c.h.b16 %v8008
      %v8065 = vunpack.c.l.b16 %v8009
      %v8066 = vunpack.c.h.b16 %v8009
      %v8067 = vunpack.c.l.b16 %v8010
      %v8068 = vunpack.c.h.b16 %v8010
      %v8069 = vunpack.c.l.b16 %v8011
      %v8070 = vunpack.c.h.b16 %v8011
      %v8071 = vunpack.c.l.b16 %v8012
      %v8072 = vunpack.c.h.b16 %v8012
      %v8073 = vunpack.c.l.b16 %v8013
      %v8074 = vunpack.c.h.b16 %v8013
      %v8075 = vunpack.c.l.b16 %v8014
      %v8076 = vunpack.c.h.b16 %v8014
      %v8077 = vunpack.c.l.b16 %v8015
      %v8078 = vunpack.c.h.b16 %v8015
      %v8079 = vunpack.c.l.b16 %v8016
      %v8080 = vunpack.c.h.b16 %v8016
      %v8081 = vpack.c.b16 %v8051, %v8049
      %v8082 = vpack.c.b16 %v8052, %v8050
      %v8083 = vpack.c.b16 %v8055, %v8053
      %v8084 = vpack.c.b16 %v8056, %v8054
      %v8085 = vpack.c.b16 %v8059, %v8057
      %v8086 = vpack.c.b16 %v8060, %v8058
      %v8087 = vpack.c.b16 %v8063, %v8061
      %v8088 = vpack.c.b16 %v8064, %v8062
      %v8089 = vpack.c.b16 %v8067, %v8065
      %v8090 = vpack.c.b16 %v8068, %v8066
      %v8091 = vpack.c.b16 %v8071, %v8069
      %v8092 = vpack.c.b16 %v8072, %v8070
      %v8093 = vpack.c.b16 %v8075, %v8073
      %v8094 = vpack.c.b16 %v8076, %v8074
      %v8095 = vpack.c.b16 %v8079, %v8077
      %v8096 = vpack.c.b16 %v8080, %v8078
      %8113 = vmatprep.subr.bf16.mxu0 %v8082
      %8114 = vmatpush1.bf16.msra.mxu0 %v8081
      %8115 = vmatprep.subr.bf16.mxu0 %v8084
      %8116 = vmatpush1.bf16.msra.mxu0 %v8083
      %8117 = vmatprep.subr.bf16.mxu0 %v8086
      %8118 = vmatpush1.bf16.msra.mxu0 %v8085
      %8119 = vmatprep.subr.bf16.mxu0 %v8088
      %8120 = vmatpush1.bf16.msra.mxu0 %v8087
      %8121 = vmatprep.subr.bf16.mxu0 %v8090
      %8122 = vmatpush1.bf16.msra.mxu0 %v8089
      %8123 = vmatprep.subr.bf16.mxu0 %v8092
      %8124 = vmatpush1.bf16.msra.mxu0 %v8091
      %8125 = vmatprep.subr.bf16.mxu0 %v8094
      %8126 = vmatpush1.bf16.msra.mxu0 %v8093
      %8127 = vmatprep.subr.bf16.mxu0 %v8096
      %8128 = vmatpush1.bf16.msra.mxu0 %v8095
      %8129 = vmatprep.subr.bf16.mxu0 0
      %8130 = vmatpush1.bf16.msra.mxu0 0
      %8131 = vmatprep.subr.bf16.mxu0 0
      %8132 = vmatpush1.bf16.msra.mxu0 0
      %8133 = vmatprep.subr.bf16.mxu0 0
      %8134 = vmatpush1.bf16.msra.mxu0 0
      %8135 = vmatprep.subr.bf16.mxu0 0
      %8136 = vmatpush1.bf16.msra.mxu0 0
      %8137 = vmatprep.subr.bf16.mxu0 0
      %8138 = vmatpush1.bf16.msra.mxu0 0
      %8139 = vmatprep.subr.bf16.mxu0 0
      %8140 = vmatpush1.bf16.msra.mxu0 0
      %8141 = vmatprep.subr.bf16.mxu0 0
      %8142 = vmatpush1.bf16.msra.mxu0 0
      %8143 = vmatprep.subr.bf16.mxu0 0
      %8144 = vmatpush1.bf16.msra.mxu0 0
      %8145 = vmatprep.mubr.bf16.mxu0 0
      %8146 = vmatmul.mubr.bf16.gmra.mrb[0].mxu0 %v8025
      %v8147 = vpop.f32.mrb[0].mxu0
      %v8148 = vadd.f32 0.0, %v8147
      %v8149 = vpop.f32.mrb[0].mxu0
      %v8150 = vadd.f32 0.0, %v8149
      %v8151 = vpop.f32.mrb[0].mxu0
      %v8152 = vadd.f32 0.0, %v8151
      %v8153 = vpop.f32.mrb[0].mxu0
      %v8154 = vadd.f32 0.0, %v8153
      %8155 = vmatprep.mubr.bf16.mxu0 0
      %8156 = vmatmul.mubr.bf16.gmra.mrb[0].mxu0 %v8026
      %v8157 = vpop.f32.mrb[0].mxu0
      %v8158 = vadd.f32 0.0, %v8157
      %v8159 = vpop.f32.mrb[0].mxu0
      %v8160 = vadd.f32 0.0, %v8159
      %v8161 = vpop.f32.mrb[0].mxu0
      %v8162 = vadd.f32 0.0, %v8161
      %v8163 = vpop.f32.mrb[0].mxu0
      %v8164 = vadd.f32 0.0, %v8163
      %8165 = vmatprep.mubr.bf16.mxu0 0
      %8166 = vmatmul.mubr.bf16.gmra.mrb[0].mxu0 %v8027
      %v8167 = vpop.f32.mrb[0].mxu0
      %v8168 = vadd.f32 0.0, %v8167
      %v8169 = vpop.f32.mrb[0].mxu0
      %v8170 = vadd.f32 0.0, %v8169
      %v8171 = vpop.f32.mrb[0].mxu0
      %v8172 = vadd.f32 0.0, %v8171
      %v8173 = vpop.f32.mrb[0].mxu0
      %v8174 = vadd.f32 0.0, %v8173
      %8175 = vmatprep.mubr.bf16.mxu0 0
      %8176 = vmatmul.mubr.bf16.gmra.mrb[0].mxu0 %v8028
      %v8177 = vpop.f32.mrb[0].mxu0
      %v8178 = vadd.f32 0.0, %v8177
      %v8179 = vpop.f32.mrb[0].mxu0
      %v8180 = vadd.f32 0.0, %v8179
      %v8181 = vpop.f32.mrb[0].mxu0
      %v8182 = vadd.f32 0.0, %v8181
      %v8183 = vpop.f32.mrb[0].mxu0
      %v8184 = vadd.f32 0.0, %v8183
      %8185 = vdwg.mxu0
      %v8186 = vadd.f32 %v7857, %v8148
      %v8187 = vadd.f32 %v7858, %v8150
      %v8188 = vadd.f32 %v7859, %v8152
      %v8189 = vadd.f32 %v7860, %v8154
      %v8190 = vadd.f32 %v7861, %v8158
      %v8191 = vadd.f32 %v7862, %v8160
      %v8192 = vadd.f32 %v7863, %v8162
      %v8193 = vadd.f32 %v7864, %v8164
      %v8194 = vadd.f32 %v7865, %v8168
      %v8195 = vadd.f32 %v7866, %v8170
      %v8196 = vadd.f32 %v7867, %v8172
      %v8197 = vadd.f32 %v7868, %v8174
      %v8198 = vadd.f32 %v7869, %v8178
      %v8199 = vadd.f32 %v7870, %v8180
      %v8200 = vadd.f32 %v7871, %v8182
      %v8201 = vadd.f32 %v7872, %v8184
      %v8202 = vld [vmem:[%s3097] sm:$0xe]
      %v8203 = vld [vmem:[%s3097 + $0x8] sm:$0xe]
      %v8204 = vld [vmem:[%s3097 + $0x10] sm:$0xe]
      %v8205 = vld [vmem:[%s3097 + $0x18] sm:$0xe]
      %v8206 = vld [vmem:[%s3097 + $0x20] sm:$0xe]
      %v8207 = vld [vmem:[%s3097 + $0x28] sm:$0xe]
      %v8208 = vld [vmem:[%s3097 + $0x30] sm:$0xe]
      %v8209 = vld [vmem:[%s3097 + $0x38] sm:$0xe]
      %v8226 = vrot.slane %v8202, 5
      %v8227 = vrot.slane %v8226, 4
      %v8228 = vrot.slane %v7874, 5
      %v8229 = vsel %vm2252, %v8227, %v8228
      %v8230 = vrot.slane %v8203, 5
      %v8231 = vrot.slane %v8230, 4
      %v8232 = vrot.slane %v7876, 5
      %v8233 = vsel %vm2252, %v8231, %v8232
      %v8234 = vrot.slane %v8204, 5
      %v8235 = vrot.slane %v8234, 4
      %v8236 = vrot.slane %v7878, 5
      %v8237 = vsel %vm2252, %v8235, %v8236
      %v8238 = vrot.slane %v8205, 5
      %v8239 = vrot.slane %v8238, 4
      %v8240 = vrot.slane %v7880, 5
      %v8241 = vsel %vm2252, %v8239, %v8240
      %v8242 = vrot.slane %v8206, 5
      %v8243 = vrot.slane %v8242, 4
      %v8244 = vrot.slane %v7882, 5
      %v8245 = vsel %vm2252, %v8243, %v8244
      %v8246 = vrot.slane %v8207, 5
      %v8247 = vrot.slane %v8246, 4
      %v8248 = vrot.slane %v7884, 5
      %v8249 = vsel %vm2252, %v8247, %v8248
      %v8250 = vrot.slane %v8208, 5
      %v8251 = vrot.slane %v8250, 4
      %v8252 = vrot.slane %v7886, 5
      %v8253 = vsel %vm2252, %v8251, %v8252
      %v8254 = vrot.slane %v8209, 5
      %v8255 = vrot.slane %v8254, 4
      %v8256 = vrot.slane %v7888, 5
      %v8257 = vsel %vm2252, %v8255, %v8256
      %v8258 = vld [vmem:[%s7 + $0x400] sm:$0xff]
      %v8259 = vld [vmem:[%s7 + $0x408] sm:$0xff]
      %v8260 = vld [vmem:[%s7 + $0x410] sm:$0xff]
      %v8261 = vld [vmem:[%s7 + $0x418] sm:$0xff]
      %v8262 = vld [vmem:[%s7 + $0x420] sm:$0xff]
      %v8263 = vld [vmem:[%s7 + $0x428] sm:$0xff]
      %v8264 = vld [vmem:[%s7 + $0x430] sm:$0xff]
      %v8265 = vld [vmem:[%s7 + $0x438] sm:$0xff]
      %v8266 = vld [vmem:[%s7 + $0x440] sm:$0xff]
      %v8267 = vld [vmem:[%s7 + $0x448] sm:$0xff]
      %v8268 = vld [vmem:[%s7 + $0x450] sm:$0xff]
      %v8269 = vld [vmem:[%s7 + $0x458] sm:$0xff]
      %v8270 = vld [vmem:[%s7 + $0x460] sm:$0xff]
      %v8271 = vld [vmem:[%s7 + $0x468] sm:$0xff]
      %v8272 = vld [vmem:[%s7 + $0x470] sm:$0xff]
      %v8273 = vld [vmem:[%s7 + $0x478] sm:$0xff]
      %v8274 = vunpack.c.l.b16 %v8229
      %v8275 = vunpack.c.l.b16 %v8233
      %v8276 = vunpack.c.l.b16 %v8237
      %v8277 = vunpack.c.l.b16 %v8241
      %v8278 = vunpack.c.l.b16 %v8245
      %v8279 = vunpack.c.l.b16 %v8249
      %v8280 = vunpack.c.l.b16 %v8253
      %v8281 = vunpack.c.l.b16 %v8257
      %v8282 = vpack.c.b16 %v8275, %v8274
      %v8283 = vpack.c.b16 %v8277, %v8276
      %v8284 = vpack.c.b16 %v8279, %v8278
      %v8285 = vpack.c.b16 %v8281, %v8280
      %v8306 = vunpack.c.l.b16 %v8258
      %v8307 = vunpack.c.h.b16 %v8258
      %v8308 = vunpack.c.l.b16 %v8259
      %v8309 = vunpack.c.h.b16 %v8259
      %v8310 = vunpack.c.l.b16 %v8260
      %v8311 = vunpack.c.h.b16 %v8260
      %v8312 = vunpack.c.l.b16 %v8261
      %v8313 = vunpack.c.h.b16 %v8261
      %v8314 = vunpack.c.l.b16 %v8262
      %v8315 = vunpack.c.h.b16 %v8262
      %v8316 = vunpack.c.l.b16 %v8263
      %v8317 = vunpack.c.h.b16 %v8263
      %v8318 = vunpack.c.l.b16 %v8264
      %v8319 = vunpack.c.h.b16 %v8264
      %v8320 = vunpack.c.l.b16 %v8265
      %v8321 = vunpack.c.h.b16 %v8265
      %v8322 = vunpack.c.l.b16 %v8266
      %v8323 = vunpack.c.h.b16 %v8266
      %v8324 = vunpack.c.l.b16 %v8267
      %v8325 = vunpack.c.h.b16 %v8267
      %v8326 = vunpack.c.l.b16 %v8268
      %v8327 = vunpack.c.h.b16 %v8268
      %v8328 = vunpack.c.l.b16 %v8269
      %v8329 = vunpack.c.h.b16 %v8269
      %v8330 = vunpack.c.l.b16 %v8270
      %v8331 = vunpack.c.h.b16 %v8270
      %v8332 = vunpack.c.l.b16 %v8271
      %v8333 = vunpack.c.h.b16 %v8271
      %v8334 = vunpack.c.l.b16 %v8272
      %v8335 = vunpack.c.h.b16 %v8272
      %v8336 = vunpack.c.l.b16 %v8273
      %v8337 = vunpack.c.h.b16 %v8273
      %v8338 = vpack.c.b16 %v8308, %v8306
      %v8339 = vpack.c.b16 %v8309, %v8307
      %v8340 = vpack.c.b16 %v8312, %v8310
      %v8341 = vpack.c.b16 %v8313, %v8311
      %v8342 = vpack.c.b16 %v8316, %v8314
      %v8343 = vpack.c.b16 %v8317, %v8315
      %v8344 = vpack.c.b16 %v8320, %v8318
      %v8345 = vpack.c.b16 %v8321, %v8319
      %v8346 = vpack.c.b16 %v8324, %v8322
      %v8347 = vpack.c.b16 %v8325, %v8323
      %v8348 = vpack.c.b16 %v8328, %v8326
      %v8349 = vpack.c.b16 %v8329, %v8327
      %v8350 = vpack.c.b16 %v8332, %v8330
      %v8351 = vpack.c.b16 %v8333, %v8331
      %v8352 = vpack.c.b16 %v8336, %v8334
      %v8353 = vpack.c.b16 %v8337, %v8335
      %8370 = vmatprep.subr.bf16.mxu0 %v8339
      %8371 = vmatpush1.bf16.msra.mxu0 %v8338
      %8372 = vmatprep.subr.bf16.mxu0 %v8341
      %8373 = vmatpush1.bf16.msra.mxu0 %v8340
      %8374 = vmatprep.subr.bf16.mxu0 %v8343
      %8375 = vmatpush1.bf16.msra.mxu0 %v8342
      %8376 = vmatprep.subr.bf16.mxu0 %v8345
      %8377 = vmatpush1.bf16.msra.mxu0 %v8344
      %8378 = vmatprep.subr.bf16.mxu0 %v8347
      %8379 = vmatpush1.bf16.msra.mxu0 %v8346
      %8380 = vmatprep.subr.bf16.mxu0 %v8349
      %8381 = vmatpush1.bf16.msra.mxu0 %v8348
      %8382 = vmatprep.subr.bf16.mxu0 %v8351
      %8383 = vmatpush1.bf16.msra.mxu0 %v8350
      %8384 = vmatprep.subr.bf16.mxu0 %v8353
      %8385 = vmatpush1.bf16.msra.mxu0 %v8352
      %8386 = vmatprep.subr.bf16.mxu0 0
      %8387 = vmatpush1.bf16.msra.mxu0 0
      %8388 = vmatprep.subr.bf16.mxu0 0
      %8389 = vmatpush1.bf16.msra.mxu0 0
      %8390 = vmatprep.subr.bf16.mxu0 0
      %8391 = vmatpush1.bf16.msra.mxu0 0
      %8392 = vmatprep.subr.bf16.mxu0 0
      %8393 = vmatpush1.bf16.msra.mxu0 0
      %8394 = vmatprep.subr.bf16.mxu0 0
      %8395 = vmatpush1.bf16.msra.mxu0 0
      %8396 = vmatprep.subr.bf16.mxu0 0
      %8397 = vmatpush1.bf16.msra.mxu0 0
      %8398 = vmatprep.subr.bf16.mxu0 0
      %8399 = vmatpush1.bf16.msra.mxu0 0
      %8400 = vmatprep.subr.bf16.mxu0 0
      %8401 = vmatpush1.bf16.msra.mxu0 0
      %8402 = vmatprep.mubr.bf16.mxu0 0
      %8403 = vmatmul.mubr.bf16.gmra.mrb[0].mxu0 %v8282
      %v8404 = vpop.f32.mrb[0].mxu0
      %v8405 = vadd.f32 0.0, %v8404
      %v8406 = vpop.f32.mrb[0].mxu0
      %v8407 = vadd.f32 0.0, %v8406
      %v8408 = vpop.f32.mrb[0].mxu0
      %v8409 = vadd.f32 0.0, %v8408
      %v8410 = vpop.f32.mrb[0].mxu0
      %v8411 = vadd.f32 0.0, %v8410
      %8412 = vmatprep.mubr.bf16.mxu0 0
      %8413 = vmatmul.mubr.bf16.gmra.mrb[0].mxu0 %v8283
      %v8414 = vpop.f32.mrb[0].mxu0
      %v8415 = vadd.f32 0.0, %v8414
      %v8416 = vpop.f32.mrb[0].mxu0
      %v8417 = vadd.f32 0.0, %v8416
      %v8418 = vpop.f32.mrb[0].mxu0
      %v8419 = vadd.f32 0.0, %v8418
      %v8420 = vpop.f32.mrb[0].mxu0
      %v8421 = vadd.f32 0.0, %v8420
      %8422 = vmatprep.mubr.bf16.mxu0 0
      %8423 = vmatmul.mubr.bf16.gmra.mrb[0].mxu0 %v8284
      %v8424 = vpop.f32.mrb[0].mxu0
      %v8425 = vadd.f32 0.0, %v8424
      %v8426 = vpop.f32.mrb[0].mxu0
      %v8427 = vadd.f32 0.0, %v8426
      %v8428 = vpop.f32.mrb[0].mxu0
      %v8429 = vadd.f32 0.0, %v8428
      %v8430 = vpop.f32.mrb[0].mxu0
      %v8431 = vadd.f32 0.0, %v8430
      %8432 = vmatprep.mubr.bf16.mxu0 0
      %8433 = vmatmul.mubr.bf16.gmra.mrb[0].mxu0 %v8285
      %v8434 = vpop.f32.mrb[0].mxu0
      %v8435 = vadd.f32 0.0, %v8434
      %v8436 = vpop.f32.mrb[0].mxu0
      %v8437 = vadd.f32 0.0, %v8436
      %v8438 = vpop.f32.mrb[0].mxu0
      %v8439 = vadd.f32 0.0, %v8438
      %v8440 = vpop.f32.mrb[0].mxu0
      %v8441 = vadd.f32 0.0, %v8440
      %8442 = vdwg.mxu0
      %v8443 = vadd.f32 %v8186, %v8405
      %v8444 = vadd.f32 %v8187, %v8407
      %v8445 = vadd.f32 %v8188, %v8409
      %v8446 = vadd.f32 %v8189, %v8411
      %v8447 = vadd.f32 %v8190, %v8415
      %v8448 = vadd.f32 %v8191, %v8417
      %v8449 = vadd.f32 %v8192, %v8419
      %v8450 = vadd.f32 %v8193, %v8421
      %v8451 = vadd.f32 %v8194, %v8425
      %v8452 = vadd.f32 %v8195, %v8427
      %v8453 = vadd.f32 %v8196, %v8429
      %v8454 = vadd.f32 %v8197, %v8431
      %v8455 = vadd.f32 %v8198, %v8435
      %v8456 = vadd.f32 %v8199, %v8437
      %v8457 = vadd.f32 %v8200, %v8439
      %v8458 = vadd.f32 %v8201, %v8441
      %v8459 = vld [vmem:[%s8] sm:$0x3]
      %v8461 = vlaneseq
      %v8462 = vshrl.u32 %v8461, 7
      %v8463 = vsub.s32 0, %v8462
      %v8464 = vrot.slane %v8459, %v8463
      %v8465 = vlaneseq
      %v8466 = vshrl.u32 %v8465, 7
      %v8467 = vsub.s32 1, %v8466
      %v8468 = vrot.slane %v8459, %v8467
      %v8471 = vadd.f32 %v8443, %v8464
      %v8472 = vadd.f32 %v8444, %v8468
      %v8473 = vadd.f32 %v8445, %v8464
      %v8474 = vadd.f32 %v8446, %v8468
      %v8475 = vadd.f32 %v8447, %v8464
      %v8476 = vadd.f32 %v8448, %v8468
      %v8477 = vadd.f32 %v8449, %v8464
      %v8478 = vadd.f32 %v8450, %v8468
      %v8479 = vadd.f32 %v8451, %v8464
      %v8480 = vadd.f32 %v8452, %v8468
      %v8481 = vadd.f32 %v8453, %v8464
      %v8482 = vadd.f32 %v8454, %v8468
      %v8483 = vadd.f32 %v8455, %v8464
      %v8484 = vadd.f32 %v8456, %v8468
      %v8485 = vadd.f32 %v8457, %v8464
      %v8486 = vadd.f32 %v8458, %v8468
      %vm8487 = vcmp.ge.f32.partialorder %v8471, 0.0
      %vm8488 = vcmp.ge.f32.partialorder %v8472, 0.0
      %vm8489 = vcmp.ge.f32.partialorder %v8473, 0.0
      %vm8490 = vcmp.ge.f32.partialorder %v8474, 0.0
      %vm8491 = vcmp.ge.f32.partialorder %v8475, 0.0
      %vm8492 = vcmp.ge.f32.partialorder %v8476, 0.0
      %vm8493 = vcmp.ge.f32.partialorder %v8477, 0.0
      %vm8494 = vcmp.ge.f32.partialorder %v8478, 0.0
      %vm8495 = vcmp.ge.f32.partialorder %v8479, 0.0
      %vm8496 = vcmp.ge.f32.partialorder %v8480, 0.0
      %vm8497 = vcmp.ge.f32.partialorder %v8481, 0.0
      %vm8498 = vcmp.ge.f32.partialorder %v8482, 0.0
      %vm8499 = vcmp.ge.f32.partialorder %v8483, 0.0
      %vm8500 = vcmp.ge.f32.partialorder %v8484, 0.0
      %vm8501 = vcmp.ge.f32.partialorder %v8485, 0.0
      %vm8502 = vcmp.ge.f32.partialorder %v8486, 0.0
      %v8503 = vmul.f32 %v8471, 0.05
      %v8504 = vmul.f32 %v8472, 0.05
      %v8505 = vmul.f32 %v8473, 0.05
      %v8506 = vmul.f32 %v8474, 0.05
      %v8507 = vmul.f32 %v8475, 0.05
      %v8508 = vmul.f32 %v8476, 0.05
      %v8509 = vmul.f32 %v8477, 0.05
      %v8510 = vmul.f32 %v8478, 0.05
      %v8511 = vmul.f32 %v8479, 0.05
      %v8512 = vmul.f32 %v8480, 0.05
      %v8513 = vmul.f32 %v8481, 0.05
      %v8514 = vmul.f32 %v8482, 0.05
      %v8515 = vmul.f32 %v8483, 0.05
      %v8516 = vmul.f32 %v8484, 0.05
      %v8517 = vmul.f32 %v8485, 0.05
      %v8518 = vmul.f32 %v8486, 0.05
      %v8519 = vsel %vm8487, %v8471, %v8503
      %v8520 = vsel %vm8488, %v8472, %v8504
      %v8521 = vsel %vm8489, %v8473, %v8505
      %v8522 = vsel %vm8490, %v8474, %v8506
      %v8523 = vsel %vm8491, %v8475, %v8507
      %v8524 = vsel %vm8492, %v8476, %v8508
      %v8525 = vsel %vm8493, %v8477, %v8509
      %v8526 = vsel %vm8494, %v8478, %v8510
      %v8527 = vsel %vm8495, %v8479, %v8511
      %v8528 = vsel %vm8496, %v8480, %v8512
      %v8529 = vsel %vm8497, %v8481, %v8513
      %v8530 = vsel %vm8498, %v8482, %v8514
      %v8531 = vsel %vm8499, %v8483, %v8515
      %v8532 = vsel %vm8500, %v8484, %v8516
      %v8533 = vsel %vm8501, %v8485, %v8517
      %v8534 = vsel %vm8502, %v8486, %v8518
      %v8535 = vpack.c.bf16 %v8521, %v8519
      %v8536 = vpack.c.bf16 %v8522, %v8520
      %v8537 = vpack.c.bf16 %v8525, %v8523
      %v8538 = vpack.c.bf16 %v8526, %v8524
      %v8539 = vpack.c.bf16 %v8529, %v8527
      %v8540 = vpack.c.bf16 %v8530, %v8528
      %v8541 = vpack.c.bf16 %v8533, %v8531
      %v8542 = vpack.c.bf16 %v8534, %v8532
      %v8551 = vunpack.c.l.b16 %v8535
      %v8552 = vunpack.c.l.b16 %v8536
      %v8553 = vunpack.c.h.b16 %v8535
      %v8554 = vunpack.c.h.b16 %v8536
      %v8555 = vunpack.c.l.b16 %v8537
      %v8556 = vunpack.c.l.b16 %v8538
      %v8557 = vunpack.c.h.b16 %v8537
      %v8558 = vunpack.c.h.b16 %v8538
      %v8559 = vunpack.c.l.b16 %v8539
      %v8560 = vunpack.c.l.b16 %v8540
      %v8561 = vunpack.c.h.b16 %v8539
      %v8562 = vunpack.c.h.b16 %v8540
      %v8563 = vunpack.c.l.b16 %v8541
      %v8564 = vunpack.c.l.b16 %v8542
      %v8565 = vunpack.c.h.b16 %v8541
      %v8566 = vunpack.c.h.b16 %v8542
      %v8567 = vpack.c.b16 %v8552, %v8551
      %v8568 = vpack.c.b16 %v8554, %v8553
      %v8569 = vpack.c.b16 %v8556, %v8555
      %v8570 = vpack.c.b16 %v8558, %v8557
      %v8571 = vpack.c.b16 %v8560, %v8559
      %v8572 = vpack.c.b16 %v8562, %v8561
      %v8573 = vpack.c.b16 %v8564, %v8563
      %v8574 = vpack.c.b16 %v8566, %v8565
      %v8576 = vshrl.u32 %v8567, 16
      %v8578 = vrot.slane %v8576, 7
      %v8579 = vshll.u32 %v8567, 16
      %v8581 = vor.u32 %v8578, %v8579
      %v8582 = vrot.slane %v8578, 4
      %v8584 = vshrl.u32 %v8568, 16
      %v8586 = vrot.slane %v8584, 7
      %v8587 = vshll.u32 %v8568, 16
      %v8589 = vor.u32 %v8586, %v8587
      %v8590 = vrot.slane %v8586, 4
      %v8592 = vshrl.u32 %v8569, 16
      %v8594 = vrot.slane %v8592, 7
      %v8595 = vshll.u32 %v8569, 16
      %v8597 = vor.u32 %v8594, %v8595
      %v8598 = vrot.slane %v8594, 4
      %v8600 = vshrl.u32 %v8570, 16
      %v8602 = vrot.slane %v8600, 7
      %v8603 = vshll.u32 %v8570, 16
      %v8605 = vor.u32 %v8602, %v8603
      %v8606 = vrot.slane %v8602, 4
      %v8608 = vshrl.u32 %v8571, 16
      %v8610 = vrot.slane %v8608, 7
      %v8611 = vshll.u32 %v8571, 16
      %v8613 = vor.u32 %v8610, %v8611
      %v8614 = vrot.slane %v8610, 4
      %v8616 = vshrl.u32 %v8572, 16
      %v8618 = vrot.slane %v8616, 7
      %v8619 = vshll.u32 %v8572, 16
      %v8621 = vor.u32 %v8618, %v8619
      %v8622 = vrot.slane %v8618, 4
      %v8624 = vshrl.u32 %v8573, 16
      %v8626 = vrot.slane %v8624, 7
      %v8627 = vshll.u32 %v8573, 16
      %v8629 = vor.u32 %v8626, %v8627
      %v8630 = vrot.slane %v8626, 4
      %v8632 = vshrl.u32 %v8574, 16
      %v8634 = vrot.slane %v8632, 7
      %v8635 = vshll.u32 %v8574, 16
      %v8637 = vor.u32 %v8634, %v8635
      %v8638 = vrot.slane %v8634, 4
      %s8655 = scalar_lea.vmem [#allocation3], 16
      %vm8656 = vcmask 1047556
      %vm8657 = vsmask.f32 7954
      %vm8658 = vmand %vm8656, %vm8657
      %vm8659 = vmor %vm8658, %vm1748
      %v8660 = vld [vmem:[%s8655] sm:$0xff]
      %v8661 = vsel %vm8659, %v8581, %v8660
      %8662 = vst [vmem:[%s8655] sm:$0xff] %v8661
      %vm8663 = vcmask 1044484
      %vm8664 = vsmask.f32 4352
      %vm8665 = vmand %vm8663, %vm8664
      %vm8666 = vmor %vm8665, %vm1754
      %v8667 = vld [vmem:[%s8655 + $0x8] sm:$0x11]
      %v8668 = vsel %vm8666, %v8582, %v8667
      %8669 = vst [vmem:[%s8655 + $0x8] sm:$0x11] %v8668
      %v8670 = vld [vmem:[%s8655 + $0x10] sm:$0xff]
      %v8671 = vsel %vm8659, %v8589, %v8670
      %8672 = vst [vmem:[%s8655 + $0x10] sm:$0xff] %v8671
      %v8673 = vld [vmem:[%s8655 + $0x18] sm:$0x11]
      %v8674 = vsel %vm8666, %v8590, %v8673
      %8675 = vst [vmem:[%s8655 + $0x18] sm:$0x11] %v8674
      %v8676 = vld [vmem:[%s8655 + $0x20] sm:$0xff]
      %v8677 = vsel %vm8659, %v8597, %v8676
      %8678 = vst [vmem:[%s8655 + $0x20] sm:$0xff] %v8677
      %v8679 = vld [vmem:[%s8655 + $0x28] sm:$0x11]
      %v8680 = vsel %vm8666, %v8598, %v8679
      %8681 = vst [vmem:[%s8655 + $0x28] sm:$0x11] %v8680
      %v8682 = vld [vmem:[%s8655 + $0x30] sm:$0xff]
      %v8683 = vsel %vm8659, %v8605, %v8682
      %8684 = vst [vmem:[%s8655 + $0x30] sm:$0xff] %v8683
      %v8685 = vld [vmem:[%s8655 + $0x38] sm:$0x11]
      %v8686 = vsel %vm8666, %v8606, %v8685
      %8687 = vst [vmem:[%s8655 + $0x38] sm:$0x11] %v8686
      %v8688 = vld [vmem:[%s8655 + $0x40] sm:$0xff]
      %v8689 = vsel %vm8659, %v8613, %v8688
      %8690 = vst [vmem:[%s8655 + $0x40] sm:$0xff] %v8689
      %v8691 = vld [vmem:[%s8655 + $0x48] sm:$0x11]
      %v8692 = vsel %vm8666, %v8614, %v8691
      %8693 = vst [vmem:[%s8655 + $0x48] sm:$0x11] %v8692
      %v8694 = vld [vmem:[%s8655 + $0x50] sm:$0xff]
      %v8695 = vsel %vm8659, %v8621, %v8694
      %8696 = vst [vmem:[%s8655 + $0x50] sm:$0xff] %v8695
      %v8697 = vld [vmem:[%s8655 + $0x58] sm:$0x11]
      %v8698 = vsel %vm8666, %v8622, %v8697
      %8699 = vst [vmem:[%s8655 + $0x58] sm:$0x11] %v8698
      %v8700 = vld [vmem:[%s8655 + $0x60] sm:$0xff]
      %v8701 = vsel %vm8659, %v8629, %v8700
      %8702 = vst [vmem:[%s8655 + $0x60] sm:$0xff] %v8701
      %v8703 = vld [vmem:[%s8655 + $0x68] sm:$0x11]
      %v8704 = vsel %vm8666, %v8630, %v8703
      %8705 = vst [vmem:[%s8655 + $0x68] sm:$0x11] %v8704
      %v8706 = vld [vmem:[%s8655 + $0x70] sm:$0xff]
      %v8707 = vsel %vm8659, %v8637, %v8706
      %8708 = vst [vmem:[%s8655 + $0x70] sm:$0xff] %v8707
      %v8709 = vld [vmem:[%s8655 + $0x78] sm:$0x11]
      %v8710 = vsel %vm8666, %v8638, %v8709
      %8711 = vst [vmem:[%s8655 + $0x78] sm:$0x11] %v8710
      %v8712 = vld [vmem:[#allocation3] sm:$0xff]
      %v8713 = vld [vmem:[#allocation3 + $0x10] sm:$0xff]
      %v8714 = vld [vmem:[#allocation3 + $0x20] sm:$0xff]
      %v8715 = vld [vmem:[#allocation3 + $0x30] sm:$0xff]
      %v8716 = vld [vmem:[#allocation3 + $0x40] sm:$0xff]
      %v8717 = vld [vmem:[#allocation3 + $0x50] sm:$0xff]
      %v8718 = vld [vmem:[#allocation3 + $0x60] sm:$0xff]
      %v8719 = vld [vmem:[#allocation3 + $0x70] sm:$0xff]
      %v8720 = vld [vmem:[%s9] sm:$0xf]
      %v8721 = vld [vmem:[%s9 + $0x4] sm:$0xf]
      %v8722 = vld [vmem:[%s9 + $0x8] sm:$0xf]
      %v8723 = vld [vmem:[%s9 + $0xc] sm:$0xf]
      %v8724 = vld [vmem:[%s9 + $0x10] sm:$0xf]
      %v8725 = vld [vmem:[%s9 + $0x14] sm:$0xf]
      %v8726 = vld [vmem:[%s9 + $0x18] sm:$0xf]
      %v8727 = vld [vmem:[%s9 + $0x1c] sm:$0xf]
      %v8728 = vld [vmem:[%s9 + $0x20] sm:$0xf]
      %v8729 = vld [vmem:[%s9 + $0x24] sm:$0xf]
      %v8730 = vld [vmem:[%s9 + $0x28] sm:$0xf]
      %v8731 = vld [vmem:[%s9 + $0x2c] sm:$0xf]
      %v8732 = vld [vmem:[%s9 + $0x30] sm:$0xf]
      %v8733 = vld [vmem:[%s9 + $0x34] sm:$0xf]
      %v8734 = vld [vmem:[%s9 + $0x38] sm:$0xf]
      %v8735 = vld [vmem:[%s9 + $0x3c] sm:$0xf]
      %v8736 = vld [vmem:[%s9 + $0x40] sm:$0xf]
      %v8737 = vld [vmem:[%s9 + $0x44] sm:$0xf]
      %v8738 = vld [vmem:[%s9 + $0x48] sm:$0xf]
      %v8739 = vld [vmem:[%s9 + $0x4c] sm:$0xf]
      %v8740 = vld [vmem:[%s9 + $0x50] sm:$0xf]
      %v8741 = vld [vmem:[%s9 + $0x54] sm:$0xf]
      %v8742 = vld [vmem:[%s9 + $0x58] sm:$0xf]
      %v8743 = vld [vmem:[%s9 + $0x5c] sm:$0xf]
      %v8744 = vld [vmem:[%s9 + $0x60] sm:$0xf]
      %v8745 = vld [vmem:[%s9 + $0x64] sm:$0xf]
      %v8746 = vld [vmem:[%s9 + $0x68] sm:$0xf]
      %v8747 = vld [vmem:[%s9 + $0x6c] sm:$0xf]
      %v8748 = vld [vmem:[%s9 + $0x70] sm:$0xf]
      %v8749 = vld [vmem:[%s9 + $0x74] sm:$0xf]
      %v8750 = vld [vmem:[%s9 + $0x78] sm:$0xf]
      %v8751 = vld [vmem:[%s9 + $0x7c] sm:$0xf]
      %v8752 = vld [vmem:[#allocation3 + $0x8] sm:$0x11]
      %v8753 = vld [vmem:[#allocation3 + $0x18] sm:$0x11]
      %v8754 = vld [vmem:[#allocation3 + $0x28] sm:$0x11]
      %v8755 = vld [vmem:[#allocation3 + $0x38] sm:$0x11]
      %v8756 = vld [vmem:[#allocation3 + $0x48] sm:$0x11]
      %v8757 = vld [vmem:[#allocation3 + $0x58] sm:$0x11]
      %v8758 = vld [vmem:[#allocation3 + $0x68] sm:$0x11]
      %v8759 = vld [vmem:[#allocation3 + $0x78] sm:$0x11]
      %v8761 = vshrl.u32 %v8712, 16
      %v8763 = vrot.slane %v8761, 4
      %v8764 = vshll.u32 %v8712, 16
      %v8766 = vrot.slane %v8764, 5
      %v8767 = vor.u32 %v8763, %v8766
      %v8768 = vrot.slane %v8767, 4
      %v8770 = vshll.u32 %v8752, 16
      %v8772 = vrot.slane %v8770, 5
      %v8773 = vsel %vm452, %v8768, %v8772
      %v8775 = vshrl.u32 %v8713, 16
      %v8777 = vrot.slane %v8775, 4
      %v8778 = vshll.u32 %v8713, 16
      %v8780 = vrot.slane %v8778, 5
      %v8781 = vor.u32 %v8777, %v8780
      %v8782 = vrot.slane %v8781, 4
      %v8784 = vshll.u32 %v8753, 16
      %v8786 = vrot.slane %v8784, 5
      %v8787 = vsel %vm452, %v8782, %v8786
      %v8789 = vshrl.u32 %v8714, 16
      %v8791 = vrot.slane %v8789, 4
      %v8792 = vshll.u32 %v8714, 16
      %v8794 = vrot.slane %v8792, 5
      %v8795 = vor.u32 %v8791, %v8794
      %v8796 = vrot.slane %v8795, 4
      %v8798 = vshll.u32 %v8754, 16
      %v8800 = vrot.slane %v8798, 5
      %v8801 = vsel %vm452, %v8796, %v8800
      %v8803 = vshrl.u32 %v8715, 16
      %v8805 = vrot.slane %v8803, 4
      %v8806 = vshll.u32 %v8715, 16
      %v8808 = vrot.slane %v8806, 5
      %v8809 = vor.u32 %v8805, %v8808
      %v8810 = vrot.slane %v8809, 4
      %v8812 = vshll.u32 %v8755, 16
      %v8814 = vrot.slane %v8812, 5
      %v8815 = vsel %vm452, %v8810, %v8814
      %v8817 = vshrl.u32 %v8716, 16
      %v8819 = vrot.slane %v8817, 4
      %v8820 = vshll.u32 %v8716, 16
      %v8822 = vrot.slane %v8820, 5
      %v8823 = vor.u32 %v8819, %v8822
      %v8824 = vrot.slane %v8823, 4
      %v8826 = vshll.u32 %v8756, 16
      %v8828 = vrot.slane %v8826, 5
      %v8829 = vsel %vm452, %v8824, %v8828
      %v8831 = vshrl.u32 %v8717, 16
      %v8833 = vrot.slane %v8831, 4
      %v8834 = vshll.u32 %v8717, 16
      %v8836 = vrot.slane %v8834, 5
      %v8837 = vor.u32 %v8833, %v8836
      %v8838 = vrot.slane %v8837, 4
      %v8840 = vshll.u32 %v8757, 16
      %v8842 = vrot.slane %v8840, 5
      %v8843 = vsel %vm452, %v8838, %v8842
      %v8845 = vshrl.u32 %v8718, 16
      %v8847 = vrot.slane %v8845, 4
      %v8848 = vshll.u32 %v8718, 16
      %v8850 = vrot.slane %v8848, 5
      %v8851 = vor.u32 %v8847, %v8850
      %v8852 = vrot.slane %v8851, 4
      %v8854 = vshll.u32 %v8758, 16
      %v8856 = vrot.slane %v8854, 5
      %v8857 = vsel %vm452, %v8852, %v8856
      %v8859 = vshrl.u32 %v8719, 16
      %v8861 = vrot.slane %v8859, 4
      %v8862 = vshll.u32 %v8719, 16
      %v8864 = vrot.slane %v8862, 5
      %v8865 = vor.u32 %v8861, %v8864
      %v8866 = vrot.slane %v8865, 4
      %v8868 = vshll.u32 %v8759, 16
      %v8870 = vrot.slane %v8868, 5
      %v8871 = vsel %vm452, %v8866, %v8870
      %v8872 = vld [vmem:[%s9 + $0x80] sm:$0xf]
      %v8873 = vld [vmem:[%s9 + $0x84] sm:$0xf]
      %v8874 = vld [vmem:[%s9 + $0x88] sm:$0xf]
      %v8875 = vld [vmem:[%s9 + $0x8c] sm:$0xf]
      %v8876 = vld [vmem:[%s9 + $0x90] sm:$0xf]
      %v8877 = vld [vmem:[%s9 + $0x94] sm:$0xf]
      %v8878 = vld [vmem:[%s9 + $0x98] sm:$0xf]
      %v8879 = vld [vmem:[%s9 + $0x9c] sm:$0xf]
      %v8880 = vld [vmem:[%s9 + $0xa0] sm:$0xf]
      %v8881 = vld [vmem:[%s9 + $0xa4] sm:$0xf]
      %v8882 = vld [vmem:[%s9 + $0xa8] sm:$0xf]
      %v8883 = vld [vmem:[%s9 + $0xac] sm:$0xf]
      %v8884 = vld [vmem:[%s9 + $0xb0] sm:$0xf]
      %v8885 = vld [vmem:[%s9 + $0xb4] sm:$0xf]
      %v8886 = vld [vmem:[%s9 + $0xb8] sm:$0xf]
      %v8887 = vld [vmem:[%s9 + $0xbc] sm:$0xf]
      %v8888 = vld [vmem:[%s9 + $0xc0] sm:$0xf]
      %v8889 = vld [vmem:[%s9 + $0xc4] sm:$0xf]
      %v8890 = vld [vmem:[%s9 + $0xc8] sm:$0xf]
      %v8891 = vld [vmem:[%s9 + $0xcc] sm:$0xf]
      %v8892 = vld [vmem:[%s9 + $0xd0] sm:$0xf]
      %v8893 = vld [vmem:[%s9 + $0xd4] sm:$0xf]
      %v8894 = vld [vmem:[%s9 + $0xd8] sm:$0xf]
      %v8895 = vld [vmem:[%s9 + $0xdc] sm:$0xf]
      %v8896 = vld [vmem:[%s9 + $0xe0] sm:$0xf]
      %v8897 = vld [vmem:[%s9 + $0xe4] sm:$0xf]
      %v8898 = vld [vmem:[%s9 + $0xe8] sm:$0xf]
      %v8899 = vld [vmem:[%s9 + $0xec] sm:$0xf]
      %v8900 = vld [vmem:[%s9 + $0xf0] sm:$0xf]
      %v8901 = vld [vmem:[%s9 + $0xf4] sm:$0xf]
      %v8902 = vld [vmem:[%s9 + $0xf8] sm:$0xf]
      %v8903 = vld [vmem:[%s9 + $0xfc] sm:$0xf]
      %v8904 = vunpack.c.l.b16 %v8773
      %v8905 = vunpack.c.h.b16 %v8773
      %v8906 = vunpack.c.l.b16 %v8787
      %v8907 = vunpack.c.h.b16 %v8787
      %v8908 = vunpack.c.l.b16 %v8801
      %v8909 = vunpack.c.h.b16 %v8801
      %v8910 = vunpack.c.l.b16 %v8815
      %v8911 = vunpack.c.h.b16 %v8815
      %v8912 = vunpack.c.l.b16 %v8829
      %v8913 = vunpack.c.h.b16 %v8829
      %v8914 = vunpack.c.l.b16 %v8843
      %v8915 = vunpack.c.h.b16 %v8843
      %v8916 = vunpack.c.l.b16 %v8857
      %v8917 = vunpack.c.h.b16 %v8857
      %v8918 = vunpack.c.l.b16 %v8871
      %v8919 = vunpack.c.h.b16 %v8871
      %v8920 = vpack.c.b16 %v8906, %v8904
      %v8921 = vpack.c.b16 %v8907, %v8905
      %v8922 = vpack.c.b16 %v8910, %v8908
      %v8923 = vpack.c.b16 %v8911, %v8909
      %v8924 = vpack.c.b16 %v8914, %v8912
      %v8925 = vpack.c.b16 %v8915, %v8913
      %v8926 = vpack.c.b16 %v8918, %v8916
      %v8927 = vpack.c.b16 %v8919, %v8917
      %v8968 = vunpack.c.l.b16 %v8872
      %v8969 = vunpack.c.l.b16 %v8873
      %v8970 = vunpack.c.l.b16 %v8874
      %v8971 = vunpack.c.l.b16 %v8875
      %v8972 = vunpack.c.l.b16 %v8876
      %v8973 = vunpack.c.l.b16 %v8877
      %v8974 = vunpack.c.l.b16 %v8878
      %v8975 = vunpack.c.l.b16 %v8879
      %v8976 = vunpack.c.l.b16 %v8880
      %v8977 = vunpack.c.l.b16 %v8881
      %v8978 = vunpack.c.l.b16 %v8882
      %v8979 = vunpack.c.l.b16 %v8883
      %v8980 = vunpack.c.l.b16 %v8884
      %v8981 = vunpack.c.l.b16 %v8885
      %v8982 = vunpack.c.l.b16 %v8886
      %v8983 = vunpack.c.l.b16 %v8887
      %v8984 = vunpack.c.l.b16 %v8888
      %v8985 = vunpack.c.l.b16 %v8889
      %v8986 = vunpack.c.l.b16 %v8890
      %v8987 = vunpack.c.l.b16 %v8891
      %v8988 = vunpack.c.l.b16 %v8892
      %v8989 = vunpack.c.l.b16 %v8893
      %v8990 = vunpack.c.l.b16 %v8894
      %v8991 = vunpack.c.l.b16 %v8895
      %v8992 = vunpack.c.l.b16 %v8896
      %v8993 = vunpack.c.l.b16 %v8897
      %v8994 = vunpack.c.l.b16 %v8898
      %v8995 = vunpack.c.l.b16 %v8899
      %v8996 = vunpack.c.l.b16 %v8900
      %v8997 = vunpack.c.l.b16 %v8901
      %v8998 = vunpack.c.l.b16 %v8902
      %v8999 = vunpack.c.l.b16 %v8903
      %v9000 = vpack.c.b16 %v8969, %v8968
      %v9001 = vpack.c.b16 %v8971, %v8970
      %v9002 = vpack.c.b16 %v8973, %v8972
      %v9003 = vpack.c.b16 %v8975, %v8974
      %v9004 = vpack.c.b16 %v8977, %v8976
      %v9005 = vpack.c.b16 %v8979, %v8978
      %v9006 = vpack.c.b16 %v8981, %v8980
      %v9007 = vpack.c.b16 %v8983, %v8982
      %v9008 = vpack.c.b16 %v8985, %v8984
      %v9009 = vpack.c.b16 %v8987, %v8986
      %v9010 = vpack.c.b16 %v8989, %v8988
      %v9011 = vpack.c.b16 %v8991, %v8990
      %v9012 = vpack.c.b16 %v8993, %v8992
      %v9013 = vpack.c.b16 %v8995, %v8994
      %v9014 = vpack.c.b16 %v8997, %v8996
      %v9015 = vpack.c.b16 %v8999, %v8998
      %9032 = vmatprep.subr.bf16.mxu0 0
      %9033 = vmatpush1.bf16.msra.mxu0 %v9000
      %9034 = vmatprep.subr.bf16.mxu0 0
      %9035 = vmatpush1.bf16.msra.mxu0 %v9001
      %9036 = vmatprep.subr.bf16.mxu0 0
      %9037 = vmatpush1.bf16.msra.mxu0 %v9002
      %9038 = vmatprep.subr.bf16.mxu0 0
      %9039 = vmatpush1.bf16.msra.mxu0 %v9003
      %9040 = vmatprep.subr.bf16.mxu0 0
      %9041 = vmatpush1.bf16.msra.mxu0 %v9004
      %9042 = vmatprep.subr.bf16.mxu0 0
      %9043 = vmatpush1.bf16.msra.mxu0 %v9005
      %9044 = vmatprep.subr.bf16.mxu0 0
      %9045 = vmatpush1.bf16.msra.mxu0 %v9006
      %9046 = vmatprep.subr.bf16.mxu0 0
      %9047 = vmatpush1.bf16.msra.mxu0 %v9007
      %9048 = vmatprep.subr.bf16.mxu0 0
      %9049 = vmatpush1.bf16.msra.mxu0 %v9008
      %9050 = vmatprep.subr.bf16.mxu0 0
      %9051 = vmatpush1.bf16.msra.mxu0 %v9009
      %9052 = vmatprep.subr.bf16.mxu0 0
      %9053 = vmatpush1.bf16.msra.mxu0 %v9010
      %9054 = vmatprep.subr.bf16.mxu0 0
      %9055 = vmatpush1.bf16.msra.mxu0 %v9011
      %9056 = vmatprep.subr.bf16.mxu0 0
      %9057 = vmatpush1.bf16.msra.mxu0 %v9012
      %9058 = vmatprep.subr.bf16.mxu0 0
      %9059 = vmatpush1.bf16.msra.mxu0 %v9013
      %9060 = vmatprep.subr.bf16.mxu0 0
      %9061 = vmatpush1.bf16.msra.mxu0 %v9014
      %9062 = vmatprep.subr.bf16.mxu0 0
      %9063 = vmatpush1.bf16.msra.mxu0 %v9015
      %9064 = vmatprep.mubr.bf16.mxu0 %v8921
      %9065 = vmatmul.mubr.bf16.gmra.mrb[0].mxu0 %v8920
      %v9066 = vpop.f32.mrb[0].mxu0
      %v9067 = vadd.f32 0.0, %v9066
      %v9068 = vpop.f32.mrb[0].mxu0
      %v9069 = vpop.f32.mrb[0].mxu0
      %v9070 = vadd.f32 0.0, %v9069
      %v9071 = vpop.f32.mrb[0].mxu0
      %9072 = vmatprep.mubr.bf16.mxu0 %v8923
      %9073 = vmatmul.mubr.bf16.gmra.mrb[0].mxu0 %v8922
      %v9074 = vpop.f32.mrb[0].mxu0
      %v9075 = vadd.f32 0.0, %v9074
      %v9076 = vpop.f32.mrb[0].mxu0
      %v9077 = vpop.f32.mrb[0].mxu0
      %v9078 = vadd.f32 0.0, %v9077
      %v9079 = vpop.f32.mrb[0].mxu0
      %9080 = vmatprep.mubr.bf16.mxu0 %v8925
      %9081 = vmatmul.mubr.bf16.gmra.mrb[0].mxu0 %v8924
      %v9082 = vpop.f32.mrb[0].mxu0
      %v9083 = vadd.f32 0.0, %v9082
      %v9084 = vpop.f32.mrb[0].mxu0
      %v9085 = vpop.f32.mrb[0].mxu0
      %v9086 = vadd.f32 0.0, %v9085
      %v9087 = vpop.f32.mrb[0].mxu0
      %9088 = vmatprep.mubr.bf16.mxu0 %v8927
      %9089 = vmatmul.mubr.bf16.gmra.mrb[0].mxu0 %v8926
      %v9090 = vpop.f32.mrb[0].mxu0
      %v9091 = vadd.f32 0.0, %v9090
      %v9092 = vpop.f32.mrb[0].mxu0
      %v9093 = vpop.f32.mrb[0].mxu0
      %v9094 = vadd.f32 0.0, %v9093
      %v9095 = vpop.f32.mrb[0].mxu0
      %9096 = vdwg.mxu0
      %v9105 = vunpack.c.l.b16 %v8712
      %v9106 = vunpack.c.h.b16 %v8712
      %v9107 = vunpack.c.l.b16 %v8713
      %v9108 = vunpack.c.h.b16 %v8713
      %v9109 = vunpack.c.l.b16 %v8714
      %v9110 = vunpack.c.h.b16 %v8714
      %v9111 = vunpack.c.l.b16 %v8715
      %v9112 = vunpack.c.h.b16 %v8715
      %v9113 = vunpack.c.l.b16 %v8716
      %v9114 = vunpack.c.h.b16 %v8716
      %v9115 = vunpack.c.l.b16 %v8717
      %v9116 = vunpack.c.h.b16 %v8717
      %v9117 = vunpack.c.l.b16 %v8718
      %v9118 = vunpack.c.h.b16 %v8718
      %v9119 = vunpack.c.l.b16 %v8719
      %v9120 = vunpack.c.h.b16 %v8719
      %v9121 = vpack.c.b16 %v9107, %v9105
      %v9122 = vpack.c.b16 %v9108, %v9106
      %v9123 = vpack.c.b16 %v9111, %v9109
      %v9124 = vpack.c.b16 %v9112, %v9110
      %v9125 = vpack.c.b16 %v9115, %v9113
      %v9126 = vpack.c.b16 %v9116, %v9114
      %v9127 = vpack.c.b16 %v9119, %v9117
      %v9128 = vpack.c.b16 %v9120, %v9118
      %v9169 = vunpack.c.l.b16 %v8720
      %v9170 = vunpack.c.l.b16 %v8721
      %v9171 = vunpack.c.l.b16 %v8722
      %v9172 = vunpack.c.l.b16 %v8723
      %v9173 = vunpack.c.l.b16 %v8724
      %v9174 = vunpack.c.l.b16 %v8725
      %v9175 = vunpack.c.l.b16 %v8726
      %v9176 = vunpack.c.l.b16 %v8727
      %v9177 = vunpack.c.l.b16 %v8728
      %v9178 = vunpack.c.l.b16 %v8729
      %v9179 = vunpack.c.l.b16 %v8730
      %v9180 = vunpack.c.l.b16 %v8731
      %v9181 = vunpack.c.l.b16 %v8732
      %v9182 = vunpack.c.l.b16 %v8733
      %v9183 = vunpack.c.l.b16 %v8734
      %v9184 = vunpack.c.l.b16 %v8735
      %v9185 = vunpack.c.l.b16 %v8736
      %v9186 = vunpack.c.l.b16 %v8737
      %v9187 = vunpack.c.l.b16 %v8738
      %v9188 = vunpack.c.l.b16 %v8739
      %v9189 = vunpack.c.l.b16 %v8740
      %v9190 = vunpack.c.l.b16 %v8741
      %v9191 = vunpack.c.l.b16 %v8742
      %v9192 = vunpack.c.l.b16 %v8743
      %v9193 = vunpack.c.l.b16 %v8744
      %v9194 = vunpack.c.l.b16 %v8745
      %v9195 = vunpack.c.l.b16 %v8746
      %v9196 = vunpack.c.l.b16 %v8747
      %v9197 = vunpack.c.l.b16 %v8748
      %v9198 = vunpack.c.l.b16 %v8749
      %v9199 = vunpack.c.l.b16 %v8750
      %v9200 = vunpack.c.l.b16 %v8751
      %v9201 = vpack.c.b16 %v9170, %v9169
      %v9202 = vpack.c.b16 %v9172, %v9171
      %v9203 = vpack.c.b16 %v9174, %v9173
      %v9204 = vpack.c.b16 %v9176, %v9175
      %v9205 = vpack.c.b16 %v9178, %v9177
      %v9206 = vpack.c.b16 %v9180, %v9179
      %v9207 = vpack.c.b16 %v9182, %v9181
      %v9208 = vpack.c.b16 %v9184, %v9183
      %v9209 = vpack.c.b16 %v9186, %v9185
      %v9210 = vpack.c.b16 %v9188, %v9187
      %v9211 = vpack.c.b16 %v9190, %v9189
      %v9212 = vpack.c.b16 %v9192, %v9191
      %v9213 = vpack.c.b16 %v9194, %v9193
      %v9214 = vpack.c.b16 %v9196, %v9195
      %v9215 = vpack.c.b16 %v9198, %v9197
      %v9216 = vpack.c.b16 %v9200, %v9199
      %9233 = vmatprep.subr.bf16.mxu0 0
      %9234 = vmatpush1.bf16.msra.mxu0 %v9201
      %9235 = vmatprep.subr.bf16.mxu0 0
      %9236 = vmatpush1.bf16.msra.mxu0 %v9202
      %9237 = vmatprep.subr.bf16.mxu0 0
      %9238 = vmatpush1.bf16.msra.mxu0 %v9203
      %9239 = vmatprep.subr.bf16.mxu0 0
      %9240 = vmatpush1.bf16.msra.mxu0 %v9204
      %9241 = vmatprep.subr.bf16.mxu0 0
      %9242 = vmatpush1.bf16.msra.mxu0 %v9205
      %9243 = vmatprep.subr.bf16.mxu0 0
      %9244 = vmatpush1.bf16.msra.mxu0 %v9206
      %9245 = vmatprep.subr.bf16.mxu0 0
      %9246 = vmatpush1.bf16.msra.mxu0 %v9207
      %9247 = vmatprep.subr.bf16.mxu0 0
      %9248 = vmatpush1.bf16.msra.mxu0 %v9208
      %9249 = vmatprep.subr.bf16.mxu0 0
      %9250 = vmatpush1.bf16.msra.mxu0 %v9209
      %9251 = vmatprep.subr.bf16.mxu0 0
      %9252 = vmatpush1.bf16.msra.mxu0 %v9210
      %9253 = vmatprep.subr.bf16.mxu0 0
      %9254 = vmatpush1.bf16.msra.mxu0 %v9211
      %9255 = vmatprep.subr.bf16.mxu0 0
      %9256 = vmatpush1.bf16.msra.mxu0 %v9212
      %9257 = vmatprep.subr.bf16.mxu0 0
      %9258 = vmatpush1.bf16.msra.mxu0 %v9213
      %9259 = vmatprep.subr.bf16.mxu0 0
      %9260 = vmatpush1.bf16.msra.mxu0 %v9214
      %9261 = vmatprep.subr.bf16.mxu0 0
      %9262 = vmatpush1.bf16.msra.mxu0 %v9215
      %9263 = vmatprep.subr.bf16.mxu0 0
      %9264 = vmatpush1.bf16.msra.mxu0 %v9216
      %9265 = vmatprep.mubr.bf16.mxu0 %v9122
      %9266 = vmatmul.mubr.bf16.gmra.mrb[0].mxu0 %v9121
      %v9267 = vpop.f32.mrb[0].mxu0
      %v9268 = vadd.f32 %v9067, %v9267
      %v9269 = vpop.f32.mrb[0].mxu0
      %v9270 = vpop.f32.mrb[0].mxu0
      %v9271 = vadd.f32 %v9070, %v9270
      %v9272 = vpop.f32.mrb[0].mxu0
      %9273 = vmatprep.mubr.bf16.mxu0 %v9124
      %9274 = vmatmul.mubr.bf16.gmra.mrb[0].mxu0 %v9123
      %v9275 = vpop.f32.mrb[0].mxu0
      %v9276 = vadd.f32 %v9075, %v9275
      %v9277 = vpop.f32.mrb[0].mxu0
      %v9278 = vpop.f32.mrb[0].mxu0
      %v9279 = vadd.f32 %v9078, %v9278
      %v9280 = vpop.f32.mrb[0].mxu0
      %9281 = vmatprep.mubr.bf16.mxu0 %v9126
      %9282 = vmatmul.mubr.bf16.gmra.mrb[0].mxu0 %v9125
      %v9283 = vpop.f32.mrb[0].mxu0
      %v9284 = vadd.f32 %v9083, %v9283
      %v9285 = vpop.f32.mrb[0].mxu0
      %v9286 = vpop.f32.mrb[0].mxu0
      %v9287 = vadd.f32 %v9086, %v9286
      %v9288 = vpop.f32.mrb[0].mxu0
      %9289 = vmatprep.mubr.bf16.mxu0 %v9128
      %9290 = vmatmul.mubr.bf16.gmra.mrb[0].mxu0 %v9127
      %v9291 = vpop.f32.mrb[0].mxu0
      %v9292 = vadd.f32 %v9091, %v9291
      %v9293 = vpop.f32.mrb[0].mxu0
      %v9294 = vpop.f32.mrb[0].mxu0
      %v9295 = vadd.f32 %v9094, %v9294
      %v9296 = vpop.f32.mrb[0].mxu0
      %9297 = vdwg.mxu0
      %v9298 = vld [vmem:[#allocation3] sm:$0xee]
      %v9299 = vld [vmem:[#allocation3 + $0x10] sm:$0xee]
      %v9300 = vld [vmem:[#allocation3 + $0x20] sm:$0xee]
      %v9301 = vld [vmem:[#allocation3 + $0x30] sm:$0xee]
      %v9302 = vld [vmem:[#allocation3 + $0x40] sm:$0xee]
      %v9303 = vld [vmem:[#allocation3 + $0x50] sm:$0xee]
      %v9304 = vld [vmem:[#allocation3 + $0x60] sm:$0xee]
      %v9305 = vld [vmem:[#allocation3 + $0x70] sm:$0xee]
      %v9322 = vrot.slane %v9298, 5
      %v9323 = vrot.slane %v9322, 4
      %v9324 = vrot.slane %v8752, 5
      %v9325 = vsel %vm2252, %v9323, %v9324
      %v9326 = vrot.slane %v9299, 5
      %v9327 = vrot.slane %v9326, 4
      %v9328 = vrot.slane %v8753, 5
      %v9329 = vsel %vm2252, %v9327, %v9328
      %v9330 = vrot.slane %v9300, 5
      %v9331 = vrot.slane %v9330, 4
      %v9332 = vrot.slane %v8754, 5
      %v9333 = vsel %vm2252, %v9331, %v9332
      %v9334 = vrot.slane %v9301, 5
      %v9335 = vrot.slane %v9334, 4
      %v9336 = vrot.slane %v8755, 5
      %v9337 = vsel %vm2252, %v9335, %v9336
      %v9338 = vrot.slane %v9302, 5
      %v9339 = vrot.slane %v9338, 4
      %v9340 = vrot.slane %v8756, 5
      %v9341 = vsel %vm2252, %v9339, %v9340
      %v9342 = vrot.slane %v9303, 5
      %v9343 = vrot.slane %v9342, 4
      %v9344 = vrot.slane %v8757, 5
      %v9345 = vsel %vm2252, %v9343, %v9344
      %v9346 = vrot.slane %v9304, 5
      %v9347 = vrot.slane %v9346, 4
      %v9348 = vrot.slane %v8758, 5
      %v9349 = vsel %vm2252, %v9347, %v9348
      %v9350 = vrot.slane %v9305, 5
      %v9351 = vrot.slane %v9350, 4
      %v9352 = vrot.slane %v8759, 5
      %v9353 = vsel %vm2252, %v9351, %v9352
      %v9354 = vld [vmem:[%s9 + $0x100] sm:$0xf]
      %v9355 = vld [vmem:[%s9 + $0x104] sm:$0xf]
      %v9356 = vld [vmem:[%s9 + $0x108] sm:$0xf]
      %v9357 = vld [vmem:[%s9 + $0x10c] sm:$0xf]
      %v9358 = vld [vmem:[%s9 + $0x110] sm:$0xf]
      %v9359 = vld [vmem:[%s9 + $0x114] sm:$0xf]
      %v9360 = vld [vmem:[%s9 + $0x118] sm:$0xf]
      %v9361 = vld [vmem:[%s9 + $0x11c] sm:$0xf]
      %v9362 = vld [vmem:[%s9 + $0x120] sm:$0xf]
      %v9363 = vld [vmem:[%s9 + $0x124] sm:$0xf]
      %v9364 = vld [vmem:[%s9 + $0x128] sm:$0xf]
      %v9365 = vld [vmem:[%s9 + $0x12c] sm:$0xf]
      %v9366 = vld [vmem:[%s9 + $0x130] sm:$0xf]
      %v9367 = vld [vmem:[%s9 + $0x134] sm:$0xf]
      %v9368 = vld [vmem:[%s9 + $0x138] sm:$0xf]
      %v9369 = vld [vmem:[%s9 + $0x13c] sm:$0xf]
      %v9370 = vld [vmem:[%s9 + $0x140] sm:$0xf]
      %v9371 = vld [vmem:[%s9 + $0x144] sm:$0xf]
      %v9372 = vld [vmem:[%s9 + $0x148] sm:$0xf]
      %v9373 = vld [vmem:[%s9 + $0x14c] sm:$0xf]
      %v9374 = vld [vmem:[%s9 + $0x150] sm:$0xf]
      %v9375 = vld [vmem:[%s9 + $0x154] sm:$0xf]
      %v9376 = vld [vmem:[%s9 + $0x158] sm:$0xf]
      %v9377 = vld [vmem:[%s9 + $0x15c] sm:$0xf]
      %v9378 = vld [vmem:[%s9 + $0x160] sm:$0xf]
      %v9379 = vld [vmem:[%s9 + $0x164] sm:$0xf]
      %v9380 = vld [vmem:[%s9 + $0x168] sm:$0xf]
      %v9381 = vld [vmem:[%s9 + $0x16c] sm:$0xf]
      %v9382 = vld [vmem:[%s9 + $0x170] sm:$0xf]
      %v9383 = vld [vmem:[%s9 + $0x174] sm:$0xf]
      %v9384 = vld [vmem:[%s9 + $0x178] sm:$0xf]
      %v9385 = vld [vmem:[%s9 + $0x17c] sm:$0xf]
      %v9386 = vunpack.c.l.b16 %v9325
      %v9387 = vunpack.c.h.b16 %v9325
      %v9388 = vunpack.c.l.b16 %v9329
      %v9389 = vunpack.c.h.b16 %v9329
      %v9390 = vunpack.c.l.b16 %v9333
      %v9391 = vunpack.c.h.b16 %v9333
      %v9392 = vunpack.c.l.b16 %v9337
      %v9393 = vunpack.c.h.b16 %v9337
      %v9394 = vunpack.c.l.b16 %v9341
      %v9395 = vunpack.c.h.b16 %v9341
      %v9396 = vunpack.c.l.b16 %v9345
      %v9397 = vunpack.c.h.b16 %v9345
      %v9398 = vunpack.c.l.b16 %v9349
      %v9399 = vunpack.c.h.b16 %v9349
      %v9400 = vunpack.c.l.b16 %v9353
      %v9401 = vunpack.c.h.b16 %v9353
      %v9402 = vpack.c.b16 %v9388, %v9386
      %v9403 = vpack.c.b16 %v9389, %v9387
      %v9404 = vpack.c.b16 %v9392, %v9390
      %v9405 = vpack.c.b16 %v9393, %v9391
      %v9406 = vpack.c.b16 %v9396, %v9394
      %v9407 = vpack.c.b16 %v9397, %v9395
      %v9408 = vpack.c.b16 %v9400, %v9398
      %v9409 = vpack.c.b16 %v9401, %v9399
      %v9450 = vunpack.c.l.b16 %v9354
      %v9451 = vunpack.c.l.b16 %v9355
      %v9452 = vunpack.c.l.b16 %v9356
      %v9453 = vunpack.c.l.b16 %v9357
      %v9454 = vunpack.c.l.b16 %v9358
      %v9455 = vunpack.c.l.b16 %v9359
      %v9456 = vunpack.c.l.b16 %v9360
      %v9457 = vunpack.c.l.b16 %v9361
      %v9458 = vunpack.c.l.b16 %v9362
      %v9459 = vunpack.c.l.b16 %v9363
      %v9460 = vunpack.c.l.b16 %v9364
      %v9461 = vunpack.c.l.b16 %v9365
      %v9462 = vunpack.c.l.b16 %v9366
      %v9463 = vunpack.c.l.b16 %v9367
      %v9464 = vunpack.c.l.b16 %v9368
      %v9465 = vunpack.c.l.b16 %v9369
      %v9466 = vunpack.c.l.b16 %v9370
      %v9467 = vunpack.c.l.b16 %v9371
      %v9468 = vunpack.c.l.b16 %v9372
      %v9469 = vunpack.c.l.b16 %v9373
      %v9470 = vunpack.c.l.b16 %v9374
      %v9471 = vunpack.c.l.b16 %v9375
      %v9472 = vunpack.c.l.b16 %v9376
      %v9473 = vunpack.c.l.b16 %v9377
      %v9474 = vunpack.c.l.b16 %v9378
      %v9475 = vunpack.c.l.b16 %v9379
      %v9476 = vunpack.c.l.b16 %v9380
      %v9477 = vunpack.c.l.b16 %v9381
      %v9478 = vunpack.c.l.b16 %v9382
      %v9479 = vunpack.c.l.b16 %v9383
      %v9480 = vunpack.c.l.b16 %v9384
      %v9481 = vunpack.c.l.b16 %v9385
      %v9482 = vpack.c.b16 %v9451, %v9450
      %v9483 = vpack.c.b16 %v9453, %v9452
      %v9484 = vpack.c.b16 %v9455, %v9454
      %v9485 = vpack.c.b16 %v9457, %v9456
      %v9486 = vpack.c.b16 %v9459, %v9458
      %v9487 = vpack.c.b16 %v9461, %v9460
      %v9488 = vpack.c.b16 %v9463, %v9462
      %v9489 = vpack.c.b16 %v9465, %v9464
      %v9490 = vpack.c.b16 %v9467, %v9466
      %v9491 = vpack.c.b16 %v9469, %v9468
      %v9492 = vpack.c.b16 %v9471, %v9470
      %v9493 = vpack.c.b16 %v9473, %v9472
      %v9494 = vpack.c.b16 %v9475, %v9474
      %v9495 = vpack.c.b16 %v9477, %v9476
      %v9496 = vpack.c.b16 %v9479, %v9478
      %v9497 = vpack.c.b16 %v9481, %v9480
      %9514 = vmatprep.subr.bf16.mxu0 0
      %9515 = vmatpush1.bf16.msra.mxu0 %v9482
      %9516 = vmatprep.subr.bf16.mxu0 0
      %9517 = vmatpush1.bf16.msra.mxu0 %v9483
      %9518 = vmatprep.subr.bf16.mxu0 0
      %9519 = vmatpush1.bf16.msra.mxu0 %v9484
      %9520 = vmatprep.subr.bf16.mxu0 0
      %9521 = vmatpush1.bf16.msra.mxu0 %v9485
      %9522 = vmatprep.subr.bf16.mxu0 0
      %9523 = vmatpush1.bf16.msra.mxu0 %v9486
      %9524 = vmatprep.subr.bf16.mxu0 0
      %9525 = vmatpush1.bf16.msra.mxu0 %v9487
      %9526 = vmatprep.subr.bf16.mxu0 0
      %9527 = vmatpush1.bf16.msra.mxu0 %v9488
      %9528 = vmatprep.subr.bf16.mxu0 0
      %9529 = vmatpush1.bf16.msra.mxu0 %v9489
      %9530 = vmatprep.subr.bf16.mxu0 0
      %9531 = vmatpush1.bf16.msra.mxu0 %v9490
      %9532 = vmatprep.subr.bf16.mxu0 0
      %9533 = vmatpush1.bf16.msra.mxu0 %v9491
      %9534 = vmatprep.subr.bf16.mxu0 0
      %9535 = vmatpush1.bf16.msra.mxu0 %v9492
      %9536 = vmatprep.subr.bf16.mxu0 0
      %9537 = vmatpush1.bf16.msra.mxu0 %v9493
      %9538 = vmatprep.subr.bf16.mxu0 0
      %9539 = vmatpush1.bf16.msra.mxu0 %v9494
      %9540 = vmatprep.subr.bf16.mxu0 0
      %9541 = vmatpush1.bf16.msra.mxu0 %v9495
      %9542 = vmatprep.subr.bf16.mxu0 0
      %9543 = vmatpush1.bf16.msra.mxu0 %v9496
      %9544 = vmatprep.subr.bf16.mxu0 0
      %9545 = vmatpush1.bf16.msra.mxu0 %v9497
      %9546 = vmatprep.mubr.bf16.mxu0 %v9403
      %9547 = vmatmul.mubr.bf16.gmra.mrb[0].mxu0 %v9402
      %v9548 = vpop.f32.mrb[0].mxu0
      %v9549 = vadd.f32 0.0, %v9548
      %v9550 = vpop.f32.mrb[0].mxu0
      %v9551 = vpop.f32.mrb[0].mxu0
      %v9552 = vadd.f32 0.0, %v9551
      %v9553 = vpop.f32.mrb[0].mxu0
      %9554 = vmatprep.mubr.bf16.mxu0 %v9405
      %9555 = vmatmul.mubr.bf16.gmra.mrb[0].mxu0 %v9404
      %v9556 = vpop.f32.mrb[0].mxu0
      %v9557 = vadd.f32 0.0, %v9556
      %v9558 = vpop.f32.mrb[0].mxu0
      %v9559 = vpop.f32.mrb[0].mxu0
      %v9560 = vadd.f32 0.0, %v9559
      %v9561 = vpop.f32.mrb[0].mxu0
      %9562 = vmatprep.mubr.bf16.mxu0 %v9407
      %9563 = vmatmul.mubr.bf16.gmra.mrb[0].mxu0 %v9406
      %v9564 = vpop.f32.mrb[0].mxu0
      %v9565 = vadd.f32 0.0, %v9564
      %v9566 = vpop.f32.mrb[0].mxu0
      %v9567 = vpop.f32.mrb[0].mxu0
      %v9568 = vadd.f32 0.0, %v9567
      %v9569 = vpop.f32.mrb[0].mxu0
      %9570 = vmatprep.mubr.bf16.mxu0 %v9409
      %9571 = vmatmul.mubr.bf16.gmra.mrb[0].mxu0 %v9408
      %v9572 = vpop.f32.mrb[0].mxu0
      %v9573 = vadd.f32 0.0, %v9572
      %v9574 = vpop.f32.mrb[0].mxu0
      %v9575 = vpop.f32.mrb[0].mxu0
      %v9576 = vadd.f32 0.0, %v9575
      %v9577 = vpop.f32.mrb[0].mxu0
      %9578 = vdwg.mxu0
      %v9579 = vadd.f32 %v9268, %v9549
      %v9580 = vadd.f32 %v9271, %v9552
      %v9581 = vadd.f32 %v9276, %v9557
      %v9582 = vadd.f32 %v9279, %v9560
      %v9583 = vadd.f32 %v9284, %v9565
      %v9584 = vadd.f32 %v9287, %v9568
      %v9585 = vadd.f32 %v9292, %v9573
      %v9586 = vadd.f32 %v9295, %v9576
      %v9587 = vld [vmem:[%s8655] sm:$0xff]
      %v9588 = vld [vmem:[%s8655 + $0x10] sm:$0xff]
      %v9589 = vld [vmem:[%s8655 + $0x20] sm:$0xff]
      %v9590 = vld [vmem:[%s8655 + $0x30] sm:$0xff]
      %v9591 = vld [vmem:[%s8655 + $0x40] sm:$0xff]
      %v9592 = vld [vmem:[%s8655 + $0x50] sm:$0xff]
      %v9593 = vld [vmem:[%s8655 + $0x60] sm:$0xff]
      %v9594 = vld [vmem:[%s8655 + $0x70] sm:$0xff]
      %v9595 = vld [vmem:[%s9 + $0x180] sm:$0xf]
      %v9596 = vld [vmem:[%s9 + $0x184] sm:$0xf]
      %v9597 = vld [vmem:[%s9 + $0x188] sm:$0xf]
      %v9598 = vld [vmem:[%s9 + $0x18c] sm:$0xf]
      %v9599 = vld [vmem:[%s9 + $0x190] sm:$0xf]
      %v9600 = vld [vmem:[%s9 + $0x194] sm:$0xf]
      %v9601 = vld [vmem:[%s9 + $0x198] sm:$0xf]
      %v9602 = vld [vmem:[%s9 + $0x19c] sm:$0xf]
      %v9603 = vld [vmem:[%s9 + $0x1a0] sm:$0xf]
      %v9604 = vld [vmem:[%s9 + $0x1a4] sm:$0xf]
      %v9605 = vld [vmem:[%s9 + $0x1a8] sm:$0xf]
      %v9606 = vld [vmem:[%s9 + $0x1ac] sm:$0xf]
      %v9607 = vld [vmem:[%s9 + $0x1b0] sm:$0xf]
      %v9608 = vld [vmem:[%s9 + $0x1b4] sm:$0xf]
      %v9609 = vld [vmem:[%s9 + $0x1b8] sm:$0xf]
      %v9610 = vld [vmem:[%s9 + $0x1bc] sm:$0xf]
      %v9611 = vld [vmem:[%s9 + $0x1c0] sm:$0xf]
      %v9612 = vld [vmem:[%s9 + $0x1c4] sm:$0xf]
      %v9613 = vld [vmem:[%s9 + $0x1c8] sm:$0xf]
      %v9614 = vld [vmem:[%s9 + $0x1cc] sm:$0xf]
      %v9615 = vld [vmem:[%s9 + $0x1d0] sm:$0xf]
      %v9616 = vld [vmem:[%s9 + $0x1d4] sm:$0xf]
      %v9617 = vld [vmem:[%s9 + $0x1d8] sm:$0xf]
      %v9618 = vld [vmem:[%s9 + $0x1dc] sm:$0xf]
      %v9619 = vld [vmem:[%s9 + $0x1e0] sm:$0xf]
      %v9620 = vld [vmem:[%s9 + $0x1e4] sm:$0xf]
      %v9621 = vld [vmem:[%s9 + $0x1e8] sm:$0xf]
      %v9622 = vld [vmem:[%s9 + $0x1ec] sm:$0xf]
      %v9623 = vld [vmem:[%s9 + $0x1f0] sm:$0xf]
      %v9624 = vld [vmem:[%s9 + $0x1f4] sm:$0xf]
      %v9625 = vld [vmem:[%s9 + $0x1f8] sm:$0xf]
      %v9626 = vld [vmem:[%s9 + $0x1fc] sm:$0xf]
      %v9635 = vunpack.c.l.b16 %v9587
      %v9636 = vunpack.c.h.b16 %v9587
      %v9637 = vunpack.c.l.b16 %v9588
      %v9638 = vunpack.c.h.b16 %v9588
      %v9639 = vunpack.c.l.b16 %v9589
      %v9640 = vunpack.c.h.b16 %v9589
      %v9641 = vunpack.c.l.b16 %v9590
      %v9642 = vunpack.c.h.b16 %v9590
      %v9643 = vunpack.c.l.b16 %v9591
      %v9644 = vunpack.c.h.b16 %v9591
      %v9645 = vunpack.c.l.b16 %v9592
      %v9646 = vunpack.c.h.b16 %v9592
      %v9647 = vunpack.c.l.b16 %v9593
      %v9648 = vunpack.c.h.b16 %v9593
      %v9649 = vunpack.c.l.b16 %v9594
      %v9650 = vunpack.c.h.b16 %v9594
      %v9651 = vpack.c.b16 %v9637, %v9635
      %v9652 = vpack.c.b16 %v9638, %v9636
      %v9653 = vpack.c.b16 %v9641, %v9639
      %v9654 = vpack.c.b16 %v9642, %v9640
      %v9655 = vpack.c.b16 %v9645, %v9643
      %v9656 = vpack.c.b16 %v9646, %v9644
      %v9657 = vpack.c.b16 %v9649, %v9647
      %v9658 = vpack.c.b16 %v9650, %v9648
      %v9699 = vunpack.c.l.b16 %v9595
      %v9700 = vunpack.c.l.b16 %v9596
      %v9701 = vunpack.c.l.b16 %v9597
      %v9702 = vunpack.c.l.b16 %v9598
      %v9703 = vunpack.c.l.b16 %v9599
      %v9704 = vunpack.c.l.b16 %v9600
      %v9705 = vunpack.c.l.b16 %v9601
      %v9706 = vunpack.c.l.b16 %v9602
      %v9707 = vunpack.c.l.b16 %v9603
      %v9708 = vunpack.c.l.b16 %v9604
      %v9709 = vunpack.c.l.b16 %v9605
      %v9710 = vunpack.c.l.b16 %v9606
      %v9711 = vunpack.c.l.b16 %v9607
      %v9712 = vunpack.c.l.b16 %v9608
      %v9713 = vunpack.c.l.b16 %v9609
      %v9714 = vunpack.c.l.b16 %v9610
      %v9715 = vunpack.c.l.b16 %v9611
      %v9716 = vunpack.c.l.b16 %v9612
      %v9717 = vunpack.c.l.b16 %v9613
      %v9718 = vunpack.c.l.b16 %v9614
      %v9719 = vunpack.c.l.b16 %v9615
      %v9720 = vunpack.c.l.b16 %v9616
      %v9721 = vunpack.c.l.b16 %v9617
      %v9722 = vunpack.c.l.b16 %v9618
      %v9723 = vunpack.c.l.b16 %v9619
      %v9724 = vunpack.c.l.b16 %v9620
      %v9725 = vunpack.c.l.b16 %v9621
      %v9726 = vunpack.c.l.b16 %v9622
      %v9727 = vunpack.c.l.b16 %v9623
      %v9728 = vunpack.c.l.b16 %v9624
      %v9729 = vunpack.c.l.b16 %v9625
      %v9730 = vunpack.c.l.b16 %v9626
      %v9731 = vpack.c.b16 %v9700, %v9699
      %v9732 = vpack.c.b16 %v9702, %v9701
      %v9733 = vpack.c.b16 %v9704, %v9703
      %v9734 = vpack.c.b16 %v9706, %v9705
      %v9735 = vpack.c.b16 %v9708, %v9707
      %v9736 = vpack.c.b16 %v9710, %v9709
      %v9737 = vpack.c.b16 %v9712, %v9711
      %v9738 = vpack.c.b16 %v9714, %v9713
      %v9739 = vpack.c.b16 %v9716, %v9715
      %v9740 = vpack.c.b16 %v9718, %v9717
      %v9741 = vpack.c.b16 %v9720, %v9719
      %v9742 = vpack.c.b16 %v9722, %v9721
      %v9743 = vpack.c.b16 %v9724, %v9723
      %v9744 = vpack.c.b16 %v9726, %v9725
      %v9745 = vpack.c.b16 %v9728, %v9727
      %v9746 = vpack.c.b16 %v9730, %v9729
      %9763 = vmatprep.subr.bf16.mxu0 0
      %9764 = vmatpush1.bf16.msra.mxu0 %v9731
      %9765 = vmatprep.subr.bf16.mxu0 0
      %9766 = vmatpush1.bf16.msra.mxu0 %v9732
      %9767 = vmatprep.subr.bf16.mxu0 0
      %9768 = vmatpush1.bf16.msra.mxu0 %v9733
      %9769 = vmatprep.subr.bf16.mxu0 0
      %9770 = vmatpush1.bf16.msra.mxu0 %v9734
      %9771 = vmatprep.subr.bf16.mxu0 0
      %9772 = vmatpush1.bf16.msra.mxu0 %v9735
      %9773 = vmatprep.subr.bf16.mxu0 0
      %9774 = vmatpush1.bf16.msra.mxu0 %v9736
      %9775 = vmatprep.subr.bf16.mxu0 0
      %9776 = vmatpush1.bf16.msra.mxu0 %v9737
      %9777 = vmatprep.subr.bf16.mxu0 0
      %9778 = vmatpush1.bf16.msra.mxu0 %v9738
      %9779 = vmatprep.subr.bf16.mxu0 0
      %9780 = vmatpush1.bf16.msra.mxu0 %v9739
      %9781 = vmatprep.subr.bf16.mxu0 0
      %9782 = vmatpush1.bf16.msra.mxu0 %v9740
      %9783 = vmatprep.subr.bf16.mxu0 0
      %9784 = vmatpush1.bf16.msra.mxu0 %v9741
      %9785 = vmatprep.subr.bf16.mxu0 0
      %9786 = vmatpush1.bf16.msra.mxu0 %v9742
      %9787 = vmatprep.subr.bf16.mxu0 0
      %9788 = vmatpush1.bf16.msra.mxu0 %v9743
      %9789 = vmatprep.subr.bf16.mxu0 0
      %9790 = vmatpush1.bf16.msra.mxu0 %v9744
      %9791 = vmatprep.subr.bf16.mxu0 0
      %9792 = vmatpush1.bf16.msra.mxu0 %v9745
      %9793 = vmatprep.subr.bf16.mxu0 0
      %9794 = vmatpush1.bf16.msra.mxu0 %v9746
      %9795 = vmatprep.mubr.bf16.mxu0 %v9652
      %9796 = vmatmul.mubr.bf16.gmra.mrb[0].mxu0 %v9651
      %v9797 = vpop.f32.mrb[0].mxu0
      %v9798 = vadd.f32 0.0, %v9797
      %v9799 = vpop.f32.mrb[0].mxu0
      %v9800 = vpop.f32.mrb[0].mxu0
      %v9801 = vadd.f32 0.0, %v9800
      %v9802 = vpop.f32.mrb[0].mxu0
      %9803 = vmatprep.mubr.bf16.mxu0 %v9654
      %9804 = vmatmul.mubr.bf16.gmra.mrb[0].mxu0 %v9653
      %v9805 = vpop.f32.mrb[0].mxu0
      %v9806 = vadd.f32 0.0, %v9805
      %v9807 = vpop.f32.mrb[0].mxu0
      %v9808 = vpop.f32.mrb[0].mxu0
      %v9809 = vadd.f32 0.0, %v9808
      %v9810 = vpop.f32.mrb[0].mxu0
      %9811 = vmatprep.mubr.bf16.mxu0 %v9656
      %9812 = vmatmul.mubr.bf16.gmra.mrb[0].mxu0 %v9655
      %v9813 = vpop.f32.mrb[0].mxu0
      %v9814 = vadd.f32 0.0, %v9813
      %v9815 = vpop.f32.mrb[0].mxu0
      %v9816 = vpop.f32.mrb[0].mxu0
      %v9817 = vadd.f32 0.0, %v9816
      %v9818 = vpop.f32.mrb[0].mxu0
      %9819 = vmatprep.mubr.bf16.mxu0 %v9658
      %9820 = vmatmul.mubr.bf16.gmra.mrb[0].mxu0 %v9657
      %v9821 = vpop.f32.mrb[0].mxu0
      %v9822 = vadd.f32 0.0, %v9821
      %v9823 = vpop.f32.mrb[0].mxu0
      %v9824 = vpop.f32.mrb[0].mxu0
      %v9825 = vadd.f32 0.0, %v9824
      %v9826 = vpop.f32.mrb[0].mxu0
      %9827 = vdwg.mxu0
      %v9828 = vadd.f32 %v9579, %v9798
      %v9829 = vadd.f32 %v9580, %v9801
      %v9830 = vadd.f32 %v9581, %v9806
      %v9831 = vadd.f32 %v9582, %v9809
      %v9832 = vadd.f32 %v9583, %v9814
      %v9833 = vadd.f32 %v9584, %v9817
      %v9834 = vadd.f32 %v9585, %v9822
      %v9835 = vadd.f32 %v9586, %v9825
      %v9836 = vld [vmem:[%s8655] sm:$0xff]
      %v9837 = vld [vmem:[%s8655 + $0x8] sm:$0x11]
      %v9838 = vld [vmem:[%s8655 + $0x10] sm:$0xff]
      %v9839 = vld [vmem:[%s8655 + $0x18] sm:$0x11]
      %v9840 = vld [vmem:[%s8655 + $0x20] sm:$0xff]
      %v9841 = vld [vmem:[%s8655 + $0x28] sm:$0x11]
      %v9842 = vld [vmem:[%s8655 + $0x30] sm:$0xff]
      %v9843 = vld [vmem:[%s8655 + $0x38] sm:$0x11]
      %v9844 = vld [vmem:[%s8655 + $0x40] sm:$0xff]
      %v9845 = vld [vmem:[%s8655 + $0x48] sm:$0x11]
      %v9846 = vld [vmem:[%s8655 + $0x50] sm:$0xff]
      %v9847 = vld [vmem:[%s8655 + $0x58] sm:$0x11]
      %v9848 = vld [vmem:[%s8655 + $0x60] sm:$0xff]
      %v9849 = vld [vmem:[%s8655 + $0x68] sm:$0x11]
      %v9850 = vld [vmem:[%s8655 + $0x70] sm:$0xff]
      %v9851 = vld [vmem:[%s8655 + $0x78] sm:$0x11]
      %v9853 = vshrl.u32 %v9836, 16
      %v9855 = vrot.slane %v9853, 4
      %v9856 = vshll.u32 %v9836, 16
      %v9858 = vrot.slane %v9856, 5
      %v9859 = vor.u32 %v9855, %v9858
      %v9860 = vrot.slane %v9859, 4
      %v9862 = vshll.u32 %v9837, 16
      %v9864 = vrot.slane %v9862, 5
      %v9865 = vsel %vm452, %v9860, %v9864
      %v9867 = vshrl.u32 %v9838, 16
      %v9869 = vrot.slane %v9867, 4
      %v9870 = vshll.u32 %v9838, 16
      %v9872 = vrot.slane %v9870, 5
      %v9873 = vor.u32 %v9869, %v9872
      %v9874 = vrot.slane %v9873, 4
      %v9876 = vshll.u32 %v9839, 16
      %v9878 = vrot.slane %v9876, 5
      %v9879 = vsel %vm452, %v9874, %v9878
      %v9881 = vshrl.u32 %v9840, 16
      %v9883 = vrot.slane %v9881, 4
      %v9884 = vshll.u32 %v9840, 16
      %v9886 = vrot.slane %v9884, 5
      %v9887 = vor.u32 %v9883, %v9886
      %v9888 = vrot.slane %v9887, 4
      %v9890 = vshll.u32 %v9841, 16
      %v9892 = vrot.slane %v9890, 5
      %v9893 = vsel %vm452, %v9888, %v9892
      %v9895 = vshrl.u32 %v9842, 16
      %v9897 = vrot.slane %v9895, 4
      %v9898 = vshll.u32 %v9842, 16
      %v9900 = vrot.slane %v9898, 5
      %v9901 = vor.u32 %v9897, %v9900
      %v9902 = vrot.slane %v9901, 4
      %v9904 = vshll.u32 %v9843, 16
      %v9906 = vrot.slane %v9904, 5
      %v9907 = vsel %vm452, %v9902, %v9906
      %v9909 = vshrl.u32 %v9844, 16
      %v9911 = vrot.slane %v9909, 4
      %v9912 = vshll.u32 %v9844, 16
      %v9914 = vrot.slane %v9912, 5
      %v9915 = vor.u32 %v9911, %v9914
      %v9916 = vrot.slane %v9915, 4
      %v9918 = vshll.u32 %v9845, 16
      %v9920 = vrot.slane %v9918, 5
      %v9921 = vsel %vm452, %v9916, %v9920
      %v9923 = vshrl.u32 %v9846, 16
      %v9925 = vrot.slane %v9923, 4
      %v9926 = vshll.u32 %v9846, 16
      %v9928 = vrot.slane %v9926, 5
      %v9929 = vor.u32 %v9925, %v9928
      %v9930 = vrot.slane %v9929, 4
      %v9932 = vshll.u32 %v9847, 16
      %v9934 = vrot.slane %v9932, 5
      %v9935 = vsel %vm452, %v9930, %v9934
      %v9937 = vshrl.u32 %v9848, 16
      %v9939 = vrot.slane %v9937, 4
      %v9940 = vshll.u32 %v9848, 16
      %v9942 = vrot.slane %v9940, 5
      %v9943 = vor.u32 %v9939, %v9942
      %v9944 = vrot.slane %v9943, 4
      %v9946 = vshll.u32 %v9849, 16
      %v9948 = vrot.slane %v9946, 5
      %v9949 = vsel %vm452, %v9944, %v9948
      %v9951 = vshrl.u32 %v9850, 16
      %v9953 = vrot.slane %v9951, 4
      %v9954 = vshll.u32 %v9850, 16
      %v9956 = vrot.slane %v9954, 5
      %v9957 = vor.u32 %v9953, %v9956
      %v9958 = vrot.slane %v9957, 4
      %v9960 = vshll.u32 %v9851, 16
      %v9962 = vrot.slane %v9960, 5
      %v9963 = vsel %vm452, %v9958, %v9962
      %v9964 = vld [vmem:[%s9 + $0x200] sm:$0xf]
      %v9965 = vld [vmem:[%s9 + $0x204] sm:$0xf]
      %v9966 = vld [vmem:[%s9 + $0x208] sm:$0xf]
      %v9967 = vld [vmem:[%s9 + $0x20c] sm:$0xf]
      %v9968 = vld [vmem:[%s9 + $0x210] sm:$0xf]
      %v9969 = vld [vmem:[%s9 + $0x214] sm:$0xf]
      %v9970 = vld [vmem:[%s9 + $0x218] sm:$0xf]
      %v9971 = vld [vmem:[%s9 + $0x21c] sm:$0xf]
      %v9972 = vld [vmem:[%s9 + $0x220] sm:$0xf]
      %v9973 = vld [vmem:[%s9 + $0x224] sm:$0xf]
      %v9974 = vld [vmem:[%s9 + $0x228] sm:$0xf]
      %v9975 = vld [vmem:[%s9 + $0x22c] sm:$0xf]
      %v9976 = vld [vmem:[%s9 + $0x230] sm:$0xf]
      %v9977 = vld [vmem:[%s9 + $0x234] sm:$0xf]
      %v9978 = vld [vmem:[%s9 + $0x238] sm:$0xf]
      %v9979 = vld [vmem:[%s9 + $0x23c] sm:$0xf]
      %v9980 = vld [vmem:[%s9 + $0x240] sm:$0xf]
      %v9981 = vld [vmem:[%s9 + $0x244] sm:$0xf]
      %v9982 = vld [vmem:[%s9 + $0x248] sm:$0xf]
      %v9983 = vld [vmem:[%s9 + $0x24c] sm:$0xf]
      %v9984 = vld [vmem:[%s9 + $0x250] sm:$0xf]
      %v9985 = vld [vmem:[%s9 + $0x254] sm:$0xf]
      %v9986 = vld [vmem:[%s9 + $0x258] sm:$0xf]
      %v9987 = vld [vmem:[%s9 + $0x25c] sm:$0xf]
      %v9988 = vld [vmem:[%s9 + $0x260] sm:$0xf]
      %v9989 = vld [vmem:[%s9 + $0x264] sm:$0xf]
      %v9990 = vld [vmem:[%s9 + $0x268] sm:$0xf]
      %v9991 = vld [vmem:[%s9 + $0x26c] sm:$0xf]
      %v9992 = vld [vmem:[%s9 + $0x270] sm:$0xf]
      %v9993 = vld [vmem:[%s9 + $0x274] sm:$0xf]
      %v9994 = vld [vmem:[%s9 + $0x278] sm:$0xf]
      %v9995 = vld [vmem:[%s9 + $0x27c] sm:$0xf]
      %v9996 = vunpack.c.l.b16 %v9865
      %v9997 = vunpack.c.h.b16 %v9865
      %v9998 = vunpack.c.l.b16 %v9879
      %v9999 = vunpack.c.h.b16 %v9879
      %v10000 = vunpack.c.l.b16 %v9893
      %v10001 = vunpack.c.h.b16 %v9893
      %v10002 = vunpack.c.l.b16 %v9907
      %v10003 = vunpack.c.h.b16 %v9907
      %v10004 = vunpack.c.l.b16 %v9921
      %v10005 = vunpack.c.h.b16 %v9921
      %v10006 = vunpack.c.l.b16 %v9935
      %v10007 = vunpack.c.h.b16 %v9935
      %v10008 = vunpack.c.l.b16 %v9949
      %v10009 = vunpack.c.h.b16 %v9949
      %v10010 = vunpack.c.l.b16 %v9963
      %v10011 = vunpack.c.h.b16 %v9963
      %v10012 = vpack.c.b16 %v9998, %v9996
      %v10013 = vpack.c.b16 %v9999, %v9997
      %v10014 = vpack.c.b16 %v10002, %v10000
      %v10015 = vpack.c.b16 %v10003, %v10001
      %v10016 = vpack.c.b16 %v10006, %v10004
      %v10017 = vpack.c.b16 %v10007, %v10005
      %v10018 = vpack.c.b16 %v10010, %v10008
      %v10019 = vpack.c.b16 %v10011, %v10009
      %v10060 = vunpack.c.l.b16 %v9964
      %v10061 = vunpack.c.l.b16 %v9965
      %v10062 = vunpack.c.l.b16 %v9966
      %v10063 = vunpack.c.l.b16 %v9967
      %v10064 = vunpack.c.l.b16 %v9968
      %v10065 = vunpack.c.l.b16 %v9969
      %v10066 = vunpack.c.l.b16 %v9970
      %v10067 = vunpack.c.l.b16 %v9971
      %v10068 = vunpack.c.l.b16 %v9972
      %v10069 = vunpack.c.l.b16 %v9973
      %v10070 = vunpack.c.l.b16 %v9974
      %v10071 = vunpack.c.l.b16 %v9975
      %v10072 = vunpack.c.l.b16 %v9976
      %v10073 = vunpack.c.l.b16 %v9977
      %v10074 = vunpack.c.l.b16 %v9978
      %v10075 = vunpack.c.l.b16 %v9979
      %v10076 = vunpack.c.l.b16 %v9980
      %v10077 = vunpack.c.l.b16 %v9981
      %v10078 = vunpack.c.l.b16 %v9982
      %v10079 = vunpack.c.l.b16 %v9983
      %v10080 = vunpack.c.l.b16 %v9984
      %v10081 = vunpack.c.l.b16 %v9985
      %v10082 = vunpack.c.l.b16 %v9986
      %v10083 = vunpack.c.l.b16 %v9987
      %v10084 = vunpack.c.l.b16 %v9988
      %v10085 = vunpack.c.l.b16 %v9989
      %v10086 = vunpack.c.l.b16 %v9990
      %v10087 = vunpack.c.l.b16 %v9991
      %v10088 = vunpack.c.l.b16 %v9992
      %v10089 = vunpack.c.l.b16 %v9993
      %v10090 = vunpack.c.l.b16 %v9994
      %v10091 = vunpack.c.l.b16 %v9995
      %v10092 = vpack.c.b16 %v10061, %v10060
      %v10093 = vpack.c.b16 %v10063, %v10062
      %v10094 = vpack.c.b16 %v10065, %v10064
      %v10095 = vpack.c.b16 %v10067, %v10066
      %v10096 = vpack.c.b16 %v10069, %v10068
      %v10097 = vpack.c.b16 %v10071, %v10070
      %v10098 = vpack.c.b16 %v10073, %v10072
      %v10099 = vpack.c.b16 %v10075, %v10074
      %v10100 = vpack.c.b16 %v10077, %v10076
      %v10101 = vpack.c.b16 %v10079, %v10078
      %v10102 = vpack.c.b16 %v10081, %v10080
      %v10103 = vpack.c.b16 %v10083, %v10082
      %v10104 = vpack.c.b16 %v10085, %v10084
      %v10105 = vpack.c.b16 %v10087, %v10086
      %v10106 = vpack.c.b16 %v10089, %v10088
      %v10107 = vpack.c.b16 %v10091, %v10090
      %10124 = vmatprep.subr.bf16.mxu0 0
      %10125 = vmatpush1.bf16.msra.mxu0 %v10092
      %10126 = vmatprep.subr.bf16.mxu0 0
      %10127 = vmatpush1.bf16.msra.mxu0 %v10093
      %10128 = vmatprep.subr.bf16.mxu0 0
      %10129 = vmatpush1.bf16.msra.mxu0 %v10094
      %10130 = vmatprep.subr.bf16.mxu0 0
      %10131 = vmatpush1.bf16.msra.mxu0 %v10095
      %10132 = vmatprep.subr.bf16.mxu0 0
      %10133 = vmatpush1.bf16.msra.mxu0 %v10096
      %10134 = vmatprep.subr.bf16.mxu0 0
      %10135 = vmatpush1.bf16.msra.mxu0 %v10097
      %10136 = vmatprep.subr.bf16.mxu0 0
      %10137 = vmatpush1.bf16.msra.mxu0 %v10098
      %10138 = vmatprep.subr.bf16.mxu0 0
      %10139 = vmatpush1.bf16.msra.mxu0 %v10099
      %10140 = vmatprep.subr.bf16.mxu0 0
      %10141 = vmatpush1.bf16.msra.mxu0 %v10100
      %10142 = vmatprep.subr.bf16.mxu0 0
      %10143 = vmatpush1.bf16.msra.mxu0 %v10101
      %10144 = vmatprep.subr.bf16.mxu0 0
      %10145 = vmatpush1.bf16.msra.mxu0 %v10102
      %10146 = vmatprep.subr.bf16.mxu0 0
      %10147 = vmatpush1.bf16.msra.mxu0 %v10103
      %10148 = vmatprep.subr.bf16.mxu0 0
      %10149 = vmatpush1.bf16.msra.mxu0 %v10104
      %10150 = vmatprep.subr.bf16.mxu0 0
      %10151 = vmatpush1.bf16.msra.mxu0 %v10105
      %10152 = vmatprep.subr.bf16.mxu0 0
      %10153 = vmatpush1.bf16.msra.mxu0 %v10106
      %10154 = vmatprep.subr.bf16.mxu0 0
      %10155 = vmatpush1.bf16.msra.mxu0 %v10107
      %10156 = vmatprep.mubr.bf16.mxu0 %v10013
      %10157 = vmatmul.mubr.bf16.gmra.mrb[0].mxu0 %v10012
      %v10158 = vpop.f32.mrb[0].mxu0
      %v10159 = vadd.f32 0.0, %v10158
      %v10160 = vpop.f32.mrb[0].mxu0
      %v10161 = vpop.f32.mrb[0].mxu0
      %v10162 = vadd.f32 0.0, %v10161
      %v10163 = vpop.f32.mrb[0].mxu0
      %10164 = vmatprep.mubr.bf16.mxu0 %v10015
      %10165 = vmatmul.mubr.bf16.gmra.mrb[0].mxu0 %v10014
      %v10166 = vpop.f32.mrb[0].mxu0
      %v10167 = vadd.f32 0.0, %v10166
      %v10168 = vpop.f32.mrb[0].mxu0
      %v10169 = vpop.f32.mrb[0].mxu0
      %v10170 = vadd.f32 0.0, %v10169
      %v10171 = vpop.f32.mrb[0].mxu0
      %10172 = vmatprep.mubr.bf16.mxu0 %v10017
      %10173 = vmatmul.mubr.bf16.gmra.mrb[0].mxu0 %v10016
      %v10174 = vpop.f32.mrb[0].mxu0
      %v10175 = vadd.f32 0.0, %v10174
      %v10176 = vpop.f32.mrb[0].mxu0
      %v10177 = vpop.f32.mrb[0].mxu0
      %v10178 = vadd.f32 0.0, %v10177
      %v10179 = vpop.f32.mrb[0].mxu0
      %10180 = vmatprep.mubr.bf16.mxu0 %v10019
      %10181 = vmatmul.mubr.bf16.gmra.mrb[0].mxu0 %v10018
      %v10182 = vpop.f32.mrb[0].mxu0
      %v10183 = vadd.f32 0.0, %v10182
      %v10184 = vpop.f32.mrb[0].mxu0
      %v10185 = vpop.f32.mrb[0].mxu0
      %v10186 = vadd.f32 0.0, %v10185
      %v10187 = vpop.f32.mrb[0].mxu0
      %10188 = vdwg.mxu0
      %v10189 = vadd.f32 %v9828, %v10159
      %v10190 = vadd.f32 %v9829, %v10162
      %v10191 = vadd.f32 %v9830, %v10167
      %v10192 = vadd.f32 %v9831, %v10170
      %v10193 = vadd.f32 %v9832, %v10175
      %v10194 = vadd.f32 %v9833, %v10178
      %v10195 = vadd.f32 %v9834, %v10183
      %v10196 = vadd.f32 %v9835, %v10186
      %v10197 = vld [vmem:[%s8655] sm:$0xee]
      %v10198 = vld [vmem:[%s8655 + $0x10] sm:$0xee]
      %v10199 = vld [vmem:[%s8655 + $0x20] sm:$0xee]
      %v10200 = vld [vmem:[%s8655 + $0x30] sm:$0xee]
      %v10201 = vld [vmem:[%s8655 + $0x40] sm:$0xee]
      %v10202 = vld [vmem:[%s8655 + $0x50] sm:$0xee]
      %v10203 = vld [vmem:[%s8655 + $0x60] sm:$0xee]
      %v10204 = vld [vmem:[%s8655 + $0x70] sm:$0xee]
      %v10221 = vrot.slane %v10197, 5
      %v10222 = vrot.slane %v10221, 4
      %v10223 = vrot.slane %v9837, 5
      %v10224 = vsel %vm2252, %v10222, %v10223
      %v10225 = vrot.slane %v10198, 5
      %v10226 = vrot.slane %v10225, 4
      %v10227 = vrot.slane %v9839, 5
      %v10228 = vsel %vm2252, %v10226, %v10227
      %v10229 = vrot.slane %v10199, 5
      %v10230 = vrot.slane %v10229, 4
      %v10231 = vrot.slane %v9841, 5
      %v10232 = vsel %vm2252, %v10230, %v10231
      %v10233 = vrot.slane %v10200, 5
      %v10234 = vrot.slane %v10233, 4
      %v10235 = vrot.slane %v9843, 5
      %v10236 = vsel %vm2252, %v10234, %v10235
      %v10237 = vrot.slane %v10201, 5
      %v10238 = vrot.slane %v10237, 4
      %v10239 = vrot.slane %v9845, 5
      %v10240 = vsel %vm2252, %v10238, %v10239
      %v10241 = vrot.slane %v10202, 5
      %v10242 = vrot.slane %v10241, 4
      %v10243 = vrot.slane %v9847, 5
      %v10244 = vsel %vm2252, %v10242, %v10243
      %v10245 = vrot.slane %v10203, 5
      %v10246 = vrot.slane %v10245, 4
      %v10247 = vrot.slane %v9849, 5
      %v10248 = vsel %vm2252, %v10246, %v10247
      %v10249 = vrot.slane %v10204, 5
      %v10250 = vrot.slane %v10249, 4
      %v10251 = vrot.slane %v9851, 5
      %v10252 = vsel %vm2252, %v10250, %v10251
      %v10253 = vld [vmem:[%s9 + $0x280] sm:$0xf]
      %v10254 = vld [vmem:[%s9 + $0x284] sm:$0xf]
      %v10255 = vld [vmem:[%s9 + $0x288] sm:$0xf]
      %v10256 = vld [vmem:[%s9 + $0x28c] sm:$0xf]
      %v10257 = vld [vmem:[%s9 + $0x290] sm:$0xf]
      %v10258 = vld [vmem:[%s9 + $0x294] sm:$0xf]
      %v10259 = vld [vmem:[%s9 + $0x298] sm:$0xf]
      %v10260 = vld [vmem:[%s9 + $0x29c] sm:$0xf]
      %v10261 = vld [vmem:[%s9 + $0x2a0] sm:$0xf]
      %v10262 = vld [vmem:[%s9 + $0x2a4] sm:$0xf]
      %v10263 = vld [vmem:[%s9 + $0x2a8] sm:$0xf]
      %v10264 = vld [vmem:[%s9 + $0x2ac] sm:$0xf]
      %v10265 = vld [vmem:[%s9 + $0x2b0] sm:$0xf]
      %v10266 = vld [vmem:[%s9 + $0x2b4] sm:$0xf]
      %v10267 = vld [vmem:[%s9 + $0x2b8] sm:$0xf]
      %v10268 = vld [vmem:[%s9 + $0x2bc] sm:$0xf]
      %v10269 = vld [vmem:[%s9 + $0x2c0] sm:$0xf]
      %v10270 = vld [vmem:[%s9 + $0x2c4] sm:$0xf]
      %v10271 = vld [vmem:[%s9 + $0x2c8] sm:$0xf]
      %v10272 = vld [vmem:[%s9 + $0x2cc] sm:$0xf]
      %v10273 = vld [vmem:[%s9 + $0x2d0] sm:$0xf]
      %v10274 = vld [vmem:[%s9 + $0x2d4] sm:$0xf]
      %v10275 = vld [vmem:[%s9 + $0x2d8] sm:$0xf]
      %v10276 = vld [vmem:[%s9 + $0x2dc] sm:$0xf]
      %v10277 = vld [vmem:[%s9 + $0x2e0] sm:$0xf]
      %v10278 = vld [vmem:[%s9 + $0x2e4] sm:$0xf]
      %v10279 = vld [vmem:[%s9 + $0x2e8] sm:$0xf]
      %v10280 = vld [vmem:[%s9 + $0x2ec] sm:$0xf]
      %v10281 = vld [vmem:[%s9 + $0x2f0] sm:$0xf]
      %v10282 = vld [vmem:[%s9 + $0x2f4] sm:$0xf]
      %v10283 = vld [vmem:[%s9 + $0x2f8] sm:$0xf]
      %v10284 = vld [vmem:[%s9 + $0x2fc] sm:$0xf]
      %v10285 = vunpack.c.l.b16 %v10224
      %v10286 = vunpack.c.h.b16 %v10224
      %v10287 = vunpack.c.l.b16 %v10228
      %v10288 = vunpack.c.h.b16 %v10228
      %v10289 = vunpack.c.l.b16 %v10232
      %v10290 = vunpack.c.h.b16 %v10232
      %v10291 = vunpack.c.l.b16 %v10236
      %v10292 = vunpack.c.h.b16 %v10236
      %v10293 = vunpack.c.l.b16 %v10240
      %v10294 = vunpack.c.h.b16 %v10240
      %v10295 = vunpack.c.l.b16 %v10244
      %v10296 = vunpack.c.h.b16 %v10244
      %v10297 = vunpack.c.l.b16 %v10248
      %v10298 = vunpack.c.h.b16 %v10248
      %v10299 = vunpack.c.l.b16 %v10252
      %v10300 = vunpack.c.h.b16 %v10252
      %v10301 = vpack.c.b16 %v10287, %v10285
      %v10302 = vpack.c.b16 %v10288, %v10286
      %v10303 = vpack.c.b16 %v10291, %v10289
      %v10304 = vpack.c.b16 %v10292, %v10290
      %v10305 = vpack.c.b16 %v10295, %v10293
      %v10306 = vpack.c.b16 %v10296, %v10294
      %v10307 = vpack.c.b16 %v10299, %v10297
      %v10308 = vpack.c.b16 %v10300, %v10298
      %v10349 = vunpack.c.l.b16 %v10253
      %v10350 = vunpack.c.l.b16 %v10254
      %v10351 = vunpack.c.l.b16 %v10255
      %v10352 = vunpack.c.l.b16 %v10256
      %v10353 = vunpack.c.l.b16 %v10257
      %v10354 = vunpack.c.l.b16 %v10258
      %v10355 = vunpack.c.l.b16 %v10259
      %v10356 = vunpack.c.l.b16 %v10260
      %v10357 = vunpack.c.l.b16 %v10261
      %v10358 = vunpack.c.l.b16 %v10262
      %v10359 = vunpack.c.l.b16 %v10263
      %v10360 = vunpack.c.l.b16 %v10264
      %v10361 = vunpack.c.l.b16 %v10265
      %v10362 = vunpack.c.l.b16 %v10266
      %v10363 = vunpack.c.l.b16 %v10267
      %v10364 = vunpack.c.l.b16 %v10268
      %v10365 = vunpack.c.l.b16 %v10269
      %v10366 = vunpack.c.l.b16 %v10270
      %v10367 = vunpack.c.l.b16 %v10271
      %v10368 = vunpack.c.l.b16 %v10272
      %v10369 = vunpack.c.l.b16 %v10273
      %v10370 = vunpack.c.l.b16 %v10274
      %v10371 = vunpack.c.l.b16 %v10275
      %v10372 = vunpack.c.l.b16 %v10276
      %v10373 = vunpack.c.l.b16 %v10277
      %v10374 = vunpack.c.l.b16 %v10278
      %v10375 = vunpack.c.l.b16 %v10279
      %v10376 = vunpack.c.l.b16 %v10280
      %v10377 = vunpack.c.l.b16 %v10281
      %v10378 = vunpack.c.l.b16 %v10282
      %v10379 = vunpack.c.l.b16 %v10283
      %v10380 = vunpack.c.l.b16 %v10284
      %v10381 = vpack.c.b16 %v10350, %v10349
      %v10382 = vpack.c.b16 %v10352, %v10351
      %v10383 = vpack.c.b16 %v10354, %v10353
      %v10384 = vpack.c.b16 %v10356, %v10355
      %v10385 = vpack.c.b16 %v10358, %v10357
      %v10386 = vpack.c.b16 %v10360, %v10359
      %v10387 = vpack.c.b16 %v10362, %v10361
      %v10388 = vpack.c.b16 %v10364, %v10363
      %v10389 = vpack.c.b16 %v10366, %v10365
      %v10390 = vpack.c.b16 %v10368, %v10367
      %v10391 = vpack.c.b16 %v10370, %v10369
      %v10392 = vpack.c.b16 %v10372, %v10371
      %v10393 = vpack.c.b16 %v10374, %v10373
      %v10394 = vpack.c.b16 %v10376, %v10375
      %v10395 = vpack.c.b16 %v10378, %v10377
      %v10396 = vpack.c.b16 %v10380, %v10379
      %10413 = vmatprep.subr.bf16.mxu0 0
      %10414 = vmatpush1.bf16.msra.mxu0 %v10381
      %10415 = vmatprep.subr.bf16.mxu0 0
      %10416 = vmatpush1.bf16.msra.mxu0 %v10382
      %10417 = vmatprep.subr.bf16.mxu0 0
      %10418 = vmatpush1.bf16.msra.mxu0 %v10383
      %10419 = vmatprep.subr.bf16.mxu0 0
      %10420 = vmatpush1.bf16.msra.mxu0 %v10384
      %10421 = vmatprep.subr.bf16.mxu0 0
      %10422 = vmatpush1.bf16.msra.mxu0 %v10385
      %10423 = vmatprep.subr.bf16.mxu0 0
      %10424 = vmatpush1.bf16.msra.mxu0 %v10386
      %10425 = vmatprep.subr.bf16.mxu0 0
      %10426 = vmatpush1.bf16.msra.mxu0 %v10387
      %10427 = vmatprep.subr.bf16.mxu0 0
      %10428 = vmatpush1.bf16.msra.mxu0 %v10388
      %10429 = vmatprep.subr.bf16.mxu0 0
      %10430 = vmatpush1.bf16.msra.mxu0 %v10389
      %10431 = vmatprep.subr.bf16.mxu0 0
      %10432 = vmatpush1.bf16.msra.mxu0 %v10390
      %10433 = vmatprep.subr.bf16.mxu0 0
      %10434 = vmatpush1.bf16.msra.mxu0 %v10391
      %10435 = vmatprep.subr.bf16.mxu0 0
      %10436 = vmatpush1.bf16.msra.mxu0 %v10392
      %10437 = vmatprep.subr.bf16.mxu0 0
      %10438 = vmatpush1.bf16.msra.mxu0 %v10393
      %10439 = vmatprep.subr.bf16.mxu0 0
      %10440 = vmatpush1.bf16.msra.mxu0 %v10394
      %10441 = vmatprep.subr.bf16.mxu0 0
      %10442 = vmatpush1.bf16.msra.mxu0 %v10395
      %10443 = vmatprep.subr.bf16.mxu0 0
      %10444 = vmatpush1.bf16.msra.mxu0 %v10396
      %10445 = vmatprep.mubr.bf16.mxu0 %v10302
      %10446 = vmatmul.mubr.bf16.gmra.mrb[0].mxu0 %v10301
      %v10447 = vpop.f32.mrb[0].mxu0
      %v10448 = vadd.f32 0.0, %v10447
      %v10449 = vpop.f32.mrb[0].mxu0
      %v10450 = vpop.f32.mrb[0].mxu0
      %v10451 = vadd.f32 0.0, %v10450
      %v10452 = vpop.f32.mrb[0].mxu0
      %10453 = vmatprep.mubr.bf16.mxu0 %v10304
      %10454 = vmatmul.mubr.bf16.gmra.mrb[0].mxu0 %v10303
      %v10455 = vpop.f32.mrb[0].mxu0
      %v10456 = vadd.f32 0.0, %v10455
      %v10457 = vpop.f32.mrb[0].mxu0
      %v10458 = vpop.f32.mrb[0].mxu0
      %v10459 = vadd.f32 0.0, %v10458
      %v10460 = vpop.f32.mrb[0].mxu0
      %10461 = vmatprep.mubr.bf16.mxu0 %v10306
      %10462 = vmatmul.mubr.bf16.gmra.mrb[0].mxu0 %v10305
      %v10463 = vpop.f32.mrb[0].mxu0
      %v10464 = vadd.f32 0.0, %v10463
      %v10465 = vpop.f32.mrb[0].mxu0
      %v10466 = vpop.f32.mrb[0].mxu0
      %v10467 = vadd.f32 0.0, %v10466
      %v10468 = vpop.f32.mrb[0].mxu0
      %10469 = vmatprep.mubr.bf16.mxu0 %v10308
      %10470 = vmatmul.mubr.bf16.gmra.mrb[0].mxu0 %v10307
      %v10471 = vpop.f32.mrb[0].mxu0
      %v10472 = vadd.f32 0.0, %v10471
      %v10473 = vpop.f32.mrb[0].mxu0
      %v10474 = vpop.f32.mrb[0].mxu0
      %v10475 = vadd.f32 0.0, %v10474
      %v10476 = vpop.f32.mrb[0].mxu0
      %10477 = vdwg.mxu0
      %v10478 = vadd.f32 %v10189, %v10448
      %v10479 = vadd.f32 %v10190, %v10451
      %v10480 = vadd.f32 %v10191, %v10456
      %v10481 = vadd.f32 %v10192, %v10459
      %v10482 = vadd.f32 %v10193, %v10464
      %v10483 = vadd.f32 %v10194, %v10467
      %v10484 = vadd.f32 %v10195, %v10472
      %v10485 = vadd.f32 %v10196, %v10475
      %s10486 = scalar_lea.vmem [#allocation3], 32
      %v10487 = vld [vmem:[%s10486] sm:$0xff]
      %v10488 = vld [vmem:[%s10486 + $0x10] sm:$0xff]
      %v10489 = vld [vmem:[%s10486 + $0x20] sm:$0xff]
      %v10490 = vld [vmem:[%s10486 + $0x30] sm:$0xff]
      %v10491 = vld [vmem:[%s10486 + $0x40] sm:$0xff]
      %v10492 = vld [vmem:[%s10486 + $0x50] sm:$0xff]
      %v10493 = vld [vmem:[%s10486 + $0x60] sm:$0xff]
      %v10494 = vld [vmem:[%s10486 + $0x70] sm:$0xff]
      %v10495 = vld [vmem:[%s9 + $0x300] sm:$0xf]
      %v10496 = vld [vmem:[%s9 + $0x304] sm:$0xf]
      %v10497 = vld [vmem:[%s9 + $0x308] sm:$0xf]
      %v10498 = vld [vmem:[%s9 + $0x30c] sm:$0xf]
      %v10499 = vld [vmem:[%s9 + $0x310] sm:$0xf]
      %v10500 = vld [vmem:[%s9 + $0x314] sm:$0xf]
      %v10501 = vld [vmem:[%s9 + $0x318] sm:$0xf]
      %v10502 = vld [vmem:[%s9 + $0x31c] sm:$0xf]
      %v10503 = vld [vmem:[%s9 + $0x320] sm:$0xf]
      %v10504 = vld [vmem:[%s9 + $0x324] sm:$0xf]
      %v10505 = vld [vmem:[%s9 + $0x328] sm:$0xf]
      %v10506 = vld [vmem:[%s9 + $0x32c] sm:$0xf]
      %v10507 = vld [vmem:[%s9 + $0x330] sm:$0xf]
      %v10508 = vld [vmem:[%s9 + $0x334] sm:$0xf]
      %v10509 = vld [vmem:[%s9 + $0x338] sm:$0xf]
      %v10510 = vld [vmem:[%s9 + $0x33c] sm:$0xf]
      %v10511 = vld [vmem:[%s9 + $0x340] sm:$0xf]
      %v10512 = vld [vmem:[%s9 + $0x344] sm:$0xf]
      %v10513 = vld [vmem:[%s9 + $0x348] sm:$0xf]
      %v10514 = vld [vmem:[%s9 + $0x34c] sm:$0xf]
      %v10515 = vld [vmem:[%s9 + $0x350] sm:$0xf]
      %v10516 = vld [vmem:[%s9 + $0x354] sm:$0xf]
      %v10517 = vld [vmem:[%s9 + $0x358] sm:$0xf]
      %v10518 = vld [vmem:[%s9 + $0x35c] sm:$0xf]
      %v10519 = vld [vmem:[%s9 + $0x360] sm:$0xf]
      %v10520 = vld [vmem:[%s9 + $0x364] sm:$0xf]
      %v10521 = vld [vmem:[%s9 + $0x368] sm:$0xf]
      %v10522 = vld [vmem:[%s9 + $0x36c] sm:$0xf]
      %v10523 = vld [vmem:[%s9 + $0x370] sm:$0xf]
      %v10524 = vld [vmem:[%s9 + $0x374] sm:$0xf]
      %v10525 = vld [vmem:[%s9 + $0x378] sm:$0xf]
      %v10526 = vld [vmem:[%s9 + $0x37c] sm:$0xf]
      %v10535 = vunpack.c.l.b16 %v10487
      %v10536 = vunpack.c.h.b16 %v10487
      %v10537 = vunpack.c.l.b16 %v10488
      %v10538 = vunpack.c.h.b16 %v10488
      %v10539 = vunpack.c.l.b16 %v10489
      %v10540 = vunpack.c.h.b16 %v10489
      %v10541 = vunpack.c.l.b16 %v10490
      %v10542 = vunpack.c.h.b16 %v10490
      %v10543 = vunpack.c.l.b16 %v10491
      %v10544 = vunpack.c.h.b16 %v10491
      %v10545 = vunpack.c.l.b16 %v10492
      %v10546 = vunpack.c.h.b16 %v10492
      %v10547 = vunpack.c.l.b16 %v10493
      %v10548 = vunpack.c.h.b16 %v10493
      %v10549 = vunpack.c.l.b16 %v10494
      %v10550 = vunpack.c.h.b16 %v10494
      %v10551 = vpack.c.b16 %v10537, %v10535
      %v10552 = vpack.c.b16 %v10538, %v10536
      %v10553 = vpack.c.b16 %v10541, %v10539
      %v10554 = vpack.c.b16 %v10542, %v10540
      %v10555 = vpack.c.b16 %v10545, %v10543
      %v10556 = vpack.c.b16 %v10546, %v10544
      %v10557 = vpack.c.b16 %v10549, %v10547
      %v10558 = vpack.c.b16 %v10550, %v10548
      %v10599 = vunpack.c.l.b16 %v10495
      %v10600 = vunpack.c.l.b16 %v10496
      %v10601 = vunpack.c.l.b16 %v10497
      %v10602 = vunpack.c.l.b16 %v10498
      %v10603 = vunpack.c.l.b16 %v10499
      %v10604 = vunpack.c.l.b16 %v10500
      %v10605 = vunpack.c.l.b16 %v10501
      %v10606 = vunpack.c.l.b16 %v10502
      %v10607 = vunpack.c.l.b16 %v10503
      %v10608 = vunpack.c.l.b16 %v10504
      %v10609 = vunpack.c.l.b16 %v10505
      %v10610 = vunpack.c.l.b16 %v10506
      %v10611 = vunpack.c.l.b16 %v10507
      %v10612 = vunpack.c.l.b16 %v10508
      %v10613 = vunpack.c.l.b16 %v10509
      %v10614 = vunpack.c.l.b16 %v10510
      %v10615 = vunpack.c.l.b16 %v10511
      %v10616 = vunpack.c.l.b16 %v10512
      %v10617 = vunpack.c.l.b16 %v10513
      %v10618 = vunpack.c.l.b16 %v10514
      %v10619 = vunpack.c.l.b16 %v10515
      %v10620 = vunpack.c.l.b16 %v10516
      %v10621 = vunpack.c.l.b16 %v10517
      %v10622 = vunpack.c.l.b16 %v10518
      %v10623 = vunpack.c.l.b16 %v10519
      %v10624 = vunpack.c.l.b16 %v10520
      %v10625 = vunpack.c.l.b16 %v10521
      %v10626 = vunpack.c.l.b16 %v10522
      %v10627 = vunpack.c.l.b16 %v10523
      %v10628 = vunpack.c.l.b16 %v10524
      %v10629 = vunpack.c.l.b16 %v10525
      %v10630 = vunpack.c.l.b16 %v10526
      %v10631 = vpack.c.b16 %v10600, %v10599
      %v10632 = vpack.c.b16 %v10602, %v10601
      %v10633 = vpack.c.b16 %v10604, %v10603
      %v10634 = vpack.c.b16 %v10606, %v10605
      %v10635 = vpack.c.b16 %v10608, %v10607
      %v10636 = vpack.c.b16 %v10610, %v10609
      %v10637 = vpack.c.b16 %v10612, %v10611
      %v10638 = vpack.c.b16 %v10614, %v10613
      %v10639 = vpack.c.b16 %v10616, %v10615
      %v10640 = vpack.c.b16 %v10618, %v10617
      %v10641 = vpack.c.b16 %v10620, %v10619
      %v10642 = vpack.c.b16 %v10622, %v10621
      %v10643 = vpack.c.b16 %v10624, %v10623
      %v10644 = vpack.c.b16 %v10626, %v10625
      %v10645 = vpack.c.b16 %v10628, %v10627
      %v10646 = vpack.c.b16 %v10630, %v10629
      %10663 = vmatprep.subr.bf16.mxu0 0
      %10664 = vmatpush1.bf16.msra.mxu0 %v10631
      %10665 = vmatprep.subr.bf16.mxu0 0
      %10666 = vmatpush1.bf16.msra.mxu0 %v10632
      %10667 = vmatprep.subr.bf16.mxu0 0
      %10668 = vmatpush1.bf16.msra.mxu0 %v10633
      %10669 = vmatprep.subr.bf16.mxu0 0
      %10670 = vmatpush1.bf16.msra.mxu0 %v10634
      %10671 = vmatprep.subr.bf16.mxu0 0
      %10672 = vmatpush1.bf16.msra.mxu0 %v10635
      %10673 = vmatprep.subr.bf16.mxu0 0
      %10674 = vmatpush1.bf16.msra.mxu0 %v10636
      %10675 = vmatprep.subr.bf16.mxu0 0
      %10676 = vmatpush1.bf16.msra.mxu0 %v10637
      %10677 = vmatprep.subr.bf16.mxu0 0
      %10678 = vmatpush1.bf16.msra.mxu0 %v10638
      %10679 = vmatprep.subr.bf16.mxu0 0
      %10680 = vmatpush1.bf16.msra.mxu0 %v10639
      %10681 = vmatprep.subr.bf16.mxu0 0
      %10682 = vmatpush1.bf16.msra.mxu0 %v10640
      %10683 = vmatprep.subr.bf16.mxu0 0
      %10684 = vmatpush1.bf16.msra.mxu0 %v10641
      %10685 = vmatprep.subr.bf16.mxu0 0
      %10686 = vmatpush1.bf16.msra.mxu0 %v10642
      %10687 = vmatprep.subr.bf16.mxu0 0
      %10688 = vmatpush1.bf16.msra.mxu0 %v10643
      %10689 = vmatprep.subr.bf16.mxu0 0
      %10690 = vmatpush1.bf16.msra.mxu0 %v10644
      %10691 = vmatprep.subr.bf16.mxu0 0
      %10692 = vmatpush1.bf16.msra.mxu0 %v10645
      %10693 = vmatprep.subr.bf16.mxu0 0
      %10694 = vmatpush1.bf16.msra.mxu0 %v10646
      %10695 = vmatprep.mubr.bf16.mxu0 %v10552
      %10696 = vmatmul.mubr.bf16.gmra.mrb[0].mxu0 %v10551
      %v10697 = vpop.f32.mrb[0].mxu0
      %v10698 = vadd.f32 0.0, %v10697
      %v10699 = vpop.f32.mrb[0].mxu0
      %v10700 = vpop.f32.mrb[0].mxu0
      %v10701 = vadd.f32 0.0, %v10700
      %v10702 = vpop.f32.mrb[0].mxu0
      %10703 = vmatprep.mubr.bf16.mxu0 %v10554
      %10704 = vmatmul.mubr.bf16.gmra.mrb[0].mxu0 %v10553
      %v10705 = vpop.f32.mrb[0].mxu0
      %v10706 = vadd.f32 0.0, %v10705
      %v10707 = vpop.f32.mrb[0].mxu0
      %v10708 = vpop.f32.mrb[0].mxu0
      %v10709 = vadd.f32 0.0, %v10708
      %v10710 = vpop.f32.mrb[0].mxu0
      %10711 = vmatprep.mubr.bf16.mxu0 %v10556
      %10712 = vmatmul.mubr.bf16.gmra.mrb[0].mxu0 %v10555
      %v10713 = vpop.f32.mrb[0].mxu0
      %v10714 = vadd.f32 0.0, %v10713
      %v10715 = vpop.f32.mrb[0].mxu0
      %v10716 = vpop.f32.mrb[0].mxu0
      %v10717 = vadd.f32 0.0, %v10716
      %v10718 = vpop.f32.mrb[0].mxu0
      %10719 = vmatprep.mubr.bf16.mxu0 %v10558
      %10720 = vmatmul.mubr.bf16.gmra.mrb[0].mxu0 %v10557
      %v10721 = vpop.f32.mrb[0].mxu0
      %v10722 = vadd.f32 0.0, %v10721
      %v10723 = vpop.f32.mrb[0].mxu0
      %v10724 = vpop.f32.mrb[0].mxu0
      %v10725 = vadd.f32 0.0, %v10724
      %v10726 = vpop.f32.mrb[0].mxu0
      %10727 = vdwg.mxu0
      %v10728 = vadd.f32 %v10478, %v10698
      %v10729 = vadd.f32 %v10479, %v10701
      %v10730 = vadd.f32 %v10480, %v10706
      %v10731 = vadd.f32 %v10481, %v10709
      %v10732 = vadd.f32 %v10482, %v10714
      %v10733 = vadd.f32 %v10483, %v10717
      %v10734 = vadd.f32 %v10484, %v10722
      %v10735 = vadd.f32 %v10485, %v10725
      %v10736 = vld [vmem:[%s10486] sm:$0xff]
      %v10737 = vld [vmem:[%s10486 + $0x8] sm:$0x11]
      %v10738 = vld [vmem:[%s10486 + $0x10] sm:$0xff]
      %v10739 = vld [vmem:[%s10486 + $0x18] sm:$0x11]
      %v10740 = vld [vmem:[%s10486 + $0x20] sm:$0xff]
      %v10741 = vld [vmem:[%s10486 + $0x28] sm:$0x11]
      %v10742 = vld [vmem:[%s10486 + $0x30] sm:$0xff]
      %v10743 = vld [vmem:[%s10486 + $0x38] sm:$0x11]
      %v10744 = vld [vmem:[%s10486 + $0x40] sm:$0xff]
      %v10745 = vld [vmem:[%s10486 + $0x48] sm:$0x11]
      %v10746 = vld [vmem:[%s10486 + $0x50] sm:$0xff]
      %v10747 = vld [vmem:[%s10486 + $0x58] sm:$0x11]
      %v10748 = vld [vmem:[%s10486 + $0x60] sm:$0xff]
      %v10749 = vld [vmem:[%s10486 + $0x68] sm:$0x11]
      %v10750 = vld [vmem:[%s10486 + $0x70] sm:$0xff]
      %v10751 = vld [vmem:[%s10486 + $0x78] sm:$0x11]
      %v10753 = vshrl.u32 %v10736, 16
      %v10755 = vrot.slane %v10753, 4
      %v10756 = vshll.u32 %v10736, 16
      %v10758 = vrot.slane %v10756, 5
      %v10759 = vor.u32 %v10755, %v10758
      %v10760 = vrot.slane %v10759, 4
      %v10762 = vshll.u32 %v10737, 16
      %v10764 = vrot.slane %v10762, 5
      %v10765 = vsel %vm452, %v10760, %v10764
      %v10767 = vshrl.u32 %v10738, 16
      %v10769 = vrot.slane %v10767, 4
      %v10770 = vshll.u32 %v10738, 16
      %v10772 = vrot.slane %v10770, 5
      %v10773 = vor.u32 %v10769, %v10772
      %v10774 = vrot.slane %v10773, 4
      %v10776 = vshll.u32 %v10739, 16
      %v10778 = vrot.slane %v10776, 5
      %v10779 = vsel %vm452, %v10774, %v10778
      %v10781 = vshrl.u32 %v10740, 16
      %v10783 = vrot.slane %v10781, 4
      %v10784 = vshll.u32 %v10740, 16
      %v10786 = vrot.slane %v10784, 5
      %v10787 = vor.u32 %v10783, %v10786
      %v10788 = vrot.slane %v10787, 4
      %v10790 = vshll.u32 %v10741, 16
      %v10792 = vrot.slane %v10790, 5
      %v10793 = vsel %vm452, %v10788, %v10792
      %v10795 = vshrl.u32 %v10742, 16
      %v10797 = vrot.slane %v10795, 4
      %v10798 = vshll.u32 %v10742, 16
      %v10800 = vrot.slane %v10798, 5
      %v10801 = vor.u32 %v10797, %v10800
      %v10802 = vrot.slane %v10801, 4
      %v10804 = vshll.u32 %v10743, 16
      %v10806 = vrot.slane %v10804, 5
      %v10807 = vsel %vm452, %v10802, %v10806
      %v10809 = vshrl.u32 %v10744, 16
      %v10811 = vrot.slane %v10809, 4
      %v10812 = vshll.u32 %v10744, 16
      %v10814 = vrot.slane %v10812, 5
      %v10815 = vor.u32 %v10811, %v10814
      %v10816 = vrot.slane %v10815, 4
      %v10818 = vshll.u32 %v10745, 16
      %v10820 = vrot.slane %v10818, 5
      %v10821 = vsel %vm452, %v10816, %v10820
      %v10823 = vshrl.u32 %v10746, 16
      %v10825 = vrot.slane %v10823, 4
      %v10826 = vshll.u32 %v10746, 16
      %v10828 = vrot.slane %v10826, 5
      %v10829 = vor.u32 %v10825, %v10828
      %v10830 = vrot.slane %v10829, 4
      %v10832 = vshll.u32 %v10747, 16
      %v10834 = vrot.slane %v10832, 5
      %v10835 = vsel %vm452, %v10830, %v10834
      %v10837 = vshrl.u32 %v10748, 16
      %v10839 = vrot.slane %v10837, 4
      %v10840 = vshll.u32 %v10748, 16
      %v10842 = vrot.slane %v10840, 5
      %v10843 = vor.u32 %v10839, %v10842
      %v10844 = vrot.slane %v10843, 4
      %v10846 = vshll.u32 %v10749, 16
      %v10848 = vrot.slane %v10846, 5
      %v10849 = vsel %vm452, %v10844, %v10848
      %v10851 = vshrl.u32 %v10750, 16
      %v10853 = vrot.slane %v10851, 4
      %v10854 = vshll.u32 %v10750, 16
      %v10856 = vrot.slane %v10854, 5
      %v10857 = vor.u32 %v10853, %v10856
      %v10858 = vrot.slane %v10857, 4
      %v10860 = vshll.u32 %v10751, 16
      %v10862 = vrot.slane %v10860, 5
      %v10863 = vsel %vm452, %v10858, %v10862
      %v10864 = vld [vmem:[%s9 + $0x380] sm:$0xf]
      %v10865 = vld [vmem:[%s9 + $0x384] sm:$0xf]
      %v10866 = vld [vmem:[%s9 + $0x388] sm:$0xf]
      %v10867 = vld [vmem:[%s9 + $0x38c] sm:$0xf]
      %v10868 = vld [vmem:[%s9 + $0x390] sm:$0xf]
      %v10869 = vld [vmem:[%s9 + $0x394] sm:$0xf]
      %v10870 = vld [vmem:[%s9 + $0x398] sm:$0xf]
      %v10871 = vld [vmem:[%s9 + $0x39c] sm:$0xf]
      %v10872 = vld [vmem:[%s9 + $0x3a0] sm:$0xf]
      %v10873 = vld [vmem:[%s9 + $0x3a4] sm:$0xf]
      %v10874 = vld [vmem:[%s9 + $0x3a8] sm:$0xf]
      %v10875 = vld [vmem:[%s9 + $0x3ac] sm:$0xf]
      %v10876 = vld [vmem:[%s9 + $0x3b0] sm:$0xf]
      %v10877 = vld [vmem:[%s9 + $0x3b4] sm:$0xf]
      %v10878 = vld [vmem:[%s9 + $0x3b8] sm:$0xf]
      %v10879 = vld [vmem:[%s9 + $0x3bc] sm:$0xf]
      %v10880 = vld [vmem:[%s9 + $0x3c0] sm:$0xf]
      %v10881 = vld [vmem:[%s9 + $0x3c4] sm:$0xf]
      %v10882 = vld [vmem:[%s9 + $0x3c8] sm:$0xf]
      %v10883 = vld [vmem:[%s9 + $0x3cc] sm:$0xf]
      %v10884 = vld [vmem:[%s9 + $0x3d0] sm:$0xf]
      %v10885 = vld [vmem:[%s9 + $0x3d4] sm:$0xf]
      %v10886 = vld [vmem:[%s9 + $0x3d8] sm:$0xf]
      %v10887 = vld [vmem:[%s9 + $0x3dc] sm:$0xf]
      %v10888 = vld [vmem:[%s9 + $0x3e0] sm:$0xf]
      %v10889 = vld [vmem:[%s9 + $0x3e4] sm:$0xf]
      %v10890 = vld [vmem:[%s9 + $0x3e8] sm:$0xf]
      %v10891 = vld [vmem:[%s9 + $0x3ec] sm:$0xf]
      %v10892 = vld [vmem:[%s9 + $0x3f0] sm:$0xf]
      %v10893 = vld [vmem:[%s9 + $0x3f4] sm:$0xf]
      %v10894 = vld [vmem:[%s9 + $0x3f8] sm:$0xf]
      %v10895 = vld [vmem:[%s9 + $0x3fc] sm:$0xf]
      %v10896 = vunpack.c.l.b16 %v10765
      %v10897 = vunpack.c.h.b16 %v10765
      %v10898 = vunpack.c.l.b16 %v10779
      %v10899 = vunpack.c.h.b16 %v10779
      %v10900 = vunpack.c.l.b16 %v10793
      %v10901 = vunpack.c.h.b16 %v10793
      %v10902 = vunpack.c.l.b16 %v10807
      %v10903 = vunpack.c.h.b16 %v10807
      %v10904 = vunpack.c.l.b16 %v10821
      %v10905 = vunpack.c.h.b16 %v10821
      %v10906 = vunpack.c.l.b16 %v10835
      %v10907 = vunpack.c.h.b16 %v10835
      %v10908 = vunpack.c.l.b16 %v10849
      %v10909 = vunpack.c.h.b16 %v10849
      %v10910 = vunpack.c.l.b16 %v10863
      %v10911 = vunpack.c.h.b16 %v10863
      %v10912 = vpack.c.b16 %v10898, %v10896
      %v10913 = vpack.c.b16 %v10899, %v10897
      %v10914 = vpack.c.b16 %v10902, %v10900
      %v10915 = vpack.c.b16 %v10903, %v10901
      %v10916 = vpack.c.b16 %v10906, %v10904
      %v10917 = vpack.c.b16 %v10907, %v10905
      %v10918 = vpack.c.b16 %v10910, %v10908
      %v10919 = vpack.c.b16 %v10911, %v10909
      %v10960 = vunpack.c.l.b16 %v10864
      %v10961 = vunpack.c.l.b16 %v10865
      %v10962 = vunpack.c.l.b16 %v10866
      %v10963 = vunpack.c.l.b16 %v10867
      %v10964 = vunpack.c.l.b16 %v10868
      %v10965 = vunpack.c.l.b16 %v10869
      %v10966 = vunpack.c.l.b16 %v10870
      %v10967 = vunpack.c.l.b16 %v10871
      %v10968 = vunpack.c.l.b16 %v10872
      %v10969 = vunpack.c.l.b16 %v10873
      %v10970 = vunpack.c.l.b16 %v10874
      %v10971 = vunpack.c.l.b16 %v10875
      %v10972 = vunpack.c.l.b16 %v10876
      %v10973 = vunpack.c.l.b16 %v10877
      %v10974 = vunpack.c.l.b16 %v10878
      %v10975 = vunpack.c.l.b16 %v10879
      %v10976 = vunpack.c.l.b16 %v10880
      %v10977 = vunpack.c.l.b16 %v10881
      %v10978 = vunpack.c.l.b16 %v10882
      %v10979 = vunpack.c.l.b16 %v10883
      %v10980 = vunpack.c.l.b16 %v10884
      %v10981 = vunpack.c.l.b16 %v10885
      %v10982 = vunpack.c.l.b16 %v10886
      %v10983 = vunpack.c.l.b16 %v10887
      %v10984 = vunpack.c.l.b16 %v10888
      %v10985 = vunpack.c.l.b16 %v10889
      %v10986 = vunpack.c.l.b16 %v10890
      %v10987 = vunpack.c.l.b16 %v10891
      %v10988 = vunpack.c.l.b16 %v10892
      %v10989 = vunpack.c.l.b16 %v10893
      %v10990 = vunpack.c.l.b16 %v10894
      %v10991 = vunpack.c.l.b16 %v10895
      %v10992 = vpack.c.b16 %v10961, %v10960
      %v10993 = vpack.c.b16 %v10963, %v10962
      %v10994 = vpack.c.b16 %v10965, %v10964
      %v10995 = vpack.c.b16 %v10967, %v10966
      %v10996 = vpack.c.b16 %v10969, %v10968
      %v10997 = vpack.c.b16 %v10971, %v10970
      %v10998 = vpack.c.b16 %v10973, %v10972
      %v10999 = vpack.c.b16 %v10975, %v10974
      %v11000 = vpack.c.b16 %v10977, %v10976
      %v11001 = vpack.c.b16 %v10979, %v10978
      %v11002 = vpack.c.b16 %v10981, %v10980
      %v11003 = vpack.c.b16 %v10983, %v10982
      %v11004 = vpack.c.b16 %v10985, %v10984
      %v11005 = vpack.c.b16 %v10987, %v10986
      %v11006 = vpack.c.b16 %v10989, %v10988
      %v11007 = vpack.c.b16 %v10991, %v10990
      %11024 = vmatprep.subr.bf16.mxu0 0
      %11025 = vmatpush1.bf16.msra.mxu0 %v10992
      %11026 = vmatprep.subr.bf16.mxu0 0
      %11027 = vmatpush1.bf16.msra.mxu0 %v10993
      %11028 = vmatprep.subr.bf16.mxu0 0
      %11029 = vmatpush1.bf16.msra.mxu0 %v10994
      %11030 = vmatprep.subr.bf16.mxu0 0
      %11031 = vmatpush1.bf16.msra.mxu0 %v10995
      %11032 = vmatprep.subr.bf16.mxu0 0
      %11033 = vmatpush1.bf16.msra.mxu0 %v10996
      %11034 = vmatprep.subr.bf16.mxu0 0
      %11035 = vmatpush1.bf16.msra.mxu0 %v10997
      %11036 = vmatprep.subr.bf16.mxu0 0
      %11037 = vmatpush1.bf16.msra.mxu0 %v10998
      %11038 = vmatprep.subr.bf16.mxu0 0
      %11039 = vmatpush1.bf16.msra.mxu0 %v10999
      %11040 = vmatprep.subr.bf16.mxu0 0
      %11041 = vmatpush1.bf16.msra.mxu0 %v11000
      %11042 = vmatprep.subr.bf16.mxu0 0
      %11043 = vmatpush1.bf16.msra.mxu0 %v11001
      %11044 = vmatprep.subr.bf16.mxu0 0
      %11045 = vmatpush1.bf16.msra.mxu0 %v11002
      %11046 = vmatprep.subr.bf16.mxu0 0
      %11047 = vmatpush1.bf16.msra.mxu0 %v11003
      %11048 = vmatprep.subr.bf16.mxu0 0
      %11049 = vmatpush1.bf16.msra.mxu0 %v11004
      %11050 = vmatprep.subr.bf16.mxu0 0
      %11051 = vmatpush1.bf16.msra.mxu0 %v11005
      %11052 = vmatprep.subr.bf16.mxu0 0
      %11053 = vmatpush1.bf16.msra.mxu0 %v11006
      %11054 = vmatprep.subr.bf16.mxu0 0
      %11055 = vmatpush1.bf16.msra.mxu0 %v11007
      %11056 = vmatprep.mubr.bf16.mxu0 %v10913
      %11057 = vmatmul.mubr.bf16.gmra.mrb[0].mxu0 %v10912
      %v11058 = vpop.f32.mrb[0].mxu0
      %v11059 = vadd.f32 0.0, %v11058
      %v11060 = vpop.f32.mrb[0].mxu0
      %v11061 = vpop.f32.mrb[0].mxu0
      %v11062 = vadd.f32 0.0, %v11061
      %v11063 = vpop.f32.mrb[0].mxu0
      %11064 = vmatprep.mubr.bf16.mxu0 %v10915
      %11065 = vmatmul.mubr.bf16.gmra.mrb[0].mxu0 %v10914
      %v11066 = vpop.f32.mrb[0].mxu0
      %v11067 = vadd.f32 0.0, %v11066
      %v11068 = vpop.f32.mrb[0].mxu0
      %v11069 = vpop.f32.mrb[0].mxu0
      %v11070 = vadd.f32 0.0, %v11069
      %v11071 = vpop.f32.mrb[0].mxu0
      %11072 = vmatprep.mubr.bf16.mxu0 %v10917
      %11073 = vmatmul.mubr.bf16.gmra.mrb[0].mxu0 %v10916
      %v11074 = vpop.f32.mrb[0].mxu0
      %v11075 = vadd.f32 0.0, %v11074
      %v11076 = vpop.f32.mrb[0].mxu0
      %v11077 = vpop.f32.mrb[0].mxu0
      %v11078 = vadd.f32 0.0, %v11077
      %v11079 = vpop.f32.mrb[0].mxu0
      %11080 = vmatprep.mubr.bf16.mxu0 %v10919
      %11081 = vmatmul.mubr.bf16.gmra.mrb[0].mxu0 %v10918
      %v11082 = vpop.f32.mrb[0].mxu0
      %v11083 = vadd.f32 0.0, %v11082
      %v11084 = vpop.f32.mrb[0].mxu0
      %v11085 = vpop.f32.mrb[0].mxu0
      %v11086 = vadd.f32 0.0, %v11085
      %v11087 = vpop.f32.mrb[0].mxu0
      %11088 = vdwg.mxu0
      %v11089 = vadd.f32 %v10728, %v11059
      %v11090 = vadd.f32 %v10729, %v11062
      %v11091 = vadd.f32 %v10730, %v11067
      %v11092 = vadd.f32 %v10731, %v11070
      %v11093 = vadd.f32 %v10732, %v11075
      %v11094 = vadd.f32 %v10733, %v11078
      %v11095 = vadd.f32 %v10734, %v11083
      %v11096 = vadd.f32 %v10735, %v11086
      %v11097 = vld [vmem:[%s10486] sm:$0xee]
      %v11098 = vld [vmem:[%s10486 + $0x10] sm:$0xee]
      %v11099 = vld [vmem:[%s10486 + $0x20] sm:$0xee]
      %v11100 = vld [vmem:[%s10486 + $0x30] sm:$0xee]
      %v11101 = vld [vmem:[%s10486 + $0x40] sm:$0xee]
      %v11102 = vld [vmem:[%s10486 + $0x50] sm:$0xee]
      %v11103 = vld [vmem:[%s10486 + $0x60] sm:$0xee]
      %v11104 = vld [vmem:[%s10486 + $0x70] sm:$0xee]
      %v11121 = vrot.slane %v11097, 5
      %v11122 = vrot.slane %v11121, 4
      %v11123 = vrot.slane %v10737, 5
      %v11124 = vsel %vm2252, %v11122, %v11123
      %v11125 = vrot.slane %v11098, 5
      %v11126 = vrot.slane %v11125, 4
      %v11127 = vrot.slane %v10739, 5
      %v11128 = vsel %vm2252, %v11126, %v11127
      %v11129 = vrot.slane %v11099, 5
      %v11130 = vrot.slane %v11129, 4
      %v11131 = vrot.slane %v10741, 5
      %v11132 = vsel %vm2252, %v11130, %v11131
      %v11133 = vrot.slane %v11100, 5
      %v11134 = vrot.slane %v11133, 4
      %v11135 = vrot.slane %v10743, 5
      %v11136 = vsel %vm2252, %v11134, %v11135
      %v11137 = vrot.slane %v11101, 5
      %v11138 = vrot.slane %v11137, 4
      %v11139 = vrot.slane %v10745, 5
      %v11140 = vsel %vm2252, %v11138, %v11139
      %v11141 = vrot.slane %v11102, 5
      %v11142 = vrot.slane %v11141, 4
      %v11143 = vrot.slane %v10747, 5
      %v11144 = vsel %vm2252, %v11142, %v11143
      %v11145 = vrot.slane %v11103, 5
      %v11146 = vrot.slane %v11145, 4
      %v11147 = vrot.slane %v10749, 5
      %v11148 = vsel %vm2252, %v11146, %v11147
      %v11149 = vrot.slane %v11104, 5
      %v11150 = vrot.slane %v11149, 4
      %v11151 = vrot.slane %v10751, 5
      %v11152 = vsel %vm2252, %v11150, %v11151
      %v11153 = vld [vmem:[%s9 + $0x400] sm:$0xf]
      %v11154 = vld [vmem:[%s9 + $0x404] sm:$0xf]
      %v11155 = vld [vmem:[%s9 + $0x408] sm:$0xf]
      %v11156 = vld [vmem:[%s9 + $0x40c] sm:$0xf]
      %v11157 = vld [vmem:[%s9 + $0x410] sm:$0xf]
      %v11158 = vld [vmem:[%s9 + $0x414] sm:$0xf]
      %v11159 = vld [vmem:[%s9 + $0x418] sm:$0xf]
      %v11160 = vld [vmem:[%s9 + $0x41c] sm:$0xf]
      %v11161 = vld [vmem:[%s9 + $0x420] sm:$0xf]
      %v11162 = vld [vmem:[%s9 + $0x424] sm:$0xf]
      %v11163 = vld [vmem:[%s9 + $0x428] sm:$0xf]
      %v11164 = vld [vmem:[%s9 + $0x42c] sm:$0xf]
      %v11165 = vld [vmem:[%s9 + $0x430] sm:$0xf]
      %v11166 = vld [vmem:[%s9 + $0x434] sm:$0xf]
      %v11167 = vld [vmem:[%s9 + $0x438] sm:$0xf]
      %v11168 = vld [vmem:[%s9 + $0x43c] sm:$0xf]
      %v11169 = vld [vmem:[%s9 + $0x440] sm:$0xf]
      %v11170 = vld [vmem:[%s9 + $0x444] sm:$0xf]
      %v11171 = vld [vmem:[%s9 + $0x448] sm:$0xf]
      %v11172 = vld [vmem:[%s9 + $0x44c] sm:$0xf]
      %v11173 = vld [vmem:[%s9 + $0x450] sm:$0xf]
      %v11174 = vld [vmem:[%s9 + $0x454] sm:$0xf]
      %v11175 = vld [vmem:[%s9 + $0x458] sm:$0xf]
      %v11176 = vld [vmem:[%s9 + $0x45c] sm:$0xf]
      %v11177 = vld [vmem:[%s9 + $0x460] sm:$0xf]
      %v11178 = vld [vmem:[%s9 + $0x464] sm:$0xf]
      %v11179 = vld [vmem:[%s9 + $0x468] sm:$0xf]
      %v11180 = vld [vmem:[%s9 + $0x46c] sm:$0xf]
      %v11181 = vld [vmem:[%s9 + $0x470] sm:$0xf]
      %v11182 = vld [vmem:[%s9 + $0x474] sm:$0xf]
      %v11183 = vld [vmem:[%s9 + $0x478] sm:$0xf]
      %v11184 = vld [vmem:[%s9 + $0x47c] sm:$0xf]
      %v11185 = vunpack.c.l.b16 %v11124
      %v11186 = vunpack.c.h.b16 %v11124
      %v11187 = vunpack.c.l.b16 %v11128
      %v11188 = vunpack.c.h.b16 %v11128
      %v11189 = vunpack.c.l.b16 %v11132
      %v11190 = vunpack.c.h.b16 %v11132
      %v11191 = vunpack.c.l.b16 %v11136
      %v11192 = vunpack.c.h.b16 %v11136
      %v11193 = vunpack.c.l.b16 %v11140
      %v11194 = vunpack.c.h.b16 %v11140
      %v11195 = vunpack.c.l.b16 %v11144
      %v11196 = vunpack.c.h.b16 %v11144
      %v11197 = vunpack.c.l.b16 %v11148
      %v11198 = vunpack.c.h.b16 %v11148
      %v11199 = vunpack.c.l.b16 %v11152
      %v11200 = vunpack.c.h.b16 %v11152
      %v11201 = vpack.c.b16 %v11187, %v11185
      %v11202 = vpack.c.b16 %v11188, %v11186
      %v11203 = vpack.c.b16 %v11191, %v11189
      %v11204 = vpack.c.b16 %v11192, %v11190
      %v11205 = vpack.c.b16 %v11195, %v11193
      %v11206 = vpack.c.b16 %v11196, %v11194
      %v11207 = vpack.c.b16 %v11199, %v11197
      %v11208 = vpack.c.b16 %v11200, %v11198
      %v11249 = vunpack.c.l.b16 %v11153
      %v11250 = vunpack.c.l.b16 %v11154
      %v11251 = vunpack.c.l.b16 %v11155
      %v11252 = vunpack.c.l.b16 %v11156
      %v11253 = vunpack.c.l.b16 %v11157
      %v11254 = vunpack.c.l.b16 %v11158
      %v11255 = vunpack.c.l.b16 %v11159
      %v11256 = vunpack.c.l.b16 %v11160
      %v11257 = vunpack.c.l.b16 %v11161
      %v11258 = vunpack.c.l.b16 %v11162
      %v11259 = vunpack.c.l.b16 %v11163
      %v11260 = vunpack.c.l.b16 %v11164
      %v11261 = vunpack.c.l.b16 %v11165
      %v11262 = vunpack.c.l.b16 %v11166
      %v11263 = vunpack.c.l.b16 %v11167
      %v11264 = vunpack.c.l.b16 %v11168
      %v11265 = vunpack.c.l.b16 %v11169
      %v11266 = vunpack.c.l.b16 %v11170
      %v11267 = vunpack.c.l.b16 %v11171
      %v11268 = vunpack.c.l.b16 %v11172
      %v11269 = vunpack.c.l.b16 %v11173
      %v11270 = vunpack.c.l.b16 %v11174
      %v11271 = vunpack.c.l.b16 %v11175
      %v11272 = vunpack.c.l.b16 %v11176
      %v11273 = vunpack.c.l.b16 %v11177
      %v11274 = vunpack.c.l.b16 %v11178
      %v11275 = vunpack.c.l.b16 %v11179
      %v11276 = vunpack.c.l.b16 %v11180
      %v11277 = vunpack.c.l.b16 %v11181
      %v11278 = vunpack.c.l.b16 %v11182
      %v11279 = vunpack.c.l.b16 %v11183
      %v11280 = vunpack.c.l.b16 %v11184
      %v11281 = vpack.c.b16 %v11250, %v11249
      %v11282 = vpack.c.b16 %v11252, %v11251
      %v11283 = vpack.c.b16 %v11254, %v11253
      %v11284 = vpack.c.b16 %v11256, %v11255
      %v11285 = vpack.c.b16 %v11258, %v11257
      %v11286 = vpack.c.b16 %v11260, %v11259
      %v11287 = vpack.c.b16 %v11262, %v11261
      %v11288 = vpack.c.b16 %v11264, %v11263
      %v11289 = vpack.c.b16 %v11266, %v11265
      %v11290 = vpack.c.b16 %v11268, %v11267
      %v11291 = vpack.c.b16 %v11270, %v11269
      %v11292 = vpack.c.b16 %v11272, %v11271
      %v11293 = vpack.c.b16 %v11274, %v11273
      %v11294 = vpack.c.b16 %v11276, %v11275
      %v11295 = vpack.c.b16 %v11278, %v11277
      %v11296 = vpack.c.b16 %v11280, %v11279
      %11313 = vmatprep.subr.bf16.mxu0 0
      %11314 = vmatpush1.bf16.msra.mxu0 %v11281
      %11315 = vmatprep.subr.bf16.mxu0 0
      %11316 = vmatpush1.bf16.msra.mxu0 %v11282
      %11317 = vmatprep.subr.bf16.mxu0 0
      %11318 = vmatpush1.bf16.msra.mxu0 %v11283
      %11319 = vmatprep.subr.bf16.mxu0 0
      %11320 = vmatpush1.bf16.msra.mxu0 %v11284
      %11321 = vmatprep.subr.bf16.mxu0 0
      %11322 = vmatpush1.bf16.msra.mxu0 %v11285
      %11323 = vmatprep.subr.bf16.mxu0 0
      %11324 = vmatpush1.bf16.msra.mxu0 %v11286
      %11325 = vmatprep.subr.bf16.mxu0 0
      %11326 = vmatpush1.bf16.msra.mxu0 %v11287
      %11327 = vmatprep.subr.bf16.mxu0 0
      %11328 = vmatpush1.bf16.msra.mxu0 %v11288
      %11329 = vmatprep.subr.bf16.mxu0 0
      %11330 = vmatpush1.bf16.msra.mxu0 %v11289
      %11331 = vmatprep.subr.bf16.mxu0 0
      %11332 = vmatpush1.bf16.msra.mxu0 %v11290
      %11333 = vmatprep.subr.bf16.mxu0 0
      %11334 = vmatpush1.bf16.msra.mxu0 %v11291
      %11335 = vmatprep.subr.bf16.mxu0 0
      %11336 = vmatpush1.bf16.msra.mxu0 %v11292
      %11337 = vmatprep.subr.bf16.mxu0 0
      %11338 = vmatpush1.bf16.msra.mxu0 %v11293
      %11339 = vmatprep.subr.bf16.mxu0 0
      %11340 = vmatpush1.bf16.msra.mxu0 %v11294
      %11341 = vmatprep.subr.bf16.mxu0 0
      %11342 = vmatpush1.bf16.msra.mxu0 %v11295
      %11343 = vmatprep.subr.bf16.mxu0 0
      %11344 = vmatpush1.bf16.msra.mxu0 %v11296
      %11345 = vmatprep.mubr.bf16.mxu0 %v11202
      %11346 = vmatmul.mubr.bf16.gmra.mrb[0].mxu0 %v11201
      %v11347 = vpop.f32.mrb[0].mxu0
      %v11348 = vadd.f32 0.0, %v11347
      %v11349 = vpop.f32.mrb[0].mxu0
      %v11350 = vpop.f32.mrb[0].mxu0
      %v11351 = vadd.f32 0.0, %v11350
      %v11352 = vpop.f32.mrb[0].mxu0
      %11353 = vmatprep.mubr.bf16.mxu0 %v11204
      %11354 = vmatmul.mubr.bf16.gmra.mrb[0].mxu0 %v11203
      %v11355 = vpop.f32.mrb[0].mxu0
      %v11356 = vadd.f32 0.0, %v11355
      %v11357 = vpop.f32.mrb[0].mxu0
      %v11358 = vpop.f32.mrb[0].mxu0
      %v11359 = vadd.f32 0.0, %v11358
      %v11360 = vpop.f32.mrb[0].mxu0
      %11361 = vmatprep.mubr.bf16.mxu0 %v11206
      %11362 = vmatmul.mubr.bf16.gmra.mrb[0].mxu0 %v11205
      %v11363 = vpop.f32.mrb[0].mxu0
      %v11364 = vadd.f32 0.0, %v11363
      %v11365 = vpop.f32.mrb[0].mxu0
      %v11366 = vpop.f32.mrb[0].mxu0
      %v11367 = vadd.f32 0.0, %v11366
      %v11368 = vpop.f32.mrb[0].mxu0
      %11369 = vmatprep.mubr.bf16.mxu0 %v11208
      %11370 = vmatmul.mubr.bf16.gmra.mrb[0].mxu0 %v11207
      %v11371 = vpop.f32.mrb[0].mxu0
      %v11372 = vadd.f32 0.0, %v11371
      %v11373 = vpop.f32.mrb[0].mxu0
      %v11374 = vpop.f32.mrb[0].mxu0
      %v11375 = vadd.f32 0.0, %v11374
      %v11376 = vpop.f32.mrb[0].mxu0
      %11377 = vdwg.mxu0
      %v11378 = vadd.f32 %v11089, %v11348
      %v11379 = vadd.f32 %v11090, %v11351
      %v11380 = vadd.f32 %v11091, %v11356
      %v11381 = vadd.f32 %v11092, %v11359
      %v11382 = vadd.f32 %v11093, %v11364
      %v11383 = vadd.f32 %v11094, %v11367
      %v11384 = vadd.f32 %v11095, %v11372
      %v11385 = vadd.f32 %v11096, %v11375
      %v11386 = vtanh.pop %v11378
      %v11387 = vtanh.pop %v11379
      %v11388 = vtanh.pop %v11380
      %v11389 = vtanh.pop %v11381
      %v11390 = vtanh.pop %v11382
      %v11391 = vtanh.pop %v11383
      %v11392 = vtanh.pop %v11384
      %v11393 = vtanh.pop %v11385
      %11394 = vst [vmem:[%s359] sm:$0xff] %v11386
      %11395 = vst [vmem:[%s359 + $0x8] sm:$0xff] %v11387
      %11396 = vst [vmem:[%s359 + $0x10] sm:$0xff] %v11388
      %11397 = vst [vmem:[%s359 + $0x18] sm:$0xff] %v11389
      %11398 = vst [vmem:[%s359 + $0x20] sm:$0xff] %v11390
      %11399 = vst [vmem:[%s359 + $0x28] sm:$0xff] %v11391
      %11400 = vst [vmem:[%s359 + $0x30] sm:$0xff] %v11392
      %11401 = vst [vmem:[%s359 + $0x38] sm:$0xff] %v11393
      %s11402 = smul.u32 8, %s21
      %p11403 = scmp.lt.s32.totalorder %s11402, 15
      %s11404 = scalar_select %p11403, %s11402, 15
      %s11405 = smul.addr %s11404, 8
      %s11406 = scalar_lea.vmem %s10, %s11405
      // Predicated region
      $region61: #{g21_forward.3} parent=59 // pred_check
        %p11407 = pneg %p254
      $region62: #{g21_forward.3} parent=59 // pred_check_branch
        %11409 = sbr.rel (%p11407) target = $region64
      $region63: #{g21_forward.3} parent=59 // pred_region
        %s11410 = smul.u32 8, %s21
      $region64: #{g21_forward.3} parent=59 // pred_fallthru
        _
    $region60: #{g21_forward.3} parent=5 // pred_fallthru
      _
    %p11411 = scmp.le.s32.totalorder 2, %s16
    // Predicated region
    $region65: #{g21_forward.3} parent=5 // pred_check
      %p11412 = pneg %p11411
    $region66: #{g21_forward.3} parent=5 // pred_check_branch
      %11414 = sbr.rel (%p11412) target = $region68
    $region67: #{g21_forward.3} parent=5 // pred_region
      %s11415 = ssub.s32 %s16, 2
      // Predicated region
      $region69: #{g21_forward.3} parent=67 // pred_check
        %p11416 = pneg %p260
      $region70: #{g21_forward.3} parent=67 // pred_check_branch
        %11418 = sbr.rel (%p11416) target = $region72
      $region71: #{g21_forward.3} parent=67 // pred_region
        %s11419 = smul.u32 8, %s22
        %p11420 = scmp.lt.s32.totalorder %s11419, 15
        %s11421 = scalar_select %p11420, %s11419, 15
        %s11422 = smul.addr %s11421, 8
        %s11423 = scalar_lea.vmem %s10, %s11422
      $region72: #{g21_forward.3} parent=67 // pred_fallthru
        _
    $region68: #{g21_forward.3} parent=5 // pred_fallthru
      _
  $region6: #{g21_forward.3} parent=0 // loop_footer
    %s20 = sadd.s32 1, %s16
  $region7: #{g21_forward.3} parent=0 // loop_footer_branch
    %15 = sbr.rel target = $region3
  $region8: #{g21_forward.3} parent=0 // loop_exit
    _

</llo_original>
